<compile_context>
chip_gen: v7x
topology: tpu7x:2x2x1
jax: 0.10.0
libtpu: 0.0.40
codegen_flags: <defaults>
</compile_context>

<pallas_src>
import jax
import jax.numpy as jnp
from jax.experimental import pallas as pl
from jax.experimental.pallas import tpu as pltpu


# ----------------------------------------------------------------------------
# Parameter build: DCGAN init, BN folded, ConvTranspose layers pre-lowered to
# dense matmul operators over flattened (h, w, c) activations.
# ----------------------------------------------------------------------------
def _expand_convT_s2(w, scale, h_in, w_in, out_order):
    """Dense operator for ConvTranspose2d(K=4, stride=2, pad=1) with BN scale.

    w: (cin, cout, K, K) float32 (PyTorch ConvTranspose2d weight layout).
    Returns (h_in*w_in*cin, h_out*w_out*cout); rows ordered (ih, iw, ci),
    columns ordered (oh, ow, co) if out_order == "hwc" else (co, oh, ow).
    """
    cin, cout, K, _ = w.shape
    h_out, w_out = 2 * h_in, 2 * w_in
    # ConvTranspose: oh = 2*ih - pad + kh  =>  kh = oh - 2*ih + 1
    kh = jnp.arange(h_out)[None, :] - 2 * jnp.arange(h_in)[:, None] + 1
    kw = jnp.arange(w_out)[None, :] - 2 * jnp.arange(w_in)[:, None] + 1
    mh = (kh >= 0) & (kh < K)
    mw = (kw >= 0) & (kw < K)
    khc = jnp.clip(kh, 0, K - 1)
    kwc = jnp.clip(kw, 0, K - 1)
    wt = jnp.transpose(w, (2, 3, 0, 1)) * scale[None, None, None, :]  # (K,K,ci,co)
    # g[ih, oh, iw, ow, ci, co]
    g = wt[khc[:, :, None, None], kwc[None, None, :, :]]
    mask = (mh[:, :, None, None] & mw[None, None, :, :]).astype(g.dtype)
    g = g * mask[:, :, :, :, None, None]
    if out_order == "hwc":
        g = jnp.transpose(g, (0, 2, 4, 1, 3, 5))   # (ih, iw, ci, oh, ow, co)
        return g.reshape(h_in * w_in * cin, h_out * w_out * cout)
    g = jnp.transpose(g, (0, 2, 4, 5, 1, 3))       # (ih, iw, ci, co, oh, ow)
    return g.reshape(h_in * w_in * cin, cout * h_out * w_out)


def init_decoder_params(key, isize, nz, nc, ngf):
    """Returns (params, raw_layers).

    params["layers"]: matmul-ready dense operators (BN folded, bf16) consumed
    by the fused Pallas kernel.  raw_layers: PyTorch-layout weights for the
    pure-XLA reference check.
    """
    assert isize >= 8 and isize & (isize - 1) == 0
    assert isize <= 32, "dense operator expansion is only meant for small isize"

    cngf, tisize = ngf // 2, 4
    while tisize != isize:
        cngf, tisize = cngf * 2, tisize * 2

    # (cin, cout, K, stride, pad, has_bn, activation)
    defs = [(nz, cngf, 4, 1, 0, True, "relu")]
    csize, c = 4, cngf
    while csize < isize // 2:
        defs.append((c, c // 2, 4, 2, 1, True, "relu"))
        c //= 2
        csize *= 2
    defs.append((c, nc, 4, 2, 1, False, "tanh"))

    layers, raw = [], []
    spatial = 1
    for li, (cin, cout, K, s, p, has_bn, act) in enumerate(defs):
        key, k1, k2, k3 = jax.random.split(key, 4)
        w = 0.02 * jax.random.normal(k1, (cin, cout, K, K), jnp.float32)
        if has_bn:
            gamma = 1.0 + 0.1 * jax.random.normal(k2, (cout,), jnp.float32)
            beta = 0.1 * jax.random.normal(k3, (cout,), jnp.float32)
            running_mean = jnp.zeros((cout,), jnp.float32)
            running_var = jnp.ones((cout,), jnp.float32)
            scale = gamma * jax.lax.rsqrt(running_var + 1e-5)
            bias = beta - running_mean * scale
        else:
            scale = jnp.ones((cout,), jnp.float32)
            bias = jnp.zeros((cout,), jnp.float32)
        raw.append(dict(w=w, scale=scale, bias=bias, stride=s, pad=p, act=act))

        last = li == len(defs) - 1
        if li == 0:
            # 1x1 spatial latent, stride 1, pad 0: oh == kh, ow == kw.
            assert s == 1 and p == 0 and spatial == 1
            w_mat = (jnp.transpose(w, (0, 2, 3, 1)) * scale).reshape(
                cin, K * K * cout)                        # cols (oh, ow, co)
            b_vec = jnp.tile(bias, K * K)
            spatial = K
        else:
            assert s == 2 and p == 1 and K == 4
            order = "chw" if last else "hwc"
            w_mat = _expand_convT_s2(w, scale, spatial, spatial, order)
            spatial *= 2
            if last:
                b_vec = jnp.repeat(bias, spatial * spatial)   # cols (co, oh, ow)
            else:
                b_vec = jnp.tile(bias, spatial * spatial)     # cols (oh, ow, co)
        layers.append(dict(w=w_mat.astype(jnp.bfloat16),
                           b=b_vec[None, :].astype(jnp.float32),
                           act=act))

    return dict(layers=layers, nz=nz, nc=nc, isize=isize), raw


# ----------------------------------------------------------------------------
# Fused Pallas kernel: the entire decoder in one pallas_call.
# ----------------------------------------------------------------------------
def _make_decoder_kernel(num_layers):
    def kernel(*refs):
        z_ref, o_ref = refs[0], refs[-1]
        h = z_ref[...].astype(jnp.bfloat16)
        for li in range(num_layers):
            w_ref = refs[1 + 2 * li]
            b_ref = refs[2 + 2 * li]
            acc = jnp.dot(h, w_ref[...], preferred_element_type=jnp.float32)
            acc = acc + b_ref[...]
            if li + 1 < num_layers:
                # ReLU epilogue; bf16 intermediate never leaves VMEM/vregs.
                h = jnp.maximum(acc, 0.0).astype(jnp.bfloat16)
            else:
                o_ref[...] = jnp.tanh(acc).astype(o_ref.dtype)
    return kernel


def decoder_forward_pallas(z2d, layers):
    """Runs the whole decoder in a single no-grid pallas_call.

    z2d: (B, nz) float32.  Returns (B, nc*isize*isize) float32 with columns
    ordered (c, h, w) so a plain reshape yields NCHW.
    """
    B = z2d.shape[0]
    n_out = layers[-1]["w"].shape[1]
    args, specs = [z2d], [pl.BlockSpec(memory_space=pltpu.MemorySpace.VMEM)]
    for lyr in layers:
        args += [lyr["w"], lyr["b"]]
        specs += [pl.BlockSpec(memory_space=pltpu.MemorySpace.VMEM)] * 2
    return pl.pallas_call(
        _make_decoder_kernel(len(layers)),
        out_shape=jax.ShapeDtypeStruct((B, n_out), jnp.float32),
        in_specs=specs,
        out_specs=pl.BlockSpec(memory_space=pltpu.MemorySpace.VMEM),
        compiler_params=pltpu.CompilerParams(
            # Whole resident set (weights + biases + activations) is ~7 MiB at
            # the default config; 32 MiB leaves headroom on every generation
            # (v7x physical VMEM is 64 MiB).
            vmem_limit_bytes=32 * 1024 * 1024,
        ),
    )(*args)


def netg_forward(params, z_nchw):
    """NetG.forward: output = decoder(input)."""
    B = z_nchw.shape[0]
    nz, nc, isize = params["nz"], params["nc"], params["isize"]
    z2d = z_nchw.reshape(B, nz)
    flat = decoder_forward_pallas(z2d, params["layers"])
    return flat.reshape(B, nc, isize, isize)   # columns already (c, h, w)


# ----------------------------------------------------------------------------
# Pure-XLA f32 reference (ConvTranspose == dilated conv with flipped kernel)
# ----------------------------------------------------------------------------
def reference_forward(raw_layers, z):
    x = z
    for lyr in raw_layers:
        w, s, p = lyr["w"], lyr["stride"], lyr["pad"]
        K = w.shape[2]
        wf = jnp.transpose(w[:, :, ::-1, ::-1], (1, 0, 2, 3))  # (cout, cin, K, K)
        y = jax.lax.conv_general_dilated(
            x, wf, window_strides=(1, 1),
            padding=[(K - 1 - p, K - 1 - p)] * 2,
            lhs_dilation=(s, s),
            dimension_numbers=("NCHW", "OIHW", "NCHW"))
        y = y * lyr["scale"][None, :, None, None] + lyr["bias"][None, :, None, None]
        y = jnp.maximum(y, 0.0) if lyr["act"] == "relu" else jnp.tanh(y)
        x = y
    return x


if __name__ == "__main__":
    key = jax.random.PRNGKey(0)
    k_params, k_z = jax.random.split(key)

    # Small DCGAN-style config: 16x16 RGB output from an 8-dim latent.
    B, nz, nc, ngf, isize = 2, 8, 3, 32, 16
    params, raw = init_decoder_params(k_params, isize, nz, nc, ngf)

    z = jax.random.normal(k_z, (B, nz, 1, 1), jnp.float32)  # NCHW latent

    fwd = jax.jit(lambda zz: netg_forward(params, zz))
    out = jax.block_until_ready(fwd(z))

    assert out.shape == (B, nc, isize, isize), out.shape
    assert bool(jnp.all(jnp.isfinite(out)))
    assert bool(jnp.all(jnp.abs(out) <= 1.0 + 1e-6))  # tanh range

    # Numerical cross-check against the f32 XLA reference.  Tolerance is
    # tightened vs. the previous version: ~5% of the global output magnitude
    # plus a small absolute floor (bf16 operands / f32 accumulation land well
    # inside this; a tap / ordering bug would not).
    ref = jax.block_until_ready(reference_forward(raw, z))
    err = float(jnp.max(jnp.abs(out - ref)))
    ref_mag = float(jnp.max(jnp.abs(ref)))
    assert err <= 0.05 * ref_mag + 2e-4, (err, ref_mag)

    print("KERNEL_OK")
</pallas_src>

<mosaic_0001>
module attributes {stable_mosaic.version = 11 : i64} {
  func.func @kernel(%arg0: memref<2x8xf32, #tpu.memory_space<vmem>>, %arg1: memref<8x1024xbf16, #tpu.memory_space<vmem>>, %arg2: memref<1x1024xf32, #tpu.memory_space<vmem>>, %arg3: memref<1024x2048xbf16, #tpu.memory_space<vmem>>, %arg4: memref<1x2048xf32, #tpu.memory_space<vmem>>, %arg5: memref<2048x768xbf16, #tpu.memory_space<vmem>>, %arg6: memref<1x768xf32, #tpu.memory_space<vmem>>, %arg7: memref<2x768xf32, #tpu.memory_space<vmem>>) attributes {dimension_semantics = [], scalar_prefetch = 0 : i64, scratch_operands = 0 : i64, tpu.core_type = #tpu.core_type<tc>} {
    %c0 = arith.constant 0 : index
    %c0_0 = arith.constant 0 : index
    %0 = vector.load %arg0[%c0, %c0_0] : memref<2x8xf32, #tpu.memory_space<vmem>>, vector<2x8xf32>
    %1 = arith.truncf %0 : vector<2x8xf32> to vector<2x8xbf16>
    %c0_1 = arith.constant 0 : index
    %c0_2 = arith.constant 0 : index
    %2 = vector.load %arg1[%c0_1, %c0_2] : memref<8x1024xbf16, #tpu.memory_space<vmem>>, vector<8x1024xbf16>
    %cst = arith.constant dense<0.000000e+00> : vector<2x1024xf32>
    %3 = tpu.matmul %1, %2, %cst {dimension_numbers = #tpu.dot_dimension_numbers<[1], [0], [0], [1], [0, 0, 1, 1], [], []>} : vector<2x8xbf16>, vector<8x1024xbf16>, vector<2x1024xf32> -> vector<2x1024xf32>
    %c0_3 = arith.constant 0 : index
    %c0_4 = arith.constant 0 : index
    %4 = vector.load %arg2[%c0_3, %c0_4] : memref<1x1024xf32, #tpu.memory_space<vmem>>, vector<1x1024xf32>
    %5 = vector.broadcast %4 : vector<1x1024xf32> to vector<2x1024xf32>
    %6 = arith.addf %3, %5 : vector<2x1024xf32>
    %cst_5 = arith.constant 0.000000e+00 : f32
    %7 = vector.broadcast %cst_5 : f32 to vector<2x1024xf32>
    %8 = arith.maximumf %6, %7 : vector<2x1024xf32>
    %9 = arith.truncf %8 : vector<2x1024xf32> to vector<2x1024xbf16>
    %c0_6 = arith.constant 0 : index
    %c0_7 = arith.constant 0 : index
    %10 = vector.load %arg3[%c0_6, %c0_7] : memref<1024x2048xbf16, #tpu.memory_space<vmem>>, vector<1024x2048xbf16>
    %cst_8 = arith.constant dense<0.000000e+00> : vector<2x2048xf32>
    %11 = tpu.matmul %9, %10, %cst_8 {dimension_numbers = #tpu.dot_dimension_numbers<[1], [0], [0], [1], [0, 0, 1, 1], [], []>} : vector<2x1024xbf16>, vector<1024x2048xbf16>, vector<2x2048xf32> -> vector<2x2048xf32>
    %c0_9 = arith.constant 0 : index
    %c0_10 = arith.constant 0 : index
    %12 = vector.load %arg4[%c0_9, %c0_10] : memref<1x2048xf32, #tpu.memory_space<vmem>>, vector<1x2048xf32>
    %13 = vector.broadcast %12 : vector<1x2048xf32> to vector<2x2048xf32>
    %14 = arith.addf %11, %13 : vector<2x2048xf32>
    %cst_11 = arith.constant 0.000000e+00 : f32
    %15 = vector.broadcast %cst_11 : f32 to vector<2x2048xf32>
    %16 = arith.maximumf %14, %15 : vector<2x2048xf32>
    %17 = arith.truncf %16 : vector<2x2048xf32> to vector<2x2048xbf16>
    %c0_12 = arith.constant 0 : index
    %c0_13 = arith.constant 0 : index
    %18 = vector.load %arg5[%c0_12, %c0_13] : memref<2048x768xbf16, #tpu.memory_space<vmem>>, vector<2048x768xbf16>
    %cst_14 = arith.constant dense<0.000000e+00> : vector<2x768xf32>
    %19 = tpu.matmul %17, %18, %cst_14 {dimension_numbers = #tpu.dot_dimension_numbers<[1], [0], [0], [1], [0, 0, 1, 1], [], []>} : vector<2x2048xbf16>, vector<2048x768xbf16>, vector<2x768xf32> -> vector<2x768xf32>
    %c0_15 = arith.constant 0 : index
    %c0_16 = arith.constant 0 : index
    %20 = vector.load %arg6[%c0_15, %c0_16] : memref<1x768xf32, #tpu.memory_space<vmem>>, vector<1x768xf32>
    %21 = vector.broadcast %20 : vector<1x768xf32> to vector<2x768xf32>
    %22 = arith.addf %19, %21 : vector<2x768xf32>
    %23 = math.tanh %22 : vector<2x768xf32>
    %c0_17 = arith.constant 0 : index
    %c0_18 = arith.constant 0 : index
    %24 = vector.load %arg7[%c0_17, %c0_18] : memref<2x768xf32, #tpu.memory_space<vmem>>, vector<2x768xf32>
    tpu.vector_store %arg7[%c0_17, %c0_18], %23 {strides = array<i32>} : memref<2x768xf32, #tpu.memory_space<vmem>>, vector<2x768xf32>,
    return
  }
}

</mosaic_0001>

<llo_original>
// kernel: _lambda_.1
$region0: #{_lambda_.1}
  #allocation0 [shape = 'u32[]', space=smem, size = 0x4, offset = 0x4, fixed_abs, tag = 'smem constant byte address 0x4 - core index']
  #allocation1 [shape = 'u32[144,128]{1,0:T(1,128)}', space=vmem, size = 0x12000, scoped, tag = 'internal scratch']
  %s0 = inlined_call_operand.vmem [shape: f32[2,8], index: 0, kind: input, shape index: {}]
  %s1 = inlined_call_operand.vmem [shape: bf16[8,1024], index: 1, kind: input, shape index: {}]
  %s2 = inlined_call_operand.vmem [shape: f32[1,1024], index: 2, kind: input, shape index: {}]
  %s3 = inlined_call_operand.vmem [shape: bf16[1024,2048], index: 3, kind: input, shape index: {}]
  %s4 = inlined_call_operand.vmem [shape: f32[1,2048], index: 4, kind: input, shape index: {}]
  %s5 = inlined_call_operand.vmem [shape: bf16[2048,768], index: 5, kind: input, shape index: {}]
  %s6 = inlined_call_operand.vmem [shape: f32[1,768], index: 6, kind: input, shape index: {}]
  %s7 = inlined_call_operand.vmem [shape: f32[2,768], index: 7, kind: output, shape index: {}]
  %s8 = sld [smem:[#allocation0]]
  $region38: #{_lambda_.1} parent=0
    _
  %s10 = ssub.s32 1, %s8
  %s11 = scalar_select 0, %s10, %s8
  // Predicated region
  $region2: #{_lambda_.1} parent=0 // pred_check
    _
  $region3: #{_lambda_.1} parent=0 // pred_check_branch
    %13 = sbr.rel (0) target = $region5
  $region4: #{_lambda_.1} parent=0 // pred_region
    _
  $region5: #{_lambda_.1} parent=0 // pred_fallthru
    _
  // Predicated region
  $region6: #{_lambda_.1} parent=0 // pred_check
    _
  $region7: #{_lambda_.1} parent=0 // pred_check_branch
    %15 = sbr.rel (0) target = $region9
  $region8: #{_lambda_.1} parent=0 // pred_region
    _
  $region9: #{_lambda_.1} parent=0 // pred_fallthru
    _
  // Predicated region
  $region10: #{_lambda_.1} parent=0 // pred_check
    _
  $region11: #{_lambda_.1} parent=0 // pred_check_branch
    %17 = sbr.rel (0) target = $region13
  $region12: #{_lambda_.1} parent=0 // pred_region
    _
  $region13: #{_lambda_.1} parent=0 // pred_fallthru
    _
  // Predicated region
  $region14: #{_lambda_.1} parent=0 // pred_check
    _
  $region15: #{_lambda_.1} parent=0 // pred_check_branch
    %19 = sbr.rel (0) target = $region17
  $region16: #{_lambda_.1} parent=0 // pred_region
    _
  $region17: #{_lambda_.1} parent=0 // pred_fallthru
    _
  // Predicated region
  $region18: #{_lambda_.1} parent=0 // pred_check
    _
  $region19: #{_lambda_.1} parent=0 // pred_check_branch
    %21 = sbr.rel (0) target = $region21
  $region20: #{_lambda_.1} parent=0 // pred_region
    _
  $region21: #{_lambda_.1} parent=0 // pred_fallthru
    _
  // Predicated region
  $region22: #{_lambda_.1} parent=0 // pred_check
    _
  $region23: #{_lambda_.1} parent=0 // pred_check_branch
    %23 = sbr.rel (0) target = $region25
  $region24: #{_lambda_.1} parent=0 // pred_region
    _
  $region25: #{_lambda_.1} parent=0 // pred_fallthru
    _
  // Predicated region
  $region26: #{_lambda_.1} parent=0 // pred_check
    _
  $region27: #{_lambda_.1} parent=0 // pred_check_branch
    %25 = sbr.rel (0) target = $region29
  $region28: #{_lambda_.1} parent=0 // pred_region
    _
  $region29: #{_lambda_.1} parent=0 // pred_fallthru
    _
  %v27 = vld [vmem:[%s0] sm:$0x3]
  %v28 = vpack.c.bf16 %v27, %v27
  %v29 = vld [vmem:[%s1] sm:$0xff]
  %v30 = vld [vmem:[%s1 + $0x8] sm:$0xff]
  %v31 = vld [vmem:[%s1 + $0x10] sm:$0xff]
  %v32 = vld [vmem:[%s1 + $0x18] sm:$0xff]
  %v33 = vld [vmem:[%s2] sm:$0xff]
  %v35 = vlaneseq
  %v36 = vshrl.u32 %v35, 7
  %v37 = vsub.s32 0, %v36
  %v38 = vrot.slane %v33, %v37
  %v39 = vlaneseq
  %v40 = vshrl.u32 %v39, 7
  %v41 = vsub.s32 1, %v40
  %v42 = vrot.slane %v33, %v41
  %v43 = vlaneseq
  %v44 = vshrl.u32 %v43, 7
  %v45 = vsub.s32 2, %v44
  %v46 = vrot.slane %v33, %v45
  %v47 = vlaneseq
  %v48 = vshrl.u32 %v47, 7
  %v49 = vsub.s32 3, %v48
  %v50 = vrot.slane %v33, %v49
  %v51 = vlaneseq
  %v52 = vshrl.u32 %v51, 7
  %v53 = vsub.s32 4, %v52
  %v54 = vrot.slane %v33, %v53
  %v55 = vlaneseq
  %v56 = vshrl.u32 %v55, 7
  %v57 = vsub.s32 5, %v56
  %v58 = vrot.slane %v33, %v57
  %v59 = vlaneseq
  %v60 = vshrl.u32 %v59, 7
  %v61 = vsub.s32 6, %v60
  %v62 = vrot.slane %v33, %v61
  %v63 = vlaneseq
  %v64 = vshrl.u32 %v63, 7
  %v65 = vsub.s32 7, %v64
  %v66 = vrot.slane %v33, %v65
  %v79 = vunpack.c.l.b16 %v29
  %v80 = vunpack.c.h.b16 %v29
  %v81 = vunpack.c.l.b16 %v30
  %v82 = vunpack.c.h.b16 %v30
  %v83 = vunpack.c.l.b16 %v31
  %v84 = vunpack.c.h.b16 %v31
  %v85 = vunpack.c.l.b16 %v32
  %v86 = vunpack.c.h.b16 %v32
  %v87 = vpack.c.b16 %v79, %v79
  %v88 = vpack.c.b16 %v80, %v80
  %v89 = vpack.c.b16 %v81, %v81
  %v90 = vpack.c.b16 %v82, %v82
  %v91 = vpack.c.b16 %v83, %v83
  %v92 = vpack.c.b16 %v84, %v84
  %v93 = vpack.c.b16 %v85, %v85
  %v94 = vpack.c.b16 %v86, %v86
  %vm95 = vcmask 64512
  %v97 = vsel %vm95, %v28, 0
  %vm99 = vcmask 1043456
  %v101 = vsel %vm99, %v87, 0
  %v104 = vsel %vm99, %v88, 0
  %v107 = vsel %vm99, %v89, 0
  %v110 = vsel %vm99, %v90, 0
  %v113 = vsel %vm99, %v91, 0
  %v116 = vsel %vm99, %v92, 0
  %v119 = vsel %vm99, %v93, 0
  %v122 = vsel %vm99, %v94, 0
  %124 = vmatprep.subr.bf16.mxu0 %v104
  %125 = vmatpush1.bf16.msra.mxu0 %v101
  %126 = vmatprep.subr.bf16.mxu0 0
  %127 = vmatpush1.bf16.msra.mxu0 0
  %128 = vmatprep.subr.bf16.mxu0 0
  %129 = vmatpush1.bf16.msra.mxu0 0
  %130 = vmatprep.subr.bf16.mxu0 0
  %131 = vmatpush1.bf16.msra.mxu0 0
  %132 = vmatprep.subr.bf16.mxu0 0
  %133 = vmatpush1.bf16.msra.mxu0 0
  %134 = vmatprep.subr.bf16.mxu0 0
  %135 = vmatpush1.bf16.msra.mxu0 0
  %136 = vmatprep.subr.bf16.mxu0 0
  %137 = vmatpush1.bf16.msra.mxu0 0
  %138 = vmatprep.subr.bf16.mxu0 0
  %139 = vmatpush1.bf16.msra.mxu0 0
  %140 = vmatprep.subr.bf16.mxu0 0
  %141 = vmatpush1.bf16.msra.mxu0 0
  %142 = vmatprep.subr.bf16.mxu0 0
  %143 = vmatpush1.bf16.msra.mxu0 0
  %144 = vmatprep.subr.bf16.mxu0 0
  %145 = vmatpush1.bf16.msra.mxu0 0
  %146 = vmatprep.subr.bf16.mxu0 0
  %147 = vmatpush1.bf16.msra.mxu0 0
  %148 = vmatprep.subr.bf16.mxu0 0
  %149 = vmatpush1.bf16.msra.mxu0 0
  %150 = vmatprep.subr.bf16.mxu0 0
  %151 = vmatpush1.bf16.msra.mxu0 0
  %152 = vmatprep.subr.bf16.mxu0 0
  %153 = vmatpush1.bf16.msra.mxu0 0
  %154 = vmatprep.subr.bf16.mxu0 0
  %155 = vmatpush1.bf16.msra.mxu0 0
  %156 = vmatprep.mubr.bf16.mxu0 0
  %157 = vmatmul.mubr.bf16.gmra.mrb[0].mxu0 %v97
  %v158 = vpop.f32.mrb[0].mxu0
  %v159 = vadd.f32 %v38, %v158
  %v160 = vpop.f32.mrb[0].mxu0
  %v161 = vadd.f32 %v42, %v160
  %v162 = vpop.f32.mrb[0].mxu0
  %v163 = vpop.f32.mrb[0].mxu0
  %164 = vdwg.mxu0
  %165 = vmatprep.subr.bf16.mxu0 %v110
  %166 = vmatpush1.bf16.msra.mxu0 %v107
  %167 = vmatprep.subr.bf16.mxu0 0
  %168 = vmatpush1.bf16.msra.mxu0 0
  %169 = vmatprep.subr.bf16.mxu0 0
  %170 = vmatpush1.bf16.msra.mxu0 0
  %171 = vmatprep.subr.bf16.mxu0 0
  %172 = vmatpush1.bf16.msra.mxu0 0
  %173 = vmatprep.subr.bf16.mxu0 0
  %174 = vmatpush1.bf16.msra.mxu0 0
  %175 = vmatprep.subr.bf16.mxu0 0
  %176 = vmatpush1.bf16.msra.mxu0 0
  %177 = vmatprep.subr.bf16.mxu0 0
  %178 = vmatpush1.bf16.msra.mxu0 0
  %179 = vmatprep.subr.bf16.mxu0 0
  %180 = vmatpush1.bf16.msra.mxu0 0
  %181 = vmatprep.subr.bf16.mxu0 0
  %182 = vmatpush1.bf16.msra.mxu0 0
  %183 = vmatprep.subr.bf16.mxu0 0
  %184 = vmatpush1.bf16.msra.mxu0 0
  %185 = vmatprep.subr.bf16.mxu0 0
  %186 = vmatpush1.bf16.msra.mxu0 0
  %187 = vmatprep.subr.bf16.mxu0 0
  %188 = vmatpush1.bf16.msra.mxu0 0
  %189 = vmatprep.subr.bf16.mxu0 0
  %190 = vmatpush1.bf16.msra.mxu0 0
  %191 = vmatprep.subr.bf16.mxu0 0
  %192 = vmatpush1.bf16.msra.mxu0 0
  %193 = vmatprep.subr.bf16.mxu0 0
  %194 = vmatpush1.bf16.msra.mxu0 0
  %195 = vmatprep.subr.bf16.mxu0 0
  %196 = vmatpush1.bf16.msra.mxu0 0
  %197 = vmatprep.mubr.bf16.mxu0 0
  %198 = vmatmul.mubr.bf16.gmra.mrb[0].mxu0 %v97
  %v199 = vpop.f32.mrb[0].mxu0
  %v200 = vadd.f32 %v46, %v199
  %v201 = vpop.f32.mrb[0].mxu0
  %v202 = vadd.f32 %v50, %v201
  %v203 = vpop.f32.mrb[0].mxu0
  %v204 = vpop.f32.mrb[0].mxu0
  %205 = vdwg.mxu0
  %206 = vmatprep.subr.bf16.mxu0 %v116
  %207 = vmatpush1.bf16.msra.mxu0 %v113
  %208 = vmatprep.subr.bf16.mxu0 0
  %209 = vmatpush1.bf16.msra.mxu0 0
  %210 = vmatprep.subr.bf16.mxu0 0
  %211 = vmatpush1.bf16.msra.mxu0 0
  %212 = vmatprep.subr.bf16.mxu0 0
  %213 = vmatpush1.bf16.msra.mxu0 0
  %214 = vmatprep.subr.bf16.mxu0 0
  %215 = vmatpush1.bf16.msra.mxu0 0
  %216 = vmatprep.subr.bf16.mxu0 0
  %217 = vmatpush1.bf16.msra.mxu0 0
  %218 = vmatprep.subr.bf16.mxu0 0
  %219 = vmatpush1.bf16.msra.mxu0 0
  %220 = vmatprep.subr.bf16.mxu0 0
  %221 = vmatpush1.bf16.msra.mxu0 0
  %222 = vmatprep.subr.bf16.mxu0 0
  %223 = vmatpush1.bf16.msra.mxu0 0
  %224 = vmatprep.subr.bf16.mxu0 0
  %225 = vmatpush1.bf16.msra.mxu0 0
  %226 = vmatprep.subr.bf16.mxu0 0
  %227 = vmatpush1.bf16.msra.mxu0 0
  %228 = vmatprep.subr.bf16.mxu0 0
  %229 = vmatpush1.bf16.msra.mxu0 0
  %230 = vmatprep.subr.bf16.mxu0 0
  %231 = vmatpush1.bf16.msra.mxu0 0
  %232 = vmatprep.subr.bf16.mxu0 0
  %233 = vmatpush1.bf16.msra.mxu0 0
  %234 = vmatprep.subr.bf16.mxu0 0
  %235 = vmatpush1.bf16.msra.mxu0 0
  %236 = vmatprep.subr.bf16.mxu0 0
  %237 = vmatpush1.bf16.msra.mxu0 0
  %238 = vmatprep.mubr.bf16.mxu0 0
  %239 = vmatmul.mubr.bf16.gmra.mrb[0].mxu0 %v97
  %v240 = vpop.f32.mrb[0].mxu0
  %v241 = vadd.f32 %v54, %v240
  %v242 = vpop.f32.mrb[0].mxu0
  %v243 = vadd.f32 %v58, %v242
  %v244 = vpop.f32.mrb[0].mxu0
  %v245 = vpop.f32.mrb[0].mxu0
  %246 = vdwg.mxu0
  %247 = vmatprep.subr.bf16.mxu0 %v122
  %248 = vmatpush1.bf16.msra.mxu0 %v119
  %249 = vmatprep.subr.bf16.mxu0 0
  %250 = vmatpush1.bf16.msra.mxu0 0
  %251 = vmatprep.subr.bf16.mxu0 0
  %252 = vmatpush1.bf16.msra.mxu0 0
  %253 = vmatprep.subr.bf16.mxu0 0
  %254 = vmatpush1.bf16.msra.mxu0 0
  %255 = vmatprep.subr.bf16.mxu0 0
  %256 = vmatpush1.bf16.msra.mxu0 0
  %257 = vmatprep.subr.bf16.mxu0 0
  %258 = vmatpush1.bf16.msra.mxu0 0
  %259 = vmatprep.subr.bf16.mxu0 0
  %260 = vmatpush1.bf16.msra.mxu0 0
  %261 = vmatprep.subr.bf16.mxu0 0
  %262 = vmatpush1.bf16.msra.mxu0 0
  %263 = vmatprep.subr.bf16.mxu0 0
  %264 = vmatpush1.bf16.msra.mxu0 0
  %265 = vmatprep.subr.bf16.mxu0 0
  %266 = vmatpush1.bf16.msra.mxu0 0
  %267 = vmatprep.subr.bf16.mxu0 0
  %268 = vmatpush1.bf16.msra.mxu0 0
  %269 = vmatprep.subr.bf16.mxu0 0
  %270 = vmatpush1.bf16.msra.mxu0 0
  %271 = vmatprep.subr.bf16.mxu0 0
  %272 = vmatpush1.bf16.msra.mxu0 0
  %273 = vmatprep.subr.bf16.mxu0 0
  %274 = vmatpush1.bf16.msra.mxu0 0
  %275 = vmatprep.subr.bf16.mxu0 0
  %276 = vmatpush1.bf16.msra.mxu0 0
  %277 = vmatprep.subr.bf16.mxu0 0
  %278 = vmatpush1.bf16.msra.mxu0 0
  %279 = vmatprep.mubr.bf16.mxu0 0
  %280 = vmatmul.mubr.bf16.gmra.mrb[0].mxu0 %v97
  %v281 = vpop.f32.mrb[0].mxu0
  %v282 = vadd.f32 %v62, %v281
  %v283 = vpop.f32.mrb[0].mxu0
  %v284 = vadd.f32 %v66, %v283
  %v285 = vpop.f32.mrb[0].mxu0
  %v286 = vpop.f32.mrb[0].mxu0
  %287 = vdwg.mxu0
  %v288 = vmax.f32 %v159, 0.0
  %v289 = vmax.f32 %v161, 0.0
  %v290 = vmax.f32 %v200, 0.0
  %v291 = vmax.f32 %v202, 0.0
  %v292 = vmax.f32 %v241, 0.0
  %v293 = vmax.f32 %v243, 0.0
  %v294 = vmax.f32 %v282, 0.0
  %v295 = vmax.f32 %v284, 0.0
  %v296 = vpack.c.bf16 %v288, %v288
  %v297 = vpack.c.bf16 %v289, %v289
  %v298 = vpack.c.bf16 %v290, %v290
  %v299 = vpack.c.bf16 %v291, %v291
  %v300 = vpack.c.bf16 %v292, %v292
  %v301 = vpack.c.bf16 %v293, %v293
  %v302 = vpack.c.bf16 %v294, %v294
  %v303 = vpack.c.bf16 %v295, %v295
  %v304 = vld [vmem:[%s3] sm:$0xff]
  %v305 = vld [vmem:[%s3 + $0x8] sm:$0xff]
  %v306 = vld [vmem:[%s3 + $0x10] sm:$0xff]
  %v307 = vld [vmem:[%s3 + $0x18] sm:$0xff]
  %v308 = vld [vmem:[%s3 + $0x20] sm:$0xff]
  %v309 = vld [vmem:[%s3 + $0x28] sm:$0xff]
  %v310 = vld [vmem:[%s3 + $0x30] sm:$0xff]
  %v311 = vld [vmem:[%s3 + $0x38] sm:$0xff]
  %v312 = vld [vmem:[%s3 + $0x40] sm:$0xff]
  %v313 = vld [vmem:[%s3 + $0x48] sm:$0xff]
  %v314 = vld [vmem:[%s3 + $0x50] sm:$0xff]
  %v315 = vld [vmem:[%s3 + $0x58] sm:$0xff]
  %v316 = vld [vmem:[%s3 + $0x60] sm:$0xff]
  %v317 = vld [vmem:[%s3 + $0x68] sm:$0xff]
  %v318 = vld [vmem:[%s3 + $0x70] sm:$0xff]
  %v319 = vld [vmem:[%s3 + $0x78] sm:$0xff]
  %v320 = vld [vmem:[%s3 + $0x80] sm:$0xff]
  %v321 = vld [vmem:[%s3 + $0x88] sm:$0xff]
  %v322 = vld [vmem:[%s3 + $0x90] sm:$0xff]
  %v323 = vld [vmem:[%s3 + $0x98] sm:$0xff]
  %v324 = vld [vmem:[%s3 + $0xa0] sm:$0xff]
  %v325 = vld [vmem:[%s3 + $0xa8] sm:$0xff]
  %v326 = vld [vmem:[%s3 + $0xb0] sm:$0xff]
  %v327 = vld [vmem:[%s3 + $0xb8] sm:$0xff]
  %v328 = vld [vmem:[%s3 + $0xc0] sm:$0xff]
  %v329 = vld [vmem:[%s3 + $0xc8] sm:$0xff]
  %v330 = vld [vmem:[%s3 + $0xd0] sm:$0xff]
  %v331 = vld [vmem:[%s3 + $0xd8] sm:$0xff]
  %v332 = vld [vmem:[%s3 + $0xe0] sm:$0xff]
  %v333 = vld [vmem:[%s3 + $0xe8] sm:$0xff]
  %v334 = vld [vmem:[%s3 + $0xf0] sm:$0xff]
  %v335 = vld [vmem:[%s3 + $0xf8] sm:$0xff]
  %v336 = vld [vmem:[%s3 + $0x100] sm:$0xff]
  %v337 = vld [vmem:[%s3 + $0x108] sm:$0xff]
  %v338 = vld [vmem:[%s3 + $0x110] sm:$0xff]
  %v339 = vld [vmem:[%s3 + $0x118] sm:$0xff]
  %v340 = vld [vmem:[%s3 + $0x120] sm:$0xff]
  %v341 = vld [vmem:[%s3 + $0x128] sm:$0xff]
  %v342 = vld [vmem:[%s3 + $0x130] sm:$0xff]
  %v343 = vld [vmem:[%s3 + $0x138] sm:$0xff]
  %v344 = vld [vmem:[%s3 + $0x140] sm:$0xff]
  %v345 = vld [vmem:[%s3 + $0x148] sm:$0xff]
  %v346 = vld [vmem:[%s3 + $0x150] sm:$0xff]
  %v347 = vld [vmem:[%s3 + $0x158] sm:$0xff]
  %v348 = vld [vmem:[%s3 + $0x160] sm:$0xff]
  %v349 = vld [vmem:[%s3 + $0x168] sm:$0xff]
  %v350 = vld [vmem:[%s3 + $0x170] sm:$0xff]
  %v351 = vld [vmem:[%s3 + $0x178] sm:$0xff]
  %v352 = vld [vmem:[%s3 + $0x180] sm:$0xff]
  %v353 = vld [vmem:[%s3 + $0x188] sm:$0xff]
  %v354 = vld [vmem:[%s3 + $0x190] sm:$0xff]
  %v355 = vld [vmem:[%s3 + $0x198] sm:$0xff]
  %v356 = vld [vmem:[%s3 + $0x1a0] sm:$0xff]
  %v357 = vld [vmem:[%s3 + $0x1a8] sm:$0xff]
  %v358 = vld [vmem:[%s3 + $0x1b0] sm:$0xff]
  %v359 = vld [vmem:[%s3 + $0x1b8] sm:$0xff]
  %v360 = vld [vmem:[%s3 + $0x1c0] sm:$0xff]
  %v361 = vld [vmem:[%s3 + $0x1c8] sm:$0xff]
  %v362 = vld [vmem:[%s3 + $0x1d0] sm:$0xff]
  %v363 = vld [vmem:[%s3 + $0x1d8] sm:$0xff]
  %v364 = vld [vmem:[%s3 + $0x1e0] sm:$0xff]
  %v365 = vld [vmem:[%s3 + $0x1e8] sm:$0xff]
  %v366 = vld [vmem:[%s3 + $0x1f0] sm:$0xff]
  %v367 = vld [vmem:[%s3 + $0x1f8] sm:$0xff]
  %v368 = vld [vmem:[%s3 + $0x200] sm:$0xff]
  %v369 = vld [vmem:[%s3 + $0x208] sm:$0xff]
  %v370 = vld [vmem:[%s3 + $0x210] sm:$0xff]
  %v371 = vld [vmem:[%s3 + $0x218] sm:$0xff]
  %v372 = vld [vmem:[%s3 + $0x220] sm:$0xff]
  %v373 = vld [vmem:[%s3 + $0x228] sm:$0xff]
  %v374 = vld [vmem:[%s3 + $0x230] sm:$0xff]
  %v375 = vld [vmem:[%s3 + $0x238] sm:$0xff]
  %v376 = vld [vmem:[%s3 + $0x240] sm:$0xff]
  %v377 = vld [vmem:[%s3 + $0x248] sm:$0xff]
  %v378 = vld [vmem:[%s3 + $0x250] sm:$0xff]
  %v379 = vld [vmem:[%s3 + $0x258] sm:$0xff]
  %v380 = vld [vmem:[%s3 + $0x260] sm:$0xff]
  %v381 = vld [vmem:[%s3 + $0x268] sm:$0xff]
  %v382 = vld [vmem:[%s3 + $0x270] sm:$0xff]
  %v383 = vld [vmem:[%s3 + $0x278] sm:$0xff]
  %v384 = vld [vmem:[%s3 + $0x280] sm:$0xff]
  %v385 = vld [vmem:[%s3 + $0x288] sm:$0xff]
  %v386 = vld [vmem:[%s3 + $0x290] sm:$0xff]
  %v387 = vld [vmem:[%s3 + $0x298] sm:$0xff]
  %v388 = vld [vmem:[%s3 + $0x2a0] sm:$0xff]
  %v389 = vld [vmem:[%s3 + $0x2a8] sm:$0xff]
  %v390 = vld [vmem:[%s3 + $0x2b0] sm:$0xff]
  %v391 = vld [vmem:[%s3 + $0x2b8] sm:$0xff]
  %v392 = vld [vmem:[%s3 + $0x2c0] sm:$0xff]
  %v393 = vld [vmem:[%s3 + $0x2c8] sm:$0xff]
  %v394 = vld [vmem:[%s3 + $0x2d0] sm:$0xff]
  %v395 = vld [vmem:[%s3 + $0x2d8] sm:$0xff]
  %v396 = vld [vmem:[%s3 + $0x2e0] sm:$0xff]
  %v397 = vld [vmem:[%s3 + $0x2e8] sm:$0xff]
  %v398 = vld [vmem:[%s3 + $0x2f0] sm:$0xff]
  %v399 = vld [vmem:[%s3 + $0x2f8] sm:$0xff]
  %v400 = vld [vmem:[%s3 + $0x300] sm:$0xff]
  %v401 = vld [vmem:[%s3 + $0x308] sm:$0xff]
  %v402 = vld [vmem:[%s3 + $0x310] sm:$0xff]
  %v403 = vld [vmem:[%s3 + $0x318] sm:$0xff]
  %v404 = vld [vmem:[%s3 + $0x320] sm:$0xff]
  %v405 = vld [vmem:[%s3 + $0x328] sm:$0xff]
  %v406 = vld [vmem:[%s3 + $0x330] sm:$0xff]
  %v407 = vld [vmem:[%s3 + $0x338] sm:$0xff]
  %v408 = vld [vmem:[%s3 + $0x340] sm:$0xff]
  %v409 = vld [vmem:[%s3 + $0x348] sm:$0xff]
  %v410 = vld [vmem:[%s3 + $0x350] sm:$0xff]
  %v411 = vld [vmem:[%s3 + $0x358] sm:$0xff]
  %v412 = vld [vmem:[%s3 + $0x360] sm:$0xff]
  %v413 = vld [vmem:[%s3 + $0x368] sm:$0xff]
  %v414 = vld [vmem:[%s3 + $0x370] sm:$0xff]
  %v415 = vld [vmem:[%s3 + $0x378] sm:$0xff]
  %v416 = vld [vmem:[%s3 + $0x380] sm:$0xff]
  %v417 = vld [vmem:[%s3 + $0x388] sm:$0xff]
  %v418 = vld [vmem:[%s3 + $0x390] sm:$0xff]
  %v419 = vld [vmem:[%s3 + $0x398] sm:$0xff]
  %v420 = vld [vmem:[%s3 + $0x3a0] sm:$0xff]
  %v421 = vld [vmem:[%s3 + $0x3a8] sm:$0xff]
  %v422 = vld [vmem:[%s3 + $0x3b0] sm:$0xff]
  %v423 = vld [vmem:[%s3 + $0x3b8] sm:$0xff]
  %v424 = vld [vmem:[%s3 + $0x3c0] sm:$0xff]
  %v425 = vld [vmem:[%s3 + $0x3c8] sm:$0xff]
  %v426 = vld [vmem:[%s3 + $0x3d0] sm:$0xff]
  %v427 = vld [vmem:[%s3 + $0x3d8] sm:$0xff]
  %v428 = vld [vmem:[%s3 + $0x3e0] sm:$0xff]
  %v429 = vld [vmem:[%s3 + $0x3e8] sm:$0xff]
  %v430 = vld [vmem:[%s3 + $0x3f0] sm:$0xff]
  %v431 = vld [vmem:[%s3 + $0x3f8] sm:$0xff]
  %v432 = vld [vmem:[%s3 + $0x400] sm:$0xff]
  %v433 = vld [vmem:[%s3 + $0x408] sm:$0xff]
  %v434 = vld [vmem:[%s3 + $0x410] sm:$0xff]
  %v435 = vld [vmem:[%s3 + $0x418] sm:$0xff]
  %v436 = vld [vmem:[%s3 + $0x420] sm:$0xff]
  %v437 = vld [vmem:[%s3 + $0x428] sm:$0xff]
  %v438 = vld [vmem:[%s3 + $0x430] sm:$0xff]
  %v439 = vld [vmem:[%s3 + $0x438] sm:$0xff]
  %v440 = vld [vmem:[%s3 + $0x440] sm:$0xff]
  %v441 = vld [vmem:[%s3 + $0x448] sm:$0xff]
  %v442 = vld [vmem:[%s3 + $0x450] sm:$0xff]
  %v443 = vld [vmem:[%s3 + $0x458] sm:$0xff]
  %v444 = vld [vmem:[%s3 + $0x460] sm:$0xff]
  %v445 = vld [vmem:[%s3 + $0x468] sm:$0xff]
  %v446 = vld [vmem:[%s3 + $0x470] sm:$0xff]
  %v447 = vld [vmem:[%s3 + $0x478] sm:$0xff]
  %v448 = vld [vmem:[%s3 + $0x480] sm:$0xff]
  %v449 = vld [vmem:[%s3 + $0x488] sm:$0xff]
  %v450 = vld [vmem:[%s3 + $0x490] sm:$0xff]
  %v451 = vld [vmem:[%s3 + $0x498] sm:$0xff]
  %v452 = vld [vmem:[%s3 + $0x4a0] sm:$0xff]
  %v453 = vld [vmem:[%s3 + $0x4a8] sm:$0xff]
  %v454 = vld [vmem:[%s3 + $0x4b0] sm:$0xff]
  %v455 = vld [vmem:[%s3 + $0x4b8] sm:$0xff]
  %v456 = vld [vmem:[%s3 + $0x4c0] sm:$0xff]
  %v457 = vld [vmem:[%s3 + $0x4c8] sm:$0xff]
  %v458 = vld [vmem:[%s3 + $0x4d0] sm:$0xff]
  %v459 = vld [vmem:[%s3 + $0x4d8] sm:$0xff]
  %v460 = vld [vmem:[%s3 + $0x4e0] sm:$0xff]
  %v461 = vld [vmem:[%s3 + $0x4e8] sm:$0xff]
  %v462 = vld [vmem:[%s3 + $0x4f0] sm:$0xff]
  %v463 = vld [vmem:[%s3 + $0x4f8] sm:$0xff]
  %v464 = vld [vmem:[%s3 + $0x500] sm:$0xff]
  %v465 = vld [vmem:[%s3 + $0x508] sm:$0xff]
  %v466 = vld [vmem:[%s3 + $0x510] sm:$0xff]
  %v467 = vld [vmem:[%s3 + $0x518] sm:$0xff]
  %v468 = vld [vmem:[%s3 + $0x520] sm:$0xff]
  %v469 = vld [vmem:[%s3 + $0x528] sm:$0xff]
  %v470 = vld [vmem:[%s3 + $0x530] sm:$0xff]
  %v471 = vld [vmem:[%s3 + $0x538] sm:$0xff]
  %v472 = vld [vmem:[%s3 + $0x540] sm:$0xff]
  %v473 = vld [vmem:[%s3 + $0x548] sm:$0xff]
  %v474 = vld [vmem:[%s3 + $0x550] sm:$0xff]
  %v475 = vld [vmem:[%s3 + $0x558] sm:$0xff]
  %v476 = vld [vmem:[%s3 + $0x560] sm:$0xff]
  %v477 = vld [vmem:[%s3 + $0x568] sm:$0xff]
  %v478 = vld [vmem:[%s3 + $0x570] sm:$0xff]
  %v479 = vld [vmem:[%s3 + $0x578] sm:$0xff]
  %v480 = vld [vmem:[%s3 + $0x580] sm:$0xff]
  %v481 = vld [vmem:[%s3 + $0x588] sm:$0xff]
  %v482 = vld [vmem:[%s3 + $0x590] sm:$0xff]
  %v483 = vld [vmem:[%s3 + $0x598] sm:$0xff]
  %v484 = vld [vmem:[%s3 + $0x5a0] sm:$0xff]
  %v485 = vld [vmem:[%s3 + $0x5a8] sm:$0xff]
  %v486 = vld [vmem:[%s3 + $0x5b0] sm:$0xff]
  %v487 = vld [vmem:[%s3 + $0x5b8] sm:$0xff]
  %v488 = vld [vmem:[%s3 + $0x5c0] sm:$0xff]
  %v489 = vld [vmem:[%s3 + $0x5c8] sm:$0xff]
  %v490 = vld [vmem:[%s3 + $0x5d0] sm:$0xff]
  %v491 = vld [vmem:[%s3 + $0x5d8] sm:$0xff]
  %v492 = vld [vmem:[%s3 + $0x5e0] sm:$0xff]
  %v493 = vld [vmem:[%s3 + $0x5e8] sm:$0xff]
  %v494 = vld [vmem:[%s3 + $0x5f0] sm:$0xff]
  %v495 = vld [vmem:[%s3 + $0x5f8] sm:$0xff]
  %v496 = vld [vmem:[%s3 + $0x600] sm:$0xff]
  %v497 = vld [vmem:[%s3 + $0x608] sm:$0xff]
  %v498 = vld [vmem:[%s3 + $0x610] sm:$0xff]
  %v499 = vld [vmem:[%s3 + $0x618] sm:$0xff]
  %v500 = vld [vmem:[%s3 + $0x620] sm:$0xff]
  %v501 = vld [vmem:[%s3 + $0x628] sm:$0xff]
  %v502 = vld [vmem:[%s3 + $0x630] sm:$0xff]
  %v503 = vld [vmem:[%s3 + $0x638] sm:$0xff]
  %v504 = vld [vmem:[%s3 + $0x640] sm:$0xff]
  %v505 = vld [vmem:[%s3 + $0x648] sm:$0xff]
  %v506 = vld [vmem:[%s3 + $0x650] sm:$0xff]
  %v507 = vld [vmem:[%s3 + $0x658] sm:$0xff]
  %v508 = vld [vmem:[%s3 + $0x660] sm:$0xff]
  %v509 = vld [vmem:[%s3 + $0x668] sm:$0xff]
  %v510 = vld [vmem:[%s3 + $0x670] sm:$0xff]
  %v511 = vld [vmem:[%s3 + $0x678] sm:$0xff]
  %v512 = vld [vmem:[%s3 + $0x680] sm:$0xff]
  %v513 = vld [vmem:[%s3 + $0x688] sm:$0xff]
  %v514 = vld [vmem:[%s3 + $0x690] sm:$0xff]
  %v515 = vld [vmem:[%s3 + $0x698] sm:$0xff]
  %v516 = vld [vmem:[%s3 + $0x6a0] sm:$0xff]
  %v517 = vld [vmem:[%s3 + $0x6a8] sm:$0xff]
  %v518 = vld [vmem:[%s3 + $0x6b0] sm:$0xff]
  %v519 = vld [vmem:[%s3 + $0x6b8] sm:$0xff]
  %v520 = vld [vmem:[%s3 + $0x6c0] sm:$0xff]
  %v521 = vld [vmem:[%s3 + $0x6c8] sm:$0xff]
  %v522 = vld [vmem:[%s3 + $0x6d0] sm:$0xff]
  %v523 = vld [vmem:[%s3 + $0x6d8] sm:$0xff]
  %v524 = vld [vmem:[%s3 + $0x6e0] sm:$0xff]
  %v525 = vld [vmem:[%s3 + $0x6e8] sm:$0xff]
  %v526 = vld [vmem:[%s3 + $0x6f0] sm:$0xff]
  %v527 = vld [vmem:[%s3 + $0x6f8] sm:$0xff]
  %v528 = vld [vmem:[%s3 + $0x700] sm:$0xff]
  %v529 = vld [vmem:[%s3 + $0x708] sm:$0xff]
  %v530 = vld [vmem:[%s3 + $0x710] sm:$0xff]
  %v531 = vld [vmem:[%s3 + $0x718] sm:$0xff]
  %v532 = vld [vmem:[%s3 + $0x720] sm:$0xff]
  %v533 = vld [vmem:[%s3 + $0x728] sm:$0xff]
  %v534 = vld [vmem:[%s3 + $0x730] sm:$0xff]
  %v535 = vld [vmem:[%s3 + $0x738] sm:$0xff]
  %v536 = vld [vmem:[%s3 + $0x740] sm:$0xff]
  %v537 = vld [vmem:[%s3 + $0x748] sm:$0xff]
  %v538 = vld [vmem:[%s3 + $0x750] sm:$0xff]
  %v539 = vld [vmem:[%s3 + $0x758] sm:$0xff]
  %v540 = vld [vmem:[%s3 + $0x760] sm:$0xff]
  %v541 = vld [vmem:[%s3 + $0x768] sm:$0xff]
  %v542 = vld [vmem:[%s3 + $0x770] sm:$0xff]
  %v543 = vld [vmem:[%s3 + $0x778] sm:$0xff]
  %v544 = vld [vmem:[%s3 + $0x780] sm:$0xff]
  %v545 = vld [vmem:[%s3 + $0x788] sm:$0xff]
  %v546 = vld [vmem:[%s3 + $0x790] sm:$0xff]
  %v547 = vld [vmem:[%s3 + $0x798] sm:$0xff]
  %v548 = vld [vmem:[%s3 + $0x7a0] sm:$0xff]
  %v549 = vld [vmem:[%s3 + $0x7a8] sm:$0xff]
  %v550 = vld [vmem:[%s3 + $0x7b0] sm:$0xff]
  %v551 = vld [vmem:[%s3 + $0x7b8] sm:$0xff]
  %v552 = vld [vmem:[%s3 + $0x7c0] sm:$0xff]
  %v553 = vld [vmem:[%s3 + $0x7c8] sm:$0xff]
  %v554 = vld [vmem:[%s3 + $0x7d0] sm:$0xff]
  %v555 = vld [vmem:[%s3 + $0x7d8] sm:$0xff]
  %v556 = vld [vmem:[%s3 + $0x7e0] sm:$0xff]
  %v557 = vld [vmem:[%s3 + $0x7e8] sm:$0xff]
  %v558 = vld [vmem:[%s3 + $0x7f0] sm:$0xff]
  %v559 = vld [vmem:[%s3 + $0x7f8] sm:$0xff]
  %v560 = vld [vmem:[%s3 + $0x800] sm:$0xff]
  %v561 = vld [vmem:[%s3 + $0x808] sm:$0xff]
  %v562 = vld [vmem:[%s3 + $0x810] sm:$0xff]
  %v563 = vld [vmem:[%s3 + $0x818] sm:$0xff]
  %v564 = vld [vmem:[%s3 + $0x820] sm:$0xff]
  %v565 = vld [vmem:[%s3 + $0x828] sm:$0xff]
  %v566 = vld [vmem:[%s3 + $0x830] sm:$0xff]
  %v567 = vld [vmem:[%s3 + $0x838] sm:$0xff]
  %v568 = vld [vmem:[%s3 + $0x840] sm:$0xff]
  %v569 = vld [vmem:[%s3 + $0x848] sm:$0xff]
  %v570 = vld [vmem:[%s3 + $0x850] sm:$0xff]
  %v571 = vld [vmem:[%s3 + $0x858] sm:$0xff]
  %v572 = vld [vmem:[%s3 + $0x860] sm:$0xff]
  %v573 = vld [vmem:[%s3 + $0x868] sm:$0xff]
  %v574 = vld [vmem:[%s3 + $0x870] sm:$0xff]
  %v575 = vld [vmem:[%s3 + $0x878] sm:$0xff]
  %v576 = vld [vmem:[%s3 + $0x880] sm:$0xff]
  %v577 = vld [vmem:[%s3 + $0x888] sm:$0xff]
  %v578 = vld [vmem:[%s3 + $0x890] sm:$0xff]
  %v579 = vld [vmem:[%s3 + $0x898] sm:$0xff]
  %v580 = vld [vmem:[%s3 + $0x8a0] sm:$0xff]
  %v581 = vld [vmem:[%s3 + $0x8a8] sm:$0xff]
  %v582 = vld [vmem:[%s3 + $0x8b0] sm:$0xff]
  %v583 = vld [vmem:[%s3 + $0x8b8] sm:$0xff]
  %v584 = vld [vmem:[%s3 + $0x8c0] sm:$0xff]
  %v585 = vld [vmem:[%s3 + $0x8c8] sm:$0xff]
  %v586 = vld [vmem:[%s3 + $0x8d0] sm:$0xff]
  %v587 = vld [vmem:[%s3 + $0x8d8] sm:$0xff]
  %v588 = vld [vmem:[%s3 + $0x8e0] sm:$0xff]
  %v589 = vld [vmem:[%s3 + $0x8e8] sm:$0xff]
  %v590 = vld [vmem:[%s3 + $0x8f0] sm:$0xff]
  %v591 = vld [vmem:[%s3 + $0x8f8] sm:$0xff]
  %v592 = vld [vmem:[%s3 + $0x900] sm:$0xff]
  %v593 = vld [vmem:[%s3 + $0x908] sm:$0xff]
  %v594 = vld [vmem:[%s3 + $0x910] sm:$0xff]
  %v595 = vld [vmem:[%s3 + $0x918] sm:$0xff]
  %v596 = vld [vmem:[%s3 + $0x920] sm:$0xff]
  %v597 = vld [vmem:[%s3 + $0x928] sm:$0xff]
  %v598 = vld [vmem:[%s3 + $0x930] sm:$0xff]
  %v599 = vld [vmem:[%s3 + $0x938] sm:$0xff]
  %v600 = vld [vmem:[%s3 + $0x940] sm:$0xff]
  %v601 = vld [vmem:[%s3 + $0x948] sm:$0xff]
  %v602 = vld [vmem:[%s3 + $0x950] sm:$0xff]
  %v603 = vld [vmem:[%s3 + $0x958] sm:$0xff]
  %v604 = vld [vmem:[%s3 + $0x960] sm:$0xff]
  %v605 = vld [vmem:[%s3 + $0x968] sm:$0xff]
  %v606 = vld [vmem:[%s3 + $0x970] sm:$0xff]
  %v607 = vld [vmem:[%s3 + $0x978] sm:$0xff]
  %v608 = vld [vmem:[%s3 + $0x980] sm:$0xff]
  %v609 = vld [vmem:[%s3 + $0x988] sm:$0xff]
  %v610 = vld [vmem:[%s3 + $0x990] sm:$0xff]
  %v611 = vld [vmem:[%s3 + $0x998] sm:$0xff]
  %v612 = vld [vmem:[%s3 + $0x9a0] sm:$0xff]
  %v613 = vld [vmem:[%s3 + $0x9a8] sm:$0xff]
  %v614 = vld [vmem:[%s3 + $0x9b0] sm:$0xff]
  %v615 = vld [vmem:[%s3 + $0x9b8] sm:$0xff]
  %v616 = vld [vmem:[%s3 + $0x9c0] sm:$0xff]
  %v617 = vld [vmem:[%s3 + $0x9c8] sm:$0xff]
  %v618 = vld [vmem:[%s3 + $0x9d0] sm:$0xff]
  %v619 = vld [vmem:[%s3 + $0x9d8] sm:$0xff]
  %v620 = vld [vmem:[%s3 + $0x9e0] sm:$0xff]
  %v621 = vld [vmem:[%s3 + $0x9e8] sm:$0xff]
  %v622 = vld [vmem:[%s3 + $0x9f0] sm:$0xff]
  %v623 = vld [vmem:[%s3 + $0x9f8] sm:$0xff]
  %v624 = vld [vmem:[%s3 + $0xa00] sm:$0xff]
  %v625 = vld [vmem:[%s3 + $0xa08] sm:$0xff]
  %v626 = vld [vmem:[%s3 + $0xa10] sm:$0xff]
  %v627 = vld [vmem:[%s3 + $0xa18] sm:$0xff]
  %v628 = vld [vmem:[%s3 + $0xa20] sm:$0xff]
  %v629 = vld [vmem:[%s3 + $0xa28] sm:$0xff]
  %v630 = vld [vmem:[%s3 + $0xa30] sm:$0xff]
  %v631 = vld [vmem:[%s3 + $0xa38] sm:$0xff]
  %v632 = vld [vmem:[%s3 + $0xa40] sm:$0xff]
  %v633 = vld [vmem:[%s3 + $0xa48] sm:$0xff]
  %v634 = vld [vmem:[%s3 + $0xa50] sm:$0xff]
  %v635 = vld [vmem:[%s3 + $0xa58] sm:$0xff]
  %v636 = vld [vmem:[%s3 + $0xa60] sm:$0xff]
  %v637 = vld [vmem:[%s3 + $0xa68] sm:$0xff]
  %v638 = vld [vmem:[%s3 + $0xa70] sm:$0xff]
  %v639 = vld [vmem:[%s3 + $0xa78] sm:$0xff]
  %v640 = vld [vmem:[%s3 + $0xa80] sm:$0xff]
  %v641 = vld [vmem:[%s3 + $0xa88] sm:$0xff]
  %v642 = vld [vmem:[%s3 + $0xa90] sm:$0xff]
  %v643 = vld [vmem:[%s3 + $0xa98] sm:$0xff]
  %v644 = vld [vmem:[%s3 + $0xaa0] sm:$0xff]
  %v645 = vld [vmem:[%s3 + $0xaa8] sm:$0xff]
  %v646 = vld [vmem:[%s3 + $0xab0] sm:$0xff]
  %v647 = vld [vmem:[%s3 + $0xab8] sm:$0xff]
  %v648 = vld [vmem:[%s3 + $0xac0] sm:$0xff]
  %v649 = vld [vmem:[%s3 + $0xac8] sm:$0xff]
  %v650 = vld [vmem:[%s3 + $0xad0] sm:$0xff]
  %v651 = vld [vmem:[%s3 + $0xad8] sm:$0xff]
  %v652 = vld [vmem:[%s3 + $0xae0] sm:$0xff]
  %v653 = vld [vmem:[%s3 + $0xae8] sm:$0xff]
  %v654 = vld [vmem:[%s3 + $0xaf0] sm:$0xff]
  %v655 = vld [vmem:[%s3 + $0xaf8] sm:$0xff]
  %v656 = vld [vmem:[%s3 + $0xb00] sm:$0xff]
  %v657 = vld [vmem:[%s3 + $0xb08] sm:$0xff]
  %v658 = vld [vmem:[%s3 + $0xb10] sm:$0xff]
  %v659 = vld [vmem:[%s3 + $0xb18] sm:$0xff]
  %v660 = vld [vmem:[%s3 + $0xb20] sm:$0xff]
  %v661 = vld [vmem:[%s3 + $0xb28] sm:$0xff]
  %v662 = vld [vmem:[%s3 + $0xb30] sm:$0xff]
  %v663 = vld [vmem:[%s3 + $0xb38] sm:$0xff]
  %v664 = vld [vmem:[%s3 + $0xb40] sm:$0xff]
  %v665 = vld [vmem:[%s3 + $0xb48] sm:$0xff]
  %v666 = vld [vmem:[%s3 + $0xb50] sm:$0xff]
  %v667 = vld [vmem:[%s3 + $0xb58] sm:$0xff]
  %v668 = vld [vmem:[%s3 + $0xb60] sm:$0xff]
  %v669 = vld [vmem:[%s3 + $0xb68] sm:$0xff]
  %v670 = vld [vmem:[%s3 + $0xb70] sm:$0xff]
  %v671 = vld [vmem:[%s3 + $0xb78] sm:$0xff]
  %v672 = vld [vmem:[%s3 + $0xb80] sm:$0xff]
  %v673 = vld [vmem:[%s3 + $0xb88] sm:$0xff]
  %v674 = vld [vmem:[%s3 + $0xb90] sm:$0xff]
  %v675 = vld [vmem:[%s3 + $0xb98] sm:$0xff]
  %v676 = vld [vmem:[%s3 + $0xba0] sm:$0xff]
  %v677 = vld [vmem:[%s3 + $0xba8] sm:$0xff]
  %v678 = vld [vmem:[%s3 + $0xbb0] sm:$0xff]
  %v679 = vld [vmem:[%s3 + $0xbb8] sm:$0xff]
  %v680 = vld [vmem:[%s3 + $0xbc0] sm:$0xff]
  %v681 = vld [vmem:[%s3 + $0xbc8] sm:$0xff]
  %v682 = vld [vmem:[%s3 + $0xbd0] sm:$0xff]
  %v683 = vld [vmem:[%s3 + $0xbd8] sm:$0xff]
  %v684 = vld [vmem:[%s3 + $0xbe0] sm:$0xff]
  %v685 = vld [vmem:[%s3 + $0xbe8] sm:$0xff]
  %v686 = vld [vmem:[%s3 + $0xbf0] sm:$0xff]
  %v687 = vld [vmem:[%s3 + $0xbf8] sm:$0xff]
  %v688 = vld [vmem:[%s3 + $0xc00] sm:$0xff]
  %v689 = vld [vmem:[%s3 + $0xc08] sm:$0xff]
  %v690 = vld [vmem:[%s3 + $0xc10] sm:$0xff]
  %v691 = vld [vmem:[%s3 + $0xc18] sm:$0xff]
  %v692 = vld [vmem:[%s3 + $0xc20] sm:$0xff]
  %v693 = vld [vmem:[%s3 + $0xc28] sm:$0xff]
  %v694 = vld [vmem:[%s3 + $0xc30] sm:$0xff]
  %v695 = vld [vmem:[%s3 + $0xc38] sm:$0xff]
  %v696 = vld [vmem:[%s3 + $0xc40] sm:$0xff]
  %v697 = vld [vmem:[%s3 + $0xc48] sm:$0xff]
  %v698 = vld [vmem:[%s3 + $0xc50] sm:$0xff]
  %v699 = vld [vmem:[%s3 + $0xc58] sm:$0xff]
  %v700 = vld [vmem:[%s3 + $0xc60] sm:$0xff]
  %v701 = vld [vmem:[%s3 + $0xc68] sm:$0xff]
  %v702 = vld [vmem:[%s3 + $0xc70] sm:$0xff]
  %v703 = vld [vmem:[%s3 + $0xc78] sm:$0xff]
  %v704 = vld [vmem:[%s3 + $0xc80] sm:$0xff]
  %v705 = vld [vmem:[%s3 + $0xc88] sm:$0xff]
  %v706 = vld [vmem:[%s3 + $0xc90] sm:$0xff]
  %v707 = vld [vmem:[%s3 + $0xc98] sm:$0xff]
  %v708 = vld [vmem:[%s3 + $0xca0] sm:$0xff]
  %v709 = vld [vmem:[%s3 + $0xca8] sm:$0xff]
  %v710 = vld [vmem:[%s3 + $0xcb0] sm:$0xff]
  %v711 = vld [vmem:[%s3 + $0xcb8] sm:$0xff]
  %v712 = vld [vmem:[%s3 + $0xcc0] sm:$0xff]
  %v713 = vld [vmem:[%s3 + $0xcc8] sm:$0xff]
  %v714 = vld [vmem:[%s3 + $0xcd0] sm:$0xff]
  %v715 = vld [vmem:[%s3 + $0xcd8] sm:$0xff]
  %v716 = vld [vmem:[%s3 + $0xce0] sm:$0xff]
  %v717 = vld [vmem:[%s3 + $0xce8] sm:$0xff]
  %v718 = vld [vmem:[%s3 + $0xcf0] sm:$0xff]
  %v719 = vld [vmem:[%s3 + $0xcf8] sm:$0xff]
  %v720 = vld [vmem:[%s3 + $0xd00] sm:$0xff]
  %v721 = vld [vmem:[%s3 + $0xd08] sm:$0xff]
  %v722 = vld [vmem:[%s3 + $0xd10] sm:$0xff]
  %v723 = vld [vmem:[%s3 + $0xd18] sm:$0xff]
  %v724 = vld [vmem:[%s3 + $0xd20] sm:$0xff]
  %v725 = vld [vmem:[%s3 + $0xd28] sm:$0xff]
  %v726 = vld [vmem:[%s3 + $0xd30] sm:$0xff]
  %v727 = vld [vmem:[%s3 + $0xd38] sm:$0xff]
  %v728 = vld [vmem:[%s3 + $0xd40] sm:$0xff]
  %v729 = vld [vmem:[%s3 + $0xd48] sm:$0xff]
  %v730 = vld [vmem:[%s3 + $0xd50] sm:$0xff]
  %v731 = vld [vmem:[%s3 + $0xd58] sm:$0xff]
  %v732 = vld [vmem:[%s3 + $0xd60] sm:$0xff]
  %v733 = vld [vmem:[%s3 + $0xd68] sm:$0xff]
  %v734 = vld [vmem:[%s3 + $0xd70] sm:$0xff]
  %v735 = vld [vmem:[%s3 + $0xd78] sm:$0xff]
  %v736 = vld [vmem:[%s3 + $0xd80] sm:$0xff]
  %v737 = vld [vmem:[%s3 + $0xd88] sm:$0xff]
  %v738 = vld [vmem:[%s3 + $0xd90] sm:$0xff]
  %v739 = vld [vmem:[%s3 + $0xd98] sm:$0xff]
  %v740 = vld [vmem:[%s3 + $0xda0] sm:$0xff]
  %v741 = vld [vmem:[%s3 + $0xda8] sm:$0xff]
  %v742 = vld [vmem:[%s3 + $0xdb0] sm:$0xff]
  %v743 = vld [vmem:[%s3 + $0xdb8] sm:$0xff]
  %v744 = vld [vmem:[%s3 + $0xdc0] sm:$0xff]
  %v745 = vld [vmem:[%s3 + $0xdc8] sm:$0xff]
  %v746 = vld [vmem:[%s3 + $0xdd0] sm:$0xff]
  %v747 = vld [vmem:[%s3 + $0xdd8] sm:$0xff]
  %v748 = vld [vmem:[%s3 + $0xde0] sm:$0xff]
  %v749 = vld [vmem:[%s3 + $0xde8] sm:$0xff]
  %v750 = vld [vmem:[%s3 + $0xdf0] sm:$0xff]
  %v751 = vld [vmem:[%s3 + $0xdf8] sm:$0xff]
  %v752 = vld [vmem:[%s3 + $0xe00] sm:$0xff]
  %v753 = vld [vmem:[%s3 + $0xe08] sm:$0xff]
  %v754 = vld [vmem:[%s3 + $0xe10] sm:$0xff]
  %v755 = vld [vmem:[%s3 + $0xe18] sm:$0xff]
  %v756 = vld [vmem:[%s3 + $0xe20] sm:$0xff]
  %v757 = vld [vmem:[%s3 + $0xe28] sm:$0xff]
  %v758 = vld [vmem:[%s3 + $0xe30] sm:$0xff]
  %v759 = vld [vmem:[%s3 + $0xe38] sm:$0xff]
  %v760 = vld [vmem:[%s3 + $0xe40] sm:$0xff]
  %v761 = vld [vmem:[%s3 + $0xe48] sm:$0xff]
  %v762 = vld [vmem:[%s3 + $0xe50] sm:$0xff]
  %v763 = vld [vmem:[%s3 + $0xe58] sm:$0xff]
  %v764 = vld [vmem:[%s3 + $0xe60] sm:$0xff]
  %v765 = vld [vmem:[%s3 + $0xe68] sm:$0xff]
  %v766 = vld [vmem:[%s3 + $0xe70] sm:$0xff]
  %v767 = vld [vmem:[%s3 + $0xe78] sm:$0xff]
  %v768 = vld [vmem:[%s3 + $0xe80] sm:$0xff]
  %v769 = vld [vmem:[%s3 + $0xe88] sm:$0xff]
  %v770 = vld [vmem:[%s3 + $0xe90] sm:$0xff]
  %v771 = vld [vmem:[%s3 + $0xe98] sm:$0xff]
  %v772 = vld [vmem:[%s3 + $0xea0] sm:$0xff]
  %v773 = vld [vmem:[%s3 + $0xea8] sm:$0xff]
  %v774 = vld [vmem:[%s3 + $0xeb0] sm:$0xff]
  %v775 = vld [vmem:[%s3 + $0xeb8] sm:$0xff]
  %v776 = vld [vmem:[%s3 + $0xec0] sm:$0xff]
  %v777 = vld [vmem:[%s3 + $0xec8] sm:$0xff]
  %v778 = vld [vmem:[%s3 + $0xed0] sm:$0xff]
  %v779 = vld [vmem:[%s3 + $0xed8] sm:$0xff]
  %v780 = vld [vmem:[%s3 + $0xee0] sm:$0xff]
  %v781 = vld [vmem:[%s3 + $0xee8] sm:$0xff]
  %v782 = vld [vmem:[%s3 + $0xef0] sm:$0xff]
  %v783 = vld [vmem:[%s3 + $0xef8] sm:$0xff]
  %v784 = vld [vmem:[%s3 + $0xf00] sm:$0xff]
  %v785 = vld [vmem:[%s3 + $0xf08] sm:$0xff]
  %v786 = vld [vmem:[%s3 + $0xf10] sm:$0xff]
  %v787 = vld [vmem:[%s3 + $0xf18] sm:$0xff]
  %v788 = vld [vmem:[%s3 + $0xf20] sm:$0xff]
  %v789 = vld [vmem:[%s3 + $0xf28] sm:$0xff]
  %v790 = vld [vmem:[%s3 + $0xf30] sm:$0xff]
  %v791 = vld [vmem:[%s3 + $0xf38] sm:$0xff]
  %v792 = vld [vmem:[%s3 + $0xf40] sm:$0xff]
  %v793 = vld [vmem:[%s3 + $0xf48] sm:$0xff]
  %v794 = vld [vmem:[%s3 + $0xf50] sm:$0xff]
  %v795 = vld [vmem:[%s3 + $0xf58] sm:$0xff]
  %v796 = vld [vmem:[%s3 + $0xf60] sm:$0xff]
  %v797 = vld [vmem:[%s3 + $0xf68] sm:$0xff]
  %v798 = vld [vmem:[%s3 + $0xf70] sm:$0xff]
  %v799 = vld [vmem:[%s3 + $0xf78] sm:$0xff]
  %v800 = vld [vmem:[%s3 + $0xf80] sm:$0xff]
  %v801 = vld [vmem:[%s3 + $0xf88] sm:$0xff]
  %v802 = vld [vmem:[%s3 + $0xf90] sm:$0xff]
  %v803 = vld [vmem:[%s3 + $0xf98] sm:$0xff]
  %v804 = vld [vmem:[%s3 + $0xfa0] sm:$0xff]
  %v805 = vld [vmem:[%s3 + $0xfa8] sm:$0xff]
  %v806 = vld [vmem:[%s3 + $0xfb0] sm:$0xff]
  %v807 = vld [vmem:[%s3 + $0xfb8] sm:$0xff]
  %v808 = vld [vmem:[%s3 + $0xfc0] sm:$0xff]
  %v809 = vld [vmem:[%s3 + $0xfc8] sm:$0xff]
  %v810 = vld [vmem:[%s3 + $0xfd0] sm:$0xff]
  %v811 = vld [vmem:[%s3 + $0xfd8] sm:$0xff]
  %v812 = vld [vmem:[%s3 + $0xfe0] sm:$0xff]
  %v813 = vld [vmem:[%s3 + $0xfe8] sm:$0xff]
  %v814 = vld [vmem:[%s3 + $0xff0] sm:$0xff]
  %v815 = vld [vmem:[%s3 + $0xff8] sm:$0xff]
  %v816 = vld [vmem:[%s3 + $0x1000] sm:$0xff]
  %v817 = vld [vmem:[%s3 + $0x1008] sm:$0xff]
  %v818 = vld [vmem:[%s3 + $0x1010] sm:$0xff]
  %v819 = vld [vmem:[%s3 + $0x1018] sm:$0xff]
  %v820 = vld [vmem:[%s3 + $0x1020] sm:$0xff]
  %v821 = vld [vmem:[%s3 + $0x1028] sm:$0xff]
  %v822 = vld [vmem:[%s3 + $0x1030] sm:$0xff]
  %v823 = vld [vmem:[%s3 + $0x1038] sm:$0xff]
  %v824 = vld [vmem:[%s3 + $0x1040] sm:$0xff]
  %v825 = vld [vmem:[%s3 + $0x1048] sm:$0xff]
  %v826 = vld [vmem:[%s3 + $0x1050] sm:$0xff]
  %v827 = vld [vmem:[%s3 + $0x1058] sm:$0xff]
  %v828 = vld [vmem:[%s3 + $0x1060] sm:$0xff]
  %v829 = vld [vmem:[%s3 + $0x1068] sm:$0xff]
  %v830 = vld [vmem:[%s3 + $0x1070] sm:$0xff]
  %v831 = vld [vmem:[%s3 + $0x1078] sm:$0xff]
  %v832 = vld [vmem:[%s3 + $0x1080] sm:$0xff]
  %v833 = vld [vmem:[%s3 + $0x1088] sm:$0xff]
  %v834 = vld [vmem:[%s3 + $0x1090] sm:$0xff]
  %v835 = vld [vmem:[%s3 + $0x1098] sm:$0xff]
  %v836 = vld [vmem:[%s3 + $0x10a0] sm:$0xff]
  %v837 = vld [vmem:[%s3 + $0x10a8] sm:$0xff]
  %v838 = vld [vmem:[%s3 + $0x10b0] sm:$0xff]
  %v839 = vld [vmem:[%s3 + $0x10b8] sm:$0xff]
  %v840 = vld [vmem:[%s3 + $0x10c0] sm:$0xff]
  %v841 = vld [vmem:[%s3 + $0x10c8] sm:$0xff]
  %v842 = vld [vmem:[%s3 + $0x10d0] sm:$0xff]
  %v843 = vld [vmem:[%s3 + $0x10d8] sm:$0xff]
  %v844 = vld [vmem:[%s3 + $0x10e0] sm:$0xff]
  %v845 = vld [vmem:[%s3 + $0x10e8] sm:$0xff]
  %v846 = vld [vmem:[%s3 + $0x10f0] sm:$0xff]
  %v847 = vld [vmem:[%s3 + $0x10f8] sm:$0xff]
  %v848 = vld [vmem:[%s3 + $0x1100] sm:$0xff]
  %v849 = vld [vmem:[%s3 + $0x1108] sm:$0xff]
  %v850 = vld [vmem:[%s3 + $0x1110] sm:$0xff]
  %v851 = vld [vmem:[%s3 + $0x1118] sm:$0xff]
  %v852 = vld [vmem:[%s3 + $0x1120] sm:$0xff]
  %v853 = vld [vmem:[%s3 + $0x1128] sm:$0xff]
  %v854 = vld [vmem:[%s3 + $0x1130] sm:$0xff]
  %v855 = vld [vmem:[%s3 + $0x1138] sm:$0xff]
  %v856 = vld [vmem:[%s3 + $0x1140] sm:$0xff]
  %v857 = vld [vmem:[%s3 + $0x1148] sm:$0xff]
  %v858 = vld [vmem:[%s3 + $0x1150] sm:$0xff]
  %v859 = vld [vmem:[%s3 + $0x1158] sm:$0xff]
  %v860 = vld [vmem:[%s3 + $0x1160] sm:$0xff]
  %v861 = vld [vmem:[%s3 + $0x1168] sm:$0xff]
  %v862 = vld [vmem:[%s3 + $0x1170] sm:$0xff]
  %v863 = vld [vmem:[%s3 + $0x1178] sm:$0xff]
  %v864 = vld [vmem:[%s3 + $0x1180] sm:$0xff]
  %v865 = vld [vmem:[%s3 + $0x1188] sm:$0xff]
  %v866 = vld [vmem:[%s3 + $0x1190] sm:$0xff]
  %v867 = vld [vmem:[%s3 + $0x1198] sm:$0xff]
  %v868 = vld [vmem:[%s3 + $0x11a0] sm:$0xff]
  %v869 = vld [vmem:[%s3 + $0x11a8] sm:$0xff]
  %v870 = vld [vmem:[%s3 + $0x11b0] sm:$0xff]
  %v871 = vld [vmem:[%s3 + $0x11b8] sm:$0xff]
  %v872 = vld [vmem:[%s3 + $0x11c0] sm:$0xff]
  %v873 = vld [vmem:[%s3 + $0x11c8] sm:$0xff]
  %v874 = vld [vmem:[%s3 + $0x11d0] sm:$0xff]
  %v875 = vld [vmem:[%s3 + $0x11d8] sm:$0xff]
  %v876 = vld [vmem:[%s3 + $0x11e0] sm:$0xff]
  %v877 = vld [vmem:[%s3 + $0x11e8] sm:$0xff]
  %v878 = vld [vmem:[%s3 + $0x11f0] sm:$0xff]
  %v879 = vld [vmem:[%s3 + $0x11f8] sm:$0xff]
  %v880 = vld [vmem:[%s3 + $0x1200] sm:$0xff]
  %v881 = vld [vmem:[%s3 + $0x1208] sm:$0xff]
  %v882 = vld [vmem:[%s3 + $0x1210] sm:$0xff]
  %v883 = vld [vmem:[%s3 + $0x1218] sm:$0xff]
  %v884 = vld [vmem:[%s3 + $0x1220] sm:$0xff]
  %v885 = vld [vmem:[%s3 + $0x1228] sm:$0xff]
  %v886 = vld [vmem:[%s3 + $0x1230] sm:$0xff]
  %v887 = vld [vmem:[%s3 + $0x1238] sm:$0xff]
  %v888 = vld [vmem:[%s3 + $0x1240] sm:$0xff]
  %v889 = vld [vmem:[%s3 + $0x1248] sm:$0xff]
  %v890 = vld [vmem:[%s3 + $0x1250] sm:$0xff]
  %v891 = vld [vmem:[%s3 + $0x1258] sm:$0xff]
  %v892 = vld [vmem:[%s3 + $0x1260] sm:$0xff]
  %v893 = vld [vmem:[%s3 + $0x1268] sm:$0xff]
  %v894 = vld [vmem:[%s3 + $0x1270] sm:$0xff]
  %v895 = vld [vmem:[%s3 + $0x1278] sm:$0xff]
  %v896 = vld [vmem:[%s3 + $0x1280] sm:$0xff]
  %v897 = vld [vmem:[%s3 + $0x1288] sm:$0xff]
  %v898 = vld [vmem:[%s3 + $0x1290] sm:$0xff]
  %v899 = vld [vmem:[%s3 + $0x1298] sm:$0xff]
  %v900 = vld [vmem:[%s3 + $0x12a0] sm:$0xff]
  %v901 = vld [vmem:[%s3 + $0x12a8] sm:$0xff]
  %v902 = vld [vmem:[%s3 + $0x12b0] sm:$0xff]
  %v903 = vld [vmem:[%s3 + $0x12b8] sm:$0xff]
  %v904 = vld [vmem:[%s3 + $0x12c0] sm:$0xff]
  %v905 = vld [vmem:[%s3 + $0x12c8] sm:$0xff]
  %v906 = vld [vmem:[%s3 + $0x12d0] sm:$0xff]
  %v907 = vld [vmem:[%s3 + $0x12d8] sm:$0xff]
  %v908 = vld [vmem:[%s3 + $0x12e0] sm:$0xff]
  %v909 = vld [vmem:[%s3 + $0x12e8] sm:$0xff]
  %v910 = vld [vmem:[%s3 + $0x12f0] sm:$0xff]
  %v911 = vld [vmem:[%s3 + $0x12f8] sm:$0xff]
  %v912 = vld [vmem:[%s3 + $0x1300] sm:$0xff]
  %v913 = vld [vmem:[%s3 + $0x1308] sm:$0xff]
  %v914 = vld [vmem:[%s3 + $0x1310] sm:$0xff]
  %v915 = vld [vmem:[%s3 + $0x1318] sm:$0xff]
  %v916 = vld [vmem:[%s3 + $0x1320] sm:$0xff]
  %v917 = vld [vmem:[%s3 + $0x1328] sm:$0xff]
  %v918 = vld [vmem:[%s3 + $0x1330] sm:$0xff]
  %v919 = vld [vmem:[%s3 + $0x1338] sm:$0xff]
  %v920 = vld [vmem:[%s3 + $0x1340] sm:$0xff]
  %v921 = vld [vmem:[%s3 + $0x1348] sm:$0xff]
  %v922 = vld [vmem:[%s3 + $0x1350] sm:$0xff]
  %v923 = vld [vmem:[%s3 + $0x1358] sm:$0xff]
  %v924 = vld [vmem:[%s3 + $0x1360] sm:$0xff]
  %v925 = vld [vmem:[%s3 + $0x1368] sm:$0xff]
  %v926 = vld [vmem:[%s3 + $0x1370] sm:$0xff]
  %v927 = vld [vmem:[%s3 + $0x1378] sm:$0xff]
  %v928 = vld [vmem:[%s3 + $0x1380] sm:$0xff]
  %v929 = vld [vmem:[%s3 + $0x1388] sm:$0xff]
  %v930 = vld [vmem:[%s3 + $0x1390] sm:$0xff]
  %v931 = vld [vmem:[%s3 + $0x1398] sm:$0xff]
  %v932 = vld [vmem:[%s3 + $0x13a0] sm:$0xff]
  %v933 = vld [vmem:[%s3 + $0x13a8] sm:$0xff]
  %v934 = vld [vmem:[%s3 + $0x13b0] sm:$0xff]
  %v935 = vld [vmem:[%s3 + $0x13b8] sm:$0xff]
  %v936 = vld [vmem:[%s3 + $0x13c0] sm:$0xff]
  %v937 = vld [vmem:[%s3 + $0x13c8] sm:$0xff]
  %v938 = vld [vmem:[%s3 + $0x13d0] sm:$0xff]
  %v939 = vld [vmem:[%s3 + $0x13d8] sm:$0xff]
  %v940 = vld [vmem:[%s3 + $0x13e0] sm:$0xff]
  %v941 = vld [vmem:[%s3 + $0x13e8] sm:$0xff]
  %v942 = vld [vmem:[%s3 + $0x13f0] sm:$0xff]
  %v943 = vld [vmem:[%s3 + $0x13f8] sm:$0xff]
  %v944 = vld [vmem:[%s3 + $0x1400] sm:$0xff]
  %v945 = vld [vmem:[%s3 + $0x1408] sm:$0xff]
  %v946 = vld [vmem:[%s3 + $0x1410] sm:$0xff]
  %v947 = vld [vmem:[%s3 + $0x1418] sm:$0xff]
  %v948 = vld [vmem:[%s3 + $0x1420] sm:$0xff]
  %v949 = vld [vmem:[%s3 + $0x1428] sm:$0xff]
  %v950 = vld [vmem:[%s3 + $0x1430] sm:$0xff]
  %v951 = vld [vmem:[%s3 + $0x1438] sm:$0xff]
  %v952 = vld [vmem:[%s3 + $0x1440] sm:$0xff]
  %v953 = vld [vmem:[%s3 + $0x1448] sm:$0xff]
  %v954 = vld [vmem:[%s3 + $0x1450] sm:$0xff]
  %v955 = vld [vmem:[%s3 + $0x1458] sm:$0xff]
  %v956 = vld [vmem:[%s3 + $0x1460] sm:$0xff]
  %v957 = vld [vmem:[%s3 + $0x1468] sm:$0xff]
  %v958 = vld [vmem:[%s3 + $0x1470] sm:$0xff]
  %v959 = vld [vmem:[%s3 + $0x1478] sm:$0xff]
  %v960 = vld [vmem:[%s3 + $0x1480] sm:$0xff]
  %v961 = vld [vmem:[%s3 + $0x1488] sm:$0xff]
  %v962 = vld [vmem:[%s3 + $0x1490] sm:$0xff]
  %v963 = vld [vmem:[%s3 + $0x1498] sm:$0xff]
  %v964 = vld [vmem:[%s3 + $0x14a0] sm:$0xff]
  %v965 = vld [vmem:[%s3 + $0x14a8] sm:$0xff]
  %v966 = vld [vmem:[%s3 + $0x14b0] sm:$0xff]
  %v967 = vld [vmem:[%s3 + $0x14b8] sm:$0xff]
  %v968 = vld [vmem:[%s3 + $0x14c0] sm:$0xff]
  %v969 = vld [vmem:[%s3 + $0x14c8] sm:$0xff]
  %v970 = vld [vmem:[%s3 + $0x14d0] sm:$0xff]
  %v971 = vld [vmem:[%s3 + $0x14d8] sm:$0xff]
  %v972 = vld [vmem:[%s3 + $0x14e0] sm:$0xff]
  %v973 = vld [vmem:[%s3 + $0x14e8] sm:$0xff]
  %v974 = vld [vmem:[%s3 + $0x14f0] sm:$0xff]
  %v975 = vld [vmem:[%s3 + $0x14f8] sm:$0xff]
  %v976 = vld [vmem:[%s3 + $0x1500] sm:$0xff]
  %v977 = vld [vmem:[%s3 + $0x1508] sm:$0xff]
  %v978 = vld [vmem:[%s3 + $0x1510] sm:$0xff]
  %v979 = vld [vmem:[%s3 + $0x1518] sm:$0xff]
  %v980 = vld [vmem:[%s3 + $0x1520] sm:$0xff]
  %v981 = vld [vmem:[%s3 + $0x1528] sm:$0xff]
  %v982 = vld [vmem:[%s3 + $0x1530] sm:$0xff]
  %v983 = vld [vmem:[%s3 + $0x1538] sm:$0xff]
  %v984 = vld [vmem:[%s3 + $0x1540] sm:$0xff]
  %v985 = vld [vmem:[%s3 + $0x1548] sm:$0xff]
  %v986 = vld [vmem:[%s3 + $0x1550] sm:$0xff]
  %v987 = vld [vmem:[%s3 + $0x1558] sm:$0xff]
  %v988 = vld [vmem:[%s3 + $0x1560] sm:$0xff]
  %v989 = vld [vmem:[%s3 + $0x1568] sm:$0xff]
  %v990 = vld [vmem:[%s3 + $0x1570] sm:$0xff]
  %v991 = vld [vmem:[%s3 + $0x1578] sm:$0xff]
  %v992 = vld [vmem:[%s3 + $0x1580] sm:$0xff]
  %v993 = vld [vmem:[%s3 + $0x1588] sm:$0xff]
  %v994 = vld [vmem:[%s3 + $0x1590] sm:$0xff]
  %v995 = vld [vmem:[%s3 + $0x1598] sm:$0xff]
  %v996 = vld [vmem:[%s3 + $0x15a0] sm:$0xff]
  %v997 = vld [vmem:[%s3 + $0x15a8] sm:$0xff]
  %v998 = vld [vmem:[%s3 + $0x15b0] sm:$0xff]
  %v999 = vld [vmem:[%s3 + $0x15b8] sm:$0xff]
  %v1000 = vld [vmem:[%s3 + $0x15c0] sm:$0xff]
  %v1001 = vld [vmem:[%s3 + $0x15c8] sm:$0xff]
  %v1002 = vld [vmem:[%s3 + $0x15d0] sm:$0xff]
  %v1003 = vld [vmem:[%s3 + $0x15d8] sm:$0xff]
  %v1004 = vld [vmem:[%s3 + $0x15e0] sm:$0xff]
  %v1005 = vld [vmem:[%s3 + $0x15e8] sm:$0xff]
  %v1006 = vld [vmem:[%s3 + $0x15f0] sm:$0xff]
  %v1007 = vld [vmem:[%s3 + $0x15f8] sm:$0xff]
  %v1008 = vld [vmem:[%s3 + $0x1600] sm:$0xff]
  %v1009 = vld [vmem:[%s3 + $0x1608] sm:$0xff]
  %v1010 = vld [vmem:[%s3 + $0x1610] sm:$0xff]
  %v1011 = vld [vmem:[%s3 + $0x1618] sm:$0xff]
  %v1012 = vld [vmem:[%s3 + $0x1620] sm:$0xff]
  %v1013 = vld [vmem:[%s3 + $0x1628] sm:$0xff]
  %v1014 = vld [vmem:[%s3 + $0x1630] sm:$0xff]
  %v1015 = vld [vmem:[%s3 + $0x1638] sm:$0xff]
  %v1016 = vld [vmem:[%s3 + $0x1640] sm:$0xff]
  %v1017 = vld [vmem:[%s3 + $0x1648] sm:$0xff]
  %v1018 = vld [vmem:[%s3 + $0x1650] sm:$0xff]
  %v1019 = vld [vmem:[%s3 + $0x1658] sm:$0xff]
  %v1020 = vld [vmem:[%s3 + $0x1660] sm:$0xff]
  %v1021 = vld [vmem:[%s3 + $0x1668] sm:$0xff]
  %v1022 = vld [vmem:[%s3 + $0x1670] sm:$0xff]
  %v1023 = vld [vmem:[%s3 + $0x1678] sm:$0xff]
  %v1024 = vld [vmem:[%s3 + $0x1680] sm:$0xff]
  %v1025 = vld [vmem:[%s3 + $0x1688] sm:$0xff]
  %v1026 = vld [vmem:[%s3 + $0x1690] sm:$0xff]
  %v1027 = vld [vmem:[%s3 + $0x1698] sm:$0xff]
  %v1028 = vld [vmem:[%s3 + $0x16a0] sm:$0xff]
  %v1029 = vld [vmem:[%s3 + $0x16a8] sm:$0xff]
  %v1030 = vld [vmem:[%s3 + $0x16b0] sm:$0xff]
  %v1031 = vld [vmem:[%s3 + $0x16b8] sm:$0xff]
  %v1032 = vld [vmem:[%s3 + $0x16c0] sm:$0xff]
  %v1033 = vld [vmem:[%s3 + $0x16c8] sm:$0xff]
  %v1034 = vld [vmem:[%s3 + $0x16d0] sm:$0xff]
  %v1035 = vld [vmem:[%s3 + $0x16d8] sm:$0xff]
  %v1036 = vld [vmem:[%s3 + $0x16e0] sm:$0xff]
  %v1037 = vld [vmem:[%s3 + $0x16e8] sm:$0xff]
  %v1038 = vld [vmem:[%s3 + $0x16f0] sm:$0xff]
  %v1039 = vld [vmem:[%s3 + $0x16f8] sm:$0xff]
  %v1040 = vld [vmem:[%s3 + $0x1700] sm:$0xff]
  %v1041 = vld [vmem:[%s3 + $0x1708] sm:$0xff]
  %v1042 = vld [vmem:[%s3 + $0x1710] sm:$0xff]
  %v1043 = vld [vmem:[%s3 + $0x1718] sm:$0xff]
  %v1044 = vld [vmem:[%s3 + $0x1720] sm:$0xff]
  %v1045 = vld [vmem:[%s3 + $0x1728] sm:$0xff]
  %v1046 = vld [vmem:[%s3 + $0x1730] sm:$0xff]
  %v1047 = vld [vmem:[%s3 + $0x1738] sm:$0xff]
  %v1048 = vld [vmem:[%s3 + $0x1740] sm:$0xff]
  %v1049 = vld [vmem:[%s3 + $0x1748] sm:$0xff]
  %v1050 = vld [vmem:[%s3 + $0x1750] sm:$0xff]
  %v1051 = vld [vmem:[%s3 + $0x1758] sm:$0xff]
  %v1052 = vld [vmem:[%s3 + $0x1760] sm:$0xff]
  %v1053 = vld [vmem:[%s3 + $0x1768] sm:$0xff]
  %v1054 = vld [vmem:[%s3 + $0x1770] sm:$0xff]
  %v1055 = vld [vmem:[%s3 + $0x1778] sm:$0xff]
  %v1056 = vld [vmem:[%s3 + $0x1780] sm:$0xff]
  %v1057 = vld [vmem:[%s3 + $0x1788] sm:$0xff]
  %v1058 = vld [vmem:[%s3 + $0x1790] sm:$0xff]
  %v1059 = vld [vmem:[%s3 + $0x1798] sm:$0xff]
  %v1060 = vld [vmem:[%s3 + $0x17a0] sm:$0xff]
  %v1061 = vld [vmem:[%s3 + $0x17a8] sm:$0xff]
  %v1062 = vld [vmem:[%s3 + $0x17b0] sm:$0xff]
  %v1063 = vld [vmem:[%s3 + $0x17b8] sm:$0xff]
  %v1064 = vld [vmem:[%s3 + $0x17c0] sm:$0xff]
  %v1065 = vld [vmem:[%s3 + $0x17c8] sm:$0xff]
  %v1066 = vld [vmem:[%s3 + $0x17d0] sm:$0xff]
  %v1067 = vld [vmem:[%s3 + $0x17d8] sm:$0xff]
  %v1068 = vld [vmem:[%s3 + $0x17e0] sm:$0xff]
  %v1069 = vld [vmem:[%s3 + $0x17e8] sm:$0xff]
  %v1070 = vld [vmem:[%s3 + $0x17f0] sm:$0xff]
  %v1071 = vld [vmem:[%s3 + $0x17f8] sm:$0xff]
  %v1072 = vld [vmem:[%s3 + $0x1800] sm:$0xff]
  %v1073 = vld [vmem:[%s3 + $0x1808] sm:$0xff]
  %v1074 = vld [vmem:[%s3 + $0x1810] sm:$0xff]
  %v1075 = vld [vmem:[%s3 + $0x1818] sm:$0xff]
  %v1076 = vld [vmem:[%s3 + $0x1820] sm:$0xff]
  %v1077 = vld [vmem:[%s3 + $0x1828] sm:$0xff]
  %v1078 = vld [vmem:[%s3 + $0x1830] sm:$0xff]
  %v1079 = vld [vmem:[%s3 + $0x1838] sm:$0xff]
  %v1080 = vld [vmem:[%s3 + $0x1840] sm:$0xff]
  %v1081 = vld [vmem:[%s3 + $0x1848] sm:$0xff]
  %v1082 = vld [vmem:[%s3 + $0x1850] sm:$0xff]
  %v1083 = vld [vmem:[%s3 + $0x1858] sm:$0xff]
  %v1084 = vld [vmem:[%s3 + $0x1860] sm:$0xff]
  %v1085 = vld [vmem:[%s3 + $0x1868] sm:$0xff]
  %v1086 = vld [vmem:[%s3 + $0x1870] sm:$0xff]
  %v1087 = vld [vmem:[%s3 + $0x1878] sm:$0xff]
  %v1088 = vld [vmem:[%s3 + $0x1880] sm:$0xff]
  %v1089 = vld [vmem:[%s3 + $0x1888] sm:$0xff]
  %v1090 = vld [vmem:[%s3 + $0x1890] sm:$0xff]
  %v1091 = vld [vmem:[%s3 + $0x1898] sm:$0xff]
  %v1092 = vld [vmem:[%s3 + $0x18a0] sm:$0xff]
  %v1093 = vld [vmem:[%s3 + $0x18a8] sm:$0xff]
  %v1094 = vld [vmem:[%s3 + $0x18b0] sm:$0xff]
  %v1095 = vld [vmem:[%s3 + $0x18b8] sm:$0xff]
  %v1096 = vld [vmem:[%s3 + $0x18c0] sm:$0xff]
  %v1097 = vld [vmem:[%s3 + $0x18c8] sm:$0xff]
  %v1098 = vld [vmem:[%s3 + $0x18d0] sm:$0xff]
  %v1099 = vld [vmem:[%s3 + $0x18d8] sm:$0xff]
  %v1100 = vld [vmem:[%s3 + $0x18e0] sm:$0xff]
  %v1101 = vld [vmem:[%s3 + $0x18e8] sm:$0xff]
  %v1102 = vld [vmem:[%s3 + $0x18f0] sm:$0xff]
  %v1103 = vld [vmem:[%s3 + $0x18f8] sm:$0xff]
  %v1104 = vld [vmem:[%s3 + $0x1900] sm:$0xff]
  %v1105 = vld [vmem:[%s3 + $0x1908] sm:$0xff]
  %v1106 = vld [vmem:[%s3 + $0x1910] sm:$0xff]
  %v1107 = vld [vmem:[%s3 + $0x1918] sm:$0xff]
  %v1108 = vld [vmem:[%s3 + $0x1920] sm:$0xff]
  %v1109 = vld [vmem:[%s3 + $0x1928] sm:$0xff]
  %v1110 = vld [vmem:[%s3 + $0x1930] sm:$0xff]
  %v1111 = vld [vmem:[%s3 + $0x1938] sm:$0xff]
  %v1112 = vld [vmem:[%s3 + $0x1940] sm:$0xff]
  %v1113 = vld [vmem:[%s3 + $0x1948] sm:$0xff]
  %v1114 = vld [vmem:[%s3 + $0x1950] sm:$0xff]
  %v1115 = vld [vmem:[%s3 + $0x1958] sm:$0xff]
  %v1116 = vld [vmem:[%s3 + $0x1960] sm:$0xff]
  %v1117 = vld [vmem:[%s3 + $0x1968] sm:$0xff]
  %v1118 = vld [vmem:[%s3 + $0x1970] sm:$0xff]
  %v1119 = vld [vmem:[%s3 + $0x1978] sm:$0xff]
  %v1120 = vld [vmem:[%s3 + $0x1980] sm:$0xff]
  %v1121 = vld [vmem:[%s3 + $0x1988] sm:$0xff]
  %v1122 = vld [vmem:[%s3 + $0x1990] sm:$0xff]
  %v1123 = vld [vmem:[%s3 + $0x1998] sm:$0xff]
  %v1124 = vld [vmem:[%s3 + $0x19a0] sm:$0xff]
  %v1125 = vld [vmem:[%s3 + $0x19a8] sm:$0xff]
  %v1126 = vld [vmem:[%s3 + $0x19b0] sm:$0xff]
  %v1127 = vld [vmem:[%s3 + $0x19b8] sm:$0xff]
  %v1128 = vld [vmem:[%s3 + $0x19c0] sm:$0xff]
  %v1129 = vld [vmem:[%s3 + $0x19c8] sm:$0xff]
  %v1130 = vld [vmem:[%s3 + $0x19d0] sm:$0xff]
  %v1131 = vld [vmem:[%s3 + $0x19d8] sm:$0xff]
  %v1132 = vld [vmem:[%s3 + $0x19e0] sm:$0xff]
  %v1133 = vld [vmem:[%s3 + $0x19e8] sm:$0xff]
  %v1134 = vld [vmem:[%s3 + $0x19f0] sm:$0xff]
  %v1135 = vld [vmem:[%s3 + $0x19f8] sm:$0xff]
  %v1136 = vld [vmem:[%s3 + $0x1a00] sm:$0xff]
  %v1137 = vld [vmem:[%s3 + $0x1a08] sm:$0xff]
  %v1138 = vld [vmem:[%s3 + $0x1a10] sm:$0xff]
  %v1139 = vld [vmem:[%s3 + $0x1a18] sm:$0xff]
  %v1140 = vld [vmem:[%s3 + $0x1a20] sm:$0xff]
  %v1141 = vld [vmem:[%s3 + $0x1a28] sm:$0xff]
  %v1142 = vld [vmem:[%s3 + $0x1a30] sm:$0xff]
  %v1143 = vld [vmem:[%s3 + $0x1a38] sm:$0xff]
  %v1144 = vld [vmem:[%s3 + $0x1a40] sm:$0xff]
  %v1145 = vld [vmem:[%s3 + $0x1a48] sm:$0xff]
  %v1146 = vld [vmem:[%s3 + $0x1a50] sm:$0xff]
  %v1147 = vld [vmem:[%s3 + $0x1a58] sm:$0xff]
  %v1148 = vld [vmem:[%s3 + $0x1a60] sm:$0xff]
  %v1149 = vld [vmem:[%s3 + $0x1a68] sm:$0xff]
  %v1150 = vld [vmem:[%s3 + $0x1a70] sm:$0xff]
  %v1151 = vld [vmem:[%s3 + $0x1a78] sm:$0xff]
  %v1152 = vld [vmem:[%s3 + $0x1a80] sm:$0xff]
  %v1153 = vld [vmem:[%s3 + $0x1a88] sm:$0xff]
  %v1154 = vld [vmem:[%s3 + $0x1a90] sm:$0xff]
  %v1155 = vld [vmem:[%s3 + $0x1a98] sm:$0xff]
  %v1156 = vld [vmem:[%s3 + $0x1aa0] sm:$0xff]
  %v1157 = vld [vmem:[%s3 + $0x1aa8] sm:$0xff]
  %v1158 = vld [vmem:[%s3 + $0x1ab0] sm:$0xff]
  %v1159 = vld [vmem:[%s3 + $0x1ab8] sm:$0xff]
  %v1160 = vld [vmem:[%s3 + $0x1ac0] sm:$0xff]
  %v1161 = vld [vmem:[%s3 + $0x1ac8] sm:$0xff]
  %v1162 = vld [vmem:[%s3 + $0x1ad0] sm:$0xff]
  %v1163 = vld [vmem:[%s3 + $0x1ad8] sm:$0xff]
  %v1164 = vld [vmem:[%s3 + $0x1ae0] sm:$0xff]
  %v1165 = vld [vmem:[%s3 + $0x1ae8] sm:$0xff]
  %v1166 = vld [vmem:[%s3 + $0x1af0] sm:$0xff]
  %v1167 = vld [vmem:[%s3 + $0x1af8] sm:$0xff]
  %v1168 = vld [vmem:[%s3 + $0x1b00] sm:$0xff]
  %v1169 = vld [vmem:[%s3 + $0x1b08] sm:$0xff]
  %v1170 = vld [vmem:[%s3 + $0x1b10] sm:$0xff]
  %v1171 = vld [vmem:[%s3 + $0x1b18] sm:$0xff]
  %v1172 = vld [vmem:[%s3 + $0x1b20] sm:$0xff]
  %v1173 = vld [vmem:[%s3 + $0x1b28] sm:$0xff]
  %v1174 = vld [vmem:[%s3 + $0x1b30] sm:$0xff]
  %v1175 = vld [vmem:[%s3 + $0x1b38] sm:$0xff]
  %v1176 = vld [vmem:[%s3 + $0x1b40] sm:$0xff]
  %v1177 = vld [vmem:[%s3 + $0x1b48] sm:$0xff]
  %v1178 = vld [vmem:[%s3 + $0x1b50] sm:$0xff]
  %v1179 = vld [vmem:[%s3 + $0x1b58] sm:$0xff]
  %v1180 = vld [vmem:[%s3 + $0x1b60] sm:$0xff]
  %v1181 = vld [vmem:[%s3 + $0x1b68] sm:$0xff]
  %v1182 = vld [vmem:[%s3 + $0x1b70] sm:$0xff]
  %v1183 = vld [vmem:[%s3 + $0x1b78] sm:$0xff]
  %v1184 = vld [vmem:[%s3 + $0x1b80] sm:$0xff]
  %v1185 = vld [vmem:[%s3 + $0x1b88] sm:$0xff]
  %v1186 = vld [vmem:[%s3 + $0x1b90] sm:$0xff]
  %v1187 = vld [vmem:[%s3 + $0x1b98] sm:$0xff]
  %v1188 = vld [vmem:[%s3 + $0x1ba0] sm:$0xff]
  %v1189 = vld [vmem:[%s3 + $0x1ba8] sm:$0xff]
  %v1190 = vld [vmem:[%s3 + $0x1bb0] sm:$0xff]
  %v1191 = vld [vmem:[%s3 + $0x1bb8] sm:$0xff]
  %v1192 = vld [vmem:[%s3 + $0x1bc0] sm:$0xff]
  %v1193 = vld [vmem:[%s3 + $0x1bc8] sm:$0xff]
  %v1194 = vld [vmem:[%s3 + $0x1bd0] sm:$0xff]
  %v1195 = vld [vmem:[%s3 + $0x1bd8] sm:$0xff]
  %v1196 = vld [vmem:[%s3 + $0x1be0] sm:$0xff]
  %v1197 = vld [vmem:[%s3 + $0x1be8] sm:$0xff]
  %v1198 = vld [vmem:[%s3 + $0x1bf0] sm:$0xff]
  %v1199 = vld [vmem:[%s3 + $0x1bf8] sm:$0xff]
  %v1200 = vld [vmem:[%s3 + $0x1c00] sm:$0xff]
  %v1201 = vld [vmem:[%s3 + $0x1c08] sm:$0xff]
  %v1202 = vld [vmem:[%s3 + $0x1c10] sm:$0xff]
  %v1203 = vld [vmem:[%s3 + $0x1c18] sm:$0xff]
  %v1204 = vld [vmem:[%s3 + $0x1c20] sm:$0xff]
  %v1205 = vld [vmem:[%s3 + $0x1c28] sm:$0xff]
  %v1206 = vld [vmem:[%s3 + $0x1c30] sm:$0xff]
  %v1207 = vld [vmem:[%s3 + $0x1c38] sm:$0xff]
  %v1208 = vld [vmem:[%s3 + $0x1c40] sm:$0xff]
  %v1209 = vld [vmem:[%s3 + $0x1c48] sm:$0xff]
  %v1210 = vld [vmem:[%s3 + $0x1c50] sm:$0xff]
  %v1211 = vld [vmem:[%s3 + $0x1c58] sm:$0xff]
  %v1212 = vld [vmem:[%s3 + $0x1c60] sm:$0xff]
  %v1213 = vld [vmem:[%s3 + $0x1c68] sm:$0xff]
  %v1214 = vld [vmem:[%s3 + $0x1c70] sm:$0xff]
  %v1215 = vld [vmem:[%s3 + $0x1c78] sm:$0xff]
  %v1216 = vld [vmem:[%s3 + $0x1c80] sm:$0xff]
  %v1217 = vld [vmem:[%s3 + $0x1c88] sm:$0xff]
  %v1218 = vld [vmem:[%s3 + $0x1c90] sm:$0xff]
  %v1219 = vld [vmem:[%s3 + $0x1c98] sm:$0xff]
  %v1220 = vld [vmem:[%s3 + $0x1ca0] sm:$0xff]
  %v1221 = vld [vmem:[%s3 + $0x1ca8] sm:$0xff]
  %v1222 = vld [vmem:[%s3 + $0x1cb0] sm:$0xff]
  %v1223 = vld [vmem:[%s3 + $0x1cb8] sm:$0xff]
  %v1224 = vld [vmem:[%s3 + $0x1cc0] sm:$0xff]
  %v1225 = vld [vmem:[%s3 + $0x1cc8] sm:$0xff]
  %v1226 = vld [vmem:[%s3 + $0x1cd0] sm:$0xff]
  %v1227 = vld [vmem:[%s3 + $0x1cd8] sm:$0xff]
  %v1228 = vld [vmem:[%s3 + $0x1ce0] sm:$0xff]
  %v1229 = vld [vmem:[%s3 + $0x1ce8] sm:$0xff]
  %v1230 = vld [vmem:[%s3 + $0x1cf0] sm:$0xff]
  %v1231 = vld [vmem:[%s3 + $0x1cf8] sm:$0xff]
  %v1232 = vld [vmem:[%s3 + $0x1d00] sm:$0xff]
  %v1233 = vld [vmem:[%s3 + $0x1d08] sm:$0xff]
  %v1234 = vld [vmem:[%s3 + $0x1d10] sm:$0xff]
  %v1235 = vld [vmem:[%s3 + $0x1d18] sm:$0xff]
  %v1236 = vld [vmem:[%s3 + $0x1d20] sm:$0xff]
  %v1237 = vld [vmem:[%s3 + $0x1d28] sm:$0xff]
  %v1238 = vld [vmem:[%s3 + $0x1d30] sm:$0xff]
  %v1239 = vld [vmem:[%s3 + $0x1d38] sm:$0xff]
  %v1240 = vld [vmem:[%s3 + $0x1d40] sm:$0xff]
  %v1241 = vld [vmem:[%s3 + $0x1d48] sm:$0xff]
  %v1242 = vld [vmem:[%s3 + $0x1d50] sm:$0xff]
  %v1243 = vld [vmem:[%s3 + $0x1d58] sm:$0xff]
  %v1244 = vld [vmem:[%s3 + $0x1d60] sm:$0xff]
  %v1245 = vld [vmem:[%s3 + $0x1d68] sm:$0xff]
  %v1246 = vld [vmem:[%s3 + $0x1d70] sm:$0xff]
  %v1247 = vld [vmem:[%s3 + $0x1d78] sm:$0xff]
  %v1248 = vld [vmem:[%s3 + $0x1d80] sm:$0xff]
  %v1249 = vld [vmem:[%s3 + $0x1d88] sm:$0xff]
  %v1250 = vld [vmem:[%s3 + $0x1d90] sm:$0xff]
  %v1251 = vld [vmem:[%s3 + $0x1d98] sm:$0xff]
  %v1252 = vld [vmem:[%s3 + $0x1da0] sm:$0xff]
  %v1253 = vld [vmem:[%s3 + $0x1da8] sm:$0xff]
  %v1254 = vld [vmem:[%s3 + $0x1db0] sm:$0xff]
  %v1255 = vld [vmem:[%s3 + $0x1db8] sm:$0xff]
  %v1256 = vld [vmem:[%s3 + $0x1dc0] sm:$0xff]
  %v1257 = vld [vmem:[%s3 + $0x1dc8] sm:$0xff]
  %v1258 = vld [vmem:[%s3 + $0x1dd0] sm:$0xff]
  %v1259 = vld [vmem:[%s3 + $0x1dd8] sm:$0xff]
  %v1260 = vld [vmem:[%s3 + $0x1de0] sm:$0xff]
  %v1261 = vld [vmem:[%s3 + $0x1de8] sm:$0xff]
  %v1262 = vld [vmem:[%s3 + $0x1df0] sm:$0xff]
  %v1263 = vld [vmem:[%s3 + $0x1df8] sm:$0xff]
  %v1264 = vld [vmem:[%s3 + $0x1e00] sm:$0xff]
  %v1265 = vld [vmem:[%s3 + $0x1e08] sm:$0xff]
  %v1266 = vld [vmem:[%s3 + $0x1e10] sm:$0xff]
  %v1267 = vld [vmem:[%s3 + $0x1e18] sm:$0xff]
  %v1268 = vld [vmem:[%s3 + $0x1e20] sm:$0xff]
  %v1269 = vld [vmem:[%s3 + $0x1e28] sm:$0xff]
  %v1270 = vld [vmem:[%s3 + $0x1e30] sm:$0xff]
  %v1271 = vld [vmem:[%s3 + $0x1e38] sm:$0xff]
  %v1272 = vld [vmem:[%s3 + $0x1e40] sm:$0xff]
  %v1273 = vld [vmem:[%s3 + $0x1e48] sm:$0xff]
  %v1274 = vld [vmem:[%s3 + $0x1e50] sm:$0xff]
  %v1275 = vld [vmem:[%s3 + $0x1e58] sm:$0xff]
  %v1276 = vld [vmem:[%s3 + $0x1e60] sm:$0xff]
  %v1277 = vld [vmem:[%s3 + $0x1e68] sm:$0xff]
  %v1278 = vld [vmem:[%s3 + $0x1e70] sm:$0xff]
  %v1279 = vld [vmem:[%s3 + $0x1e78] sm:$0xff]
  %v1280 = vld [vmem:[%s3 + $0x1e80] sm:$0xff]
  %v1281 = vld [vmem:[%s3 + $0x1e88] sm:$0xff]
  %v1282 = vld [vmem:[%s3 + $0x1e90] sm:$0xff]
  %v1283 = vld [vmem:[%s3 + $0x1e98] sm:$0xff]
  %v1284 = vld [vmem:[%s3 + $0x1ea0] sm:$0xff]
  %v1285 = vld [vmem:[%s3 + $0x1ea8] sm:$0xff]
  %v1286 = vld [vmem:[%s3 + $0x1eb0] sm:$0xff]
  %v1287 = vld [vmem:[%s3 + $0x1eb8] sm:$0xff]
  %v1288 = vld [vmem:[%s3 + $0x1ec0] sm:$0xff]
  %v1289 = vld [vmem:[%s3 + $0x1ec8] sm:$0xff]
  %v1290 = vld [vmem:[%s3 + $0x1ed0] sm:$0xff]
  %v1291 = vld [vmem:[%s3 + $0x1ed8] sm:$0xff]
  %v1292 = vld [vmem:[%s3 + $0x1ee0] sm:$0xff]
  %v1293 = vld [vmem:[%s3 + $0x1ee8] sm:$0xff]
  %v1294 = vld [vmem:[%s3 + $0x1ef0] sm:$0xff]
  %v1295 = vld [vmem:[%s3 + $0x1ef8] sm:$0xff]
  %v1296 = vld [vmem:[%s3 + $0x1f00] sm:$0xff]
  %v1297 = vld [vmem:[%s3 + $0x1f08] sm:$0xff]
  %v1298 = vld [vmem:[%s3 + $0x1f10] sm:$0xff]
  %v1299 = vld [vmem:[%s3 + $0x1f18] sm:$0xff]
  %v1300 = vld [vmem:[%s3 + $0x1f20] sm:$0xff]
  %v1301 = vld [vmem:[%s3 + $0x1f28] sm:$0xff]
  %v1302 = vld [vmem:[%s3 + $0x1f30] sm:$0xff]
  %v1303 = vld [vmem:[%s3 + $0x1f38] sm:$0xff]
  %v1304 = vld [vmem:[%s3 + $0x1f40] sm:$0xff]
  %v1305 = vld [vmem:[%s3 + $0x1f48] sm:$0xff]
  %v1306 = vld [vmem:[%s3 + $0x1f50] sm:$0xff]
  %v1307 = vld [vmem:[%s3 + $0x1f58] sm:$0xff]
  %v1308 = vld [vmem:[%s3 + $0x1f60] sm:$0xff]
  %v1309 = vld [vmem:[%s3 + $0x1f68] sm:$0xff]
  %v1310 = vld [vmem:[%s3 + $0x1f70] sm:$0xff]
  %v1311 = vld [vmem:[%s3 + $0x1f78] sm:$0xff]
  %v1312 = vld [vmem:[%s3 + $0x1f80] sm:$0xff]
  %v1313 = vld [vmem:[%s3 + $0x1f88] sm:$0xff]
  %v1314 = vld [vmem:[%s3 + $0x1f90] sm:$0xff]
  %v1315 = vld [vmem:[%s3 + $0x1f98] sm:$0xff]
  %v1316 = vld [vmem:[%s3 + $0x1fa0] sm:$0xff]
  %v1317 = vld [vmem:[%s3 + $0x1fa8] sm:$0xff]
  %v1318 = vld [vmem:[%s3 + $0x1fb0] sm:$0xff]
  %v1319 = vld [vmem:[%s3 + $0x1fb8] sm:$0xff]
  %v1320 = vld [vmem:[%s3 + $0x1fc0] sm:$0xff]
  %v1321 = vld [vmem:[%s3 + $0x1fc8] sm:$0xff]
  %v1322 = vld [vmem:[%s3 + $0x1fd0] sm:$0xff]
  %v1323 = vld [vmem:[%s3 + $0x1fd8] sm:$0xff]
  %v1324 = vld [vmem:[%s3 + $0x1fe0] sm:$0xff]
  %v1325 = vld [vmem:[%s3 + $0x1fe8] sm:$0xff]
  %v1326 = vld [vmem:[%s3 + $0x1ff0] sm:$0xff]
  %v1327 = vld [vmem:[%s3 + $0x1ff8] sm:$0xff]
  %v1328 = vld [vmem:[%s4] sm:$0xff]
  %v1329 = vld [vmem:[%s4 + $0x8] sm:$0xff]
  %v1332 = vlaneseq
  %v1333 = vshrl.u32 %v1332, 7
  %v1334 = vsub.s32 0, %v1333
  %v1335 = vrot.slane %v1328, %v1334
  %v1336 = vlaneseq
  %v1337 = vshrl.u32 %v1336, 7
  %v1338 = vsub.s32 1, %v1337
  %v1339 = vrot.slane %v1328, %v1338
  %v1340 = vlaneseq
  %v1341 = vshrl.u32 %v1340, 7
  %v1342 = vsub.s32 2, %v1341
  %v1343 = vrot.slane %v1328, %v1342
  %v1344 = vlaneseq
  %v1345 = vshrl.u32 %v1344, 7
  %v1346 = vsub.s32 3, %v1345
  %v1347 = vrot.slane %v1328, %v1346
  %v1348 = vlaneseq
  %v1349 = vshrl.u32 %v1348, 7
  %v1350 = vsub.s32 4, %v1349
  %v1351 = vrot.slane %v1328, %v1350
  %v1352 = vlaneseq
  %v1353 = vshrl.u32 %v1352, 7
  %v1354 = vsub.s32 5, %v1353
  %v1355 = vrot.slane %v1328, %v1354
  %v1356 = vlaneseq
  %v1357 = vshrl.u32 %v1356, 7
  %v1358 = vsub.s32 6, %v1357
  %v1359 = vrot.slane %v1328, %v1358
  %v1360 = vlaneseq
  %v1361 = vshrl.u32 %v1360, 7
  %v1362 = vsub.s32 7, %v1361
  %v1363 = vrot.slane %v1328, %v1362
  %v1364 = vlaneseq
  %v1365 = vshrl.u32 %v1364, 7
  %v1366 = vsub.s32 0, %v1365
  %v1367 = vrot.slane %v1329, %v1366
  %v1368 = vlaneseq
  %v1369 = vshrl.u32 %v1368, 7
  %v1370 = vsub.s32 1, %v1369
  %v1371 = vrot.slane %v1329, %v1370
  %v1372 = vlaneseq
  %v1373 = vshrl.u32 %v1372, 7
  %v1374 = vsub.s32 2, %v1373
  %v1375 = vrot.slane %v1329, %v1374
  %v1376 = vlaneseq
  %v1377 = vshrl.u32 %v1376, 7
  %v1378 = vsub.s32 3, %v1377
  %v1379 = vrot.slane %v1329, %v1378
  %v1380 = vlaneseq
  %v1381 = vshrl.u32 %v1380, 7
  %v1382 = vsub.s32 4, %v1381
  %v1383 = vrot.slane %v1329, %v1382
  %v1384 = vlaneseq
  %v1385 = vshrl.u32 %v1384, 7
  %v1386 = vsub.s32 5, %v1385
  %v1387 = vrot.slane %v1329, %v1386
  %v1388 = vlaneseq
  %v1389 = vshrl.u32 %v1388, 7
  %v1390 = vsub.s32 6, %v1389
  %v1391 = vrot.slane %v1329, %v1390
  %v1392 = vlaneseq
  %v1393 = vshrl.u32 %v1392, 7
  %v1394 = vsub.s32 7, %v1393
  %v1395 = vrot.slane %v1329, %v1394
  %v2436 = vunpack.c.l.b16 %v304
  %v2437 = vunpack.c.h.b16 %v304
  %v2438 = vunpack.c.l.b16 %v305
  %v2439 = vunpack.c.h.b16 %v305
  %v2440 = vunpack.c.l.b16 %v306
  %v2441 = vunpack.c.h.b16 %v306
  %v2442 = vunpack.c.l.b16 %v307
  %v2443 = vunpack.c.h.b16 %v307
  %v2444 = vunpack.c.l.b16 %v308
  %v2445 = vunpack.c.h.b16 %v308
  %v2446 = vunpack.c.l.b16 %v309
  %v2447 = vunpack.c.h.b16 %v309
  %v2448 = vunpack.c.l.b16 %v310
  %v2449 = vunpack.c.h.b16 %v310
  %v2450 = vunpack.c.l.b16 %v311
  %v2451 = vunpack.c.h.b16 %v311
  %v2452 = vunpack.c.l.b16 %v312
  %v2453 = vunpack.c.h.b16 %v312
  %v2454 = vunpack.c.l.b16 %v313
  %v2455 = vunpack.c.h.b16 %v313
  %v2456 = vunpack.c.l.b16 %v314
  %v2457 = vunpack.c.h.b16 %v314
  %v2458 = vunpack.c.l.b16 %v315
  %v2459 = vunpack.c.h.b16 %v315
  %v2460 = vunpack.c.l.b16 %v316
  %v2461 = vunpack.c.h.b16 %v316
  %v2462 = vunpack.c.l.b16 %v317
  %v2463 = vunpack.c.h.b16 %v317
  %v2464 = vunpack.c.l.b16 %v318
  %v2465 = vunpack.c.h.b16 %v318
  %v2466 = vunpack.c.l.b16 %v319
  %v2467 = vunpack.c.h.b16 %v319
  %v2468 = vunpack.c.l.b16 %v320
  %v2469 = vunpack.c.h.b16 %v320
  %v2470 = vunpack.c.l.b16 %v321
  %v2471 = vunpack.c.h.b16 %v321
  %v2472 = vunpack.c.l.b16 %v322
  %v2473 = vunpack.c.h.b16 %v322
  %v2474 = vunpack.c.l.b16 %v323
  %v2475 = vunpack.c.h.b16 %v323
  %v2476 = vunpack.c.l.b16 %v324
  %v2477 = vunpack.c.h.b16 %v324
  %v2478 = vunpack.c.l.b16 %v325
  %v2479 = vunpack.c.h.b16 %v325
  %v2480 = vunpack.c.l.b16 %v326
  %v2481 = vunpack.c.h.b16 %v326
  %v2482 = vunpack.c.l.b16 %v327
  %v2483 = vunpack.c.h.b16 %v327
  %v2484 = vunpack.c.l.b16 %v328
  %v2485 = vunpack.c.h.b16 %v328
  %v2486 = vunpack.c.l.b16 %v329
  %v2487 = vunpack.c.h.b16 %v329
  %v2488 = vunpack.c.l.b16 %v330
  %v2489 = vunpack.c.h.b16 %v330
  %v2490 = vunpack.c.l.b16 %v331
  %v2491 = vunpack.c.h.b16 %v331
  %v2492 = vunpack.c.l.b16 %v332
  %v2493 = vunpack.c.h.b16 %v332
  %v2494 = vunpack.c.l.b16 %v333
  %v2495 = vunpack.c.h.b16 %v333
  %v2496 = vunpack.c.l.b16 %v334
  %v2497 = vunpack.c.h.b16 %v334
  %v2498 = vunpack.c.l.b16 %v335
  %v2499 = vunpack.c.h.b16 %v335
  %v2500 = vunpack.c.l.b16 %v336
  %v2501 = vunpack.c.h.b16 %v336
  %v2502 = vunpack.c.l.b16 %v337
  %v2503 = vunpack.c.h.b16 %v337
  %v2504 = vunpack.c.l.b16 %v338
  %v2505 = vunpack.c.h.b16 %v338
  %v2506 = vunpack.c.l.b16 %v339
  %v2507 = vunpack.c.h.b16 %v339
  %v2508 = vunpack.c.l.b16 %v340
  %v2509 = vunpack.c.h.b16 %v340
  %v2510 = vunpack.c.l.b16 %v341
  %v2511 = vunpack.c.h.b16 %v341
  %v2512 = vunpack.c.l.b16 %v342
  %v2513 = vunpack.c.h.b16 %v342
  %v2514 = vunpack.c.l.b16 %v343
  %v2515 = vunpack.c.h.b16 %v343
  %v2516 = vunpack.c.l.b16 %v344
  %v2517 = vunpack.c.h.b16 %v344
  %v2518 = vunpack.c.l.b16 %v345
  %v2519 = vunpack.c.h.b16 %v345
  %v2520 = vunpack.c.l.b16 %v346
  %v2521 = vunpack.c.h.b16 %v346
  %v2522 = vunpack.c.l.b16 %v347
  %v2523 = vunpack.c.h.b16 %v347
  %v2524 = vunpack.c.l.b16 %v348
  %v2525 = vunpack.c.h.b16 %v348
  %v2526 = vunpack.c.l.b16 %v349
  %v2527 = vunpack.c.h.b16 %v349
  %v2528 = vunpack.c.l.b16 %v350
  %v2529 = vunpack.c.h.b16 %v350
  %v2530 = vunpack.c.l.b16 %v351
  %v2531 = vunpack.c.h.b16 %v351
  %v2532 = vunpack.c.l.b16 %v352
  %v2533 = vunpack.c.h.b16 %v352
  %v2534 = vunpack.c.l.b16 %v353
  %v2535 = vunpack.c.h.b16 %v353
  %v2536 = vunpack.c.l.b16 %v354
  %v2537 = vunpack.c.h.b16 %v354
  %v2538 = vunpack.c.l.b16 %v355
  %v2539 = vunpack.c.h.b16 %v355
  %v2540 = vunpack.c.l.b16 %v356
  %v2541 = vunpack.c.h.b16 %v356
  %v2542 = vunpack.c.l.b16 %v357
  %v2543 = vunpack.c.h.b16 %v357
  %v2544 = vunpack.c.l.b16 %v358
  %v2545 = vunpack.c.h.b16 %v358
  %v2546 = vunpack.c.l.b16 %v359
  %v2547 = vunpack.c.h.b16 %v359
  %v2548 = vunpack.c.l.b16 %v360
  %v2549 = vunpack.c.h.b16 %v360
  %v2550 = vunpack.c.l.b16 %v361
  %v2551 = vunpack.c.h.b16 %v361
  %v2552 = vunpack.c.l.b16 %v362
  %v2553 = vunpack.c.h.b16 %v362
  %v2554 = vunpack.c.l.b16 %v363
  %v2555 = vunpack.c.h.b16 %v363
  %v2556 = vunpack.c.l.b16 %v364
  %v2557 = vunpack.c.h.b16 %v364
  %v2558 = vunpack.c.l.b16 %v365
  %v2559 = vunpack.c.h.b16 %v365
  %v2560 = vunpack.c.l.b16 %v366
  %v2561 = vunpack.c.h.b16 %v366
  %v2562 = vunpack.c.l.b16 %v367
  %v2563 = vunpack.c.h.b16 %v367
  %v2564 = vunpack.c.l.b16 %v368
  %v2565 = vunpack.c.h.b16 %v368
  %v2566 = vunpack.c.l.b16 %v369
  %v2567 = vunpack.c.h.b16 %v369
  %v2568 = vunpack.c.l.b16 %v370
  %v2569 = vunpack.c.h.b16 %v370
  %v2570 = vunpack.c.l.b16 %v371
  %v2571 = vunpack.c.h.b16 %v371
  %v2572 = vunpack.c.l.b16 %v372
  %v2573 = vunpack.c.h.b16 %v372
  %v2574 = vunpack.c.l.b16 %v373
  %v2575 = vunpack.c.h.b16 %v373
  %v2576 = vunpack.c.l.b16 %v374
  %v2577 = vunpack.c.h.b16 %v374
  %v2578 = vunpack.c.l.b16 %v375
  %v2579 = vunpack.c.h.b16 %v375
  %v2580 = vunpack.c.l.b16 %v376
  %v2581 = vunpack.c.h.b16 %v376
  %v2582 = vunpack.c.l.b16 %v377
  %v2583 = vunpack.c.h.b16 %v377
  %v2584 = vunpack.c.l.b16 %v378
  %v2585 = vunpack.c.h.b16 %v378
  %v2586 = vunpack.c.l.b16 %v379
  %v2587 = vunpack.c.h.b16 %v379
  %v2588 = vunpack.c.l.b16 %v380
  %v2589 = vunpack.c.h.b16 %v380
  %v2590 = vunpack.c.l.b16 %v381
  %v2591 = vunpack.c.h.b16 %v381
  %v2592 = vunpack.c.l.b16 %v382
  %v2593 = vunpack.c.h.b16 %v382
  %v2594 = vunpack.c.l.b16 %v383
  %v2595 = vunpack.c.h.b16 %v383
  %v2596 = vunpack.c.l.b16 %v384
  %v2597 = vunpack.c.h.b16 %v384
  %v2598 = vunpack.c.l.b16 %v385
  %v2599 = vunpack.c.h.b16 %v385
  %v2600 = vunpack.c.l.b16 %v386
  %v2601 = vunpack.c.h.b16 %v386
  %v2602 = vunpack.c.l.b16 %v387
  %v2603 = vunpack.c.h.b16 %v387
  %v2604 = vunpack.c.l.b16 %v388
  %v2605 = vunpack.c.h.b16 %v388
  %v2606 = vunpack.c.l.b16 %v389
  %v2607 = vunpack.c.h.b16 %v389
  %v2608 = vunpack.c.l.b16 %v390
  %v2609 = vunpack.c.h.b16 %v390
  %v2610 = vunpack.c.l.b16 %v391
  %v2611 = vunpack.c.h.b16 %v391
  %v2612 = vunpack.c.l.b16 %v392
  %v2613 = vunpack.c.h.b16 %v392
  %v2614 = vunpack.c.l.b16 %v393
  %v2615 = vunpack.c.h.b16 %v393
  %v2616 = vunpack.c.l.b16 %v394
  %v2617 = vunpack.c.h.b16 %v394
  %v2618 = vunpack.c.l.b16 %v395
  %v2619 = vunpack.c.h.b16 %v395
  %v2620 = vunpack.c.l.b16 %v396
  %v2621 = vunpack.c.h.b16 %v396
  %v2622 = vunpack.c.l.b16 %v397
  %v2623 = vunpack.c.h.b16 %v397
  %v2624 = vunpack.c.l.b16 %v398
  %v2625 = vunpack.c.h.b16 %v398
  %v2626 = vunpack.c.l.b16 %v399
  %v2627 = vunpack.c.h.b16 %v399
  %v2628 = vunpack.c.l.b16 %v400
  %v2629 = vunpack.c.h.b16 %v400
  %v2630 = vunpack.c.l.b16 %v401
  %v2631 = vunpack.c.h.b16 %v401
  %v2632 = vunpack.c.l.b16 %v402
  %v2633 = vunpack.c.h.b16 %v402
  %v2634 = vunpack.c.l.b16 %v403
  %v2635 = vunpack.c.h.b16 %v403
  %v2636 = vunpack.c.l.b16 %v404
  %v2637 = vunpack.c.h.b16 %v404
  %v2638 = vunpack.c.l.b16 %v405
  %v2639 = vunpack.c.h.b16 %v405
  %v2640 = vunpack.c.l.b16 %v406
  %v2641 = vunpack.c.h.b16 %v406
  %v2642 = vunpack.c.l.b16 %v407
  %v2643 = vunpack.c.h.b16 %v407
  %v2644 = vunpack.c.l.b16 %v408
  %v2645 = vunpack.c.h.b16 %v408
  %v2646 = vunpack.c.l.b16 %v409
  %v2647 = vunpack.c.h.b16 %v409
  %v2648 = vunpack.c.l.b16 %v410
  %v2649 = vunpack.c.h.b16 %v410
  %v2650 = vunpack.c.l.b16 %v411
  %v2651 = vunpack.c.h.b16 %v411
  %v2652 = vunpack.c.l.b16 %v412
  %v2653 = vunpack.c.h.b16 %v412
  %v2654 = vunpack.c.l.b16 %v413
  %v2655 = vunpack.c.h.b16 %v413
  %v2656 = vunpack.c.l.b16 %v414
  %v2657 = vunpack.c.h.b16 %v414
  %v2658 = vunpack.c.l.b16 %v415
  %v2659 = vunpack.c.h.b16 %v415
  %v2660 = vunpack.c.l.b16 %v416
  %v2661 = vunpack.c.h.b16 %v416
  %v2662 = vunpack.c.l.b16 %v417
  %v2663 = vunpack.c.h.b16 %v417
  %v2664 = vunpack.c.l.b16 %v418
  %v2665 = vunpack.c.h.b16 %v418
  %v2666 = vunpack.c.l.b16 %v419
  %v2667 = vunpack.c.h.b16 %v419
  %v2668 = vunpack.c.l.b16 %v420
  %v2669 = vunpack.c.h.b16 %v420
  %v2670 = vunpack.c.l.b16 %v421
  %v2671 = vunpack.c.h.b16 %v421
  %v2672 = vunpack.c.l.b16 %v422
  %v2673 = vunpack.c.h.b16 %v422
  %v2674 = vunpack.c.l.b16 %v423
  %v2675 = vunpack.c.h.b16 %v423
  %v2676 = vunpack.c.l.b16 %v424
  %v2677 = vunpack.c.h.b16 %v424
  %v2678 = vunpack.c.l.b16 %v425
  %v2679 = vunpack.c.h.b16 %v425
  %v2680 = vunpack.c.l.b16 %v426
  %v2681 = vunpack.c.h.b16 %v426
  %v2682 = vunpack.c.l.b16 %v427
  %v2683 = vunpack.c.h.b16 %v427
  %v2684 = vunpack.c.l.b16 %v428
  %v2685 = vunpack.c.h.b16 %v428
  %v2686 = vunpack.c.l.b16 %v429
  %v2687 = vunpack.c.h.b16 %v429
  %v2688 = vunpack.c.l.b16 %v430
  %v2689 = vunpack.c.h.b16 %v430
  %v2690 = vunpack.c.l.b16 %v431
  %v2691 = vunpack.c.h.b16 %v431
  %v2692 = vunpack.c.l.b16 %v432
  %v2693 = vunpack.c.h.b16 %v432
  %v2694 = vunpack.c.l.b16 %v433
  %v2695 = vunpack.c.h.b16 %v433
  %v2696 = vunpack.c.l.b16 %v434
  %v2697 = vunpack.c.h.b16 %v434
  %v2698 = vunpack.c.l.b16 %v435
  %v2699 = vunpack.c.h.b16 %v435
  %v2700 = vunpack.c.l.b16 %v436
  %v2701 = vunpack.c.h.b16 %v436
  %v2702 = vunpack.c.l.b16 %v437
  %v2703 = vunpack.c.h.b16 %v437
  %v2704 = vunpack.c.l.b16 %v438
  %v2705 = vunpack.c.h.b16 %v438
  %v2706 = vunpack.c.l.b16 %v439
  %v2707 = vunpack.c.h.b16 %v439
  %v2708 = vunpack.c.l.b16 %v440
  %v2709 = vunpack.c.h.b16 %v440
  %v2710 = vunpack.c.l.b16 %v441
  %v2711 = vunpack.c.h.b16 %v441
  %v2712 = vunpack.c.l.b16 %v442
  %v2713 = vunpack.c.h.b16 %v442
  %v2714 = vunpack.c.l.b16 %v443
  %v2715 = vunpack.c.h.b16 %v443
  %v2716 = vunpack.c.l.b16 %v444
  %v2717 = vunpack.c.h.b16 %v444
  %v2718 = vunpack.c.l.b16 %v445
  %v2719 = vunpack.c.h.b16 %v445
  %v2720 = vunpack.c.l.b16 %v446
  %v2721 = vunpack.c.h.b16 %v446
  %v2722 = vunpack.c.l.b16 %v447
  %v2723 = vunpack.c.h.b16 %v447
  %v2724 = vunpack.c.l.b16 %v448
  %v2725 = vunpack.c.h.b16 %v448
  %v2726 = vunpack.c.l.b16 %v449
  %v2727 = vunpack.c.h.b16 %v449
  %v2728 = vunpack.c.l.b16 %v450
  %v2729 = vunpack.c.h.b16 %v450
  %v2730 = vunpack.c.l.b16 %v451
  %v2731 = vunpack.c.h.b16 %v451
  %v2732 = vunpack.c.l.b16 %v452
  %v2733 = vunpack.c.h.b16 %v452
  %v2734 = vunpack.c.l.b16 %v453
  %v2735 = vunpack.c.h.b16 %v453
  %v2736 = vunpack.c.l.b16 %v454
  %v2737 = vunpack.c.h.b16 %v454
  %v2738 = vunpack.c.l.b16 %v455
  %v2739 = vunpack.c.h.b16 %v455
  %v2740 = vunpack.c.l.b16 %v456
  %v2741 = vunpack.c.h.b16 %v456
  %v2742 = vunpack.c.l.b16 %v457
  %v2743 = vunpack.c.h.b16 %v457
  %v2744 = vunpack.c.l.b16 %v458
  %v2745 = vunpack.c.h.b16 %v458
  %v2746 = vunpack.c.l.b16 %v459
  %v2747 = vunpack.c.h.b16 %v459
  %v2748 = vunpack.c.l.b16 %v460
  %v2749 = vunpack.c.h.b16 %v460
  %v2750 = vunpack.c.l.b16 %v461
  %v2751 = vunpack.c.h.b16 %v461
  %v2752 = vunpack.c.l.b16 %v462
  %v2753 = vunpack.c.h.b16 %v462
  %v2754 = vunpack.c.l.b16 %v463
  %v2755 = vunpack.c.h.b16 %v463
  %v2756 = vunpack.c.l.b16 %v464
  %v2757 = vunpack.c.h.b16 %v464
  %v2758 = vunpack.c.l.b16 %v465
  %v2759 = vunpack.c.h.b16 %v465
  %v2760 = vunpack.c.l.b16 %v466
  %v2761 = vunpack.c.h.b16 %v466
  %v2762 = vunpack.c.l.b16 %v467
  %v2763 = vunpack.c.h.b16 %v467
  %v2764 = vunpack.c.l.b16 %v468
  %v2765 = vunpack.c.h.b16 %v468
  %v2766 = vunpack.c.l.b16 %v469
  %v2767 = vunpack.c.h.b16 %v469
  %v2768 = vunpack.c.l.b16 %v470
  %v2769 = vunpack.c.h.b16 %v470
  %v2770 = vunpack.c.l.b16 %v471
  %v2771 = vunpack.c.h.b16 %v471
  %v2772 = vunpack.c.l.b16 %v472
  %v2773 = vunpack.c.h.b16 %v472
  %v2774 = vunpack.c.l.b16 %v473
  %v2775 = vunpack.c.h.b16 %v473
  %v2776 = vunpack.c.l.b16 %v474
  %v2777 = vunpack.c.h.b16 %v474
  %v2778 = vunpack.c.l.b16 %v475
  %v2779 = vunpack.c.h.b16 %v475
  %v2780 = vunpack.c.l.b16 %v476
  %v2781 = vunpack.c.h.b16 %v476
  %v2782 = vunpack.c.l.b16 %v477
  %v2783 = vunpack.c.h.b16 %v477
  %v2784 = vunpack.c.l.b16 %v478
  %v2785 = vunpack.c.h.b16 %v478
  %v2786 = vunpack.c.l.b16 %v479
  %v2787 = vunpack.c.h.b16 %v479
  %v2788 = vunpack.c.l.b16 %v480
  %v2789 = vunpack.c.h.b16 %v480
  %v2790 = vunpack.c.l.b16 %v481
  %v2791 = vunpack.c.h.b16 %v481
  %v2792 = vunpack.c.l.b16 %v482
  %v2793 = vunpack.c.h.b16 %v482
  %v2794 = vunpack.c.l.b16 %v483
  %v2795 = vunpack.c.h.b16 %v483
  %v2796 = vunpack.c.l.b16 %v484
  %v2797 = vunpack.c.h.b16 %v484
  %v2798 = vunpack.c.l.b16 %v485
  %v2799 = vunpack.c.h.b16 %v485
  %v2800 = vunpack.c.l.b16 %v486
  %v2801 = vunpack.c.h.b16 %v486
  %v2802 = vunpack.c.l.b16 %v487
  %v2803 = vunpack.c.h.b16 %v487
  %v2804 = vunpack.c.l.b16 %v488
  %v2805 = vunpack.c.h.b16 %v488
  %v2806 = vunpack.c.l.b16 %v489
  %v2807 = vunpack.c.h.b16 %v489
  %v2808 = vunpack.c.l.b16 %v490
  %v2809 = vunpack.c.h.b16 %v490
  %v2810 = vunpack.c.l.b16 %v491
  %v2811 = vunpack.c.h.b16 %v491
  %v2812 = vunpack.c.l.b16 %v492
  %v2813 = vunpack.c.h.b16 %v492
  %v2814 = vunpack.c.l.b16 %v493
  %v2815 = vunpack.c.h.b16 %v493
  %v2816 = vunpack.c.l.b16 %v494
  %v2817 = vunpack.c.h.b16 %v494
  %v2818 = vunpack.c.l.b16 %v495
  %v2819 = vunpack.c.h.b16 %v495
  %v2820 = vunpack.c.l.b16 %v496
  %v2821 = vunpack.c.h.b16 %v496
  %v2822 = vunpack.c.l.b16 %v497
  %v2823 = vunpack.c.h.b16 %v497
  %v2824 = vunpack.c.l.b16 %v498
  %v2825 = vunpack.c.h.b16 %v498
  %v2826 = vunpack.c.l.b16 %v499
  %v2827 = vunpack.c.h.b16 %v499
  %v2828 = vunpack.c.l.b16 %v500
  %v2829 = vunpack.c.h.b16 %v500
  %v2830 = vunpack.c.l.b16 %v501
  %v2831 = vunpack.c.h.b16 %v501
  %v2832 = vunpack.c.l.b16 %v502
  %v2833 = vunpack.c.h.b16 %v502
  %v2834 = vunpack.c.l.b16 %v503
  %v2835 = vunpack.c.h.b16 %v503
  %v2836 = vunpack.c.l.b16 %v504
  %v2837 = vunpack.c.h.b16 %v504
  %v2838 = vunpack.c.l.b16 %v505
  %v2839 = vunpack.c.h.b16 %v505
  %v2840 = vunpack.c.l.b16 %v506
  %v2841 = vunpack.c.h.b16 %v506
  %v2842 = vunpack.c.l.b16 %v507
  %v2843 = vunpack.c.h.b16 %v507
  %v2844 = vunpack.c.l.b16 %v508
  %v2845 = vunpack.c.h.b16 %v508
  %v2846 = vunpack.c.l.b16 %v509
  %v2847 = vunpack.c.h.b16 %v509
  %v2848 = vunpack.c.l.b16 %v510
  %v2849 = vunpack.c.h.b16 %v510
  %v2850 = vunpack.c.l.b16 %v511
  %v2851 = vunpack.c.h.b16 %v511
  %v2852 = vunpack.c.l.b16 %v512
  %v2853 = vunpack.c.h.b16 %v512
  %v2854 = vunpack.c.l.b16 %v513
  %v2855 = vunpack.c.h.b16 %v513
  %v2856 = vunpack.c.l.b16 %v514
  %v2857 = vunpack.c.h.b16 %v514
  %v2858 = vunpack.c.l.b16 %v515
  %v2859 = vunpack.c.h.b16 %v515
  %v2860 = vunpack.c.l.b16 %v516
  %v2861 = vunpack.c.h.b16 %v516
  %v2862 = vunpack.c.l.b16 %v517
  %v2863 = vunpack.c.h.b16 %v517
  %v2864 = vunpack.c.l.b16 %v518
  %v2865 = vunpack.c.h.b16 %v518
  %v2866 = vunpack.c.l.b16 %v519
  %v2867 = vunpack.c.h.b16 %v519
  %v2868 = vunpack.c.l.b16 %v520
  %v2869 = vunpack.c.h.b16 %v520
  %v2870 = vunpack.c.l.b16 %v521
  %v2871 = vunpack.c.h.b16 %v521
  %v2872 = vunpack.c.l.b16 %v522
  %v2873 = vunpack.c.h.b16 %v522
  %v2874 = vunpack.c.l.b16 %v523
  %v2875 = vunpack.c.h.b16 %v523
  %v2876 = vunpack.c.l.b16 %v524
  %v2877 = vunpack.c.h.b16 %v524
  %v2878 = vunpack.c.l.b16 %v525
  %v2879 = vunpack.c.h.b16 %v525
  %v2880 = vunpack.c.l.b16 %v526
  %v2881 = vunpack.c.h.b16 %v526
  %v2882 = vunpack.c.l.b16 %v527
  %v2883 = vunpack.c.h.b16 %v527
  %v2884 = vunpack.c.l.b16 %v528
  %v2885 = vunpack.c.h.b16 %v528
  %v2886 = vunpack.c.l.b16 %v529
  %v2887 = vunpack.c.h.b16 %v529
  %v2888 = vunpack.c.l.b16 %v530
  %v2889 = vunpack.c.h.b16 %v530
  %v2890 = vunpack.c.l.b16 %v531
  %v2891 = vunpack.c.h.b16 %v531
  %v2892 = vunpack.c.l.b16 %v532
  %v2893 = vunpack.c.h.b16 %v532
  %v2894 = vunpack.c.l.b16 %v533
  %v2895 = vunpack.c.h.b16 %v533
  %v2896 = vunpack.c.l.b16 %v534
  %v2897 = vunpack.c.h.b16 %v534
  %v2898 = vunpack.c.l.b16 %v535
  %v2899 = vunpack.c.h.b16 %v535
  %v2900 = vunpack.c.l.b16 %v536
  %v2901 = vunpack.c.h.b16 %v536
  %v2902 = vunpack.c.l.b16 %v537
  %v2903 = vunpack.c.h.b16 %v537
  %v2904 = vunpack.c.l.b16 %v538
  %v2905 = vunpack.c.h.b16 %v538
  %v2906 = vunpack.c.l.b16 %v539
  %v2907 = vunpack.c.h.b16 %v539
  %v2908 = vunpack.c.l.b16 %v540
  %v2909 = vunpack.c.h.b16 %v540
  %v2910 = vunpack.c.l.b16 %v541
  %v2911 = vunpack.c.h.b16 %v541
  %v2912 = vunpack.c.l.b16 %v542
  %v2913 = vunpack.c.h.b16 %v542
  %v2914 = vunpack.c.l.b16 %v543
  %v2915 = vunpack.c.h.b16 %v543
  %v2916 = vunpack.c.l.b16 %v544
  %v2917 = vunpack.c.h.b16 %v544
  %v2918 = vunpack.c.l.b16 %v545
  %v2919 = vunpack.c.h.b16 %v545
  %v2920 = vunpack.c.l.b16 %v546
  %v2921 = vunpack.c.h.b16 %v546
  %v2922 = vunpack.c.l.b16 %v547
  %v2923 = vunpack.c.h.b16 %v547
  %v2924 = vunpack.c.l.b16 %v548
  %v2925 = vunpack.c.h.b16 %v548
  %v2926 = vunpack.c.l.b16 %v549
  %v2927 = vunpack.c.h.b16 %v549
  %v2928 = vunpack.c.l.b16 %v550
  %v2929 = vunpack.c.h.b16 %v550
  %v2930 = vunpack.c.l.b16 %v551
  %v2931 = vunpack.c.h.b16 %v551
  %v2932 = vunpack.c.l.b16 %v552
  %v2933 = vunpack.c.h.b16 %v552
  %v2934 = vunpack.c.l.b16 %v553
  %v2935 = vunpack.c.h.b16 %v553
  %v2936 = vunpack.c.l.b16 %v554
  %v2937 = vunpack.c.h.b16 %v554
  %v2938 = vunpack.c.l.b16 %v555
  %v2939 = vunpack.c.h.b16 %v555
  %v2940 = vunpack.c.l.b16 %v556
  %v2941 = vunpack.c.h.b16 %v556
  %v2942 = vunpack.c.l.b16 %v557
  %v2943 = vunpack.c.h.b16 %v557
  %v2944 = vunpack.c.l.b16 %v558
  %v2945 = vunpack.c.h.b16 %v558
  %v2946 = vunpack.c.l.b16 %v559
  %v2947 = vunpack.c.h.b16 %v559
  %v2948 = vunpack.c.l.b16 %v560
  %v2949 = vunpack.c.h.b16 %v560
  %v2950 = vunpack.c.l.b16 %v561
  %v2951 = vunpack.c.h.b16 %v561
  %v2952 = vunpack.c.l.b16 %v562
  %v2953 = vunpack.c.h.b16 %v562
  %v2954 = vunpack.c.l.b16 %v563
  %v2955 = vunpack.c.h.b16 %v563
  %v2956 = vunpack.c.l.b16 %v564
  %v2957 = vunpack.c.h.b16 %v564
  %v2958 = vunpack.c.l.b16 %v565
  %v2959 = vunpack.c.h.b16 %v565
  %v2960 = vunpack.c.l.b16 %v566
  %v2961 = vunpack.c.h.b16 %v566
  %v2962 = vunpack.c.l.b16 %v567
  %v2963 = vunpack.c.h.b16 %v567
  %v2964 = vunpack.c.l.b16 %v568
  %v2965 = vunpack.c.h.b16 %v568
  %v2966 = vunpack.c.l.b16 %v569
  %v2967 = vunpack.c.h.b16 %v569
  %v2968 = vunpack.c.l.b16 %v570
  %v2969 = vunpack.c.h.b16 %v570
  %v2970 = vunpack.c.l.b16 %v571
  %v2971 = vunpack.c.h.b16 %v571
  %v2972 = vunpack.c.l.b16 %v572
  %v2973 = vunpack.c.h.b16 %v572
  %v2974 = vunpack.c.l.b16 %v573
  %v2975 = vunpack.c.h.b16 %v573
  %v2976 = vunpack.c.l.b16 %v574
  %v2977 = vunpack.c.h.b16 %v574
  %v2978 = vunpack.c.l.b16 %v575
  %v2979 = vunpack.c.h.b16 %v575
  %v2980 = vunpack.c.l.b16 %v576
  %v2981 = vunpack.c.h.b16 %v576
  %v2982 = vunpack.c.l.b16 %v577
  %v2983 = vunpack.c.h.b16 %v577
  %v2984 = vunpack.c.l.b16 %v578
  %v2985 = vunpack.c.h.b16 %v578
  %v2986 = vunpack.c.l.b16 %v579
  %v2987 = vunpack.c.h.b16 %v579
  %v2988 = vunpack.c.l.b16 %v580
  %v2989 = vunpack.c.h.b16 %v580
  %v2990 = vunpack.c.l.b16 %v581
  %v2991 = vunpack.c.h.b16 %v581
  %v2992 = vunpack.c.l.b16 %v582
  %v2993 = vunpack.c.h.b16 %v582
  %v2994 = vunpack.c.l.b16 %v583
  %v2995 = vunpack.c.h.b16 %v583
  %v2996 = vunpack.c.l.b16 %v584
  %v2997 = vunpack.c.h.b16 %v584
  %v2998 = vunpack.c.l.b16 %v585
  %v2999 = vunpack.c.h.b16 %v585
  %v3000 = vunpack.c.l.b16 %v586
  %v3001 = vunpack.c.h.b16 %v586
  %v3002 = vunpack.c.l.b16 %v587
  %v3003 = vunpack.c.h.b16 %v587
  %v3004 = vunpack.c.l.b16 %v588
  %v3005 = vunpack.c.h.b16 %v588
  %v3006 = vunpack.c.l.b16 %v589
  %v3007 = vunpack.c.h.b16 %v589
  %v3008 = vunpack.c.l.b16 %v590
  %v3009 = vunpack.c.h.b16 %v590
  %v3010 = vunpack.c.l.b16 %v591
  %v3011 = vunpack.c.h.b16 %v591
  %v3012 = vunpack.c.l.b16 %v592
  %v3013 = vunpack.c.h.b16 %v592
  %v3014 = vunpack.c.l.b16 %v593
  %v3015 = vunpack.c.h.b16 %v593
  %v3016 = vunpack.c.l.b16 %v594
  %v3017 = vunpack.c.h.b16 %v594
  %v3018 = vunpack.c.l.b16 %v595
  %v3019 = vunpack.c.h.b16 %v595
  %v3020 = vunpack.c.l.b16 %v596
  %v3021 = vunpack.c.h.b16 %v596
  %v3022 = vunpack.c.l.b16 %v597
  %v3023 = vunpack.c.h.b16 %v597
  %v3024 = vunpack.c.l.b16 %v598
  %v3025 = vunpack.c.h.b16 %v598
  %v3026 = vunpack.c.l.b16 %v599
  %v3027 = vunpack.c.h.b16 %v599
  %v3028 = vunpack.c.l.b16 %v600
  %v3029 = vunpack.c.h.b16 %v600
  %v3030 = vunpack.c.l.b16 %v601
  %v3031 = vunpack.c.h.b16 %v601
  %v3032 = vunpack.c.l.b16 %v602
  %v3033 = vunpack.c.h.b16 %v602
  %v3034 = vunpack.c.l.b16 %v603
  %v3035 = vunpack.c.h.b16 %v603
  %v3036 = vunpack.c.l.b16 %v604
  %v3037 = vunpack.c.h.b16 %v604
  %v3038 = vunpack.c.l.b16 %v605
  %v3039 = vunpack.c.h.b16 %v605
  %v3040 = vunpack.c.l.b16 %v606
  %v3041 = vunpack.c.h.b16 %v606
  %v3042 = vunpack.c.l.b16 %v607
  %v3043 = vunpack.c.h.b16 %v607
  %v3044 = vunpack.c.l.b16 %v608
  %v3045 = vunpack.c.h.b16 %v608
  %v3046 = vunpack.c.l.b16 %v609
  %v3047 = vunpack.c.h.b16 %v609
  %v3048 = vunpack.c.l.b16 %v610
  %v3049 = vunpack.c.h.b16 %v610
  %v3050 = vunpack.c.l.b16 %v611
  %v3051 = vunpack.c.h.b16 %v611
  %v3052 = vunpack.c.l.b16 %v612
  %v3053 = vunpack.c.h.b16 %v612
  %v3054 = vunpack.c.l.b16 %v613
  %v3055 = vunpack.c.h.b16 %v613
  %v3056 = vunpack.c.l.b16 %v614
  %v3057 = vunpack.c.h.b16 %v614
  %v3058 = vunpack.c.l.b16 %v615
  %v3059 = vunpack.c.h.b16 %v615
  %v3060 = vunpack.c.l.b16 %v616
  %v3061 = vunpack.c.h.b16 %v616
  %v3062 = vunpack.c.l.b16 %v617
  %v3063 = vunpack.c.h.b16 %v617
  %v3064 = vunpack.c.l.b16 %v618
  %v3065 = vunpack.c.h.b16 %v618
  %v3066 = vunpack.c.l.b16 %v619
  %v3067 = vunpack.c.h.b16 %v619
  %v3068 = vunpack.c.l.b16 %v620
  %v3069 = vunpack.c.h.b16 %v620
  %v3070 = vunpack.c.l.b16 %v621
  %v3071 = vunpack.c.h.b16 %v621
  %v3072 = vunpack.c.l.b16 %v622
  %v3073 = vunpack.c.h.b16 %v622
  %v3074 = vunpack.c.l.b16 %v623
  %v3075 = vunpack.c.h.b16 %v623
  %v3076 = vunpack.c.l.b16 %v624
  %v3077 = vunpack.c.h.b16 %v624
  %v3078 = vunpack.c.l.b16 %v625
  %v3079 = vunpack.c.h.b16 %v625
  %v3080 = vunpack.c.l.b16 %v626
  %v3081 = vunpack.c.h.b16 %v626
  %v3082 = vunpack.c.l.b16 %v627
  %v3083 = vunpack.c.h.b16 %v627
  %v3084 = vunpack.c.l.b16 %v628
  %v3085 = vunpack.c.h.b16 %v628
  %v3086 = vunpack.c.l.b16 %v629
  %v3087 = vunpack.c.h.b16 %v629
  %v3088 = vunpack.c.l.b16 %v630
  %v3089 = vunpack.c.h.b16 %v630
  %v3090 = vunpack.c.l.b16 %v631
  %v3091 = vunpack.c.h.b16 %v631
  %v3092 = vunpack.c.l.b16 %v632
  %v3093 = vunpack.c.h.b16 %v632
  %v3094 = vunpack.c.l.b16 %v633
  %v3095 = vunpack.c.h.b16 %v633
  %v3096 = vunpack.c.l.b16 %v634
  %v3097 = vunpack.c.h.b16 %v634
  %v3098 = vunpack.c.l.b16 %v635
  %v3099 = vunpack.c.h.b16 %v635
  %v3100 = vunpack.c.l.b16 %v636
  %v3101 = vunpack.c.h.b16 %v636
  %v3102 = vunpack.c.l.b16 %v637
  %v3103 = vunpack.c.h.b16 %v637
  %v3104 = vunpack.c.l.b16 %v638
  %v3105 = vunpack.c.h.b16 %v638
  %v3106 = vunpack.c.l.b16 %v639
  %v3107 = vunpack.c.h.b16 %v639
  %v3108 = vunpack.c.l.b16 %v640
  %v3109 = vunpack.c.h.b16 %v640
  %v3110 = vunpack.c.l.b16 %v641
  %v3111 = vunpack.c.h.b16 %v641
  %v3112 = vunpack.c.l.b16 %v642
  %v3113 = vunpack.c.h.b16 %v642
  %v3114 = vunpack.c.l.b16 %v643
  %v3115 = vunpack.c.h.b16 %v643
  %v3116 = vunpack.c.l.b16 %v644
  %v3117 = vunpack.c.h.b16 %v644
  %v3118 = vunpack.c.l.b16 %v645
  %v3119 = vunpack.c.h.b16 %v645
  %v3120 = vunpack.c.l.b16 %v646
  %v3121 = vunpack.c.h.b16 %v646
  %v3122 = vunpack.c.l.b16 %v647
  %v3123 = vunpack.c.h.b16 %v647
  %v3124 = vunpack.c.l.b16 %v648
  %v3125 = vunpack.c.h.b16 %v648
  %v3126 = vunpack.c.l.b16 %v649
  %v3127 = vunpack.c.h.b16 %v649
  %v3128 = vunpack.c.l.b16 %v650
  %v3129 = vunpack.c.h.b16 %v650
  %v3130 = vunpack.c.l.b16 %v651
  %v3131 = vunpack.c.h.b16 %v651
  %v3132 = vunpack.c.l.b16 %v652
  %v3133 = vunpack.c.h.b16 %v652
  %v3134 = vunpack.c.l.b16 %v653
  %v3135 = vunpack.c.h.b16 %v653
  %v3136 = vunpack.c.l.b16 %v654
  %v3137 = vunpack.c.h.b16 %v654
  %v3138 = vunpack.c.l.b16 %v655
  %v3139 = vunpack.c.h.b16 %v655
  %v3140 = vunpack.c.l.b16 %v656
  %v3141 = vunpack.c.h.b16 %v656
  %v3142 = vunpack.c.l.b16 %v657
  %v3143 = vunpack.c.h.b16 %v657
  %v3144 = vunpack.c.l.b16 %v658
  %v3145 = vunpack.c.h.b16 %v658
  %v3146 = vunpack.c.l.b16 %v659
  %v3147 = vunpack.c.h.b16 %v659
  %v3148 = vunpack.c.l.b16 %v660
  %v3149 = vunpack.c.h.b16 %v660
  %v3150 = vunpack.c.l.b16 %v661
  %v3151 = vunpack.c.h.b16 %v661
  %v3152 = vunpack.c.l.b16 %v662
  %v3153 = vunpack.c.h.b16 %v662
  %v3154 = vunpack.c.l.b16 %v663
  %v3155 = vunpack.c.h.b16 %v663
  %v3156 = vunpack.c.l.b16 %v664
  %v3157 = vunpack.c.h.b16 %v664
  %v3158 = vunpack.c.l.b16 %v665
  %v3159 = vunpack.c.h.b16 %v665
  %v3160 = vunpack.c.l.b16 %v666
  %v3161 = vunpack.c.h.b16 %v666
  %v3162 = vunpack.c.l.b16 %v667
  %v3163 = vunpack.c.h.b16 %v667
  %v3164 = vunpack.c.l.b16 %v668
  %v3165 = vunpack.c.h.b16 %v668
  %v3166 = vunpack.c.l.b16 %v669
  %v3167 = vunpack.c.h.b16 %v669
  %v3168 = vunpack.c.l.b16 %v670
  %v3169 = vunpack.c.h.b16 %v670
  %v3170 = vunpack.c.l.b16 %v671
  %v3171 = vunpack.c.h.b16 %v671
  %v3172 = vunpack.c.l.b16 %v672
  %v3173 = vunpack.c.h.b16 %v672
  %v3174 = vunpack.c.l.b16 %v673
  %v3175 = vunpack.c.h.b16 %v673
  %v3176 = vunpack.c.l.b16 %v674
  %v3177 = vunpack.c.h.b16 %v674
  %v3178 = vunpack.c.l.b16 %v675
  %v3179 = vunpack.c.h.b16 %v675
  %v3180 = vunpack.c.l.b16 %v676
  %v3181 = vunpack.c.h.b16 %v676
  %v3182 = vunpack.c.l.b16 %v677
  %v3183 = vunpack.c.h.b16 %v677
  %v3184 = vunpack.c.l.b16 %v678
  %v3185 = vunpack.c.h.b16 %v678
  %v3186 = vunpack.c.l.b16 %v679
  %v3187 = vunpack.c.h.b16 %v679
  %v3188 = vunpack.c.l.b16 %v680
  %v3189 = vunpack.c.h.b16 %v680
  %v3190 = vunpack.c.l.b16 %v681
  %v3191 = vunpack.c.h.b16 %v681
  %v3192 = vunpack.c.l.b16 %v682
  %v3193 = vunpack.c.h.b16 %v682
  %v3194 = vunpack.c.l.b16 %v683
  %v3195 = vunpack.c.h.b16 %v683
  %v3196 = vunpack.c.l.b16 %v684
  %v3197 = vunpack.c.h.b16 %v684
  %v3198 = vunpack.c.l.b16 %v685
  %v3199 = vunpack.c.h.b16 %v685
  %v3200 = vunpack.c.l.b16 %v686
  %v3201 = vunpack.c.h.b16 %v686
  %v3202 = vunpack.c.l.b16 %v687
  %v3203 = vunpack.c.h.b16 %v687
  %v3204 = vunpack.c.l.b16 %v688
  %v3205 = vunpack.c.h.b16 %v688
  %v3206 = vunpack.c.l.b16 %v689
  %v3207 = vunpack.c.h.b16 %v689
  %v3208 = vunpack.c.l.b16 %v690
  %v3209 = vunpack.c.h.b16 %v690
  %v3210 = vunpack.c.l.b16 %v691
  %v3211 = vunpack.c.h.b16 %v691
  %v3212 = vunpack.c.l.b16 %v692
  %v3213 = vunpack.c.h.b16 %v692
  %v3214 = vunpack.c.l.b16 %v693
  %v3215 = vunpack.c.h.b16 %v693
  %v3216 = vunpack.c.l.b16 %v694
  %v3217 = vunpack.c.h.b16 %v694
  %v3218 = vunpack.c.l.b16 %v695
  %v3219 = vunpack.c.h.b16 %v695
  %v3220 = vunpack.c.l.b16 %v696
  %v3221 = vunpack.c.h.b16 %v696
  %v3222 = vunpack.c.l.b16 %v697
  %v3223 = vunpack.c.h.b16 %v697
  %v3224 = vunpack.c.l.b16 %v698
  %v3225 = vunpack.c.h.b16 %v698
  %v3226 = vunpack.c.l.b16 %v699
  %v3227 = vunpack.c.h.b16 %v699
  %v3228 = vunpack.c.l.b16 %v700
  %v3229 = vunpack.c.h.b16 %v700
  %v3230 = vunpack.c.l.b16 %v701
  %v3231 = vunpack.c.h.b16 %v701
  %v3232 = vunpack.c.l.b16 %v702
  %v3233 = vunpack.c.h.b16 %v702
  %v3234 = vunpack.c.l.b16 %v703
  %v3235 = vunpack.c.h.b16 %v703
  %v3236 = vunpack.c.l.b16 %v704
  %v3237 = vunpack.c.h.b16 %v704
  %v3238 = vunpack.c.l.b16 %v705
  %v3239 = vunpack.c.h.b16 %v705
  %v3240 = vunpack.c.l.b16 %v706
  %v3241 = vunpack.c.h.b16 %v706
  %v3242 = vunpack.c.l.b16 %v707
  %v3243 = vunpack.c.h.b16 %v707
  %v3244 = vunpack.c.l.b16 %v708
  %v3245 = vunpack.c.h.b16 %v708
  %v3246 = vunpack.c.l.b16 %v709
  %v3247 = vunpack.c.h.b16 %v709
  %v3248 = vunpack.c.l.b16 %v710
  %v3249 = vunpack.c.h.b16 %v710
  %v3250 = vunpack.c.l.b16 %v711
  %v3251 = vunpack.c.h.b16 %v711
  %v3252 = vunpack.c.l.b16 %v712
  %v3253 = vunpack.c.h.b16 %v712
  %v3254 = vunpack.c.l.b16 %v713
  %v3255 = vunpack.c.h.b16 %v713
  %v3256 = vunpack.c.l.b16 %v714
  %v3257 = vunpack.c.h.b16 %v714
  %v3258 = vunpack.c.l.b16 %v715
  %v3259 = vunpack.c.h.b16 %v715
  %v3260 = vunpack.c.l.b16 %v716
  %v3261 = vunpack.c.h.b16 %v716
  %v3262 = vunpack.c.l.b16 %v717
  %v3263 = vunpack.c.h.b16 %v717
  %v3264 = vunpack.c.l.b16 %v718
  %v3265 = vunpack.c.h.b16 %v718
  %v3266 = vunpack.c.l.b16 %v719
  %v3267 = vunpack.c.h.b16 %v719
  %v3268 = vunpack.c.l.b16 %v720
  %v3269 = vunpack.c.h.b16 %v720
  %v3270 = vunpack.c.l.b16 %v721
  %v3271 = vunpack.c.h.b16 %v721
  %v3272 = vunpack.c.l.b16 %v722
  %v3273 = vunpack.c.h.b16 %v722
  %v3274 = vunpack.c.l.b16 %v723
  %v3275 = vunpack.c.h.b16 %v723
  %v3276 = vunpack.c.l.b16 %v724
  %v3277 = vunpack.c.h.b16 %v724
  %v3278 = vunpack.c.l.b16 %v725
  %v3279 = vunpack.c.h.b16 %v725
  %v3280 = vunpack.c.l.b16 %v726
  %v3281 = vunpack.c.h.b16 %v726
  %v3282 = vunpack.c.l.b16 %v727
  %v3283 = vunpack.c.h.b16 %v727
  %v3284 = vunpack.c.l.b16 %v728
  %v3285 = vunpack.c.h.b16 %v728
  %v3286 = vunpack.c.l.b16 %v729
  %v3287 = vunpack.c.h.b16 %v729
  %v3288 = vunpack.c.l.b16 %v730
  %v3289 = vunpack.c.h.b16 %v730
  %v3290 = vunpack.c.l.b16 %v731
  %v3291 = vunpack.c.h.b16 %v731
  %v3292 = vunpack.c.l.b16 %v732
  %v3293 = vunpack.c.h.b16 %v732
  %v3294 = vunpack.c.l.b16 %v733
  %v3295 = vunpack.c.h.b16 %v733
  %v3296 = vunpack.c.l.b16 %v734
  %v3297 = vunpack.c.h.b16 %v734
  %v3298 = vunpack.c.l.b16 %v735
  %v3299 = vunpack.c.h.b16 %v735
  %v3300 = vunpack.c.l.b16 %v736
  %v3301 = vunpack.c.h.b16 %v736
  %v3302 = vunpack.c.l.b16 %v737
  %v3303 = vunpack.c.h.b16 %v737
  %v3304 = vunpack.c.l.b16 %v738
  %v3305 = vunpack.c.h.b16 %v738
  %v3306 = vunpack.c.l.b16 %v739
  %v3307 = vunpack.c.h.b16 %v739
  %v3308 = vunpack.c.l.b16 %v740
  %v3309 = vunpack.c.h.b16 %v740
  %v3310 = vunpack.c.l.b16 %v741
  %v3311 = vunpack.c.h.b16 %v741
  %v3312 = vunpack.c.l.b16 %v742
  %v3313 = vunpack.c.h.b16 %v742
  %v3314 = vunpack.c.l.b16 %v743
  %v3315 = vunpack.c.h.b16 %v743
  %v3316 = vunpack.c.l.b16 %v744
  %v3317 = vunpack.c.h.b16 %v744
  %v3318 = vunpack.c.l.b16 %v745
  %v3319 = vunpack.c.h.b16 %v745
  %v3320 = vunpack.c.l.b16 %v746
  %v3321 = vunpack.c.h.b16 %v746
  %v3322 = vunpack.c.l.b16 %v747
  %v3323 = vunpack.c.h.b16 %v747
  %v3324 = vunpack.c.l.b16 %v748
  %v3325 = vunpack.c.h.b16 %v748
  %v3326 = vunpack.c.l.b16 %v749
  %v3327 = vunpack.c.h.b16 %v749
  %v3328 = vunpack.c.l.b16 %v750
  %v3329 = vunpack.c.h.b16 %v750
  %v3330 = vunpack.c.l.b16 %v751
  %v3331 = vunpack.c.h.b16 %v751
  %v3332 = vunpack.c.l.b16 %v752
  %v3333 = vunpack.c.h.b16 %v752
  %v3334 = vunpack.c.l.b16 %v753
  %v3335 = vunpack.c.h.b16 %v753
  %v3336 = vunpack.c.l.b16 %v754
  %v3337 = vunpack.c.h.b16 %v754
  %v3338 = vunpack.c.l.b16 %v755
  %v3339 = vunpack.c.h.b16 %v755
  %v3340 = vunpack.c.l.b16 %v756
  %v3341 = vunpack.c.h.b16 %v756
  %v3342 = vunpack.c.l.b16 %v757
  %v3343 = vunpack.c.h.b16 %v757
  %v3344 = vunpack.c.l.b16 %v758
  %v3345 = vunpack.c.h.b16 %v758
  %v3346 = vunpack.c.l.b16 %v759
  %v3347 = vunpack.c.h.b16 %v759
  %v3348 = vunpack.c.l.b16 %v760
  %v3349 = vunpack.c.h.b16 %v760
  %v3350 = vunpack.c.l.b16 %v761
  %v3351 = vunpack.c.h.b16 %v761
  %v3352 = vunpack.c.l.b16 %v762
  %v3353 = vunpack.c.h.b16 %v762
  %v3354 = vunpack.c.l.b16 %v763
  %v3355 = vunpack.c.h.b16 %v763
  %v3356 = vunpack.c.l.b16 %v764
  %v3357 = vunpack.c.h.b16 %v764
  %v3358 = vunpack.c.l.b16 %v765
  %v3359 = vunpack.c.h.b16 %v765
  %v3360 = vunpack.c.l.b16 %v766
  %v3361 = vunpack.c.h.b16 %v766
  %v3362 = vunpack.c.l.b16 %v767
  %v3363 = vunpack.c.h.b16 %v767
  %v3364 = vunpack.c.l.b16 %v768
  %v3365 = vunpack.c.h.b16 %v768
  %v3366 = vunpack.c.l.b16 %v769
  %v3367 = vunpack.c.h.b16 %v769
  %v3368 = vunpack.c.l.b16 %v770
  %v3369 = vunpack.c.h.b16 %v770
  %v3370 = vunpack.c.l.b16 %v771
  %v3371 = vunpack.c.h.b16 %v771
  %v3372 = vunpack.c.l.b16 %v772
  %v3373 = vunpack.c.h.b16 %v772
  %v3374 = vunpack.c.l.b16 %v773
  %v3375 = vunpack.c.h.b16 %v773
  %v3376 = vunpack.c.l.b16 %v774
  %v3377 = vunpack.c.h.b16 %v774
  %v3378 = vunpack.c.l.b16 %v775
  %v3379 = vunpack.c.h.b16 %v775
  %v3380 = vunpack.c.l.b16 %v776
  %v3381 = vunpack.c.h.b16 %v776
  %v3382 = vunpack.c.l.b16 %v777
  %v3383 = vunpack.c.h.b16 %v777
  %v3384 = vunpack.c.l.b16 %v778
  %v3385 = vunpack.c.h.b16 %v778
  %v3386 = vunpack.c.l.b16 %v779
  %v3387 = vunpack.c.h.b16 %v779
  %v3388 = vunpack.c.l.b16 %v780
  %v3389 = vunpack.c.h.b16 %v780
  %v3390 = vunpack.c.l.b16 %v781
  %v3391 = vunpack.c.h.b16 %v781
  %v3392 = vunpack.c.l.b16 %v782
  %v3393 = vunpack.c.h.b16 %v782
  %v3394 = vunpack.c.l.b16 %v783
  %v3395 = vunpack.c.h.b16 %v783
  %v3396 = vunpack.c.l.b16 %v784
  %v3397 = vunpack.c.h.b16 %v784
  %v3398 = vunpack.c.l.b16 %v785
  %v3399 = vunpack.c.h.b16 %v785
  %v3400 = vunpack.c.l.b16 %v786
  %v3401 = vunpack.c.h.b16 %v786
  %v3402 = vunpack.c.l.b16 %v787
  %v3403 = vunpack.c.h.b16 %v787
  %v3404 = vunpack.c.l.b16 %v788
  %v3405 = vunpack.c.h.b16 %v788
  %v3406 = vunpack.c.l.b16 %v789
  %v3407 = vunpack.c.h.b16 %v789
  %v3408 = vunpack.c.l.b16 %v790
  %v3409 = vunpack.c.h.b16 %v790
  %v3410 = vunpack.c.l.b16 %v791
  %v3411 = vunpack.c.h.b16 %v791
  %v3412 = vunpack.c.l.b16 %v792
  %v3413 = vunpack.c.h.b16 %v792
  %v3414 = vunpack.c.l.b16 %v793
  %v3415 = vunpack.c.h.b16 %v793
  %v3416 = vunpack.c.l.b16 %v794
  %v3417 = vunpack.c.h.b16 %v794
  %v3418 = vunpack.c.l.b16 %v795
  %v3419 = vunpack.c.h.b16 %v795
  %v3420 = vunpack.c.l.b16 %v796
  %v3421 = vunpack.c.h.b16 %v796
  %v3422 = vunpack.c.l.b16 %v797
  %v3423 = vunpack.c.h.b16 %v797
  %v3424 = vunpack.c.l.b16 %v798
  %v3425 = vunpack.c.h.b16 %v798
  %v3426 = vunpack.c.l.b16 %v799
  %v3427 = vunpack.c.h.b16 %v799
  %v3428 = vunpack.c.l.b16 %v800
  %v3429 = vunpack.c.h.b16 %v800
  %v3430 = vunpack.c.l.b16 %v801
  %v3431 = vunpack.c.h.b16 %v801
  %v3432 = vunpack.c.l.b16 %v802
  %v3433 = vunpack.c.h.b16 %v802
  %v3434 = vunpack.c.l.b16 %v803
  %v3435 = vunpack.c.h.b16 %v803
  %v3436 = vunpack.c.l.b16 %v804
  %v3437 = vunpack.c.h.b16 %v804
  %v3438 = vunpack.c.l.b16 %v805
  %v3439 = vunpack.c.h.b16 %v805
  %v3440 = vunpack.c.l.b16 %v806
  %v3441 = vunpack.c.h.b16 %v806
  %v3442 = vunpack.c.l.b16 %v807
  %v3443 = vunpack.c.h.b16 %v807
  %v3444 = vunpack.c.l.b16 %v808
  %v3445 = vunpack.c.h.b16 %v808
  %v3446 = vunpack.c.l.b16 %v809
  %v3447 = vunpack.c.h.b16 %v809
  %v3448 = vunpack.c.l.b16 %v810
  %v3449 = vunpack.c.h.b16 %v810
  %v3450 = vunpack.c.l.b16 %v811
  %v3451 = vunpack.c.h.b16 %v811
  %v3452 = vunpack.c.l.b16 %v812
  %v3453 = vunpack.c.h.b16 %v812
  %v3454 = vunpack.c.l.b16 %v813
  %v3455 = vunpack.c.h.b16 %v813
  %v3456 = vunpack.c.l.b16 %v814
  %v3457 = vunpack.c.h.b16 %v814
  %v3458 = vunpack.c.l.b16 %v815
  %v3459 = vunpack.c.h.b16 %v815
  %v3460 = vunpack.c.l.b16 %v816
  %v3461 = vunpack.c.h.b16 %v816
  %v3462 = vunpack.c.l.b16 %v817
  %v3463 = vunpack.c.h.b16 %v817
  %v3464 = vunpack.c.l.b16 %v818
  %v3465 = vunpack.c.h.b16 %v818
  %v3466 = vunpack.c.l.b16 %v819
  %v3467 = vunpack.c.h.b16 %v819
  %v3468 = vunpack.c.l.b16 %v820
  %v3469 = vunpack.c.h.b16 %v820
  %v3470 = vunpack.c.l.b16 %v821
  %v3471 = vunpack.c.h.b16 %v821
  %v3472 = vunpack.c.l.b16 %v822
  %v3473 = vunpack.c.h.b16 %v822
  %v3474 = vunpack.c.l.b16 %v823
  %v3475 = vunpack.c.h.b16 %v823
  %v3476 = vunpack.c.l.b16 %v824
  %v3477 = vunpack.c.h.b16 %v824
  %v3478 = vunpack.c.l.b16 %v825
  %v3479 = vunpack.c.h.b16 %v825
  %v3480 = vunpack.c.l.b16 %v826
  %v3481 = vunpack.c.h.b16 %v826
  %v3482 = vunpack.c.l.b16 %v827
  %v3483 = vunpack.c.h.b16 %v827
  %v3484 = vunpack.c.l.b16 %v828
  %v3485 = vunpack.c.h.b16 %v828
  %v3486 = vunpack.c.l.b16 %v829
  %v3487 = vunpack.c.h.b16 %v829
  %v3488 = vunpack.c.l.b16 %v830
  %v3489 = vunpack.c.h.b16 %v830
  %v3490 = vunpack.c.l.b16 %v831
  %v3491 = vunpack.c.h.b16 %v831
  %v3492 = vunpack.c.l.b16 %v832
  %v3493 = vunpack.c.h.b16 %v832
  %v3494 = vunpack.c.l.b16 %v833
  %v3495 = vunpack.c.h.b16 %v833
  %v3496 = vunpack.c.l.b16 %v834
  %v3497 = vunpack.c.h.b16 %v834
  %v3498 = vunpack.c.l.b16 %v835
  %v3499 = vunpack.c.h.b16 %v835
  %v3500 = vunpack.c.l.b16 %v836
  %v3501 = vunpack.c.h.b16 %v836
  %v3502 = vunpack.c.l.b16 %v837
  %v3503 = vunpack.c.h.b16 %v837
  %v3504 = vunpack.c.l.b16 %v838
  %v3505 = vunpack.c.h.b16 %v838
  %v3506 = vunpack.c.l.b16 %v839
  %v3507 = vunpack.c.h.b16 %v839
  %v3508 = vunpack.c.l.b16 %v840
  %v3509 = vunpack.c.h.b16 %v840
  %v3510 = vunpack.c.l.b16 %v841
  %v3511 = vunpack.c.h.b16 %v841
  %v3512 = vunpack.c.l.b16 %v842
  %v3513 = vunpack.c.h.b16 %v842
  %v3514 = vunpack.c.l.b16 %v843
  %v3515 = vunpack.c.h.b16 %v843
  %v3516 = vunpack.c.l.b16 %v844
  %v3517 = vunpack.c.h.b16 %v844
  %v3518 = vunpack.c.l.b16 %v845
  %v3519 = vunpack.c.h.b16 %v845
  %v3520 = vunpack.c.l.b16 %v846
  %v3521 = vunpack.c.h.b16 %v846
  %v3522 = vunpack.c.l.b16 %v847
  %v3523 = vunpack.c.h.b16 %v847
  %v3524 = vunpack.c.l.b16 %v848
  %v3525 = vunpack.c.h.b16 %v848
  %v3526 = vunpack.c.l.b16 %v849
  %v3527 = vunpack.c.h.b16 %v849
  %v3528 = vunpack.c.l.b16 %v850
  %v3529 = vunpack.c.h.b16 %v850
  %v3530 = vunpack.c.l.b16 %v851
  %v3531 = vunpack.c.h.b16 %v851
  %v3532 = vunpack.c.l.b16 %v852
  %v3533 = vunpack.c.h.b16 %v852
  %v3534 = vunpack.c.l.b16 %v853
  %v3535 = vunpack.c.h.b16 %v853
  %v3536 = vunpack.c.l.b16 %v854
  %v3537 = vunpack.c.h.b16 %v854
  %v3538 = vunpack.c.l.b16 %v855
  %v3539 = vunpack.c.h.b16 %v855
  %v3540 = vunpack.c.l.b16 %v856
  %v3541 = vunpack.c.h.b16 %v856
  %v3542 = vunpack.c.l.b16 %v857
  %v3543 = vunpack.c.h.b16 %v857
  %v3544 = vunpack.c.l.b16 %v858
  %v3545 = vunpack.c.h.b16 %v858
  %v3546 = vunpack.c.l.b16 %v859
  %v3547 = vunpack.c.h.b16 %v859
  %v3548 = vunpack.c.l.b16 %v860
  %v3549 = vunpack.c.h.b16 %v860
  %v3550 = vunpack.c.l.b16 %v861
  %v3551 = vunpack.c.h.b16 %v861
  %v3552 = vunpack.c.l.b16 %v862
  %v3553 = vunpack.c.h.b16 %v862
  %v3554 = vunpack.c.l.b16 %v863
  %v3555 = vunpack.c.h.b16 %v863
  %v3556 = vunpack.c.l.b16 %v864
  %v3557 = vunpack.c.h.b16 %v864
  %v3558 = vunpack.c.l.b16 %v865
  %v3559 = vunpack.c.h.b16 %v865
  %v3560 = vunpack.c.l.b16 %v866
  %v3561 = vunpack.c.h.b16 %v866
  %v3562 = vunpack.c.l.b16 %v867
  %v3563 = vunpack.c.h.b16 %v867
  %v3564 = vunpack.c.l.b16 %v868
  %v3565 = vunpack.c.h.b16 %v868
  %v3566 = vunpack.c.l.b16 %v869
  %v3567 = vunpack.c.h.b16 %v869
  %v3568 = vunpack.c.l.b16 %v870
  %v3569 = vunpack.c.h.b16 %v870
  %v3570 = vunpack.c.l.b16 %v871
  %v3571 = vunpack.c.h.b16 %v871
  %v3572 = vunpack.c.l.b16 %v872
  %v3573 = vunpack.c.h.b16 %v872
  %v3574 = vunpack.c.l.b16 %v873
  %v3575 = vunpack.c.h.b16 %v873
  %v3576 = vunpack.c.l.b16 %v874
  %v3577 = vunpack.c.h.b16 %v874
  %v3578 = vunpack.c.l.b16 %v875
  %v3579 = vunpack.c.h.b16 %v875
  %v3580 = vunpack.c.l.b16 %v876
  %v3581 = vunpack.c.h.b16 %v876
  %v3582 = vunpack.c.l.b16 %v877
  %v3583 = vunpack.c.h.b16 %v877
  %v3584 = vunpack.c.l.b16 %v878
  %v3585 = vunpack.c.h.b16 %v878
  %v3586 = vunpack.c.l.b16 %v879
  %v3587 = vunpack.c.h.b16 %v879
  %v3588 = vunpack.c.l.b16 %v880
  %v3589 = vunpack.c.h.b16 %v880
  %v3590 = vunpack.c.l.b16 %v881
  %v3591 = vunpack.c.h.b16 %v881
  %v3592 = vunpack.c.l.b16 %v882
  %v3593 = vunpack.c.h.b16 %v882
  %v3594 = vunpack.c.l.b16 %v883
  %v3595 = vunpack.c.h.b16 %v883
  %v3596 = vunpack.c.l.b16 %v884
  %v3597 = vunpack.c.h.b16 %v884
  %v3598 = vunpack.c.l.b16 %v885
  %v3599 = vunpack.c.h.b16 %v885
  %v3600 = vunpack.c.l.b16 %v886
  %v3601 = vunpack.c.h.b16 %v886
  %v3602 = vunpack.c.l.b16 %v887
  %v3603 = vunpack.c.h.b16 %v887
  %v3604 = vunpack.c.l.b16 %v888
  %v3605 = vunpack.c.h.b16 %v888
  %v3606 = vunpack.c.l.b16 %v889
  %v3607 = vunpack.c.h.b16 %v889
  %v3608 = vunpack.c.l.b16 %v890
  %v3609 = vunpack.c.h.b16 %v890
  %v3610 = vunpack.c.l.b16 %v891
  %v3611 = vunpack.c.h.b16 %v891
  %v3612 = vunpack.c.l.b16 %v892
  %v3613 = vunpack.c.h.b16 %v892
  %v3614 = vunpack.c.l.b16 %v893
  %v3615 = vunpack.c.h.b16 %v893
  %v3616 = vunpack.c.l.b16 %v894
  %v3617 = vunpack.c.h.b16 %v894
  %v3618 = vunpack.c.l.b16 %v895
  %v3619 = vunpack.c.h.b16 %v895
  %v3620 = vunpack.c.l.b16 %v896
  %v3621 = vunpack.c.h.b16 %v896
  %v3622 = vunpack.c.l.b16 %v897
  %v3623 = vunpack.c.h.b16 %v897
  %v3624 = vunpack.c.l.b16 %v898
  %v3625 = vunpack.c.h.b16 %v898
  %v3626 = vunpack.c.l.b16 %v899
  %v3627 = vunpack.c.h.b16 %v899
  %v3628 = vunpack.c.l.b16 %v900
  %v3629 = vunpack.c.h.b16 %v900
  %v3630 = vunpack.c.l.b16 %v901
  %v3631 = vunpack.c.h.b16 %v901
  %v3632 = vunpack.c.l.b16 %v902
  %v3633 = vunpack.c.h.b16 %v902
  %v3634 = vunpack.c.l.b16 %v903
  %v3635 = vunpack.c.h.b16 %v903
  %v3636 = vunpack.c.l.b16 %v904
  %v3637 = vunpack.c.h.b16 %v904
  %v3638 = vunpack.c.l.b16 %v905
  %v3639 = vunpack.c.h.b16 %v905
  %v3640 = vunpack.c.l.b16 %v906
  %v3641 = vunpack.c.h.b16 %v906
  %v3642 = vunpack.c.l.b16 %v907
  %v3643 = vunpack.c.h.b16 %v907
  %v3644 = vunpack.c.l.b16 %v908
  %v3645 = vunpack.c.h.b16 %v908
  %v3646 = vunpack.c.l.b16 %v909
  %v3647 = vunpack.c.h.b16 %v909
  %v3648 = vunpack.c.l.b16 %v910
  %v3649 = vunpack.c.h.b16 %v910
  %v3650 = vunpack.c.l.b16 %v911
  %v3651 = vunpack.c.h.b16 %v911
  %v3652 = vunpack.c.l.b16 %v912
  %v3653 = vunpack.c.h.b16 %v912
  %v3654 = vunpack.c.l.b16 %v913
  %v3655 = vunpack.c.h.b16 %v913
  %v3656 = vunpack.c.l.b16 %v914
  %v3657 = vunpack.c.h.b16 %v914
  %v3658 = vunpack.c.l.b16 %v915
  %v3659 = vunpack.c.h.b16 %v915
  %v3660 = vunpack.c.l.b16 %v916
  %v3661 = vunpack.c.h.b16 %v916
  %v3662 = vunpack.c.l.b16 %v917
  %v3663 = vunpack.c.h.b16 %v917
  %v3664 = vunpack.c.l.b16 %v918
  %v3665 = vunpack.c.h.b16 %v918
  %v3666 = vunpack.c.l.b16 %v919
  %v3667 = vunpack.c.h.b16 %v919
  %v3668 = vunpack.c.l.b16 %v920
  %v3669 = vunpack.c.h.b16 %v920
  %v3670 = vunpack.c.l.b16 %v921
  %v3671 = vunpack.c.h.b16 %v921
  %v3672 = vunpack.c.l.b16 %v922
  %v3673 = vunpack.c.h.b16 %v922
  %v3674 = vunpack.c.l.b16 %v923
  %v3675 = vunpack.c.h.b16 %v923
  %v3676 = vunpack.c.l.b16 %v924
  %v3677 = vunpack.c.h.b16 %v924
  %v3678 = vunpack.c.l.b16 %v925
  %v3679 = vunpack.c.h.b16 %v925
  %v3680 = vunpack.c.l.b16 %v926
  %v3681 = vunpack.c.h.b16 %v926
  %v3682 = vunpack.c.l.b16 %v927
  %v3683 = vunpack.c.h.b16 %v927
  %v3684 = vunpack.c.l.b16 %v928
  %v3685 = vunpack.c.h.b16 %v928
  %v3686 = vunpack.c.l.b16 %v929
  %v3687 = vunpack.c.h.b16 %v929
  %v3688 = vunpack.c.l.b16 %v930
  %v3689 = vunpack.c.h.b16 %v930
  %v3690 = vunpack.c.l.b16 %v931
  %v3691 = vunpack.c.h.b16 %v931
  %v3692 = vunpack.c.l.b16 %v932
  %v3693 = vunpack.c.h.b16 %v932
  %v3694 = vunpack.c.l.b16 %v933
  %v3695 = vunpack.c.h.b16 %v933
  %v3696 = vunpack.c.l.b16 %v934
  %v3697 = vunpack.c.h.b16 %v934
  %v3698 = vunpack.c.l.b16 %v935
  %v3699 = vunpack.c.h.b16 %v935
  %v3700 = vunpack.c.l.b16 %v936
  %v3701 = vunpack.c.h.b16 %v936
  %v3702 = vunpack.c.l.b16 %v937
  %v3703 = vunpack.c.h.b16 %v937
  %v3704 = vunpack.c.l.b16 %v938
  %v3705 = vunpack.c.h.b16 %v938
  %v3706 = vunpack.c.l.b16 %v939
  %v3707 = vunpack.c.h.b16 %v939
  %v3708 = vunpack.c.l.b16 %v940
  %v3709 = vunpack.c.h.b16 %v940
  %v3710 = vunpack.c.l.b16 %v941
  %v3711 = vunpack.c.h.b16 %v941
  %v3712 = vunpack.c.l.b16 %v942
  %v3713 = vunpack.c.h.b16 %v942
  %v3714 = vunpack.c.l.b16 %v943
  %v3715 = vunpack.c.h.b16 %v943
  %v3716 = vunpack.c.l.b16 %v944
  %v3717 = vunpack.c.h.b16 %v944
  %v3718 = vunpack.c.l.b16 %v945
  %v3719 = vunpack.c.h.b16 %v945
  %v3720 = vunpack.c.l.b16 %v946
  %v3721 = vunpack.c.h.b16 %v946
  %v3722 = vunpack.c.l.b16 %v947
  %v3723 = vunpack.c.h.b16 %v947
  %v3724 = vunpack.c.l.b16 %v948
  %v3725 = vunpack.c.h.b16 %v948
  %v3726 = vunpack.c.l.b16 %v949
  %v3727 = vunpack.c.h.b16 %v949
  %v3728 = vunpack.c.l.b16 %v950
  %v3729 = vunpack.c.h.b16 %v950
  %v3730 = vunpack.c.l.b16 %v951
  %v3731 = vunpack.c.h.b16 %v951
  %v3732 = vunpack.c.l.b16 %v952
  %v3733 = vunpack.c.h.b16 %v952
  %v3734 = vunpack.c.l.b16 %v953
  %v3735 = vunpack.c.h.b16 %v953
  %v3736 = vunpack.c.l.b16 %v954
  %v3737 = vunpack.c.h.b16 %v954
  %v3738 = vunpack.c.l.b16 %v955
  %v3739 = vunpack.c.h.b16 %v955
  %v3740 = vunpack.c.l.b16 %v956
  %v3741 = vunpack.c.h.b16 %v956
  %v3742 = vunpack.c.l.b16 %v957
  %v3743 = vunpack.c.h.b16 %v957
  %v3744 = vunpack.c.l.b16 %v958
  %v3745 = vunpack.c.h.b16 %v958
  %v3746 = vunpack.c.l.b16 %v959
  %v3747 = vunpack.c.h.b16 %v959
  %v3748 = vunpack.c.l.b16 %v960
  %v3749 = vunpack.c.h.b16 %v960
  %v3750 = vunpack.c.l.b16 %v961
  %v3751 = vunpack.c.h.b16 %v961
  %v3752 = vunpack.c.l.b16 %v962
  %v3753 = vunpack.c.h.b16 %v962
  %v3754 = vunpack.c.l.b16 %v963
  %v3755 = vunpack.c.h.b16 %v963
  %v3756 = vunpack.c.l.b16 %v964
  %v3757 = vunpack.c.h.b16 %v964
  %v3758 = vunpack.c.l.b16 %v965
  %v3759 = vunpack.c.h.b16 %v965
  %v3760 = vunpack.c.l.b16 %v966
  %v3761 = vunpack.c.h.b16 %v966
  %v3762 = vunpack.c.l.b16 %v967
  %v3763 = vunpack.c.h.b16 %v967
  %v3764 = vunpack.c.l.b16 %v968
  %v3765 = vunpack.c.h.b16 %v968
  %v3766 = vunpack.c.l.b16 %v969
  %v3767 = vunpack.c.h.b16 %v969
  %v3768 = vunpack.c.l.b16 %v970
  %v3769 = vunpack.c.h.b16 %v970
  %v3770 = vunpack.c.l.b16 %v971
  %v3771 = vunpack.c.h.b16 %v971
  %v3772 = vunpack.c.l.b16 %v972
  %v3773 = vunpack.c.h.b16 %v972
  %v3774 = vunpack.c.l.b16 %v973
  %v3775 = vunpack.c.h.b16 %v973
  %v3776 = vunpack.c.l.b16 %v974
  %v3777 = vunpack.c.h.b16 %v974
  %v3778 = vunpack.c.l.b16 %v975
  %v3779 = vunpack.c.h.b16 %v975
  %v3780 = vunpack.c.l.b16 %v976
  %v3781 = vunpack.c.h.b16 %v976
  %v3782 = vunpack.c.l.b16 %v977
  %v3783 = vunpack.c.h.b16 %v977
  %v3784 = vunpack.c.l.b16 %v978
  %v3785 = vunpack.c.h.b16 %v978
  %v3786 = vunpack.c.l.b16 %v979
  %v3787 = vunpack.c.h.b16 %v979
  %v3788 = vunpack.c.l.b16 %v980
  %v3789 = vunpack.c.h.b16 %v980
  %v3790 = vunpack.c.l.b16 %v981
  %v3791 = vunpack.c.h.b16 %v981
  %v3792 = vunpack.c.l.b16 %v982
  %v3793 = vunpack.c.h.b16 %v982
  %v3794 = vunpack.c.l.b16 %v983
  %v3795 = vunpack.c.h.b16 %v983
  %v3796 = vunpack.c.l.b16 %v984
  %v3797 = vunpack.c.h.b16 %v984
  %v3798 = vunpack.c.l.b16 %v985
  %v3799 = vunpack.c.h.b16 %v985
  %v3800 = vunpack.c.l.b16 %v986
  %v3801 = vunpack.c.h.b16 %v986
  %v3802 = vunpack.c.l.b16 %v987
  %v3803 = vunpack.c.h.b16 %v987
  %v3804 = vunpack.c.l.b16 %v988
  %v3805 = vunpack.c.h.b16 %v988
  %v3806 = vunpack.c.l.b16 %v989
  %v3807 = vunpack.c.h.b16 %v989
  %v3808 = vunpack.c.l.b16 %v990
  %v3809 = vunpack.c.h.b16 %v990
  %v3810 = vunpack.c.l.b16 %v991
  %v3811 = vunpack.c.h.b16 %v991
  %v3812 = vunpack.c.l.b16 %v992
  %v3813 = vunpack.c.h.b16 %v992
  %v3814 = vunpack.c.l.b16 %v993
  %v3815 = vunpack.c.h.b16 %v993
  %v3816 = vunpack.c.l.b16 %v994
  %v3817 = vunpack.c.h.b16 %v994
  %v3818 = vunpack.c.l.b16 %v995
  %v3819 = vunpack.c.h.b16 %v995
  %v3820 = vunpack.c.l.b16 %v996
  %v3821 = vunpack.c.h.b16 %v996
  %v3822 = vunpack.c.l.b16 %v997
  %v3823 = vunpack.c.h.b16 %v997
  %v3824 = vunpack.c.l.b16 %v998
  %v3825 = vunpack.c.h.b16 %v998
  %v3826 = vunpack.c.l.b16 %v999
  %v3827 = vunpack.c.h.b16 %v999
  %v3828 = vunpack.c.l.b16 %v1000
  %v3829 = vunpack.c.h.b16 %v1000
  %v3830 = vunpack.c.l.b16 %v1001
  %v3831 = vunpack.c.h.b16 %v1001
  %v3832 = vunpack.c.l.b16 %v1002
  %v3833 = vunpack.c.h.b16 %v1002
  %v3834 = vunpack.c.l.b16 %v1003
  %v3835 = vunpack.c.h.b16 %v1003
  %v3836 = vunpack.c.l.b16 %v1004
  %v3837 = vunpack.c.h.b16 %v1004
  %v3838 = vunpack.c.l.b16 %v1005
  %v3839 = vunpack.c.h.b16 %v1005
  %v3840 = vunpack.c.l.b16 %v1006
  %v3841 = vunpack.c.h.b16 %v1006
  %v3842 = vunpack.c.l.b16 %v1007
  %v3843 = vunpack.c.h.b16 %v1007
  %v3844 = vunpack.c.l.b16 %v1008
  %v3845 = vunpack.c.h.b16 %v1008
  %v3846 = vunpack.c.l.b16 %v1009
  %v3847 = vunpack.c.h.b16 %v1009
  %v3848 = vunpack.c.l.b16 %v1010
  %v3849 = vunpack.c.h.b16 %v1010
  %v3850 = vunpack.c.l.b16 %v1011
  %v3851 = vunpack.c.h.b16 %v1011
  %v3852 = vunpack.c.l.b16 %v1012
  %v3853 = vunpack.c.h.b16 %v1012
  %v3854 = vunpack.c.l.b16 %v1013
  %v3855 = vunpack.c.h.b16 %v1013
  %v3856 = vunpack.c.l.b16 %v1014
  %v3857 = vunpack.c.h.b16 %v1014
  %v3858 = vunpack.c.l.b16 %v1015
  %v3859 = vunpack.c.h.b16 %v1015
  %v3860 = vunpack.c.l.b16 %v1016
  %v3861 = vunpack.c.h.b16 %v1016
  %v3862 = vunpack.c.l.b16 %v1017
  %v3863 = vunpack.c.h.b16 %v1017
  %v3864 = vunpack.c.l.b16 %v1018
  %v3865 = vunpack.c.h.b16 %v1018
  %v3866 = vunpack.c.l.b16 %v1019
  %v3867 = vunpack.c.h.b16 %v1019
  %v3868 = vunpack.c.l.b16 %v1020
  %v3869 = vunpack.c.h.b16 %v1020
  %v3870 = vunpack.c.l.b16 %v1021
  %v3871 = vunpack.c.h.b16 %v1021
  %v3872 = vunpack.c.l.b16 %v1022
  %v3873 = vunpack.c.h.b16 %v1022
  %v3874 = vunpack.c.l.b16 %v1023
  %v3875 = vunpack.c.h.b16 %v1023
  %v3876 = vunpack.c.l.b16 %v1024
  %v3877 = vunpack.c.h.b16 %v1024
  %v3878 = vunpack.c.l.b16 %v1025
  %v3879 = vunpack.c.h.b16 %v1025
  %v3880 = vunpack.c.l.b16 %v1026
  %v3881 = vunpack.c.h.b16 %v1026
  %v3882 = vunpack.c.l.b16 %v1027
  %v3883 = vunpack.c.h.b16 %v1027
  %v3884 = vunpack.c.l.b16 %v1028
  %v3885 = vunpack.c.h.b16 %v1028
  %v3886 = vunpack.c.l.b16 %v1029
  %v3887 = vunpack.c.h.b16 %v1029
  %v3888 = vunpack.c.l.b16 %v1030
  %v3889 = vunpack.c.h.b16 %v1030
  %v3890 = vunpack.c.l.b16 %v1031
  %v3891 = vunpack.c.h.b16 %v1031
  %v3892 = vunpack.c.l.b16 %v1032
  %v3893 = vunpack.c.h.b16 %v1032
  %v3894 = vunpack.c.l.b16 %v1033
  %v3895 = vunpack.c.h.b16 %v1033
  %v3896 = vunpack.c.l.b16 %v1034
  %v3897 = vunpack.c.h.b16 %v1034
  %v3898 = vunpack.c.l.b16 %v1035
  %v3899 = vunpack.c.h.b16 %v1035
  %v3900 = vunpack.c.l.b16 %v1036
  %v3901 = vunpack.c.h.b16 %v1036
  %v3902 = vunpack.c.l.b16 %v1037
  %v3903 = vunpack.c.h.b16 %v1037
  %v3904 = vunpack.c.l.b16 %v1038
  %v3905 = vunpack.c.h.b16 %v1038
  %v3906 = vunpack.c.l.b16 %v1039
  %v3907 = vunpack.c.h.b16 %v1039
  %v3908 = vunpack.c.l.b16 %v1040
  %v3909 = vunpack.c.h.b16 %v1040
  %v3910 = vunpack.c.l.b16 %v1041
  %v3911 = vunpack.c.h.b16 %v1041
  %v3912 = vunpack.c.l.b16 %v1042
  %v3913 = vunpack.c.h.b16 %v1042
  %v3914 = vunpack.c.l.b16 %v1043
  %v3915 = vunpack.c.h.b16 %v1043
  %v3916 = vunpack.c.l.b16 %v1044
  %v3917 = vunpack.c.h.b16 %v1044
  %v3918 = vunpack.c.l.b16 %v1045
  %v3919 = vunpack.c.h.b16 %v1045
  %v3920 = vunpack.c.l.b16 %v1046
  %v3921 = vunpack.c.h.b16 %v1046
  %v3922 = vunpack.c.l.b16 %v1047
  %v3923 = vunpack.c.h.b16 %v1047
  %v3924 = vunpack.c.l.b16 %v1048
  %v3925 = vunpack.c.h.b16 %v1048
  %v3926 = vunpack.c.l.b16 %v1049
  %v3927 = vunpack.c.h.b16 %v1049
  %v3928 = vunpack.c.l.b16 %v1050
  %v3929 = vunpack.c.h.b16 %v1050
  %v3930 = vunpack.c.l.b16 %v1051
  %v3931 = vunpack.c.h.b16 %v1051
  %v3932 = vunpack.c.l.b16 %v1052
  %v3933 = vunpack.c.h.b16 %v1052
  %v3934 = vunpack.c.l.b16 %v1053
  %v3935 = vunpack.c.h.b16 %v1053
  %v3936 = vunpack.c.l.b16 %v1054
  %v3937 = vunpack.c.h.b16 %v1054
  %v3938 = vunpack.c.l.b16 %v1055
  %v3939 = vunpack.c.h.b16 %v1055
  %v3940 = vunpack.c.l.b16 %v1056
  %v3941 = vunpack.c.h.b16 %v1056
  %v3942 = vunpack.c.l.b16 %v1057
  %v3943 = vunpack.c.h.b16 %v1057
  %v3944 = vunpack.c.l.b16 %v1058
  %v3945 = vunpack.c.h.b16 %v1058
  %v3946 = vunpack.c.l.b16 %v1059
  %v3947 = vunpack.c.h.b16 %v1059
  %v3948 = vunpack.c.l.b16 %v1060
  %v3949 = vunpack.c.h.b16 %v1060
  %v3950 = vunpack.c.l.b16 %v1061
  %v3951 = vunpack.c.h.b16 %v1061
  %v3952 = vunpack.c.l.b16 %v1062
  %v3953 = vunpack.c.h.b16 %v1062
  %v3954 = vunpack.c.l.b16 %v1063
  %v3955 = vunpack.c.h.b16 %v1063
  %v3956 = vunpack.c.l.b16 %v1064
  %v3957 = vunpack.c.h.b16 %v1064
  %v3958 = vunpack.c.l.b16 %v1065
  %v3959 = vunpack.c.h.b16 %v1065
  %v3960 = vunpack.c.l.b16 %v1066
  %v3961 = vunpack.c.h.b16 %v1066
  %v3962 = vunpack.c.l.b16 %v1067
  %v3963 = vunpack.c.h.b16 %v1067
  %v3964 = vunpack.c.l.b16 %v1068
  %v3965 = vunpack.c.h.b16 %v1068
  %v3966 = vunpack.c.l.b16 %v1069
  %v3967 = vunpack.c.h.b16 %v1069
  %v3968 = vunpack.c.l.b16 %v1070
  %v3969 = vunpack.c.h.b16 %v1070
  %v3970 = vunpack.c.l.b16 %v1071
  %v3971 = vunpack.c.h.b16 %v1071
  %v3972 = vunpack.c.l.b16 %v1072
  %v3973 = vunpack.c.h.b16 %v1072
  %v3974 = vunpack.c.l.b16 %v1073
  %v3975 = vunpack.c.h.b16 %v1073
  %v3976 = vunpack.c.l.b16 %v1074
  %v3977 = vunpack.c.h.b16 %v1074
  %v3978 = vunpack.c.l.b16 %v1075
  %v3979 = vunpack.c.h.b16 %v1075
  %v3980 = vunpack.c.l.b16 %v1076
  %v3981 = vunpack.c.h.b16 %v1076
  %v3982 = vunpack.c.l.b16 %v1077
  %v3983 = vunpack.c.h.b16 %v1077
  %v3984 = vunpack.c.l.b16 %v1078
  %v3985 = vunpack.c.h.b16 %v1078
  %v3986 = vunpack.c.l.b16 %v1079
  %v3987 = vunpack.c.h.b16 %v1079
  %v3988 = vunpack.c.l.b16 %v1080
  %v3989 = vunpack.c.h.b16 %v1080
  %v3990 = vunpack.c.l.b16 %v1081
  %v3991 = vunpack.c.h.b16 %v1081
  %v3992 = vunpack.c.l.b16 %v1082
  %v3993 = vunpack.c.h.b16 %v1082
  %v3994 = vunpack.c.l.b16 %v1083
  %v3995 = vunpack.c.h.b16 %v1083
  %v3996 = vunpack.c.l.b16 %v1084
  %v3997 = vunpack.c.h.b16 %v1084
  %v3998 = vunpack.c.l.b16 %v1085
  %v3999 = vunpack.c.h.b16 %v1085
  %v4000 = vunpack.c.l.b16 %v1086
  %v4001 = vunpack.c.h.b16 %v1086
  %v4002 = vunpack.c.l.b16 %v1087
  %v4003 = vunpack.c.h.b16 %v1087
  %v4004 = vunpack.c.l.b16 %v1088
  %v4005 = vunpack.c.h.b16 %v1088
  %v4006 = vunpack.c.l.b16 %v1089
  %v4007 = vunpack.c.h.b16 %v1089
  %v4008 = vunpack.c.l.b16 %v1090
  %v4009 = vunpack.c.h.b16 %v1090
  %v4010 = vunpack.c.l.b16 %v1091
  %v4011 = vunpack.c.h.b16 %v1091
  %v4012 = vunpack.c.l.b16 %v1092
  %v4013 = vunpack.c.h.b16 %v1092
  %v4014 = vunpack.c.l.b16 %v1093
  %v4015 = vunpack.c.h.b16 %v1093
  %v4016 = vunpack.c.l.b16 %v1094
  %v4017 = vunpack.c.h.b16 %v1094
  %v4018 = vunpack.c.l.b16 %v1095
  %v4019 = vunpack.c.h.b16 %v1095
  %v4020 = vunpack.c.l.b16 %v1096
  %v4021 = vunpack.c.h.b16 %v1096
  %v4022 = vunpack.c.l.b16 %v1097
  %v4023 = vunpack.c.h.b16 %v1097
  %v4024 = vunpack.c.l.b16 %v1098
  %v4025 = vunpack.c.h.b16 %v1098
  %v4026 = vunpack.c.l.b16 %v1099
  %v4027 = vunpack.c.h.b16 %v1099
  %v4028 = vunpack.c.l.b16 %v1100
  %v4029 = vunpack.c.h.b16 %v1100
  %v4030 = vunpack.c.l.b16 %v1101
  %v4031 = vunpack.c.h.b16 %v1101
  %v4032 = vunpack.c.l.b16 %v1102
  %v4033 = vunpack.c.h.b16 %v1102
  %v4034 = vunpack.c.l.b16 %v1103
  %v4035 = vunpack.c.h.b16 %v1103
  %v4036 = vunpack.c.l.b16 %v1104
  %v4037 = vunpack.c.h.b16 %v1104
  %v4038 = vunpack.c.l.b16 %v1105
  %v4039 = vunpack.c.h.b16 %v1105
  %v4040 = vunpack.c.l.b16 %v1106
  %v4041 = vunpack.c.h.b16 %v1106
  %v4042 = vunpack.c.l.b16 %v1107
  %v4043 = vunpack.c.h.b16 %v1107
  %v4044 = vunpack.c.l.b16 %v1108
  %v4045 = vunpack.c.h.b16 %v1108
  %v4046 = vunpack.c.l.b16 %v1109
  %v4047 = vunpack.c.h.b16 %v1109
  %v4048 = vunpack.c.l.b16 %v1110
  %v4049 = vunpack.c.h.b16 %v1110
  %v4050 = vunpack.c.l.b16 %v1111
  %v4051 = vunpack.c.h.b16 %v1111
  %v4052 = vunpack.c.l.b16 %v1112
  %v4053 = vunpack.c.h.b16 %v1112
  %v4054 = vunpack.c.l.b16 %v1113
  %v4055 = vunpack.c.h.b16 %v1113
  %v4056 = vunpack.c.l.b16 %v1114
  %v4057 = vunpack.c.h.b16 %v1114
  %v4058 = vunpack.c.l.b16 %v1115
  %v4059 = vunpack.c.h.b16 %v1115
  %v4060 = vunpack.c.l.b16 %v1116
  %v4061 = vunpack.c.h.b16 %v1116
  %v4062 = vunpack.c.l.b16 %v1117
  %v4063 = vunpack.c.h.b16 %v1117
  %v4064 = vunpack.c.l.b16 %v1118
  %v4065 = vunpack.c.h.b16 %v1118
  %v4066 = vunpack.c.l.b16 %v1119
  %v4067 = vunpack.c.h.b16 %v1119
  %v4068 = vunpack.c.l.b16 %v1120
  %v4069 = vunpack.c.h.b16 %v1120
  %v4070 = vunpack.c.l.b16 %v1121
  %v4071 = vunpack.c.h.b16 %v1121
  %v4072 = vunpack.c.l.b16 %v1122
  %v4073 = vunpack.c.h.b16 %v1122
  %v4074 = vunpack.c.l.b16 %v1123
  %v4075 = vunpack.c.h.b16 %v1123
  %v4076 = vunpack.c.l.b16 %v1124
  %v4077 = vunpack.c.h.b16 %v1124
  %v4078 = vunpack.c.l.b16 %v1125
  %v4079 = vunpack.c.h.b16 %v1125
  %v4080 = vunpack.c.l.b16 %v1126
  %v4081 = vunpack.c.h.b16 %v1126
  %v4082 = vunpack.c.l.b16 %v1127
  %v4083 = vunpack.c.h.b16 %v1127
  %v4084 = vunpack.c.l.b16 %v1128
  %v4085 = vunpack.c.h.b16 %v1128
  %v4086 = vunpack.c.l.b16 %v1129
  %v4087 = vunpack.c.h.b16 %v1129
  %v4088 = vunpack.c.l.b16 %v1130
  %v4089 = vunpack.c.h.b16 %v1130
  %v4090 = vunpack.c.l.b16 %v1131
  %v4091 = vunpack.c.h.b16 %v1131
  %v4092 = vunpack.c.l.b16 %v1132
  %v4093 = vunpack.c.h.b16 %v1132
  %v4094 = vunpack.c.l.b16 %v1133
  %v4095 = vunpack.c.h.b16 %v1133
  %v4096 = vunpack.c.l.b16 %v1134
  %v4097 = vunpack.c.h.b16 %v1134
  %v4098 = vunpack.c.l.b16 %v1135
  %v4099 = vunpack.c.h.b16 %v1135
  %v4100 = vunpack.c.l.b16 %v1136
  %v4101 = vunpack.c.h.b16 %v1136
  %v4102 = vunpack.c.l.b16 %v1137
  %v4103 = vunpack.c.h.b16 %v1137
  %v4104 = vunpack.c.l.b16 %v1138
  %v4105 = vunpack.c.h.b16 %v1138
  %v4106 = vunpack.c.l.b16 %v1139
  %v4107 = vunpack.c.h.b16 %v1139
  %v4108 = vunpack.c.l.b16 %v1140
  %v4109 = vunpack.c.h.b16 %v1140
  %v4110 = vunpack.c.l.b16 %v1141
  %v4111 = vunpack.c.h.b16 %v1141
  %v4112 = vunpack.c.l.b16 %v1142
  %v4113 = vunpack.c.h.b16 %v1142
  %v4114 = vunpack.c.l.b16 %v1143
  %v4115 = vunpack.c.h.b16 %v1143
  %v4116 = vunpack.c.l.b16 %v1144
  %v4117 = vunpack.c.h.b16 %v1144
  %v4118 = vunpack.c.l.b16 %v1145
  %v4119 = vunpack.c.h.b16 %v1145
  %v4120 = vunpack.c.l.b16 %v1146
  %v4121 = vunpack.c.h.b16 %v1146
  %v4122 = vunpack.c.l.b16 %v1147
  %v4123 = vunpack.c.h.b16 %v1147
  %v4124 = vunpack.c.l.b16 %v1148
  %v4125 = vunpack.c.h.b16 %v1148
  %v4126 = vunpack.c.l.b16 %v1149
  %v4127 = vunpack.c.h.b16 %v1149
  %v4128 = vunpack.c.l.b16 %v1150
  %v4129 = vunpack.c.h.b16 %v1150
  %v4130 = vunpack.c.l.b16 %v1151
  %v4131 = vunpack.c.h.b16 %v1151
  %v4132 = vunpack.c.l.b16 %v1152
  %v4133 = vunpack.c.h.b16 %v1152
  %v4134 = vunpack.c.l.b16 %v1153
  %v4135 = vunpack.c.h.b16 %v1153
  %v4136 = vunpack.c.l.b16 %v1154
  %v4137 = vunpack.c.h.b16 %v1154
  %v4138 = vunpack.c.l.b16 %v1155
  %v4139 = vunpack.c.h.b16 %v1155
  %v4140 = vunpack.c.l.b16 %v1156
  %v4141 = vunpack.c.h.b16 %v1156
  %v4142 = vunpack.c.l.b16 %v1157
  %v4143 = vunpack.c.h.b16 %v1157
  %v4144 = vunpack.c.l.b16 %v1158
  %v4145 = vunpack.c.h.b16 %v1158
  %v4146 = vunpack.c.l.b16 %v1159
  %v4147 = vunpack.c.h.b16 %v1159
  %v4148 = vunpack.c.l.b16 %v1160
  %v4149 = vunpack.c.h.b16 %v1160
  %v4150 = vunpack.c.l.b16 %v1161
  %v4151 = vunpack.c.h.b16 %v1161
  %v4152 = vunpack.c.l.b16 %v1162
  %v4153 = vunpack.c.h.b16 %v1162
  %v4154 = vunpack.c.l.b16 %v1163
  %v4155 = vunpack.c.h.b16 %v1163
  %v4156 = vunpack.c.l.b16 %v1164
  %v4157 = vunpack.c.h.b16 %v1164
  %v4158 = vunpack.c.l.b16 %v1165
  %v4159 = vunpack.c.h.b16 %v1165
  %v4160 = vunpack.c.l.b16 %v1166
  %v4161 = vunpack.c.h.b16 %v1166
  %v4162 = vunpack.c.l.b16 %v1167
  %v4163 = vunpack.c.h.b16 %v1167
  %v4164 = vunpack.c.l.b16 %v1168
  %v4165 = vunpack.c.h.b16 %v1168
  %v4166 = vunpack.c.l.b16 %v1169
  %v4167 = vunpack.c.h.b16 %v1169
  %v4168 = vunpack.c.l.b16 %v1170
  %v4169 = vunpack.c.h.b16 %v1170
  %v4170 = vunpack.c.l.b16 %v1171
  %v4171 = vunpack.c.h.b16 %v1171
  %v4172 = vunpack.c.l.b16 %v1172
  %v4173 = vunpack.c.h.b16 %v1172
  %v4174 = vunpack.c.l.b16 %v1173
  %v4175 = vunpack.c.h.b16 %v1173
  %v4176 = vunpack.c.l.b16 %v1174
  %v4177 = vunpack.c.h.b16 %v1174
  %v4178 = vunpack.c.l.b16 %v1175
  %v4179 = vunpack.c.h.b16 %v1175
  %v4180 = vunpack.c.l.b16 %v1176
  %v4181 = vunpack.c.h.b16 %v1176
  %v4182 = vunpack.c.l.b16 %v1177
  %v4183 = vunpack.c.h.b16 %v1177
  %v4184 = vunpack.c.l.b16 %v1178
  %v4185 = vunpack.c.h.b16 %v1178
  %v4186 = vunpack.c.l.b16 %v1179
  %v4187 = vunpack.c.h.b16 %v1179
  %v4188 = vunpack.c.l.b16 %v1180
  %v4189 = vunpack.c.h.b16 %v1180
  %v4190 = vunpack.c.l.b16 %v1181
  %v4191 = vunpack.c.h.b16 %v1181
  %v4192 = vunpack.c.l.b16 %v1182
  %v4193 = vunpack.c.h.b16 %v1182
  %v4194 = vunpack.c.l.b16 %v1183
  %v4195 = vunpack.c.h.b16 %v1183
  %v4196 = vunpack.c.l.b16 %v1184
  %v4197 = vunpack.c.h.b16 %v1184
  %v4198 = vunpack.c.l.b16 %v1185
  %v4199 = vunpack.c.h.b16 %v1185
  %v4200 = vunpack.c.l.b16 %v1186
  %v4201 = vunpack.c.h.b16 %v1186
  %v4202 = vunpack.c.l.b16 %v1187
  %v4203 = vunpack.c.h.b16 %v1187
  %v4204 = vunpack.c.l.b16 %v1188
  %v4205 = vunpack.c.h.b16 %v1188
  %v4206 = vunpack.c.l.b16 %v1189
  %v4207 = vunpack.c.h.b16 %v1189
  %v4208 = vunpack.c.l.b16 %v1190
  %v4209 = vunpack.c.h.b16 %v1190
  %v4210 = vunpack.c.l.b16 %v1191
  %v4211 = vunpack.c.h.b16 %v1191
  %v4212 = vunpack.c.l.b16 %v1192
  %v4213 = vunpack.c.h.b16 %v1192
  %v4214 = vunpack.c.l.b16 %v1193
  %v4215 = vunpack.c.h.b16 %v1193
  %v4216 = vunpack.c.l.b16 %v1194
  %v4217 = vunpack.c.h.b16 %v1194
  %v4218 = vunpack.c.l.b16 %v1195
  %v4219 = vunpack.c.h.b16 %v1195
  %v4220 = vunpack.c.l.b16 %v1196
  %v4221 = vunpack.c.h.b16 %v1196
  %v4222 = vunpack.c.l.b16 %v1197
  %v4223 = vunpack.c.h.b16 %v1197
  %v4224 = vunpack.c.l.b16 %v1198
  %v4225 = vunpack.c.h.b16 %v1198
  %v4226 = vunpack.c.l.b16 %v1199
  %v4227 = vunpack.c.h.b16 %v1199
  %v4228 = vunpack.c.l.b16 %v1200
  %v4229 = vunpack.c.h.b16 %v1200
  %v4230 = vunpack.c.l.b16 %v1201
  %v4231 = vunpack.c.h.b16 %v1201
  %v4232 = vunpack.c.l.b16 %v1202
  %v4233 = vunpack.c.h.b16 %v1202
  %v4234 = vunpack.c.l.b16 %v1203
  %v4235 = vunpack.c.h.b16 %v1203
  %v4236 = vunpack.c.l.b16 %v1204
  %v4237 = vunpack.c.h.b16 %v1204
  %v4238 = vunpack.c.l.b16 %v1205
  %v4239 = vunpack.c.h.b16 %v1205
  %v4240 = vunpack.c.l.b16 %v1206
  %v4241 = vunpack.c.h.b16 %v1206
  %v4242 = vunpack.c.l.b16 %v1207
  %v4243 = vunpack.c.h.b16 %v1207
  %v4244 = vunpack.c.l.b16 %v1208
  %v4245 = vunpack.c.h.b16 %v1208
  %v4246 = vunpack.c.l.b16 %v1209
  %v4247 = vunpack.c.h.b16 %v1209
  %v4248 = vunpack.c.l.b16 %v1210
  %v4249 = vunpack.c.h.b16 %v1210
  %v4250 = vunpack.c.l.b16 %v1211
  %v4251 = vunpack.c.h.b16 %v1211
  %v4252 = vunpack.c.l.b16 %v1212
  %v4253 = vunpack.c.h.b16 %v1212
  %v4254 = vunpack.c.l.b16 %v1213
  %v4255 = vunpack.c.h.b16 %v1213
  %v4256 = vunpack.c.l.b16 %v1214
  %v4257 = vunpack.c.h.b16 %v1214
  %v4258 = vunpack.c.l.b16 %v1215
  %v4259 = vunpack.c.h.b16 %v1215
  %v4260 = vunpack.c.l.b16 %v1216
  %v4261 = vunpack.c.h.b16 %v1216
  %v4262 = vunpack.c.l.b16 %v1217
  %v4263 = vunpack.c.h.b16 %v1217
  %v4264 = vunpack.c.l.b16 %v1218
  %v4265 = vunpack.c.h.b16 %v1218
  %v4266 = vunpack.c.l.b16 %v1219
  %v4267 = vunpack.c.h.b16 %v1219
  %v4268 = vunpack.c.l.b16 %v1220
  %v4269 = vunpack.c.h.b16 %v1220
  %v4270 = vunpack.c.l.b16 %v1221
  %v4271 = vunpack.c.h.b16 %v1221
  %v4272 = vunpack.c.l.b16 %v1222
  %v4273 = vunpack.c.h.b16 %v1222
  %v4274 = vunpack.c.l.b16 %v1223
  %v4275 = vunpack.c.h.b16 %v1223
  %v4276 = vunpack.c.l.b16 %v1224
  %v4277 = vunpack.c.h.b16 %v1224
  %v4278 = vunpack.c.l.b16 %v1225
  %v4279 = vunpack.c.h.b16 %v1225
  %v4280 = vunpack.c.l.b16 %v1226
  %v4281 = vunpack.c.h.b16 %v1226
  %v4282 = vunpack.c.l.b16 %v1227
  %v4283 = vunpack.c.h.b16 %v1227
  %v4284 = vunpack.c.l.b16 %v1228
  %v4285 = vunpack.c.h.b16 %v1228
  %v4286 = vunpack.c.l.b16 %v1229
  %v4287 = vunpack.c.h.b16 %v1229
  %v4288 = vunpack.c.l.b16 %v1230
  %v4289 = vunpack.c.h.b16 %v1230
  %v4290 = vunpack.c.l.b16 %v1231
  %v4291 = vunpack.c.h.b16 %v1231
  %v4292 = vunpack.c.l.b16 %v1232
  %v4293 = vunpack.c.h.b16 %v1232
  %v4294 = vunpack.c.l.b16 %v1233
  %v4295 = vunpack.c.h.b16 %v1233
  %v4296 = vunpack.c.l.b16 %v1234
  %v4297 = vunpack.c.h.b16 %v1234
  %v4298 = vunpack.c.l.b16 %v1235
  %v4299 = vunpack.c.h.b16 %v1235
  %v4300 = vunpack.c.l.b16 %v1236
  %v4301 = vunpack.c.h.b16 %v1236
  %v4302 = vunpack.c.l.b16 %v1237
  %v4303 = vunpack.c.h.b16 %v1237
  %v4304 = vunpack.c.l.b16 %v1238
  %v4305 = vunpack.c.h.b16 %v1238
  %v4306 = vunpack.c.l.b16 %v1239
  %v4307 = vunpack.c.h.b16 %v1239
  %v4308 = vunpack.c.l.b16 %v1240
  %v4309 = vunpack.c.h.b16 %v1240
  %v4310 = vunpack.c.l.b16 %v1241
  %v4311 = vunpack.c.h.b16 %v1241
  %v4312 = vunpack.c.l.b16 %v1242
  %v4313 = vunpack.c.h.b16 %v1242
  %v4314 = vunpack.c.l.b16 %v1243
  %v4315 = vunpack.c.h.b16 %v1243
  %v4316 = vunpack.c.l.b16 %v1244
  %v4317 = vunpack.c.h.b16 %v1244
  %v4318 = vunpack.c.l.b16 %v1245
  %v4319 = vunpack.c.h.b16 %v1245
  %v4320 = vunpack.c.l.b16 %v1246
  %v4321 = vunpack.c.h.b16 %v1246
  %v4322 = vunpack.c.l.b16 %v1247
  %v4323 = vunpack.c.h.b16 %v1247
  %v4324 = vunpack.c.l.b16 %v1248
  %v4325 = vunpack.c.h.b16 %v1248
  %v4326 = vunpack.c.l.b16 %v1249
  %v4327 = vunpack.c.h.b16 %v1249
  %v4328 = vunpack.c.l.b16 %v1250
  %v4329 = vunpack.c.h.b16 %v1250
  %v4330 = vunpack.c.l.b16 %v1251
  %v4331 = vunpack.c.h.b16 %v1251
  %v4332 = vunpack.c.l.b16 %v1252
  %v4333 = vunpack.c.h.b16 %v1252
  %v4334 = vunpack.c.l.b16 %v1253
  %v4335 = vunpack.c.h.b16 %v1253
  %v4336 = vunpack.c.l.b16 %v1254
  %v4337 = vunpack.c.h.b16 %v1254
  %v4338 = vunpack.c.l.b16 %v1255
  %v4339 = vunpack.c.h.b16 %v1255
  %v4340 = vunpack.c.l.b16 %v1256
  %v4341 = vunpack.c.h.b16 %v1256
  %v4342 = vunpack.c.l.b16 %v1257
  %v4343 = vunpack.c.h.b16 %v1257
  %v4344 = vunpack.c.l.b16 %v1258
  %v4345 = vunpack.c.h.b16 %v1258
  %v4346 = vunpack.c.l.b16 %v1259
  %v4347 = vunpack.c.h.b16 %v1259
  %v4348 = vunpack.c.l.b16 %v1260
  %v4349 = vunpack.c.h.b16 %v1260
  %v4350 = vunpack.c.l.b16 %v1261
  %v4351 = vunpack.c.h.b16 %v1261
  %v4352 = vunpack.c.l.b16 %v1262
  %v4353 = vunpack.c.h.b16 %v1262
  %v4354 = vunpack.c.l.b16 %v1263
  %v4355 = vunpack.c.h.b16 %v1263
  %v4356 = vunpack.c.l.b16 %v1264
  %v4357 = vunpack.c.h.b16 %v1264
  %v4358 = vunpack.c.l.b16 %v1265
  %v4359 = vunpack.c.h.b16 %v1265
  %v4360 = vunpack.c.l.b16 %v1266
  %v4361 = vunpack.c.h.b16 %v1266
  %v4362 = vunpack.c.l.b16 %v1267
  %v4363 = vunpack.c.h.b16 %v1267
  %v4364 = vunpack.c.l.b16 %v1268
  %v4365 = vunpack.c.h.b16 %v1268
  %v4366 = vunpack.c.l.b16 %v1269
  %v4367 = vunpack.c.h.b16 %v1269
  %v4368 = vunpack.c.l.b16 %v1270
  %v4369 = vunpack.c.h.b16 %v1270
  %v4370 = vunpack.c.l.b16 %v1271
  %v4371 = vunpack.c.h.b16 %v1271
  %v4372 = vunpack.c.l.b16 %v1272
  %v4373 = vunpack.c.h.b16 %v1272
  %v4374 = vunpack.c.l.b16 %v1273
  %v4375 = vunpack.c.h.b16 %v1273
  %v4376 = vunpack.c.l.b16 %v1274
  %v4377 = vunpack.c.h.b16 %v1274
  %v4378 = vunpack.c.l.b16 %v1275
  %v4379 = vunpack.c.h.b16 %v1275
  %v4380 = vunpack.c.l.b16 %v1276
  %v4381 = vunpack.c.h.b16 %v1276
  %v4382 = vunpack.c.l.b16 %v1277
  %v4383 = vunpack.c.h.b16 %v1277
  %v4384 = vunpack.c.l.b16 %v1278
  %v4385 = vunpack.c.h.b16 %v1278
  %v4386 = vunpack.c.l.b16 %v1279
  %v4387 = vunpack.c.h.b16 %v1279
  %v4388 = vunpack.c.l.b16 %v1280
  %v4389 = vunpack.c.h.b16 %v1280
  %v4390 = vunpack.c.l.b16 %v1281
  %v4391 = vunpack.c.h.b16 %v1281
  %v4392 = vunpack.c.l.b16 %v1282
  %v4393 = vunpack.c.h.b16 %v1282
  %v4394 = vunpack.c.l.b16 %v1283
  %v4395 = vunpack.c.h.b16 %v1283
  %v4396 = vunpack.c.l.b16 %v1284
  %v4397 = vunpack.c.h.b16 %v1284
  %v4398 = vunpack.c.l.b16 %v1285
  %v4399 = vunpack.c.h.b16 %v1285
  %v4400 = vunpack.c.l.b16 %v1286
  %v4401 = vunpack.c.h.b16 %v1286
  %v4402 = vunpack.c.l.b16 %v1287
  %v4403 = vunpack.c.h.b16 %v1287
  %v4404 = vunpack.c.l.b16 %v1288
  %v4405 = vunpack.c.h.b16 %v1288
  %v4406 = vunpack.c.l.b16 %v1289
  %v4407 = vunpack.c.h.b16 %v1289
  %v4408 = vunpack.c.l.b16 %v1290
  %v4409 = vunpack.c.h.b16 %v1290
  %v4410 = vunpack.c.l.b16 %v1291
  %v4411 = vunpack.c.h.b16 %v1291
  %v4412 = vunpack.c.l.b16 %v1292
  %v4413 = vunpack.c.h.b16 %v1292
  %v4414 = vunpack.c.l.b16 %v1293
  %v4415 = vunpack.c.h.b16 %v1293
  %v4416 = vunpack.c.l.b16 %v1294
  %v4417 = vunpack.c.h.b16 %v1294
  %v4418 = vunpack.c.l.b16 %v1295
  %v4419 = vunpack.c.h.b16 %v1295
  %v4420 = vunpack.c.l.b16 %v1296
  %v4421 = vunpack.c.h.b16 %v1296
  %v4422 = vunpack.c.l.b16 %v1297
  %v4423 = vunpack.c.h.b16 %v1297
  %v4424 = vunpack.c.l.b16 %v1298
  %v4425 = vunpack.c.h.b16 %v1298
  %v4426 = vunpack.c.l.b16 %v1299
  %v4427 = vunpack.c.h.b16 %v1299
  %v4428 = vunpack.c.l.b16 %v1300
  %v4429 = vunpack.c.h.b16 %v1300
  %v4430 = vunpack.c.l.b16 %v1301
  %v4431 = vunpack.c.h.b16 %v1301
  %v4432 = vunpack.c.l.b16 %v1302
  %v4433 = vunpack.c.h.b16 %v1302
  %v4434 = vunpack.c.l.b16 %v1303
  %v4435 = vunpack.c.h.b16 %v1303
  %v4436 = vunpack.c.l.b16 %v1304
  %v4437 = vunpack.c.h.b16 %v1304
  %v4438 = vunpack.c.l.b16 %v1305
  %v4439 = vunpack.c.h.b16 %v1305
  %v4440 = vunpack.c.l.b16 %v1306
  %v4441 = vunpack.c.h.b16 %v1306
  %v4442 = vunpack.c.l.b16 %v1307
  %v4443 = vunpack.c.h.b16 %v1307
  %v4444 = vunpack.c.l.b16 %v1308
  %v4445 = vunpack.c.h.b16 %v1308
  %v4446 = vunpack.c.l.b16 %v1309
  %v4447 = vunpack.c.h.b16 %v1309
  %v4448 = vunpack.c.l.b16 %v1310
  %v4449 = vunpack.c.h.b16 %v1310
  %v4450 = vunpack.c.l.b16 %v1311
  %v4451 = vunpack.c.h.b16 %v1311
  %v4452 = vunpack.c.l.b16 %v1312
  %v4453 = vunpack.c.h.b16 %v1312
  %v4454 = vunpack.c.l.b16 %v1313
  %v4455 = vunpack.c.h.b16 %v1313
  %v4456 = vunpack.c.l.b16 %v1314
  %v4457 = vunpack.c.h.b16 %v1314
  %v4458 = vunpack.c.l.b16 %v1315
  %v4459 = vunpack.c.h.b16 %v1315
  %v4460 = vunpack.c.l.b16 %v1316
  %v4461 = vunpack.c.h.b16 %v1316
  %v4462 = vunpack.c.l.b16 %v1317
  %v4463 = vunpack.c.h.b16 %v1317
  %v4464 = vunpack.c.l.b16 %v1318
  %v4465 = vunpack.c.h.b16 %v1318
  %v4466 = vunpack.c.l.b16 %v1319
  %v4467 = vunpack.c.h.b16 %v1319
  %v4468 = vunpack.c.l.b16 %v1320
  %v4469 = vunpack.c.h.b16 %v1320
  %v4470 = vunpack.c.l.b16 %v1321
  %v4471 = vunpack.c.h.b16 %v1321
  %v4472 = vunpack.c.l.b16 %v1322
  %v4473 = vunpack.c.h.b16 %v1322
  %v4474 = vunpack.c.l.b16 %v1323
  %v4475 = vunpack.c.h.b16 %v1323
  %v4476 = vunpack.c.l.b16 %v1324
  %v4477 = vunpack.c.h.b16 %v1324
  %v4478 = vunpack.c.l.b16 %v1325
  %v4479 = vunpack.c.h.b16 %v1325
  %v4480 = vunpack.c.l.b16 %v1326
  %v4481 = vunpack.c.h.b16 %v1326
  %v4482 = vunpack.c.l.b16 %v1327
  %v4483 = vunpack.c.h.b16 %v1327
  %v4484 = vpack.c.b16 %v2452, %v2436
  %v4485 = vpack.c.b16 %v2453, %v2437
  %v4486 = vpack.c.b16 %v2454, %v2438
  %v4487 = vpack.c.b16 %v2455, %v2439
  %v4488 = vpack.c.b16 %v2456, %v2440
  %v4489 = vpack.c.b16 %v2457, %v2441
  %v4490 = vpack.c.b16 %v2458, %v2442
  %v4491 = vpack.c.b16 %v2459, %v2443
  %v4492 = vpack.c.b16 %v2460, %v2444
  %v4493 = vpack.c.b16 %v2461, %v2445
  %v4494 = vpack.c.b16 %v2462, %v2446
  %v4495 = vpack.c.b16 %v2463, %v2447
  %v4496 = vpack.c.b16 %v2464, %v2448
  %v4497 = vpack.c.b16 %v2465, %v2449
  %v4498 = vpack.c.b16 %v2466, %v2450
  %v4499 = vpack.c.b16 %v2467, %v2451
  %v4500 = vpack.c.b16 %v2484, %v2468
  %v4501 = vpack.c.b16 %v2485, %v2469
  %v4502 = vpack.c.b16 %v2486, %v2470
  %v4503 = vpack.c.b16 %v2487, %v2471
  %v4504 = vpack.c.b16 %v2488, %v2472
  %v4505 = vpack.c.b16 %v2489, %v2473
  %v4506 = vpack.c.b16 %v2490, %v2474
  %v4507 = vpack.c.b16 %v2491, %v2475
  %v4508 = vpack.c.b16 %v2492, %v2476
  %v4509 = vpack.c.b16 %v2493, %v2477
  %v4510 = vpack.c.b16 %v2494, %v2478
  %v4511 = vpack.c.b16 %v2495, %v2479
  %v4512 = vpack.c.b16 %v2496, %v2480
  %v4513 = vpack.c.b16 %v2497, %v2481
  %v4514 = vpack.c.b16 %v2498, %v2482
  %v4515 = vpack.c.b16 %v2499, %v2483
  %v4516 = vpack.c.b16 %v2516, %v2500
  %v4517 = vpack.c.b16 %v2517, %v2501
  %v4518 = vpack.c.b16 %v2518, %v2502
  %v4519 = vpack.c.b16 %v2519, %v2503
  %v4520 = vpack.c.b16 %v2520, %v2504
  %v4521 = vpack.c.b16 %v2521, %v2505
  %v4522 = vpack.c.b16 %v2522, %v2506
  %v4523 = vpack.c.b16 %v2523, %v2507
  %v4524 = vpack.c.b16 %v2524, %v2508
  %v4525 = vpack.c.b16 %v2525, %v2509
  %v4526 = vpack.c.b16 %v2526, %v2510
  %v4527 = vpack.c.b16 %v2527, %v2511
  %v4528 = vpack.c.b16 %v2528, %v2512
  %v4529 = vpack.c.b16 %v2529, %v2513
  %v4530 = vpack.c.b16 %v2530, %v2514
  %v4531 = vpack.c.b16 %v2531, %v2515
  %v4532 = vpack.c.b16 %v2548, %v2532
  %v4533 = vpack.c.b16 %v2549, %v2533
  %v4534 = vpack.c.b16 %v2550, %v2534
  %v4535 = vpack.c.b16 %v2551, %v2535
  %v4536 = vpack.c.b16 %v2552, %v2536
  %v4537 = vpack.c.b16 %v2553, %v2537
  %v4538 = vpack.c.b16 %v2554, %v2538
  %v4539 = vpack.c.b16 %v2555, %v2539
  %v4540 = vpack.c.b16 %v2556, %v2540
  %v4541 = vpack.c.b16 %v2557, %v2541
  %v4542 = vpack.c.b16 %v2558, %v2542
  %v4543 = vpack.c.b16 %v2559, %v2543
  %v4544 = vpack.c.b16 %v2560, %v2544
  %v4545 = vpack.c.b16 %v2561, %v2545
  %v4546 = vpack.c.b16 %v2562, %v2546
  %v4547 = vpack.c.b16 %v2563, %v2547
  %v4548 = vpack.c.b16 %v2580, %v2564
  %v4549 = vpack.c.b16 %v2581, %v2565
  %v4550 = vpack.c.b16 %v2582, %v2566
  %v4551 = vpack.c.b16 %v2583, %v2567
  %v4552 = vpack.c.b16 %v2584, %v2568
  %v4553 = vpack.c.b16 %v2585, %v2569
  %v4554 = vpack.c.b16 %v2586, %v2570
  %v4555 = vpack.c.b16 %v2587, %v2571
  %v4556 = vpack.c.b16 %v2588, %v2572
  %v4557 = vpack.c.b16 %v2589, %v2573
  %v4558 = vpack.c.b16 %v2590, %v2574
  %v4559 = vpack.c.b16 %v2591, %v2575
  %v4560 = vpack.c.b16 %v2592, %v2576
  %v4561 = vpack.c.b16 %v2593, %v2577
  %v4562 = vpack.c.b16 %v2594, %v2578
  %v4563 = vpack.c.b16 %v2595, %v2579
  %v4564 = vpack.c.b16 %v2612, %v2596
  %v4565 = vpack.c.b16 %v2613, %v2597
  %v4566 = vpack.c.b16 %v2614, %v2598
  %v4567 = vpack.c.b16 %v2615, %v2599
  %v4568 = vpack.c.b16 %v2616, %v2600
  %v4569 = vpack.c.b16 %v2617, %v2601
  %v4570 = vpack.c.b16 %v2618, %v2602
  %v4571 = vpack.c.b16 %v2619, %v2603
  %v4572 = vpack.c.b16 %v2620, %v2604
  %v4573 = vpack.c.b16 %v2621, %v2605
  %v4574 = vpack.c.b16 %v2622, %v2606
  %v4575 = vpack.c.b16 %v2623, %v2607
  %v4576 = vpack.c.b16 %v2624, %v2608
  %v4577 = vpack.c.b16 %v2625, %v2609
  %v4578 = vpack.c.b16 %v2626, %v2610
  %v4579 = vpack.c.b16 %v2627, %v2611
  %v4580 = vpack.c.b16 %v2644, %v2628
  %v4581 = vpack.c.b16 %v2645, %v2629
  %v4582 = vpack.c.b16 %v2646, %v2630
  %v4583 = vpack.c.b16 %v2647, %v2631
  %v4584 = vpack.c.b16 %v2648, %v2632
  %v4585 = vpack.c.b16 %v2649, %v2633
  %v4586 = vpack.c.b16 %v2650, %v2634
  %v4587 = vpack.c.b16 %v2651, %v2635
  %v4588 = vpack.c.b16 %v2652, %v2636
  %v4589 = vpack.c.b16 %v2653, %v2637
  %v4590 = vpack.c.b16 %v2654, %v2638
  %v4591 = vpack.c.b16 %v2655, %v2639
  %v4592 = vpack.c.b16 %v2656, %v2640
  %v4593 = vpack.c.b16 %v2657, %v2641
  %v4594 = vpack.c.b16 %v2658, %v2642
  %v4595 = vpack.c.b16 %v2659, %v2643
  %v4596 = vpack.c.b16 %v2676, %v2660
  %v4597 = vpack.c.b16 %v2677, %v2661
  %v4598 = vpack.c.b16 %v2678, %v2662
  %v4599 = vpack.c.b16 %v2679, %v2663
  %v4600 = vpack.c.b16 %v2680, %v2664
  %v4601 = vpack.c.b16 %v2681, %v2665
  %v4602 = vpack.c.b16 %v2682, %v2666
  %v4603 = vpack.c.b16 %v2683, %v2667
  %v4604 = vpack.c.b16 %v2684, %v2668
  %v4605 = vpack.c.b16 %v2685, %v2669
  %v4606 = vpack.c.b16 %v2686, %v2670
  %v4607 = vpack.c.b16 %v2687, %v2671
  %v4608 = vpack.c.b16 %v2688, %v2672
  %v4609 = vpack.c.b16 %v2689, %v2673
  %v4610 = vpack.c.b16 %v2690, %v2674
  %v4611 = vpack.c.b16 %v2691, %v2675
  %v4612 = vpack.c.b16 %v2708, %v2692
  %v4613 = vpack.c.b16 %v2709, %v2693
  %v4614 = vpack.c.b16 %v2710, %v2694
  %v4615 = vpack.c.b16 %v2711, %v2695
  %v4616 = vpack.c.b16 %v2712, %v2696
  %v4617 = vpack.c.b16 %v2713, %v2697
  %v4618 = vpack.c.b16 %v2714, %v2698
  %v4619 = vpack.c.b16 %v2715, %v2699
  %v4620 = vpack.c.b16 %v2716, %v2700
  %v4621 = vpack.c.b16 %v2717, %v2701
  %v4622 = vpack.c.b16 %v2718, %v2702
  %v4623 = vpack.c.b16 %v2719, %v2703
  %v4624 = vpack.c.b16 %v2720, %v2704
  %v4625 = vpack.c.b16 %v2721, %v2705
  %v4626 = vpack.c.b16 %v2722, %v2706
  %v4627 = vpack.c.b16 %v2723, %v2707
  %v4628 = vpack.c.b16 %v2740, %v2724
  %v4629 = vpack.c.b16 %v2741, %v2725
  %v4630 = vpack.c.b16 %v2742, %v2726
  %v4631 = vpack.c.b16 %v2743, %v2727
  %v4632 = vpack.c.b16 %v2744, %v2728
  %v4633 = vpack.c.b16 %v2745, %v2729
  %v4634 = vpack.c.b16 %v2746, %v2730
  %v4635 = vpack.c.b16 %v2747, %v2731
  %v4636 = vpack.c.b16 %v2748, %v2732
  %v4637 = vpack.c.b16 %v2749, %v2733
  %v4638 = vpack.c.b16 %v2750, %v2734
  %v4639 = vpack.c.b16 %v2751, %v2735
  %v4640 = vpack.c.b16 %v2752, %v2736
  %v4641 = vpack.c.b16 %v2753, %v2737
  %v4642 = vpack.c.b16 %v2754, %v2738
  %v4643 = vpack.c.b16 %v2755, %v2739
  %v4644 = vpack.c.b16 %v2772, %v2756
  %v4645 = vpack.c.b16 %v2773, %v2757
  %v4646 = vpack.c.b16 %v2774, %v2758
  %v4647 = vpack.c.b16 %v2775, %v2759
  %v4648 = vpack.c.b16 %v2776, %v2760
  %v4649 = vpack.c.b16 %v2777, %v2761
  %v4650 = vpack.c.b16 %v2778, %v2762
  %v4651 = vpack.c.b16 %v2779, %v2763
  %v4652 = vpack.c.b16 %v2780, %v2764
  %v4653 = vpack.c.b16 %v2781, %v2765
  %v4654 = vpack.c.b16 %v2782, %v2766
  %v4655 = vpack.c.b16 %v2783, %v2767
  %v4656 = vpack.c.b16 %v2784, %v2768
  %v4657 = vpack.c.b16 %v2785, %v2769
  %v4658 = vpack.c.b16 %v2786, %v2770
  %v4659 = vpack.c.b16 %v2787, %v2771
  %v4660 = vpack.c.b16 %v2804, %v2788
  %v4661 = vpack.c.b16 %v2805, %v2789
  %v4662 = vpack.c.b16 %v2806, %v2790
  %v4663 = vpack.c.b16 %v2807, %v2791
  %v4664 = vpack.c.b16 %v2808, %v2792
  %v4665 = vpack.c.b16 %v2809, %v2793
  %v4666 = vpack.c.b16 %v2810, %v2794
  %v4667 = vpack.c.b16 %v2811, %v2795
  %v4668 = vpack.c.b16 %v2812, %v2796
  %v4669 = vpack.c.b16 %v2813, %v2797
  %v4670 = vpack.c.b16 %v2814, %v2798
  %v4671 = vpack.c.b16 %v2815, %v2799
  %v4672 = vpack.c.b16 %v2816, %v2800
  %v4673 = vpack.c.b16 %v2817, %v2801
  %v4674 = vpack.c.b16 %v2818, %v2802
  %v4675 = vpack.c.b16 %v2819, %v2803
  %v4676 = vpack.c.b16 %v2836, %v2820
  %v4677 = vpack.c.b16 %v2837, %v2821
  %v4678 = vpack.c.b16 %v2838, %v2822
  %v4679 = vpack.c.b16 %v2839, %v2823
  %v4680 = vpack.c.b16 %v2840, %v2824
  %v4681 = vpack.c.b16 %v2841, %v2825
  %v4682 = vpack.c.b16 %v2842, %v2826
  %v4683 = vpack.c.b16 %v2843, %v2827
  %v4684 = vpack.c.b16 %v2844, %v2828
  %v4685 = vpack.c.b16 %v2845, %v2829
  %v4686 = vpack.c.b16 %v2846, %v2830
  %v4687 = vpack.c.b16 %v2847, %v2831
  %v4688 = vpack.c.b16 %v2848, %v2832
  %v4689 = vpack.c.b16 %v2849, %v2833
  %v4690 = vpack.c.b16 %v2850, %v2834
  %v4691 = vpack.c.b16 %v2851, %v2835
  %v4692 = vpack.c.b16 %v2868, %v2852
  %v4693 = vpack.c.b16 %v2869, %v2853
  %v4694 = vpack.c.b16 %v2870, %v2854
  %v4695 = vpack.c.b16 %v2871, %v2855
  %v4696 = vpack.c.b16 %v2872, %v2856
  %v4697 = vpack.c.b16 %v2873, %v2857
  %v4698 = vpack.c.b16 %v2874, %v2858
  %v4699 = vpack.c.b16 %v2875, %v2859
  %v4700 = vpack.c.b16 %v2876, %v2860
  %v4701 = vpack.c.b16 %v2877, %v2861
  %v4702 = vpack.c.b16 %v2878, %v2862
  %v4703 = vpack.c.b16 %v2879, %v2863
  %v4704 = vpack.c.b16 %v2880, %v2864
  %v4705 = vpack.c.b16 %v2881, %v2865
  %v4706 = vpack.c.b16 %v2882, %v2866
  %v4707 = vpack.c.b16 %v2883, %v2867
  %v4708 = vpack.c.b16 %v2900, %v2884
  %v4709 = vpack.c.b16 %v2901, %v2885
  %v4710 = vpack.c.b16 %v2902, %v2886
  %v4711 = vpack.c.b16 %v2903, %v2887
  %v4712 = vpack.c.b16 %v2904, %v2888
  %v4713 = vpack.c.b16 %v2905, %v2889
  %v4714 = vpack.c.b16 %v2906, %v2890
  %v4715 = vpack.c.b16 %v2907, %v2891
  %v4716 = vpack.c.b16 %v2908, %v2892
  %v4717 = vpack.c.b16 %v2909, %v2893
  %v4718 = vpack.c.b16 %v2910, %v2894
  %v4719 = vpack.c.b16 %v2911, %v2895
  %v4720 = vpack.c.b16 %v2912, %v2896
  %v4721 = vpack.c.b16 %v2913, %v2897
  %v4722 = vpack.c.b16 %v2914, %v2898
  %v4723 = vpack.c.b16 %v2915, %v2899
  %v4724 = vpack.c.b16 %v2932, %v2916
  %v4725 = vpack.c.b16 %v2933, %v2917
  %v4726 = vpack.c.b16 %v2934, %v2918
  %v4727 = vpack.c.b16 %v2935, %v2919
  %v4728 = vpack.c.b16 %v2936, %v2920
  %v4729 = vpack.c.b16 %v2937, %v2921
  %v4730 = vpack.c.b16 %v2938, %v2922
  %v4731 = vpack.c.b16 %v2939, %v2923
  %v4732 = vpack.c.b16 %v2940, %v2924
  %v4733 = vpack.c.b16 %v2941, %v2925
  %v4734 = vpack.c.b16 %v2942, %v2926
  %v4735 = vpack.c.b16 %v2943, %v2927
  %v4736 = vpack.c.b16 %v2944, %v2928
  %v4737 = vpack.c.b16 %v2945, %v2929
  %v4738 = vpack.c.b16 %v2946, %v2930
  %v4739 = vpack.c.b16 %v2947, %v2931
  %v4740 = vpack.c.b16 %v2964, %v2948
  %v4741 = vpack.c.b16 %v2965, %v2949
  %v4742 = vpack.c.b16 %v2966, %v2950
  %v4743 = vpack.c.b16 %v2967, %v2951
  %v4744 = vpack.c.b16 %v2968, %v2952
  %v4745 = vpack.c.b16 %v2969, %v2953
  %v4746 = vpack.c.b16 %v2970, %v2954
  %v4747 = vpack.c.b16 %v2971, %v2955
  %v4748 = vpack.c.b16 %v2972, %v2956
  %v4749 = vpack.c.b16 %v2973, %v2957
  %v4750 = vpack.c.b16 %v2974, %v2958
  %v4751 = vpack.c.b16 %v2975, %v2959
  %v4752 = vpack.c.b16 %v2976, %v2960
  %v4753 = vpack.c.b16 %v2977, %v2961
  %v4754 = vpack.c.b16 %v2978, %v2962
  %v4755 = vpack.c.b16 %v2979, %v2963
  %v4756 = vpack.c.b16 %v2996, %v2980
  %v4757 = vpack.c.b16 %v2997, %v2981
  %v4758 = vpack.c.b16 %v2998, %v2982
  %v4759 = vpack.c.b16 %v2999, %v2983
  %v4760 = vpack.c.b16 %v3000, %v2984
  %v4761 = vpack.c.b16 %v3001, %v2985
  %v4762 = vpack.c.b16 %v3002, %v2986
  %v4763 = vpack.c.b16 %v3003, %v2987
  %v4764 = vpack.c.b16 %v3004, %v2988
  %v4765 = vpack.c.b16 %v3005, %v2989
  %v4766 = vpack.c.b16 %v3006, %v2990
  %v4767 = vpack.c.b16 %v3007, %v2991
  %v4768 = vpack.c.b16 %v3008, %v2992
  %v4769 = vpack.c.b16 %v3009, %v2993
  %v4770 = vpack.c.b16 %v3010, %v2994
  %v4771 = vpack.c.b16 %v3011, %v2995
  %v4772 = vpack.c.b16 %v3028, %v3012
  %v4773 = vpack.c.b16 %v3029, %v3013
  %v4774 = vpack.c.b16 %v3030, %v3014
  %v4775 = vpack.c.b16 %v3031, %v3015
  %v4776 = vpack.c.b16 %v3032, %v3016
  %v4777 = vpack.c.b16 %v3033, %v3017
  %v4778 = vpack.c.b16 %v3034, %v3018
  %v4779 = vpack.c.b16 %v3035, %v3019
  %v4780 = vpack.c.b16 %v3036, %v3020
  %v4781 = vpack.c.b16 %v3037, %v3021
  %v4782 = vpack.c.b16 %v3038, %v3022
  %v4783 = vpack.c.b16 %v3039, %v3023
  %v4784 = vpack.c.b16 %v3040, %v3024
  %v4785 = vpack.c.b16 %v3041, %v3025
  %v4786 = vpack.c.b16 %v3042, %v3026
  %v4787 = vpack.c.b16 %v3043, %v3027
  %v4788 = vpack.c.b16 %v3060, %v3044
  %v4789 = vpack.c.b16 %v3061, %v3045
  %v4790 = vpack.c.b16 %v3062, %v3046
  %v4791 = vpack.c.b16 %v3063, %v3047
  %v4792 = vpack.c.b16 %v3064, %v3048
  %v4793 = vpack.c.b16 %v3065, %v3049
  %v4794 = vpack.c.b16 %v3066, %v3050
  %v4795 = vpack.c.b16 %v3067, %v3051
  %v4796 = vpack.c.b16 %v3068, %v3052
  %v4797 = vpack.c.b16 %v3069, %v3053
  %v4798 = vpack.c.b16 %v3070, %v3054
  %v4799 = vpack.c.b16 %v3071, %v3055
  %v4800 = vpack.c.b16 %v3072, %v3056
  %v4801 = vpack.c.b16 %v3073, %v3057
  %v4802 = vpack.c.b16 %v3074, %v3058
  %v4803 = vpack.c.b16 %v3075, %v3059
  %v4804 = vpack.c.b16 %v3092, %v3076
  %v4805 = vpack.c.b16 %v3093, %v3077
  %v4806 = vpack.c.b16 %v3094, %v3078
  %v4807 = vpack.c.b16 %v3095, %v3079
  %v4808 = vpack.c.b16 %v3096, %v3080
  %v4809 = vpack.c.b16 %v3097, %v3081
  %v4810 = vpack.c.b16 %v3098, %v3082
  %v4811 = vpack.c.b16 %v3099, %v3083
  %v4812 = vpack.c.b16 %v3100, %v3084
  %v4813 = vpack.c.b16 %v3101, %v3085
  %v4814 = vpack.c.b16 %v3102, %v3086
  %v4815 = vpack.c.b16 %v3103, %v3087
  %v4816 = vpack.c.b16 %v3104, %v3088
  %v4817 = vpack.c.b16 %v3105, %v3089
  %v4818 = vpack.c.b16 %v3106, %v3090
  %v4819 = vpack.c.b16 %v3107, %v3091
  %v4820 = vpack.c.b16 %v3124, %v3108
  %v4821 = vpack.c.b16 %v3125, %v3109
  %v4822 = vpack.c.b16 %v3126, %v3110
  %v4823 = vpack.c.b16 %v3127, %v3111
  %v4824 = vpack.c.b16 %v3128, %v3112
  %v4825 = vpack.c.b16 %v3129, %v3113
  %v4826 = vpack.c.b16 %v3130, %v3114
  %v4827 = vpack.c.b16 %v3131, %v3115
  %v4828 = vpack.c.b16 %v3132, %v3116
  %v4829 = vpack.c.b16 %v3133, %v3117
  %v4830 = vpack.c.b16 %v3134, %v3118
  %v4831 = vpack.c.b16 %v3135, %v3119
  %v4832 = vpack.c.b16 %v3136, %v3120
  %v4833 = vpack.c.b16 %v3137, %v3121
  %v4834 = vpack.c.b16 %v3138, %v3122
  %v4835 = vpack.c.b16 %v3139, %v3123
  %v4836 = vpack.c.b16 %v3156, %v3140
  %v4837 = vpack.c.b16 %v3157, %v3141
  %v4838 = vpack.c.b16 %v3158, %v3142
  %v4839 = vpack.c.b16 %v3159, %v3143
  %v4840 = vpack.c.b16 %v3160, %v3144
  %v4841 = vpack.c.b16 %v3161, %v3145
  %v4842 = vpack.c.b16 %v3162, %v3146
  %v4843 = vpack.c.b16 %v3163, %v3147
  %v4844 = vpack.c.b16 %v3164, %v3148
  %v4845 = vpack.c.b16 %v3165, %v3149
  %v4846 = vpack.c.b16 %v3166, %v3150
  %v4847 = vpack.c.b16 %v3167, %v3151
  %v4848 = vpack.c.b16 %v3168, %v3152
  %v4849 = vpack.c.b16 %v3169, %v3153
  %v4850 = vpack.c.b16 %v3170, %v3154
  %v4851 = vpack.c.b16 %v3171, %v3155
  %v4852 = vpack.c.b16 %v3188, %v3172
  %v4853 = vpack.c.b16 %v3189, %v3173
  %v4854 = vpack.c.b16 %v3190, %v3174
  %v4855 = vpack.c.b16 %v3191, %v3175
  %v4856 = vpack.c.b16 %v3192, %v3176
  %v4857 = vpack.c.b16 %v3193, %v3177
  %v4858 = vpack.c.b16 %v3194, %v3178
  %v4859 = vpack.c.b16 %v3195, %v3179
  %v4860 = vpack.c.b16 %v3196, %v3180
  %v4861 = vpack.c.b16 %v3197, %v3181
  %v4862 = vpack.c.b16 %v3198, %v3182
  %v4863 = vpack.c.b16 %v3199, %v3183
  %v4864 = vpack.c.b16 %v3200, %v3184
  %v4865 = vpack.c.b16 %v3201, %v3185
  %v4866 = vpack.c.b16 %v3202, %v3186
  %v4867 = vpack.c.b16 %v3203, %v3187
  %v4868 = vpack.c.b16 %v3220, %v3204
  %v4869 = vpack.c.b16 %v3221, %v3205
  %v4870 = vpack.c.b16 %v3222, %v3206
  %v4871 = vpack.c.b16 %v3223, %v3207
  %v4872 = vpack.c.b16 %v3224, %v3208
  %v4873 = vpack.c.b16 %v3225, %v3209
  %v4874 = vpack.c.b16 %v3226, %v3210
  %v4875 = vpack.c.b16 %v3227, %v3211
  %v4876 = vpack.c.b16 %v3228, %v3212
  %v4877 = vpack.c.b16 %v3229, %v3213
  %v4878 = vpack.c.b16 %v3230, %v3214
  %v4879 = vpack.c.b16 %v3231, %v3215
  %v4880 = vpack.c.b16 %v3232, %v3216
  %v4881 = vpack.c.b16 %v3233, %v3217
  %v4882 = vpack.c.b16 %v3234, %v3218
  %v4883 = vpack.c.b16 %v3235, %v3219
  %v4884 = vpack.c.b16 %v3252, %v3236
  %v4885 = vpack.c.b16 %v3253, %v3237
  %v4886 = vpack.c.b16 %v3254, %v3238
  %v4887 = vpack.c.b16 %v3255, %v3239
  %v4888 = vpack.c.b16 %v3256, %v3240
  %v4889 = vpack.c.b16 %v3257, %v3241
  %v4890 = vpack.c.b16 %v3258, %v3242
  %v4891 = vpack.c.b16 %v3259, %v3243
  %v4892 = vpack.c.b16 %v3260, %v3244
  %v4893 = vpack.c.b16 %v3261, %v3245
  %v4894 = vpack.c.b16 %v3262, %v3246
  %v4895 = vpack.c.b16 %v3263, %v3247
  %v4896 = vpack.c.b16 %v3264, %v3248
  %v4897 = vpack.c.b16 %v3265, %v3249
  %v4898 = vpack.c.b16 %v3266, %v3250
  %v4899 = vpack.c.b16 %v3267, %v3251
  %v4900 = vpack.c.b16 %v3284, %v3268
  %v4901 = vpack.c.b16 %v3285, %v3269
  %v4902 = vpack.c.b16 %v3286, %v3270
  %v4903 = vpack.c.b16 %v3287, %v3271
  %v4904 = vpack.c.b16 %v3288, %v3272
  %v4905 = vpack.c.b16 %v3289, %v3273
  %v4906 = vpack.c.b16 %v3290, %v3274
  %v4907 = vpack.c.b16 %v3291, %v3275
  %v4908 = vpack.c.b16 %v3292, %v3276
  %v4909 = vpack.c.b16 %v3293, %v3277
  %v4910 = vpack.c.b16 %v3294, %v3278
  %v4911 = vpack.c.b16 %v3295, %v3279
  %v4912 = vpack.c.b16 %v3296, %v3280
  %v4913 = vpack.c.b16 %v3297, %v3281
  %v4914 = vpack.c.b16 %v3298, %v3282
  %v4915 = vpack.c.b16 %v3299, %v3283
  %v4916 = vpack.c.b16 %v3316, %v3300
  %v4917 = vpack.c.b16 %v3317, %v3301
  %v4918 = vpack.c.b16 %v3318, %v3302
  %v4919 = vpack.c.b16 %v3319, %v3303
  %v4920 = vpack.c.b16 %v3320, %v3304
  %v4921 = vpack.c.b16 %v3321, %v3305
  %v4922 = vpack.c.b16 %v3322, %v3306
  %v4923 = vpack.c.b16 %v3323, %v3307
  %v4924 = vpack.c.b16 %v3324, %v3308
  %v4925 = vpack.c.b16 %v3325, %v3309
  %v4926 = vpack.c.b16 %v3326, %v3310
  %v4927 = vpack.c.b16 %v3327, %v3311
  %v4928 = vpack.c.b16 %v3328, %v3312
  %v4929 = vpack.c.b16 %v3329, %v3313
  %v4930 = vpack.c.b16 %v3330, %v3314
  %v4931 = vpack.c.b16 %v3331, %v3315
  %v4932 = vpack.c.b16 %v3348, %v3332
  %v4933 = vpack.c.b16 %v3349, %v3333
  %v4934 = vpack.c.b16 %v3350, %v3334
  %v4935 = vpack.c.b16 %v3351, %v3335
  %v4936 = vpack.c.b16 %v3352, %v3336
  %v4937 = vpack.c.b16 %v3353, %v3337
  %v4938 = vpack.c.b16 %v3354, %v3338
  %v4939 = vpack.c.b16 %v3355, %v3339
  %v4940 = vpack.c.b16 %v3356, %v3340
  %v4941 = vpack.c.b16 %v3357, %v3341
  %v4942 = vpack.c.b16 %v3358, %v3342
  %v4943 = vpack.c.b16 %v3359, %v3343
  %v4944 = vpack.c.b16 %v3360, %v3344
  %v4945 = vpack.c.b16 %v3361, %v3345
  %v4946 = vpack.c.b16 %v3362, %v3346
  %v4947 = vpack.c.b16 %v3363, %v3347
  %v4948 = vpack.c.b16 %v3380, %v3364
  %v4949 = vpack.c.b16 %v3381, %v3365
  %v4950 = vpack.c.b16 %v3382, %v3366
  %v4951 = vpack.c.b16 %v3383, %v3367
  %v4952 = vpack.c.b16 %v3384, %v3368
  %v4953 = vpack.c.b16 %v3385, %v3369
  %v4954 = vpack.c.b16 %v3386, %v3370
  %v4955 = vpack.c.b16 %v3387, %v3371
  %v4956 = vpack.c.b16 %v3388, %v3372
  %v4957 = vpack.c.b16 %v3389, %v3373
  %v4958 = vpack.c.b16 %v3390, %v3374
  %v4959 = vpack.c.b16 %v3391, %v3375
  %v4960 = vpack.c.b16 %v3392, %v3376
  %v4961 = vpack.c.b16 %v3393, %v3377
  %v4962 = vpack.c.b16 %v3394, %v3378
  %v4963 = vpack.c.b16 %v3395, %v3379
  %v4964 = vpack.c.b16 %v3412, %v3396
  %v4965 = vpack.c.b16 %v3413, %v3397
  %v4966 = vpack.c.b16 %v3414, %v3398
  %v4967 = vpack.c.b16 %v3415, %v3399
  %v4968 = vpack.c.b16 %v3416, %v3400
  %v4969 = vpack.c.b16 %v3417, %v3401
  %v4970 = vpack.c.b16 %v3418, %v3402
  %v4971 = vpack.c.b16 %v3419, %v3403
  %v4972 = vpack.c.b16 %v3420, %v3404
  %v4973 = vpack.c.b16 %v3421, %v3405
  %v4974 = vpack.c.b16 %v3422, %v3406
  %v4975 = vpack.c.b16 %v3423, %v3407
  %v4976 = vpack.c.b16 %v3424, %v3408
  %v4977 = vpack.c.b16 %v3425, %v3409
  %v4978 = vpack.c.b16 %v3426, %v3410
  %v4979 = vpack.c.b16 %v3427, %v3411
  %v4980 = vpack.c.b16 %v3444, %v3428
  %v4981 = vpack.c.b16 %v3445, %v3429
  %v4982 = vpack.c.b16 %v3446, %v3430
  %v4983 = vpack.c.b16 %v3447, %v3431
  %v4984 = vpack.c.b16 %v3448, %v3432
  %v4985 = vpack.c.b16 %v3449, %v3433
  %v4986 = vpack.c.b16 %v3450, %v3434
  %v4987 = vpack.c.b16 %v3451, %v3435
  %v4988 = vpack.c.b16 %v3452, %v3436
  %v4989 = vpack.c.b16 %v3453, %v3437
  %v4990 = vpack.c.b16 %v3454, %v3438
  %v4991 = vpack.c.b16 %v3455, %v3439
  %v4992 = vpack.c.b16 %v3456, %v3440
  %v4993 = vpack.c.b16 %v3457, %v3441
  %v4994 = vpack.c.b16 %v3458, %v3442
  %v4995 = vpack.c.b16 %v3459, %v3443
  %v4996 = vpack.c.b16 %v3476, %v3460
  %v4997 = vpack.c.b16 %v3477, %v3461
  %v4998 = vpack.c.b16 %v3478, %v3462
  %v4999 = vpack.c.b16 %v3479, %v3463
  %v5000 = vpack.c.b16 %v3480, %v3464
  %v5001 = vpack.c.b16 %v3481, %v3465
  %v5002 = vpack.c.b16 %v3482, %v3466
  %v5003 = vpack.c.b16 %v3483, %v3467
  %v5004 = vpack.c.b16 %v3484, %v3468
  %v5005 = vpack.c.b16 %v3485, %v3469
  %v5006 = vpack.c.b16 %v3486, %v3470
  %v5007 = vpack.c.b16 %v3487, %v3471
  %v5008 = vpack.c.b16 %v3488, %v3472
  %v5009 = vpack.c.b16 %v3489, %v3473
  %v5010 = vpack.c.b16 %v3490, %v3474
  %v5011 = vpack.c.b16 %v3491, %v3475
  %v5012 = vpack.c.b16 %v3508, %v3492
  %v5013 = vpack.c.b16 %v3509, %v3493
  %v5014 = vpack.c.b16 %v3510, %v3494
  %v5015 = vpack.c.b16 %v3511, %v3495
  %v5016 = vpack.c.b16 %v3512, %v3496
  %v5017 = vpack.c.b16 %v3513, %v3497
  %v5018 = vpack.c.b16 %v3514, %v3498
  %v5019 = vpack.c.b16 %v3515, %v3499
  %v5020 = vpack.c.b16 %v3516, %v3500
  %v5021 = vpack.c.b16 %v3517, %v3501
  %v5022 = vpack.c.b16 %v3518, %v3502
  %v5023 = vpack.c.b16 %v3519, %v3503
  %v5024 = vpack.c.b16 %v3520, %v3504
  %v5025 = vpack.c.b16 %v3521, %v3505
  %v5026 = vpack.c.b16 %v3522, %v3506
  %v5027 = vpack.c.b16 %v3523, %v3507
  %v5028 = vpack.c.b16 %v3540, %v3524
  %v5029 = vpack.c.b16 %v3541, %v3525
  %v5030 = vpack.c.b16 %v3542, %v3526
  %v5031 = vpack.c.b16 %v3543, %v3527
  %v5032 = vpack.c.b16 %v3544, %v3528
  %v5033 = vpack.c.b16 %v3545, %v3529
  %v5034 = vpack.c.b16 %v3546, %v3530
  %v5035 = vpack.c.b16 %v3547, %v3531
  %v5036 = vpack.c.b16 %v3548, %v3532
  %v5037 = vpack.c.b16 %v3549, %v3533
  %v5038 = vpack.c.b16 %v3550, %v3534
  %v5039 = vpack.c.b16 %v3551, %v3535
  %v5040 = vpack.c.b16 %v3552, %v3536
  %v5041 = vpack.c.b16 %v3553, %v3537
  %v5042 = vpack.c.b16 %v3554, %v3538
  %v5043 = vpack.c.b16 %v3555, %v3539
  %v5044 = vpack.c.b16 %v3572, %v3556
  %v5045 = vpack.c.b16 %v3573, %v3557
  %v5046 = vpack.c.b16 %v3574, %v3558
  %v5047 = vpack.c.b16 %v3575, %v3559
  %v5048 = vpack.c.b16 %v3576, %v3560
  %v5049 = vpack.c.b16 %v3577, %v3561
  %v5050 = vpack.c.b16 %v3578, %v3562
  %v5051 = vpack.c.b16 %v3579, %v3563
  %v5052 = vpack.c.b16 %v3580, %v3564
  %v5053 = vpack.c.b16 %v3581, %v3565
  %v5054 = vpack.c.b16 %v3582, %v3566
  %v5055 = vpack.c.b16 %v3583, %v3567
  %v5056 = vpack.c.b16 %v3584, %v3568
  %v5057 = vpack.c.b16 %v3585, %v3569
  %v5058 = vpack.c.b16 %v3586, %v3570
  %v5059 = vpack.c.b16 %v3587, %v3571
  %v5060 = vpack.c.b16 %v3604, %v3588
  %v5061 = vpack.c.b16 %v3605, %v3589
  %v5062 = vpack.c.b16 %v3606, %v3590
  %v5063 = vpack.c.b16 %v3607, %v3591
  %v5064 = vpack.c.b16 %v3608, %v3592
  %v5065 = vpack.c.b16 %v3609, %v3593
  %v5066 = vpack.c.b16 %v3610, %v3594
  %v5067 = vpack.c.b16 %v3611, %v3595
  %v5068 = vpack.c.b16 %v3612, %v3596
  %v5069 = vpack.c.b16 %v3613, %v3597
  %v5070 = vpack.c.b16 %v3614, %v3598
  %v5071 = vpack.c.b16 %v3615, %v3599
  %v5072 = vpack.c.b16 %v3616, %v3600
  %v5073 = vpack.c.b16 %v3617, %v3601
  %v5074 = vpack.c.b16 %v3618, %v3602
  %v5075 = vpack.c.b16 %v3619, %v3603
  %v5076 = vpack.c.b16 %v3636, %v3620
  %v5077 = vpack.c.b16 %v3637, %v3621
  %v5078 = vpack.c.b16 %v3638, %v3622
  %v5079 = vpack.c.b16 %v3639, %v3623
  %v5080 = vpack.c.b16 %v3640, %v3624
  %v5081 = vpack.c.b16 %v3641, %v3625
  %v5082 = vpack.c.b16 %v3642, %v3626
  %v5083 = vpack.c.b16 %v3643, %v3627
  %v5084 = vpack.c.b16 %v3644, %v3628
  %v5085 = vpack.c.b16 %v3645, %v3629
  %v5086 = vpack.c.b16 %v3646, %v3630
  %v5087 = vpack.c.b16 %v3647, %v3631
  %v5088 = vpack.c.b16 %v3648, %v3632
  %v5089 = vpack.c.b16 %v3649, %v3633
  %v5090 = vpack.c.b16 %v3650, %v3634
  %v5091 = vpack.c.b16 %v3651, %v3635
  %v5092 = vpack.c.b16 %v3668, %v3652
  %v5093 = vpack.c.b16 %v3669, %v3653
  %v5094 = vpack.c.b16 %v3670, %v3654
  %v5095 = vpack.c.b16 %v3671, %v3655
  %v5096 = vpack.c.b16 %v3672, %v3656
  %v5097 = vpack.c.b16 %v3673, %v3657
  %v5098 = vpack.c.b16 %v3674, %v3658
  %v5099 = vpack.c.b16 %v3675, %v3659
  %v5100 = vpack.c.b16 %v3676, %v3660
  %v5101 = vpack.c.b16 %v3677, %v3661
  %v5102 = vpack.c.b16 %v3678, %v3662
  %v5103 = vpack.c.b16 %v3679, %v3663
  %v5104 = vpack.c.b16 %v3680, %v3664
  %v5105 = vpack.c.b16 %v3681, %v3665
  %v5106 = vpack.c.b16 %v3682, %v3666
  %v5107 = vpack.c.b16 %v3683, %v3667
  %v5108 = vpack.c.b16 %v3700, %v3684
  %v5109 = vpack.c.b16 %v3701, %v3685
  %v5110 = vpack.c.b16 %v3702, %v3686
  %v5111 = vpack.c.b16 %v3703, %v3687
  %v5112 = vpack.c.b16 %v3704, %v3688
  %v5113 = vpack.c.b16 %v3705, %v3689
  %v5114 = vpack.c.b16 %v3706, %v3690
  %v5115 = vpack.c.b16 %v3707, %v3691
  %v5116 = vpack.c.b16 %v3708, %v3692
  %v5117 = vpack.c.b16 %v3709, %v3693
  %v5118 = vpack.c.b16 %v3710, %v3694
  %v5119 = vpack.c.b16 %v3711, %v3695
  %v5120 = vpack.c.b16 %v3712, %v3696
  %v5121 = vpack.c.b16 %v3713, %v3697
  %v5122 = vpack.c.b16 %v3714, %v3698
  %v5123 = vpack.c.b16 %v3715, %v3699
  %v5124 = vpack.c.b16 %v3732, %v3716
  %v5125 = vpack.c.b16 %v3733, %v3717
  %v5126 = vpack.c.b16 %v3734, %v3718
  %v5127 = vpack.c.b16 %v3735, %v3719
  %v5128 = vpack.c.b16 %v3736, %v3720
  %v5129 = vpack.c.b16 %v3737, %v3721
  %v5130 = vpack.c.b16 %v3738, %v3722
  %v5131 = vpack.c.b16 %v3739, %v3723
  %v5132 = vpack.c.b16 %v3740, %v3724
  %v5133 = vpack.c.b16 %v3741, %v3725
  %v5134 = vpack.c.b16 %v3742, %v3726
  %v5135 = vpack.c.b16 %v3743, %v3727
  %v5136 = vpack.c.b16 %v3744, %v3728
  %v5137 = vpack.c.b16 %v3745, %v3729
  %v5138 = vpack.c.b16 %v3746, %v3730
  %v5139 = vpack.c.b16 %v3747, %v3731
  %v5140 = vpack.c.b16 %v3764, %v3748
  %v5141 = vpack.c.b16 %v3765, %v3749
  %v5142 = vpack.c.b16 %v3766, %v3750
  %v5143 = vpack.c.b16 %v3767, %v3751
  %v5144 = vpack.c.b16 %v3768, %v3752
  %v5145 = vpack.c.b16 %v3769, %v3753
  %v5146 = vpack.c.b16 %v3770, %v3754
  %v5147 = vpack.c.b16 %v3771, %v3755
  %v5148 = vpack.c.b16 %v3772, %v3756
  %v5149 = vpack.c.b16 %v3773, %v3757
  %v5150 = vpack.c.b16 %v3774, %v3758
  %v5151 = vpack.c.b16 %v3775, %v3759
  %v5152 = vpack.c.b16 %v3776, %v3760
  %v5153 = vpack.c.b16 %v3777, %v3761
  %v5154 = vpack.c.b16 %v3778, %v3762
  %v5155 = vpack.c.b16 %v3779, %v3763
  %v5156 = vpack.c.b16 %v3796, %v3780
  %v5157 = vpack.c.b16 %v3797, %v3781
  %v5158 = vpack.c.b16 %v3798, %v3782
  %v5159 = vpack.c.b16 %v3799, %v3783
  %v5160 = vpack.c.b16 %v3800, %v3784
  %v5161 = vpack.c.b16 %v3801, %v3785
  %v5162 = vpack.c.b16 %v3802, %v3786
  %v5163 = vpack.c.b16 %v3803, %v3787
  %v5164 = vpack.c.b16 %v3804, %v3788
  %v5165 = vpack.c.b16 %v3805, %v3789
  %v5166 = vpack.c.b16 %v3806, %v3790
  %v5167 = vpack.c.b16 %v3807, %v3791
  %v5168 = vpack.c.b16 %v3808, %v3792
  %v5169 = vpack.c.b16 %v3809, %v3793
  %v5170 = vpack.c.b16 %v3810, %v3794
  %v5171 = vpack.c.b16 %v3811, %v3795
  %v5172 = vpack.c.b16 %v3828, %v3812
  %v5173 = vpack.c.b16 %v3829, %v3813
  %v5174 = vpack.c.b16 %v3830, %v3814
  %v5175 = vpack.c.b16 %v3831, %v3815
  %v5176 = vpack.c.b16 %v3832, %v3816
  %v5177 = vpack.c.b16 %v3833, %v3817
  %v5178 = vpack.c.b16 %v3834, %v3818
  %v5179 = vpack.c.b16 %v3835, %v3819
  %v5180 = vpack.c.b16 %v3836, %v3820
  %v5181 = vpack.c.b16 %v3837, %v3821
  %v5182 = vpack.c.b16 %v3838, %v3822
  %v5183 = vpack.c.b16 %v3839, %v3823
  %v5184 = vpack.c.b16 %v3840, %v3824
  %v5185 = vpack.c.b16 %v3841, %v3825
  %v5186 = vpack.c.b16 %v3842, %v3826
  %v5187 = vpack.c.b16 %v3843, %v3827
  %v5188 = vpack.c.b16 %v3860, %v3844
  %v5189 = vpack.c.b16 %v3861, %v3845
  %v5190 = vpack.c.b16 %v3862, %v3846
  %v5191 = vpack.c.b16 %v3863, %v3847
  %v5192 = vpack.c.b16 %v3864, %v3848
  %v5193 = vpack.c.b16 %v3865, %v3849
  %v5194 = vpack.c.b16 %v3866, %v3850
  %v5195 = vpack.c.b16 %v3867, %v3851
  %v5196 = vpack.c.b16 %v3868, %v3852
  %v5197 = vpack.c.b16 %v3869, %v3853
  %v5198 = vpack.c.b16 %v3870, %v3854
  %v5199 = vpack.c.b16 %v3871, %v3855
  %v5200 = vpack.c.b16 %v3872, %v3856
  %v5201 = vpack.c.b16 %v3873, %v3857
  %v5202 = vpack.c.b16 %v3874, %v3858
  %v5203 = vpack.c.b16 %v3875, %v3859
  %v5204 = vpack.c.b16 %v3892, %v3876
  %v5205 = vpack.c.b16 %v3893, %v3877
  %v5206 = vpack.c.b16 %v3894, %v3878
  %v5207 = vpack.c.b16 %v3895, %v3879
  %v5208 = vpack.c.b16 %v3896, %v3880
  %v5209 = vpack.c.b16 %v3897, %v3881
  %v5210 = vpack.c.b16 %v3898, %v3882
  %v5211 = vpack.c.b16 %v3899, %v3883
  %v5212 = vpack.c.b16 %v3900, %v3884
  %v5213 = vpack.c.b16 %v3901, %v3885
  %v5214 = vpack.c.b16 %v3902, %v3886
  %v5215 = vpack.c.b16 %v3903, %v3887
  %v5216 = vpack.c.b16 %v3904, %v3888
  %v5217 = vpack.c.b16 %v3905, %v3889
  %v5218 = vpack.c.b16 %v3906, %v3890
  %v5219 = vpack.c.b16 %v3907, %v3891
  %v5220 = vpack.c.b16 %v3924, %v3908
  %v5221 = vpack.c.b16 %v3925, %v3909
  %v5222 = vpack.c.b16 %v3926, %v3910
  %v5223 = vpack.c.b16 %v3927, %v3911
  %v5224 = vpack.c.b16 %v3928, %v3912
  %v5225 = vpack.c.b16 %v3929, %v3913
  %v5226 = vpack.c.b16 %v3930, %v3914
  %v5227 = vpack.c.b16 %v3931, %v3915
  %v5228 = vpack.c.b16 %v3932, %v3916
  %v5229 = vpack.c.b16 %v3933, %v3917
  %v5230 = vpack.c.b16 %v3934, %v3918
  %v5231 = vpack.c.b16 %v3935, %v3919
  %v5232 = vpack.c.b16 %v3936, %v3920
  %v5233 = vpack.c.b16 %v3937, %v3921
  %v5234 = vpack.c.b16 %v3938, %v3922
  %v5235 = vpack.c.b16 %v3939, %v3923
  %v5236 = vpack.c.b16 %v3956, %v3940
  %v5237 = vpack.c.b16 %v3957, %v3941
  %v5238 = vpack.c.b16 %v3958, %v3942
  %v5239 = vpack.c.b16 %v3959, %v3943
  %v5240 = vpack.c.b16 %v3960, %v3944
  %v5241 = vpack.c.b16 %v3961, %v3945
  %v5242 = vpack.c.b16 %v3962, %v3946
  %v5243 = vpack.c.b16 %v3963, %v3947
  %v5244 = vpack.c.b16 %v3964, %v3948
  %v5245 = vpack.c.b16 %v3965, %v3949
  %v5246 = vpack.c.b16 %v3966, %v3950
  %v5247 = vpack.c.b16 %v3967, %v3951
  %v5248 = vpack.c.b16 %v3968, %v3952
  %v5249 = vpack.c.b16 %v3969, %v3953
  %v5250 = vpack.c.b16 %v3970, %v3954
  %v5251 = vpack.c.b16 %v3971, %v3955
  %v5252 = vpack.c.b16 %v3988, %v3972
  %v5253 = vpack.c.b16 %v3989, %v3973
  %v5254 = vpack.c.b16 %v3990, %v3974
  %v5255 = vpack.c.b16 %v3991, %v3975
  %v5256 = vpack.c.b16 %v3992, %v3976
  %v5257 = vpack.c.b16 %v3993, %v3977
  %v5258 = vpack.c.b16 %v3994, %v3978
  %v5259 = vpack.c.b16 %v3995, %v3979
  %v5260 = vpack.c.b16 %v3996, %v3980
  %v5261 = vpack.c.b16 %v3997, %v3981
  %v5262 = vpack.c.b16 %v3998, %v3982
  %v5263 = vpack.c.b16 %v3999, %v3983
  %v5264 = vpack.c.b16 %v4000, %v3984
  %v5265 = vpack.c.b16 %v4001, %v3985
  %v5266 = vpack.c.b16 %v4002, %v3986
  %v5267 = vpack.c.b16 %v4003, %v3987
  %v5268 = vpack.c.b16 %v4020, %v4004
  %v5269 = vpack.c.b16 %v4021, %v4005
  %v5270 = vpack.c.b16 %v4022, %v4006
  %v5271 = vpack.c.b16 %v4023, %v4007
  %v5272 = vpack.c.b16 %v4024, %v4008
  %v5273 = vpack.c.b16 %v4025, %v4009
  %v5274 = vpack.c.b16 %v4026, %v4010
  %v5275 = vpack.c.b16 %v4027, %v4011
  %v5276 = vpack.c.b16 %v4028, %v4012
  %v5277 = vpack.c.b16 %v4029, %v4013
  %v5278 = vpack.c.b16 %v4030, %v4014
  %v5279 = vpack.c.b16 %v4031, %v4015
  %v5280 = vpack.c.b16 %v4032, %v4016
  %v5281 = vpack.c.b16 %v4033, %v4017
  %v5282 = vpack.c.b16 %v4034, %v4018
  %v5283 = vpack.c.b16 %v4035, %v4019
  %v5284 = vpack.c.b16 %v4052, %v4036
  %v5285 = vpack.c.b16 %v4053, %v4037
  %v5286 = vpack.c.b16 %v4054, %v4038
  %v5287 = vpack.c.b16 %v4055, %v4039
  %v5288 = vpack.c.b16 %v4056, %v4040
  %v5289 = vpack.c.b16 %v4057, %v4041
  %v5290 = vpack.c.b16 %v4058, %v4042
  %v5291 = vpack.c.b16 %v4059, %v4043
  %v5292 = vpack.c.b16 %v4060, %v4044
  %v5293 = vpack.c.b16 %v4061, %v4045
  %v5294 = vpack.c.b16 %v4062, %v4046
  %v5295 = vpack.c.b16 %v4063, %v4047
  %v5296 = vpack.c.b16 %v4064, %v4048
  %v5297 = vpack.c.b16 %v4065, %v4049
  %v5298 = vpack.c.b16 %v4066, %v4050
  %v5299 = vpack.c.b16 %v4067, %v4051
  %v5300 = vpack.c.b16 %v4084, %v4068
  %v5301 = vpack.c.b16 %v4085, %v4069
  %v5302 = vpack.c.b16 %v4086, %v4070
  %v5303 = vpack.c.b16 %v4087, %v4071
  %v5304 = vpack.c.b16 %v4088, %v4072
  %v5305 = vpack.c.b16 %v4089, %v4073
  %v5306 = vpack.c.b16 %v4090, %v4074
  %v5307 = vpack.c.b16 %v4091, %v4075
  %v5308 = vpack.c.b16 %v4092, %v4076
  %v5309 = vpack.c.b16 %v4093, %v4077
  %v5310 = vpack.c.b16 %v4094, %v4078
  %v5311 = vpack.c.b16 %v4095, %v4079
  %v5312 = vpack.c.b16 %v4096, %v4080
  %v5313 = vpack.c.b16 %v4097, %v4081
  %v5314 = vpack.c.b16 %v4098, %v4082
  %v5315 = vpack.c.b16 %v4099, %v4083
  %v5316 = vpack.c.b16 %v4116, %v4100
  %v5317 = vpack.c.b16 %v4117, %v4101
  %v5318 = vpack.c.b16 %v4118, %v4102
  %v5319 = vpack.c.b16 %v4119, %v4103
  %v5320 = vpack.c.b16 %v4120, %v4104
  %v5321 = vpack.c.b16 %v4121, %v4105
  %v5322 = vpack.c.b16 %v4122, %v4106
  %v5323 = vpack.c.b16 %v4123, %v4107
  %v5324 = vpack.c.b16 %v4124, %v4108
  %v5325 = vpack.c.b16 %v4125, %v4109
  %v5326 = vpack.c.b16 %v4126, %v4110
  %v5327 = vpack.c.b16 %v4127, %v4111
  %v5328 = vpack.c.b16 %v4128, %v4112
  %v5329 = vpack.c.b16 %v4129, %v4113
  %v5330 = vpack.c.b16 %v4130, %v4114
  %v5331 = vpack.c.b16 %v4131, %v4115
  %v5332 = vpack.c.b16 %v4148, %v4132
  %v5333 = vpack.c.b16 %v4149, %v4133
  %v5334 = vpack.c.b16 %v4150, %v4134
  %v5335 = vpack.c.b16 %v4151, %v4135
  %v5336 = vpack.c.b16 %v4152, %v4136
  %v5337 = vpack.c.b16 %v4153, %v4137
  %v5338 = vpack.c.b16 %v4154, %v4138
  %v5339 = vpack.c.b16 %v4155, %v4139
  %v5340 = vpack.c.b16 %v4156, %v4140
  %v5341 = vpack.c.b16 %v4157, %v4141
  %v5342 = vpack.c.b16 %v4158, %v4142
  %v5343 = vpack.c.b16 %v4159, %v4143
  %v5344 = vpack.c.b16 %v4160, %v4144
  %v5345 = vpack.c.b16 %v4161, %v4145
  %v5346 = vpack.c.b16 %v4162, %v4146
  %v5347 = vpack.c.b16 %v4163, %v4147
  %v5348 = vpack.c.b16 %v4180, %v4164
  %v5349 = vpack.c.b16 %v4181, %v4165
  %v5350 = vpack.c.b16 %v4182, %v4166
  %v5351 = vpack.c.b16 %v4183, %v4167
  %v5352 = vpack.c.b16 %v4184, %v4168
  %v5353 = vpack.c.b16 %v4185, %v4169
  %v5354 = vpack.c.b16 %v4186, %v4170
  %v5355 = vpack.c.b16 %v4187, %v4171
  %v5356 = vpack.c.b16 %v4188, %v4172
  %v5357 = vpack.c.b16 %v4189, %v4173
  %v5358 = vpack.c.b16 %v4190, %v4174
  %v5359 = vpack.c.b16 %v4191, %v4175
  %v5360 = vpack.c.b16 %v4192, %v4176
  %v5361 = vpack.c.b16 %v4193, %v4177
  %v5362 = vpack.c.b16 %v4194, %v4178
  %v5363 = vpack.c.b16 %v4195, %v4179
  %v5364 = vpack.c.b16 %v4212, %v4196
  %v5365 = vpack.c.b16 %v4213, %v4197
  %v5366 = vpack.c.b16 %v4214, %v4198
  %v5367 = vpack.c.b16 %v4215, %v4199
  %v5368 = vpack.c.b16 %v4216, %v4200
  %v5369 = vpack.c.b16 %v4217, %v4201
  %v5370 = vpack.c.b16 %v4218, %v4202
  %v5371 = vpack.c.b16 %v4219, %v4203
  %v5372 = vpack.c.b16 %v4220, %v4204
  %v5373 = vpack.c.b16 %v4221, %v4205
  %v5374 = vpack.c.b16 %v4222, %v4206
  %v5375 = vpack.c.b16 %v4223, %v4207
  %v5376 = vpack.c.b16 %v4224, %v4208
  %v5377 = vpack.c.b16 %v4225, %v4209
  %v5378 = vpack.c.b16 %v4226, %v4210
  %v5379 = vpack.c.b16 %v4227, %v4211
  %v5380 = vpack.c.b16 %v4244, %v4228
  %v5381 = vpack.c.b16 %v4245, %v4229
  %v5382 = vpack.c.b16 %v4246, %v4230
  %v5383 = vpack.c.b16 %v4247, %v4231
  %v5384 = vpack.c.b16 %v4248, %v4232
  %v5385 = vpack.c.b16 %v4249, %v4233
  %v5386 = vpack.c.b16 %v4250, %v4234
  %v5387 = vpack.c.b16 %v4251, %v4235
  %v5388 = vpack.c.b16 %v4252, %v4236
  %v5389 = vpack.c.b16 %v4253, %v4237
  %v5390 = vpack.c.b16 %v4254, %v4238
  %v5391 = vpack.c.b16 %v4255, %v4239
  %v5392 = vpack.c.b16 %v4256, %v4240
  %v5393 = vpack.c.b16 %v4257, %v4241
  %v5394 = vpack.c.b16 %v4258, %v4242
  %v5395 = vpack.c.b16 %v4259, %v4243
  %v5396 = vpack.c.b16 %v4276, %v4260
  %v5397 = vpack.c.b16 %v4277, %v4261
  %v5398 = vpack.c.b16 %v4278, %v4262
  %v5399 = vpack.c.b16 %v4279, %v4263
  %v5400 = vpack.c.b16 %v4280, %v4264
  %v5401 = vpack.c.b16 %v4281, %v4265
  %v5402 = vpack.c.b16 %v4282, %v4266
  %v5403 = vpack.c.b16 %v4283, %v4267
  %v5404 = vpack.c.b16 %v4284, %v4268
  %v5405 = vpack.c.b16 %v4285, %v4269
  %v5406 = vpack.c.b16 %v4286, %v4270
  %v5407 = vpack.c.b16 %v4287, %v4271
  %v5408 = vpack.c.b16 %v4288, %v4272
  %v5409 = vpack.c.b16 %v4289, %v4273
  %v5410 = vpack.c.b16 %v4290, %v4274
  %v5411 = vpack.c.b16 %v4291, %v4275
  %v5412 = vpack.c.b16 %v4308, %v4292
  %v5413 = vpack.c.b16 %v4309, %v4293
  %v5414 = vpack.c.b16 %v4310, %v4294
  %v5415 = vpack.c.b16 %v4311, %v4295
  %v5416 = vpack.c.b16 %v4312, %v4296
  %v5417 = vpack.c.b16 %v4313, %v4297
  %v5418 = vpack.c.b16 %v4314, %v4298
  %v5419 = vpack.c.b16 %v4315, %v4299
  %v5420 = vpack.c.b16 %v4316, %v4300
  %v5421 = vpack.c.b16 %v4317, %v4301
  %v5422 = vpack.c.b16 %v4318, %v4302
  %v5423 = vpack.c.b16 %v4319, %v4303
  %v5424 = vpack.c.b16 %v4320, %v4304
  %v5425 = vpack.c.b16 %v4321, %v4305
  %v5426 = vpack.c.b16 %v4322, %v4306
  %v5427 = vpack.c.b16 %v4323, %v4307
  %v5428 = vpack.c.b16 %v4340, %v4324
  %v5429 = vpack.c.b16 %v4341, %v4325
  %v5430 = vpack.c.b16 %v4342, %v4326
  %v5431 = vpack.c.b16 %v4343, %v4327
  %v5432 = vpack.c.b16 %v4344, %v4328
  %v5433 = vpack.c.b16 %v4345, %v4329
  %v5434 = vpack.c.b16 %v4346, %v4330
  %v5435 = vpack.c.b16 %v4347, %v4331
  %v5436 = vpack.c.b16 %v4348, %v4332
  %v5437 = vpack.c.b16 %v4349, %v4333
  %v5438 = vpack.c.b16 %v4350, %v4334
  %v5439 = vpack.c.b16 %v4351, %v4335
  %v5440 = vpack.c.b16 %v4352, %v4336
  %v5441 = vpack.c.b16 %v4353, %v4337
  %v5442 = vpack.c.b16 %v4354, %v4338
  %v5443 = vpack.c.b16 %v4355, %v4339
  %v5444 = vpack.c.b16 %v4372, %v4356
  %v5445 = vpack.c.b16 %v4373, %v4357
  %v5446 = vpack.c.b16 %v4374, %v4358
  %v5447 = vpack.c.b16 %v4375, %v4359
  %v5448 = vpack.c.b16 %v4376, %v4360
  %v5449 = vpack.c.b16 %v4377, %v4361
  %v5450 = vpack.c.b16 %v4378, %v4362
  %v5451 = vpack.c.b16 %v4379, %v4363
  %v5452 = vpack.c.b16 %v4380, %v4364
  %v5453 = vpack.c.b16 %v4381, %v4365
  %v5454 = vpack.c.b16 %v4382, %v4366
  %v5455 = vpack.c.b16 %v4383, %v4367
  %v5456 = vpack.c.b16 %v4384, %v4368
  %v5457 = vpack.c.b16 %v4385, %v4369
  %v5458 = vpack.c.b16 %v4386, %v4370
  %v5459 = vpack.c.b16 %v4387, %v4371
  %v5460 = vpack.c.b16 %v4404, %v4388
  %v5461 = vpack.c.b16 %v4405, %v4389
  %v5462 = vpack.c.b16 %v4406, %v4390
  %v5463 = vpack.c.b16 %v4407, %v4391
  %v5464 = vpack.c.b16 %v4408, %v4392
  %v5465 = vpack.c.b16 %v4409, %v4393
  %v5466 = vpack.c.b16 %v4410, %v4394
  %v5467 = vpack.c.b16 %v4411, %v4395
  %v5468 = vpack.c.b16 %v4412, %v4396
  %v5469 = vpack.c.b16 %v4413, %v4397
  %v5470 = vpack.c.b16 %v4414, %v4398
  %v5471 = vpack.c.b16 %v4415, %v4399
  %v5472 = vpack.c.b16 %v4416, %v4400
  %v5473 = vpack.c.b16 %v4417, %v4401
  %v5474 = vpack.c.b16 %v4418, %v4402
  %v5475 = vpack.c.b16 %v4419, %v4403
  %v5476 = vpack.c.b16 %v4436, %v4420
  %v5477 = vpack.c.b16 %v4437, %v4421
  %v5478 = vpack.c.b16 %v4438, %v4422
  %v5479 = vpack.c.b16 %v4439, %v4423
  %v5480 = vpack.c.b16 %v4440, %v4424
  %v5481 = vpack.c.b16 %v4441, %v4425
  %v5482 = vpack.c.b16 %v4442, %v4426
  %v5483 = vpack.c.b16 %v4443, %v4427
  %v5484 = vpack.c.b16 %v4444, %v4428
  %v5485 = vpack.c.b16 %v4445, %v4429
  %v5486 = vpack.c.b16 %v4446, %v4430
  %v5487 = vpack.c.b16 %v4447, %v4431
  %v5488 = vpack.c.b16 %v4448, %v4432
  %v5489 = vpack.c.b16 %v4449, %v4433
  %v5490 = vpack.c.b16 %v4450, %v4434
  %v5491 = vpack.c.b16 %v4451, %v4435
  %v5492 = vpack.c.b16 %v4468, %v4452
  %v5493 = vpack.c.b16 %v4469, %v4453
  %v5494 = vpack.c.b16 %v4470, %v4454
  %v5495 = vpack.c.b16 %v4471, %v4455
  %v5496 = vpack.c.b16 %v4472, %v4456
  %v5497 = vpack.c.b16 %v4473, %v4457
  %v5498 = vpack.c.b16 %v4474, %v4458
  %v5499 = vpack.c.b16 %v4475, %v4459
  %v5500 = vpack.c.b16 %v4476, %v4460
  %v5501 = vpack.c.b16 %v4477, %v4461
  %v5502 = vpack.c.b16 %v4478, %v4462
  %v5503 = vpack.c.b16 %v4479, %v4463
  %v5504 = vpack.c.b16 %v4480, %v4464
  %v5505 = vpack.c.b16 %v4481, %v4465
  %v5506 = vpack.c.b16 %v4482, %v4466
  %v5507 = vpack.c.b16 %v4483, %v4467
  %6532 = vmatprep.subr.bf16.mxu0 %v4485
  %6533 = vmatpush1.bf16.msra.mxu0 %v4484
  %6534 = vmatprep.subr.bf16.mxu0 %v4501
  %6535 = vmatpush1.bf16.msra.mxu0 %v4500
  %6536 = vmatprep.subr.bf16.mxu0 %v4517
  %6537 = vmatpush1.bf16.msra.mxu0 %v4516
  %6538 = vmatprep.subr.bf16.mxu0 %v4533
  %6539 = vmatpush1.bf16.msra.mxu0 %v4532
  %6540 = vmatprep.subr.bf16.mxu0 %v4549
  %6541 = vmatpush1.bf16.msra.mxu0 %v4548
  %6542 = vmatprep.subr.bf16.mxu0 %v4565
  %6543 = vmatpush1.bf16.msra.mxu0 %v4564
  %6544 = vmatprep.subr.bf16.mxu0 %v4581
  %6545 = vmatpush1.bf16.msra.mxu0 %v4580
  %6546 = vmatprep.subr.bf16.mxu0 %v4597
  %6547 = vmatpush1.bf16.msra.mxu0 %v4596
  %6548 = vmatprep.subr.bf16.mxu0 %v4613
  %6549 = vmatpush1.bf16.msra.mxu0 %v4612
  %6550 = vmatprep.subr.bf16.mxu0 %v4629
  %6551 = vmatpush1.bf16.msra.mxu0 %v4628
  %6552 = vmatprep.subr.bf16.mxu0 %v4645
  %6553 = vmatpush1.bf16.msra.mxu0 %v4644
  %6554 = vmatprep.subr.bf16.mxu0 %v4661
  %6555 = vmatpush1.bf16.msra.mxu0 %v4660
  %6556 = vmatprep.subr.bf16.mxu0 %v4677
  %6557 = vmatpush1.bf16.msra.mxu0 %v4676
  %6558 = vmatprep.subr.bf16.mxu0 %v4693
  %6559 = vmatpush1.bf16.msra.mxu0 %v4692
  %6560 = vmatprep.subr.bf16.mxu0 %v4709
  %6561 = vmatpush1.bf16.msra.mxu0 %v4708
  %6562 = vmatprep.subr.bf16.mxu0 %v4725
  %6563 = vmatpush1.bf16.msra.mxu0 %v4724
  %6564 = vmatprep.mubr.bf16.mxu0 %v297
  %6565 = vmatmul.mubr.bf16.gmra.mrb[0].mxu0 %v296
  %v6566 = vpop.f32.mrb[0].mxu0
  %v6567 = vadd.f32 %v1335, %v6566
  %v6568 = vpop.f32.mrb[0].mxu0
  %v6569 = vadd.f32 %v1339, %v6568
  %v6570 = vpop.f32.mrb[0].mxu0
  %v6571 = vpop.f32.mrb[0].mxu0
  %6572 = vdwg.mxu0
  %6573 = vmatprep.subr.bf16.mxu0 %v4741
  %6574 = vmatpush1.bf16.msra.mxu0 %v4740
  %6575 = vmatprep.subr.bf16.mxu0 %v4757
  %6576 = vmatpush1.bf16.msra.mxu0 %v4756
  %6577 = vmatprep.subr.bf16.mxu0 %v4773
  %6578 = vmatpush1.bf16.msra.mxu0 %v4772
  %6579 = vmatprep.subr.bf16.mxu0 %v4789
  %6580 = vmatpush1.bf16.msra.mxu0 %v4788
  %6581 = vmatprep.subr.bf16.mxu0 %v4805
  %6582 = vmatpush1.bf16.msra.mxu0 %v4804
  %6583 = vmatprep.subr.bf16.mxu0 %v4821
  %6584 = vmatpush1.bf16.msra.mxu0 %v4820
  %6585 = vmatprep.subr.bf16.mxu0 %v4837
  %6586 = vmatpush1.bf16.msra.mxu0 %v4836
  %6587 = vmatprep.subr.bf16.mxu0 %v4853
  %6588 = vmatpush1.bf16.msra.mxu0 %v4852
  %6589 = vmatprep.subr.bf16.mxu0 %v4869
  %6590 = vmatpush1.bf16.msra.mxu0 %v4868
  %6591 = vmatprep.subr.bf16.mxu0 %v4885
  %6592 = vmatpush1.bf16.msra.mxu0 %v4884
  %6593 = vmatprep.subr.bf16.mxu0 %v4901
  %6594 = vmatpush1.bf16.msra.mxu0 %v4900
  %6595 = vmatprep.subr.bf16.mxu0 %v4917
  %6596 = vmatpush1.bf16.msra.mxu0 %v4916
  %6597 = vmatprep.subr.bf16.mxu0 %v4933
  %6598 = vmatpush1.bf16.msra.mxu0 %v4932
  %6599 = vmatprep.subr.bf16.mxu0 %v4949
  %6600 = vmatpush1.bf16.msra.mxu0 %v4948
  %6601 = vmatprep.subr.bf16.mxu0 %v4965
  %6602 = vmatpush1.bf16.msra.mxu0 %v4964
  %6603 = vmatprep.subr.bf16.mxu0 %v4981
  %6604 = vmatpush1.bf16.msra.mxu0 %v4980
  %6605 = vmatprep.mubr.bf16.mxu0 %v299
  %6606 = vmatmul.mubr.bf16.gmra.mrb[0].mxu0 %v298
  %v6607 = vpop.f32.mrb[0].mxu0
  %v6608 = vadd.f32 %v6567, %v6607
  %v6609 = vpop.f32.mrb[0].mxu0
  %v6610 = vadd.f32 %v6569, %v6609
  %v6611 = vpop.f32.mrb[0].mxu0
  %v6612 = vpop.f32.mrb[0].mxu0
  %6613 = vdwg.mxu0
  %6614 = vmatprep.subr.bf16.mxu0 %v4997
  %6615 = vmatpush1.bf16.msra.mxu0 %v4996
  %6616 = vmatprep.subr.bf16.mxu0 %v5013
  %6617 = vmatpush1.bf16.msra.mxu0 %v5012
  %6618 = vmatprep.subr.bf16.mxu0 %v5029
  %6619 = vmatpush1.bf16.msra.mxu0 %v5028
  %6620 = vmatprep.subr.bf16.mxu0 %v5045
  %6621 = vmatpush1.bf16.msra.mxu0 %v5044
  %6622 = vmatprep.subr.bf16.mxu0 %v5061
  %6623 = vmatpush1.bf16.msra.mxu0 %v5060
  %6624 = vmatprep.subr.bf16.mxu0 %v5077
  %6625 = vmatpush1.bf16.msra.mxu0 %v5076
  %6626 = vmatprep.subr.bf16.mxu0 %v5093
  %6627 = vmatpush1.bf16.msra.mxu0 %v5092
  %6628 = vmatprep.subr.bf16.mxu0 %v5109
  %6629 = vmatpush1.bf16.msra.mxu0 %v5108
  %6630 = vmatprep.subr.bf16.mxu0 %v5125
  %6631 = vmatpush1.bf16.msra.mxu0 %v5124
  %6632 = vmatprep.subr.bf16.mxu0 %v5141
  %6633 = vmatpush1.bf16.msra.mxu0 %v5140
  %6634 = vmatprep.subr.bf16.mxu0 %v5157
  %6635 = vmatpush1.bf16.msra.mxu0 %v5156
  %6636 = vmatprep.subr.bf16.mxu0 %v5173
  %6637 = vmatpush1.bf16.msra.mxu0 %v5172
  %6638 = vmatprep.subr.bf16.mxu0 %v5189
  %6639 = vmatpush1.bf16.msra.mxu0 %v5188
  %6640 = vmatprep.subr.bf16.mxu0 %v5205
  %6641 = vmatpush1.bf16.msra.mxu0 %v5204
  %6642 = vmatprep.subr.bf16.mxu0 %v5221
  %6643 = vmatpush1.bf16.msra.mxu0 %v5220
  %6644 = vmatprep.subr.bf16.mxu0 %v5237
  %6645 = vmatpush1.bf16.msra.mxu0 %v5236
  %6646 = vmatprep.mubr.bf16.mxu0 %v301
  %6647 = vmatmul.mubr.bf16.gmra.mrb[0].mxu0 %v300
  %v6648 = vpop.f32.mrb[0].mxu0
  %v6649 = vadd.f32 %v6608, %v6648
  %v6650 = vpop.f32.mrb[0].mxu0
  %v6651 = vadd.f32 %v6610, %v6650
  %v6652 = vpop.f32.mrb[0].mxu0
  %v6653 = vpop.f32.mrb[0].mxu0
  %6654 = vdwg.mxu0
  %6655 = vmatprep.subr.bf16.mxu0 %v5253
  %6656 = vmatpush1.bf16.msra.mxu0 %v5252
  %6657 = vmatprep.subr.bf16.mxu0 %v5269
  %6658 = vmatpush1.bf16.msra.mxu0 %v5268
  %6659 = vmatprep.subr.bf16.mxu0 %v5285
  %6660 = vmatpush1.bf16.msra.mxu0 %v5284
  %6661 = vmatprep.subr.bf16.mxu0 %v5301
  %6662 = vmatpush1.bf16.msra.mxu0 %v5300
  %6663 = vmatprep.subr.bf16.mxu0 %v5317
  %6664 = vmatpush1.bf16.msra.mxu0 %v5316
  %6665 = vmatprep.subr.bf16.mxu0 %v5333
  %6666 = vmatpush1.bf16.msra.mxu0 %v5332
  %6667 = vmatprep.subr.bf16.mxu0 %v5349
  %6668 = vmatpush1.bf16.msra.mxu0 %v5348
  %6669 = vmatprep.subr.bf16.mxu0 %v5365
  %6670 = vmatpush1.bf16.msra.mxu0 %v5364
  %6671 = vmatprep.subr.bf16.mxu0 %v5381
  %6672 = vmatpush1.bf16.msra.mxu0 %v5380
  %6673 = vmatprep.subr.bf16.mxu0 %v5397
  %6674 = vmatpush1.bf16.msra.mxu0 %v5396
  %6675 = vmatprep.subr.bf16.mxu0 %v5413
  %6676 = vmatpush1.bf16.msra.mxu0 %v5412
  %6677 = vmatprep.subr.bf16.mxu0 %v5429
  %6678 = vmatpush1.bf16.msra.mxu0 %v5428
  %6679 = vmatprep.subr.bf16.mxu0 %v5445
  %6680 = vmatpush1.bf16.msra.mxu0 %v5444
  %6681 = vmatprep.subr.bf16.mxu0 %v5461
  %6682 = vmatpush1.bf16.msra.mxu0 %v5460
  %6683 = vmatprep.subr.bf16.mxu0 %v5477
  %6684 = vmatpush1.bf16.msra.mxu0 %v5476
  %6685 = vmatprep.subr.bf16.mxu0 %v5493
  %6686 = vmatpush1.bf16.msra.mxu0 %v5492
  %6687 = vmatprep.mubr.bf16.mxu0 %v303
  %6688 = vmatmul.mubr.bf16.gmra.mrb[0].mxu0 %v302
  %v6689 = vpop.f32.mrb[0].mxu0
  %v6690 = vadd.f32 %v6649, %v6689
  %v6691 = vpop.f32.mrb[0].mxu0
  %v6692 = vadd.f32 %v6651, %v6691
  %v6693 = vpop.f32.mrb[0].mxu0
  %v6694 = vpop.f32.mrb[0].mxu0
  %6695 = vdwg.mxu0
  %6696 = vmatprep.subr.bf16.mxu0 %v4487
  %6697 = vmatpush1.bf16.msra.mxu0 %v4486
  %6698 = vmatprep.subr.bf16.mxu0 %v4503
  %6699 = vmatpush1.bf16.msra.mxu0 %v4502
  %6700 = vmatprep.subr.bf16.mxu0 %v4519
  %6701 = vmatpush1.bf16.msra.mxu0 %v4518
  %6702 = vmatprep.subr.bf16.mxu0 %v4535
  %6703 = vmatpush1.bf16.msra.mxu0 %v4534
  %6704 = vmatprep.subr.bf16.mxu0 %v4551
  %6705 = vmatpush1.bf16.msra.mxu0 %v4550
  %6706 = vmatprep.subr.bf16.mxu0 %v4567
  %6707 = vmatpush1.bf16.msra.mxu0 %v4566
  %6708 = vmatprep.subr.bf16.mxu0 %v4583
  %6709 = vmatpush1.bf16.msra.mxu0 %v4582
  %6710 = vmatprep.subr.bf16.mxu0 %v4599
  %6711 = vmatpush1.bf16.msra.mxu0 %v4598
  %6712 = vmatprep.subr.bf16.mxu0 %v4615
  %6713 = vmatpush1.bf16.msra.mxu0 %v4614
  %6714 = vmatprep.subr.bf16.mxu0 %v4631
  %6715 = vmatpush1.bf16.msra.mxu0 %v4630
  %6716 = vmatprep.subr.bf16.mxu0 %v4647
  %6717 = vmatpush1.bf16.msra.mxu0 %v4646
  %6718 = vmatprep.subr.bf16.mxu0 %v4663
  %6719 = vmatpush1.bf16.msra.mxu0 %v4662
  %6720 = vmatprep.subr.bf16.mxu0 %v4679
  %6721 = vmatpush1.bf16.msra.mxu0 %v4678
  %6722 = vmatprep.subr.bf16.mxu0 %v4695
  %6723 = vmatpush1.bf16.msra.mxu0 %v4694
  %6724 = vmatprep.subr.bf16.mxu0 %v4711
  %6725 = vmatpush1.bf16.msra.mxu0 %v4710
  %6726 = vmatprep.subr.bf16.mxu0 %v4727
  %6727 = vmatpush1.bf16.msra.mxu0 %v4726
  %6728 = vmatprep.mubr.bf16.mxu0 %v297
  %6729 = vmatmul.mubr.bf16.gmra.mrb[0].mxu0 %v296
  %v6730 = vpop.f32.mrb[0].mxu0
  %v6731 = vadd.f32 %v1343, %v6730
  %v6732 = vpop.f32.mrb[0].mxu0
  %v6733 = vadd.f32 %v1347, %v6732
  %v6734 = vpop.f32.mrb[0].mxu0
  %v6735 = vpop.f32.mrb[0].mxu0
  %6736 = vdwg.mxu0
  %6737 = vmatprep.subr.bf16.mxu0 %v4743
  %6738 = vmatpush1.bf16.msra.mxu0 %v4742
  %6739 = vmatprep.subr.bf16.mxu0 %v4759
  %6740 = vmatpush1.bf16.msra.mxu0 %v4758
  %6741 = vmatprep.subr.bf16.mxu0 %v4775
  %6742 = vmatpush1.bf16.msra.mxu0 %v4774
  %6743 = vmatprep.subr.bf16.mxu0 %v4791
  %6744 = vmatpush1.bf16.msra.mxu0 %v4790
  %6745 = vmatprep.subr.bf16.mxu0 %v4807
  %6746 = vmatpush1.bf16.msra.mxu0 %v4806
  %6747 = vmatprep.subr.bf16.mxu0 %v4823
  %6748 = vmatpush1.bf16.msra.mxu0 %v4822
  %6749 = vmatprep.subr.bf16.mxu0 %v4839
  %6750 = vmatpush1.bf16.msra.mxu0 %v4838
  %6751 = vmatprep.subr.bf16.mxu0 %v4855
  %6752 = vmatpush1.bf16.msra.mxu0 %v4854
  %6753 = vmatprep.subr.bf16.mxu0 %v4871
  %6754 = vmatpush1.bf16.msra.mxu0 %v4870
  %6755 = vmatprep.subr.bf16.mxu0 %v4887
  %6756 = vmatpush1.bf16.msra.mxu0 %v4886
  %6757 = vmatprep.subr.bf16.mxu0 %v4903
  %6758 = vmatpush1.bf16.msra.mxu0 %v4902
  %6759 = vmatprep.subr.bf16.mxu0 %v4919
  %6760 = vmatpush1.bf16.msra.mxu0 %v4918
  %6761 = vmatprep.subr.bf16.mxu0 %v4935
  %6762 = vmatpush1.bf16.msra.mxu0 %v4934
  %6763 = vmatprep.subr.bf16.mxu0 %v4951
  %6764 = vmatpush1.bf16.msra.mxu0 %v4950
  %6765 = vmatprep.subr.bf16.mxu0 %v4967
  %6766 = vmatpush1.bf16.msra.mxu0 %v4966
  %6767 = vmatprep.subr.bf16.mxu0 %v4983
  %6768 = vmatpush1.bf16.msra.mxu0 %v4982
  %6769 = vmatprep.mubr.bf16.mxu0 %v299
  %6770 = vmatmul.mubr.bf16.gmra.mrb[0].mxu0 %v298
  %v6771 = vpop.f32.mrb[0].mxu0
  %v6772 = vadd.f32 %v6731, %v6771
  %v6773 = vpop.f32.mrb[0].mxu0
  %v6774 = vadd.f32 %v6733, %v6773
  %v6775 = vpop.f32.mrb[0].mxu0
  %v6776 = vpop.f32.mrb[0].mxu0
  %6777 = vdwg.mxu0
  %6778 = vmatprep.subr.bf16.mxu0 %v4999
  %6779 = vmatpush1.bf16.msra.mxu0 %v4998
  %6780 = vmatprep.subr.bf16.mxu0 %v5015
  %6781 = vmatpush1.bf16.msra.mxu0 %v5014
  %6782 = vmatprep.subr.bf16.mxu0 %v5031
  %6783 = vmatpush1.bf16.msra.mxu0 %v5030
  %6784 = vmatprep.subr.bf16.mxu0 %v5047
  %6785 = vmatpush1.bf16.msra.mxu0 %v5046
  %6786 = vmatprep.subr.bf16.mxu0 %v5063
  %6787 = vmatpush1.bf16.msra.mxu0 %v5062
  %6788 = vmatprep.subr.bf16.mxu0 %v5079
  %6789 = vmatpush1.bf16.msra.mxu0 %v5078
  %6790 = vmatprep.subr.bf16.mxu0 %v5095
  %6791 = vmatpush1.bf16.msra.mxu0 %v5094
  %6792 = vmatprep.subr.bf16.mxu0 %v5111
  %6793 = vmatpush1.bf16.msra.mxu0 %v5110
  %6794 = vmatprep.subr.bf16.mxu0 %v5127
  %6795 = vmatpush1.bf16.msra.mxu0 %v5126
  %6796 = vmatprep.subr.bf16.mxu0 %v5143
  %6797 = vmatpush1.bf16.msra.mxu0 %v5142
  %6798 = vmatprep.subr.bf16.mxu0 %v5159
  %6799 = vmatpush1.bf16.msra.mxu0 %v5158
  %6800 = vmatprep.subr.bf16.mxu0 %v5175
  %6801 = vmatpush1.bf16.msra.mxu0 %v5174
  %6802 = vmatprep.subr.bf16.mxu0 %v5191
  %6803 = vmatpush1.bf16.msra.mxu0 %v5190
  %6804 = vmatprep.subr.bf16.mxu0 %v5207
  %6805 = vmatpush1.bf16.msra.mxu0 %v5206
  %6806 = vmatprep.subr.bf16.mxu0 %v5223
  %6807 = vmatpush1.bf16.msra.mxu0 %v5222
  %6808 = vmatprep.subr.bf16.mxu0 %v5239
  %6809 = vmatpush1.bf16.msra.mxu0 %v5238
  %6810 = vmatprep.mubr.bf16.mxu0 %v301
  %6811 = vmatmul.mubr.bf16.gmra.mrb[0].mxu0 %v300
  %v6812 = vpop.f32.mrb[0].mxu0
  %v6813 = vadd.f32 %v6772, %v6812
  %v6814 = vpop.f32.mrb[0].mxu0
  %v6815 = vadd.f32 %v6774, %v6814
  %v6816 = vpop.f32.mrb[0].mxu0
  %v6817 = vpop.f32.mrb[0].mxu0
  %6818 = vdwg.mxu0
  %6819 = vmatprep.subr.bf16.mxu0 %v5255
  %6820 = vmatpush1.bf16.msra.mxu0 %v5254
  %6821 = vmatprep.subr.bf16.mxu0 %v5271
  %6822 = vmatpush1.bf16.msra.mxu0 %v5270
  %6823 = vmatprep.subr.bf16.mxu0 %v5287
  %6824 = vmatpush1.bf16.msra.mxu0 %v5286
  %6825 = vmatprep.subr.bf16.mxu0 %v5303
  %6826 = vmatpush1.bf16.msra.mxu0 %v5302
  %6827 = vmatprep.subr.bf16.mxu0 %v5319
  %6828 = vmatpush1.bf16.msra.mxu0 %v5318
  %6829 = vmatprep.subr.bf16.mxu0 %v5335
  %6830 = vmatpush1.bf16.msra.mxu0 %v5334
  %6831 = vmatprep.subr.bf16.mxu0 %v5351
  %6832 = vmatpush1.bf16.msra.mxu0 %v5350
  %6833 = vmatprep.subr.bf16.mxu0 %v5367
  %6834 = vmatpush1.bf16.msra.mxu0 %v5366
  %6835 = vmatprep.subr.bf16.mxu0 %v5383
  %6836 = vmatpush1.bf16.msra.mxu0 %v5382
  %6837 = vmatprep.subr.bf16.mxu0 %v5399
  %6838 = vmatpush1.bf16.msra.mxu0 %v5398
  %6839 = vmatprep.subr.bf16.mxu0 %v5415
  %6840 = vmatpush1.bf16.msra.mxu0 %v5414
  %6841 = vmatprep.subr.bf16.mxu0 %v5431
  %6842 = vmatpush1.bf16.msra.mxu0 %v5430
  %6843 = vmatprep.subr.bf16.mxu0 %v5447
  %6844 = vmatpush1.bf16.msra.mxu0 %v5446
  %6845 = vmatprep.subr.bf16.mxu0 %v5463
  %6846 = vmatpush1.bf16.msra.mxu0 %v5462
  %6847 = vmatprep.subr.bf16.mxu0 %v5479
  %6848 = vmatpush1.bf16.msra.mxu0 %v5478
  %6849 = vmatprep.subr.bf16.mxu0 %v5495
  %6850 = vmatpush1.bf16.msra.mxu0 %v5494
  %6851 = vmatprep.mubr.bf16.mxu0 %v303
  %6852 = vmatmul.mubr.bf16.gmra.mrb[0].mxu0 %v302
  %v6853 = vpop.f32.mrb[0].mxu0
  %v6854 = vadd.f32 %v6813, %v6853
  %v6855 = vpop.f32.mrb[0].mxu0
  %v6856 = vadd.f32 %v6815, %v6855
  %v6857 = vpop.f32.mrb[0].mxu0
  %v6858 = vpop.f32.mrb[0].mxu0
  %6859 = vdwg.mxu0
  %6860 = vmatprep.subr.bf16.mxu0 %v4489
  %6861 = vmatpush1.bf16.msra.mxu0 %v4488
  %6862 = vmatprep.subr.bf16.mxu0 %v4505
  %6863 = vmatpush1.bf16.msra.mxu0 %v4504
  %6864 = vmatprep.subr.bf16.mxu0 %v4521
  %6865 = vmatpush1.bf16.msra.mxu0 %v4520
  %6866 = vmatprep.subr.bf16.mxu0 %v4537
  %6867 = vmatpush1.bf16.msra.mxu0 %v4536
  %6868 = vmatprep.subr.bf16.mxu0 %v4553
  %6869 = vmatpush1.bf16.msra.mxu0 %v4552
  %6870 = vmatprep.subr.bf16.mxu0 %v4569
  %6871 = vmatpush1.bf16.msra.mxu0 %v4568
  %6872 = vmatprep.subr.bf16.mxu0 %v4585
  %6873 = vmatpush1.bf16.msra.mxu0 %v4584
  %6874 = vmatprep.subr.bf16.mxu0 %v4601
  %6875 = vmatpush1.bf16.msra.mxu0 %v4600
  %6876 = vmatprep.subr.bf16.mxu0 %v4617
  %6877 = vmatpush1.bf16.msra.mxu0 %v4616
  %6878 = vmatprep.subr.bf16.mxu0 %v4633
  %6879 = vmatpush1.bf16.msra.mxu0 %v4632
  %6880 = vmatprep.subr.bf16.mxu0 %v4649
  %6881 = vmatpush1.bf16.msra.mxu0 %v4648
  %6882 = vmatprep.subr.bf16.mxu0 %v4665
  %6883 = vmatpush1.bf16.msra.mxu0 %v4664
  %6884 = vmatprep.subr.bf16.mxu0 %v4681
  %6885 = vmatpush1.bf16.msra.mxu0 %v4680
  %6886 = vmatprep.subr.bf16.mxu0 %v4697
  %6887 = vmatpush1.bf16.msra.mxu0 %v4696
  %6888 = vmatprep.subr.bf16.mxu0 %v4713
  %6889 = vmatpush1.bf16.msra.mxu0 %v4712
  %6890 = vmatprep.subr.bf16.mxu0 %v4729
  %6891 = vmatpush1.bf16.msra.mxu0 %v4728
  %6892 = vmatprep.mubr.bf16.mxu0 %v297
  %6893 = vmatmul.mubr.bf16.gmra.mrb[0].mxu0 %v296
  %v6894 = vpop.f32.mrb[0].mxu0
  %v6895 = vadd.f32 %v1351, %v6894
  %v6896 = vpop.f32.mrb[0].mxu0
  %v6897 = vadd.f32 %v1355, %v6896
  %v6898 = vpop.f32.mrb[0].mxu0
  %v6899 = vpop.f32.mrb[0].mxu0
  %6900 = vdwg.mxu0
  %6901 = vmatprep.subr.bf16.mxu0 %v4745
  %6902 = vmatpush1.bf16.msra.mxu0 %v4744
  %6903 = vmatprep.subr.bf16.mxu0 %v4761
  %6904 = vmatpush1.bf16.msra.mxu0 %v4760
  %6905 = vmatprep.subr.bf16.mxu0 %v4777
  %6906 = vmatpush1.bf16.msra.mxu0 %v4776
  %6907 = vmatprep.subr.bf16.mxu0 %v4793
  %6908 = vmatpush1.bf16.msra.mxu0 %v4792
  %6909 = vmatprep.subr.bf16.mxu0 %v4809
  %6910 = vmatpush1.bf16.msra.mxu0 %v4808
  %6911 = vmatprep.subr.bf16.mxu0 %v4825
  %6912 = vmatpush1.bf16.msra.mxu0 %v4824
  %6913 = vmatprep.subr.bf16.mxu0 %v4841
  %6914 = vmatpush1.bf16.msra.mxu0 %v4840
  %6915 = vmatprep.subr.bf16.mxu0 %v4857
  %6916 = vmatpush1.bf16.msra.mxu0 %v4856
  %6917 = vmatprep.subr.bf16.mxu0 %v4873
  %6918 = vmatpush1.bf16.msra.mxu0 %v4872
  %6919 = vmatprep.subr.bf16.mxu0 %v4889
  %6920 = vmatpush1.bf16.msra.mxu0 %v4888
  %6921 = vmatprep.subr.bf16.mxu0 %v4905
  %6922 = vmatpush1.bf16.msra.mxu0 %v4904
  %6923 = vmatprep.subr.bf16.mxu0 %v4921
  %6924 = vmatpush1.bf16.msra.mxu0 %v4920
  %6925 = vmatprep.subr.bf16.mxu0 %v4937
  %6926 = vmatpush1.bf16.msra.mxu0 %v4936
  %6927 = vmatprep.subr.bf16.mxu0 %v4953
  %6928 = vmatpush1.bf16.msra.mxu0 %v4952
  %6929 = vmatprep.subr.bf16.mxu0 %v4969
  %6930 = vmatpush1.bf16.msra.mxu0 %v4968
  %6931 = vmatprep.subr.bf16.mxu0 %v4985
  %6932 = vmatpush1.bf16.msra.mxu0 %v4984
  %6933 = vmatprep.mubr.bf16.mxu0 %v299
  %6934 = vmatmul.mubr.bf16.gmra.mrb[0].mxu0 %v298
  %v6935 = vpop.f32.mrb[0].mxu0
  %v6936 = vadd.f32 %v6895, %v6935
  %v6937 = vpop.f32.mrb[0].mxu0
  %v6938 = vadd.f32 %v6897, %v6937
  %v6939 = vpop.f32.mrb[0].mxu0
  %v6940 = vpop.f32.mrb[0].mxu0
  %6941 = vdwg.mxu0
  %6942 = vmatprep.subr.bf16.mxu0 %v5001
  %6943 = vmatpush1.bf16.msra.mxu0 %v5000
  %6944 = vmatprep.subr.bf16.mxu0 %v5017
  %6945 = vmatpush1.bf16.msra.mxu0 %v5016
  %6946 = vmatprep.subr.bf16.mxu0 %v5033
  %6947 = vmatpush1.bf16.msra.mxu0 %v5032
  %6948 = vmatprep.subr.bf16.mxu0 %v5049
  %6949 = vmatpush1.bf16.msra.mxu0 %v5048
  %6950 = vmatprep.subr.bf16.mxu0 %v5065
  %6951 = vmatpush1.bf16.msra.mxu0 %v5064
  %6952 = vmatprep.subr.bf16.mxu0 %v5081
  %6953 = vmatpush1.bf16.msra.mxu0 %v5080
  %6954 = vmatprep.subr.bf16.mxu0 %v5097
  %6955 = vmatpush1.bf16.msra.mxu0 %v5096
  %6956 = vmatprep.subr.bf16.mxu0 %v5113
  %6957 = vmatpush1.bf16.msra.mxu0 %v5112
  %6958 = vmatprep.subr.bf16.mxu0 %v5129
  %6959 = vmatpush1.bf16.msra.mxu0 %v5128
  %6960 = vmatprep.subr.bf16.mxu0 %v5145
  %6961 = vmatpush1.bf16.msra.mxu0 %v5144
  %6962 = vmatprep.subr.bf16.mxu0 %v5161
  %6963 = vmatpush1.bf16.msra.mxu0 %v5160
  %6964 = vmatprep.subr.bf16.mxu0 %v5177
  %6965 = vmatpush1.bf16.msra.mxu0 %v5176
  %6966 = vmatprep.subr.bf16.mxu0 %v5193
  %6967 = vmatpush1.bf16.msra.mxu0 %v5192
  %6968 = vmatprep.subr.bf16.mxu0 %v5209
  %6969 = vmatpush1.bf16.msra.mxu0 %v5208
  %6970 = vmatprep.subr.bf16.mxu0 %v5225
  %6971 = vmatpush1.bf16.msra.mxu0 %v5224
  %6972 = vmatprep.subr.bf16.mxu0 %v5241
  %6973 = vmatpush1.bf16.msra.mxu0 %v5240
  %6974 = vmatprep.mubr.bf16.mxu0 %v301
  %6975 = vmatmul.mubr.bf16.gmra.mrb[0].mxu0 %v300
  %v6976 = vpop.f32.mrb[0].mxu0
  %v6977 = vadd.f32 %v6936, %v6976
  %v6978 = vpop.f32.mrb[0].mxu0
  %v6979 = vadd.f32 %v6938, %v6978
  %v6980 = vpop.f32.mrb[0].mxu0
  %v6981 = vpop.f32.mrb[0].mxu0
  %6982 = vdwg.mxu0
  %6983 = vmatprep.subr.bf16.mxu0 %v5257
  %6984 = vmatpush1.bf16.msra.mxu0 %v5256
  %6985 = vmatprep.subr.bf16.mxu0 %v5273
  %6986 = vmatpush1.bf16.msra.mxu0 %v5272
  %6987 = vmatprep.subr.bf16.mxu0 %v5289
  %6988 = vmatpush1.bf16.msra.mxu0 %v5288
  %6989 = vmatprep.subr.bf16.mxu0 %v5305
  %6990 = vmatpush1.bf16.msra.mxu0 %v5304
  %6991 = vmatprep.subr.bf16.mxu0 %v5321
  %6992 = vmatpush1.bf16.msra.mxu0 %v5320
  %6993 = vmatprep.subr.bf16.mxu0 %v5337
  %6994 = vmatpush1.bf16.msra.mxu0 %v5336
  %6995 = vmatprep.subr.bf16.mxu0 %v5353
  %6996 = vmatpush1.bf16.msra.mxu0 %v5352
  %6997 = vmatprep.subr.bf16.mxu0 %v5369
  %6998 = vmatpush1.bf16.msra.mxu0 %v5368
  %6999 = vmatprep.subr.bf16.mxu0 %v5385
  %7000 = vmatpush1.bf16.msra.mxu0 %v5384
  %7001 = vmatprep.subr.bf16.mxu0 %v5401
  %7002 = vmatpush1.bf16.msra.mxu0 %v5400
  %7003 = vmatprep.subr.bf16.mxu0 %v5417
  %7004 = vmatpush1.bf16.msra.mxu0 %v5416
  %7005 = vmatprep.subr.bf16.mxu0 %v5433
  %7006 = vmatpush1.bf16.msra.mxu0 %v5432
  %7007 = vmatprep.subr.bf16.mxu0 %v5449
  %7008 = vmatpush1.bf16.msra.mxu0 %v5448
  %7009 = vmatprep.subr.bf16.mxu0 %v5465
  %7010 = vmatpush1.bf16.msra.mxu0 %v5464
  %7011 = vmatprep.subr.bf16.mxu0 %v5481
  %7012 = vmatpush1.bf16.msra.mxu0 %v5480
  %7013 = vmatprep.subr.bf16.mxu0 %v5497
  %7014 = vmatpush1.bf16.msra.mxu0 %v5496
  %7015 = vmatprep.mubr.bf16.mxu0 %v303
  %7016 = vmatmul.mubr.bf16.gmra.mrb[0].mxu0 %v302
  %v7017 = vpop.f32.mrb[0].mxu0
  %v7018 = vadd.f32 %v6977, %v7017
  %v7019 = vpop.f32.mrb[0].mxu0
  %v7020 = vadd.f32 %v6979, %v7019
  %v7021 = vpop.f32.mrb[0].mxu0
  %v7022 = vpop.f32.mrb[0].mxu0
  %7023 = vdwg.mxu0
  %7024 = vmatprep.subr.bf16.mxu0 %v4491
  %7025 = vmatpush1.bf16.msra.mxu0 %v4490
  %7026 = vmatprep.subr.bf16.mxu0 %v4507
  %7027 = vmatpush1.bf16.msra.mxu0 %v4506
  %7028 = vmatprep.subr.bf16.mxu0 %v4523
  %7029 = vmatpush1.bf16.msra.mxu0 %v4522
  %7030 = vmatprep.subr.bf16.mxu0 %v4539
  %7031 = vmatpush1.bf16.msra.mxu0 %v4538
  %7032 = vmatprep.subr.bf16.mxu0 %v4555
  %7033 = vmatpush1.bf16.msra.mxu0 %v4554
  %7034 = vmatprep.subr.bf16.mxu0 %v4571
  %7035 = vmatpush1.bf16.msra.mxu0 %v4570
  %7036 = vmatprep.subr.bf16.mxu0 %v4587
  %7037 = vmatpush1.bf16.msra.mxu0 %v4586
  %7038 = vmatprep.subr.bf16.mxu0 %v4603
  %7039 = vmatpush1.bf16.msra.mxu0 %v4602
  %7040 = vmatprep.subr.bf16.mxu0 %v4619
  %7041 = vmatpush1.bf16.msra.mxu0 %v4618
  %7042 = vmatprep.subr.bf16.mxu0 %v4635
  %7043 = vmatpush1.bf16.msra.mxu0 %v4634
  %7044 = vmatprep.subr.bf16.mxu0 %v4651
  %7045 = vmatpush1.bf16.msra.mxu0 %v4650
  %7046 = vmatprep.subr.bf16.mxu0 %v4667
  %7047 = vmatpush1.bf16.msra.mxu0 %v4666
  %7048 = vmatprep.subr.bf16.mxu0 %v4683
  %7049 = vmatpush1.bf16.msra.mxu0 %v4682
  %7050 = vmatprep.subr.bf16.mxu0 %v4699
  %7051 = vmatpush1.bf16.msra.mxu0 %v4698
  %7052 = vmatprep.subr.bf16.mxu0 %v4715
  %7053 = vmatpush1.bf16.msra.mxu0 %v4714
  %7054 = vmatprep.subr.bf16.mxu0 %v4731
  %7055 = vmatpush1.bf16.msra.mxu0 %v4730
  %7056 = vmatprep.mubr.bf16.mxu0 %v297
  %7057 = vmatmul.mubr.bf16.gmra.mrb[0].mxu0 %v296
  %v7058 = vpop.f32.mrb[0].mxu0
  %v7059 = vadd.f32 %v1359, %v7058
  %v7060 = vpop.f32.mrb[0].mxu0
  %v7061 = vadd.f32 %v1363, %v7060
  %v7062 = vpop.f32.mrb[0].mxu0
  %v7063 = vpop.f32.mrb[0].mxu0
  %7064 = vdwg.mxu0
  %7065 = vmatprep.subr.bf16.mxu0 %v4747
  %7066 = vmatpush1.bf16.msra.mxu0 %v4746
  %7067 = vmatprep.subr.bf16.mxu0 %v4763
  %7068 = vmatpush1.bf16.msra.mxu0 %v4762
  %7069 = vmatprep.subr.bf16.mxu0 %v4779
  %7070 = vmatpush1.bf16.msra.mxu0 %v4778
  %7071 = vmatprep.subr.bf16.mxu0 %v4795
  %7072 = vmatpush1.bf16.msra.mxu0 %v4794
  %7073 = vmatprep.subr.bf16.mxu0 %v4811
  %7074 = vmatpush1.bf16.msra.mxu0 %v4810
  %7075 = vmatprep.subr.bf16.mxu0 %v4827
  %7076 = vmatpush1.bf16.msra.mxu0 %v4826
  %7077 = vmatprep.subr.bf16.mxu0 %v4843
  %7078 = vmatpush1.bf16.msra.mxu0 %v4842
  %7079 = vmatprep.subr.bf16.mxu0 %v4859
  %7080 = vmatpush1.bf16.msra.mxu0 %v4858
  %7081 = vmatprep.subr.bf16.mxu0 %v4875
  %7082 = vmatpush1.bf16.msra.mxu0 %v4874
  %7083 = vmatprep.subr.bf16.mxu0 %v4891
  %7084 = vmatpush1.bf16.msra.mxu0 %v4890
  %7085 = vmatprep.subr.bf16.mxu0 %v4907
  %7086 = vmatpush1.bf16.msra.mxu0 %v4906
  %7087 = vmatprep.subr.bf16.mxu0 %v4923
  %7088 = vmatpush1.bf16.msra.mxu0 %v4922
  %7089 = vmatprep.subr.bf16.mxu0 %v4939
  %7090 = vmatpush1.bf16.msra.mxu0 %v4938
  %7091 = vmatprep.subr.bf16.mxu0 %v4955
  %7092 = vmatpush1.bf16.msra.mxu0 %v4954
  %7093 = vmatprep.subr.bf16.mxu0 %v4971
  %7094 = vmatpush1.bf16.msra.mxu0 %v4970
  %7095 = vmatprep.subr.bf16.mxu0 %v4987
  %7096 = vmatpush1.bf16.msra.mxu0 %v4986
  %7097 = vmatprep.mubr.bf16.mxu0 %v299
  %7098 = vmatmul.mubr.bf16.gmra.mrb[0].mxu0 %v298
  %v7099 = vpop.f32.mrb[0].mxu0
  %v7100 = vadd.f32 %v7059, %v7099
  %v7101 = vpop.f32.mrb[0].mxu0
  %v7102 = vadd.f32 %v7061, %v7101
  %v7103 = vpop.f32.mrb[0].mxu0
  %v7104 = vpop.f32.mrb[0].mxu0
  %7105 = vdwg.mxu0
  %7106 = vmatprep.subr.bf16.mxu0 %v5003
  %7107 = vmatpush1.bf16.msra.mxu0 %v5002
  %7108 = vmatprep.subr.bf16.mxu0 %v5019
  %7109 = vmatpush1.bf16.msra.mxu0 %v5018
  %7110 = vmatprep.subr.bf16.mxu0 %v5035
  %7111 = vmatpush1.bf16.msra.mxu0 %v5034
  %7112 = vmatprep.subr.bf16.mxu0 %v5051
  %7113 = vmatpush1.bf16.msra.mxu0 %v5050
  %7114 = vmatprep.subr.bf16.mxu0 %v5067
  %7115 = vmatpush1.bf16.msra.mxu0 %v5066
  %7116 = vmatprep.subr.bf16.mxu0 %v5083
  %7117 = vmatpush1.bf16.msra.mxu0 %v5082
  %7118 = vmatprep.subr.bf16.mxu0 %v5099
  %7119 = vmatpush1.bf16.msra.mxu0 %v5098
  %7120 = vmatprep.subr.bf16.mxu0 %v5115
  %7121 = vmatpush1.bf16.msra.mxu0 %v5114
  %7122 = vmatprep.subr.bf16.mxu0 %v5131
  %7123 = vmatpush1.bf16.msra.mxu0 %v5130
  %7124 = vmatprep.subr.bf16.mxu0 %v5147
  %7125 = vmatpush1.bf16.msra.mxu0 %v5146
  %7126 = vmatprep.subr.bf16.mxu0 %v5163
  %7127 = vmatpush1.bf16.msra.mxu0 %v5162
  %7128 = vmatprep.subr.bf16.mxu0 %v5179
  %7129 = vmatpush1.bf16.msra.mxu0 %v5178
  %7130 = vmatprep.subr.bf16.mxu0 %v5195
  %7131 = vmatpush1.bf16.msra.mxu0 %v5194
  %7132 = vmatprep.subr.bf16.mxu0 %v5211
  %7133 = vmatpush1.bf16.msra.mxu0 %v5210
  %7134 = vmatprep.subr.bf16.mxu0 %v5227
  %7135 = vmatpush1.bf16.msra.mxu0 %v5226
  %7136 = vmatprep.subr.bf16.mxu0 %v5243
  %7137 = vmatpush1.bf16.msra.mxu0 %v5242
  %7138 = vmatprep.mubr.bf16.mxu0 %v301
  %7139 = vmatmul.mubr.bf16.gmra.mrb[0].mxu0 %v300
  %v7140 = vpop.f32.mrb[0].mxu0
  %v7141 = vadd.f32 %v7100, %v7140
  %v7142 = vpop.f32.mrb[0].mxu0
  %v7143 = vadd.f32 %v7102, %v7142
  %v7144 = vpop.f32.mrb[0].mxu0
  %v7145 = vpop.f32.mrb[0].mxu0
  %7146 = vdwg.mxu0
  %7147 = vmatprep.subr.bf16.mxu0 %v5259
  %7148 = vmatpush1.bf16.msra.mxu0 %v5258
  %7149 = vmatprep.subr.bf16.mxu0 %v5275
  %7150 = vmatpush1.bf16.msra.mxu0 %v5274
  %7151 = vmatprep.subr.bf16.mxu0 %v5291
  %7152 = vmatpush1.bf16.msra.mxu0 %v5290
  %7153 = vmatprep.subr.bf16.mxu0 %v5307
  %7154 = vmatpush1.bf16.msra.mxu0 %v5306
  %7155 = vmatprep.subr.bf16.mxu0 %v5323
  %7156 = vmatpush1.bf16.msra.mxu0 %v5322
  %7157 = vmatprep.subr.bf16.mxu0 %v5339
  %7158 = vmatpush1.bf16.msra.mxu0 %v5338
  %7159 = vmatprep.subr.bf16.mxu0 %v5355
  %7160 = vmatpush1.bf16.msra.mxu0 %v5354
  %7161 = vmatprep.subr.bf16.mxu0 %v5371
  %7162 = vmatpush1.bf16.msra.mxu0 %v5370
  %7163 = vmatprep.subr.bf16.mxu0 %v5387
  %7164 = vmatpush1.bf16.msra.mxu0 %v5386
  %7165 = vmatprep.subr.bf16.mxu0 %v5403
  %7166 = vmatpush1.bf16.msra.mxu0 %v5402
  %7167 = vmatprep.subr.bf16.mxu0 %v5419
  %7168 = vmatpush1.bf16.msra.mxu0 %v5418
  %7169 = vmatprep.subr.bf16.mxu0 %v5435
  %7170 = vmatpush1.bf16.msra.mxu0 %v5434
  %7171 = vmatprep.subr.bf16.mxu0 %v5451
  %7172 = vmatpush1.bf16.msra.mxu0 %v5450
  %7173 = vmatprep.subr.bf16.mxu0 %v5467
  %7174 = vmatpush1.bf16.msra.mxu0 %v5466
  %7175 = vmatprep.subr.bf16.mxu0 %v5483
  %7176 = vmatpush1.bf16.msra.mxu0 %v5482
  %7177 = vmatprep.subr.bf16.mxu0 %v5499
  %7178 = vmatpush1.bf16.msra.mxu0 %v5498
  %7179 = vmatprep.mubr.bf16.mxu0 %v303
  %7180 = vmatmul.mubr.bf16.gmra.mrb[0].mxu0 %v302
  %v7181 = vpop.f32.mrb[0].mxu0
  %v7182 = vadd.f32 %v7141, %v7181
  %v7183 = vpop.f32.mrb[0].mxu0
  %v7184 = vadd.f32 %v7143, %v7183
  %v7185 = vpop.f32.mrb[0].mxu0
  %v7186 = vpop.f32.mrb[0].mxu0
  %7187 = vdwg.mxu0
  %7188 = vmatprep.subr.bf16.mxu0 %v4493
  %7189 = vmatpush1.bf16.msra.mxu0 %v4492
  %7190 = vmatprep.subr.bf16.mxu0 %v4509
  %7191 = vmatpush1.bf16.msra.mxu0 %v4508
  %7192 = vmatprep.subr.bf16.mxu0 %v4525
  %7193 = vmatpush1.bf16.msra.mxu0 %v4524
  %7194 = vmatprep.subr.bf16.mxu0 %v4541
  %7195 = vmatpush1.bf16.msra.mxu0 %v4540
  %7196 = vmatprep.subr.bf16.mxu0 %v4557
  %7197 = vmatpush1.bf16.msra.mxu0 %v4556
  %7198 = vmatprep.subr.bf16.mxu0 %v4573
  %7199 = vmatpush1.bf16.msra.mxu0 %v4572
  %7200 = vmatprep.subr.bf16.mxu0 %v4589
  %7201 = vmatpush1.bf16.msra.mxu0 %v4588
  %7202 = vmatprep.subr.bf16.mxu0 %v4605
  %7203 = vmatpush1.bf16.msra.mxu0 %v4604
  %7204 = vmatprep.subr.bf16.mxu0 %v4621
  %7205 = vmatpush1.bf16.msra.mxu0 %v4620
  %7206 = vmatprep.subr.bf16.mxu0 %v4637
  %7207 = vmatpush1.bf16.msra.mxu0 %v4636
  %7208 = vmatprep.subr.bf16.mxu0 %v4653
  %7209 = vmatpush1.bf16.msra.mxu0 %v4652
  %7210 = vmatprep.subr.bf16.mxu0 %v4669
  %7211 = vmatpush1.bf16.msra.mxu0 %v4668
  %7212 = vmatprep.subr.bf16.mxu0 %v4685
  %7213 = vmatpush1.bf16.msra.mxu0 %v4684
  %7214 = vmatprep.subr.bf16.mxu0 %v4701
  %7215 = vmatpush1.bf16.msra.mxu0 %v4700
  %7216 = vmatprep.subr.bf16.mxu0 %v4717
  %7217 = vmatpush1.bf16.msra.mxu0 %v4716
  %7218 = vmatprep.subr.bf16.mxu0 %v4733
  %7219 = vmatpush1.bf16.msra.mxu0 %v4732
  %7220 = vmatprep.mubr.bf16.mxu0 %v297
  %7221 = vmatmul.mubr.bf16.gmra.mrb[0].mxu0 %v296
  %v7222 = vpop.f32.mrb[0].mxu0
  %v7223 = vadd.f32 %v1367, %v7222
  %v7224 = vpop.f32.mrb[0].mxu0
  %v7225 = vadd.f32 %v1371, %v7224
  %v7226 = vpop.f32.mrb[0].mxu0
  %v7227 = vpop.f32.mrb[0].mxu0
  %7228 = vdwg.mxu0
  %7229 = vmatprep.subr.bf16.mxu0 %v4749
  %7230 = vmatpush1.bf16.msra.mxu0 %v4748
  %7231 = vmatprep.subr.bf16.mxu0 %v4765
  %7232 = vmatpush1.bf16.msra.mxu0 %v4764
  %7233 = vmatprep.subr.bf16.mxu0 %v4781
  %7234 = vmatpush1.bf16.msra.mxu0 %v4780
  %7235 = vmatprep.subr.bf16.mxu0 %v4797
  %7236 = vmatpush1.bf16.msra.mxu0 %v4796
  %7237 = vmatprep.subr.bf16.mxu0 %v4813
  %7238 = vmatpush1.bf16.msra.mxu0 %v4812
  %7239 = vmatprep.subr.bf16.mxu0 %v4829
  %7240 = vmatpush1.bf16.msra.mxu0 %v4828
  %7241 = vmatprep.subr.bf16.mxu0 %v4845
  %7242 = vmatpush1.bf16.msra.mxu0 %v4844
  %7243 = vmatprep.subr.bf16.mxu0 %v4861
  %7244 = vmatpush1.bf16.msra.mxu0 %v4860
  %7245 = vmatprep.subr.bf16.mxu0 %v4877
  %7246 = vmatpush1.bf16.msra.mxu0 %v4876
  %7247 = vmatprep.subr.bf16.mxu0 %v4893
  %7248 = vmatpush1.bf16.msra.mxu0 %v4892
  %7249 = vmatprep.subr.bf16.mxu0 %v4909
  %7250 = vmatpush1.bf16.msra.mxu0 %v4908
  %7251 = vmatprep.subr.bf16.mxu0 %v4925
  %7252 = vmatpush1.bf16.msra.mxu0 %v4924
  %7253 = vmatprep.subr.bf16.mxu0 %v4941
  %7254 = vmatpush1.bf16.msra.mxu0 %v4940
  %7255 = vmatprep.subr.bf16.mxu0 %v4957
  %7256 = vmatpush1.bf16.msra.mxu0 %v4956
  %7257 = vmatprep.subr.bf16.mxu0 %v4973
  %7258 = vmatpush1.bf16.msra.mxu0 %v4972
  %7259 = vmatprep.subr.bf16.mxu0 %v4989
  %7260 = vmatpush1.bf16.msra.mxu0 %v4988
  %7261 = vmatprep.mubr.bf16.mxu0 %v299
  %7262 = vmatmul.mubr.bf16.gmra.mrb[0].mxu0 %v298
  %v7263 = vpop.f32.mrb[0].mxu0
  %v7264 = vadd.f32 %v7223, %v7263
  %v7265 = vpop.f32.mrb[0].mxu0
  %v7266 = vadd.f32 %v7225, %v7265
  %v7267 = vpop.f32.mrb[0].mxu0
  %v7268 = vpop.f32.mrb[0].mxu0
  %7269 = vdwg.mxu0
  %7270 = vmatprep.subr.bf16.mxu0 %v5005
  %7271 = vmatpush1.bf16.msra.mxu0 %v5004
  %7272 = vmatprep.subr.bf16.mxu0 %v5021
  %7273 = vmatpush1.bf16.msra.mxu0 %v5020
  %7274 = vmatprep.subr.bf16.mxu0 %v5037
  %7275 = vmatpush1.bf16.msra.mxu0 %v5036
  %7276 = vmatprep.subr.bf16.mxu0 %v5053
  %7277 = vmatpush1.bf16.msra.mxu0 %v5052
  %7278 = vmatprep.subr.bf16.mxu0 %v5069
  %7279 = vmatpush1.bf16.msra.mxu0 %v5068
  %7280 = vmatprep.subr.bf16.mxu0 %v5085
  %7281 = vmatpush1.bf16.msra.mxu0 %v5084
  %7282 = vmatprep.subr.bf16.mxu0 %v5101
  %7283 = vmatpush1.bf16.msra.mxu0 %v5100
  %7284 = vmatprep.subr.bf16.mxu0 %v5117
  %7285 = vmatpush1.bf16.msra.mxu0 %v5116
  %7286 = vmatprep.subr.bf16.mxu0 %v5133
  %7287 = vmatpush1.bf16.msra.mxu0 %v5132
  %7288 = vmatprep.subr.bf16.mxu0 %v5149
  %7289 = vmatpush1.bf16.msra.mxu0 %v5148
  %7290 = vmatprep.subr.bf16.mxu0 %v5165
  %7291 = vmatpush1.bf16.msra.mxu0 %v5164
  %7292 = vmatprep.subr.bf16.mxu0 %v5181
  %7293 = vmatpush1.bf16.msra.mxu0 %v5180
  %7294 = vmatprep.subr.bf16.mxu0 %v5197
  %7295 = vmatpush1.bf16.msra.mxu0 %v5196
  %7296 = vmatprep.subr.bf16.mxu0 %v5213
  %7297 = vmatpush1.bf16.msra.mxu0 %v5212
  %7298 = vmatprep.subr.bf16.mxu0 %v5229
  %7299 = vmatpush1.bf16.msra.mxu0 %v5228
  %7300 = vmatprep.subr.bf16.mxu0 %v5245
  %7301 = vmatpush1.bf16.msra.mxu0 %v5244
  %7302 = vmatprep.mubr.bf16.mxu0 %v301
  %7303 = vmatmul.mubr.bf16.gmra.mrb[0].mxu0 %v300
  %v7304 = vpop.f32.mrb[0].mxu0
  %v7305 = vadd.f32 %v7264, %v7304
  %v7306 = vpop.f32.mrb[0].mxu0
  %v7307 = vadd.f32 %v7266, %v7306
  %v7308 = vpop.f32.mrb[0].mxu0
  %v7309 = vpop.f32.mrb[0].mxu0
  %7310 = vdwg.mxu0
  %7311 = vmatprep.subr.bf16.mxu0 %v5261
  %7312 = vmatpush1.bf16.msra.mxu0 %v5260
  %7313 = vmatprep.subr.bf16.mxu0 %v5277
  %7314 = vmatpush1.bf16.msra.mxu0 %v5276
  %7315 = vmatprep.subr.bf16.mxu0 %v5293
  %7316 = vmatpush1.bf16.msra.mxu0 %v5292
  %7317 = vmatprep.subr.bf16.mxu0 %v5309
  %7318 = vmatpush1.bf16.msra.mxu0 %v5308
  %7319 = vmatprep.subr.bf16.mxu0 %v5325
  %7320 = vmatpush1.bf16.msra.mxu0 %v5324
  %7321 = vmatprep.subr.bf16.mxu0 %v5341
  %7322 = vmatpush1.bf16.msra.mxu0 %v5340
  %7323 = vmatprep.subr.bf16.mxu0 %v5357
  %7324 = vmatpush1.bf16.msra.mxu0 %v5356
  %7325 = vmatprep.subr.bf16.mxu0 %v5373
  %7326 = vmatpush1.bf16.msra.mxu0 %v5372
  %7327 = vmatprep.subr.bf16.mxu0 %v5389
  %7328 = vmatpush1.bf16.msra.mxu0 %v5388
  %7329 = vmatprep.subr.bf16.mxu0 %v5405
  %7330 = vmatpush1.bf16.msra.mxu0 %v5404
  %7331 = vmatprep.subr.bf16.mxu0 %v5421
  %7332 = vmatpush1.bf16.msra.mxu0 %v5420
  %7333 = vmatprep.subr.bf16.mxu0 %v5437
  %7334 = vmatpush1.bf16.msra.mxu0 %v5436
  %7335 = vmatprep.subr.bf16.mxu0 %v5453
  %7336 = vmatpush1.bf16.msra.mxu0 %v5452
  %7337 = vmatprep.subr.bf16.mxu0 %v5469
  %7338 = vmatpush1.bf16.msra.mxu0 %v5468
  %7339 = vmatprep.subr.bf16.mxu0 %v5485
  %7340 = vmatpush1.bf16.msra.mxu0 %v5484
  %7341 = vmatprep.subr.bf16.mxu0 %v5501
  %7342 = vmatpush1.bf16.msra.mxu0 %v5500
  %7343 = vmatprep.mubr.bf16.mxu0 %v303
  %7344 = vmatmul.mubr.bf16.gmra.mrb[0].mxu0 %v302
  %v7345 = vpop.f32.mrb[0].mxu0
  %v7346 = vadd.f32 %v7305, %v7345
  %v7347 = vpop.f32.mrb[0].mxu0
  %v7348 = vadd.f32 %v7307, %v7347
  %v7349 = vpop.f32.mrb[0].mxu0
  %v7350 = vpop.f32.mrb[0].mxu0
  %7351 = vdwg.mxu0
  %7352 = vmatprep.subr.bf16.mxu0 %v4495
  %7353 = vmatpush1.bf16.msra.mxu0 %v4494
  %7354 = vmatprep.subr.bf16.mxu0 %v4511
  %7355 = vmatpush1.bf16.msra.mxu0 %v4510
  %7356 = vmatprep.subr.bf16.mxu0 %v4527
  %7357 = vmatpush1.bf16.msra.mxu0 %v4526
  %7358 = vmatprep.subr.bf16.mxu0 %v4543
  %7359 = vmatpush1.bf16.msra.mxu0 %v4542
  %7360 = vmatprep.subr.bf16.mxu0 %v4559
  %7361 = vmatpush1.bf16.msra.mxu0 %v4558
  %7362 = vmatprep.subr.bf16.mxu0 %v4575
  %7363 = vmatpush1.bf16.msra.mxu0 %v4574
  %7364 = vmatprep.subr.bf16.mxu0 %v4591
  %7365 = vmatpush1.bf16.msra.mxu0 %v4590
  %7366 = vmatprep.subr.bf16.mxu0 %v4607
  %7367 = vmatpush1.bf16.msra.mxu0 %v4606
  %7368 = vmatprep.subr.bf16.mxu0 %v4623
  %7369 = vmatpush1.bf16.msra.mxu0 %v4622
  %7370 = vmatprep.subr.bf16.mxu0 %v4639
  %7371 = vmatpush1.bf16.msra.mxu0 %v4638
  %7372 = vmatprep.subr.bf16.mxu0 %v4655
  %7373 = vmatpush1.bf16.msra.mxu0 %v4654
  %7374 = vmatprep.subr.bf16.mxu0 %v4671
  %7375 = vmatpush1.bf16.msra.mxu0 %v4670
  %7376 = vmatprep.subr.bf16.mxu0 %v4687
  %7377 = vmatpush1.bf16.msra.mxu0 %v4686
  %7378 = vmatprep.subr.bf16.mxu0 %v4703
  %7379 = vmatpush1.bf16.msra.mxu0 %v4702
  %7380 = vmatprep.subr.bf16.mxu0 %v4719
  %7381 = vmatpush1.bf16.msra.mxu0 %v4718
  %7382 = vmatprep.subr.bf16.mxu0 %v4735
  %7383 = vmatpush1.bf16.msra.mxu0 %v4734
  %7384 = vmatprep.mubr.bf16.mxu0 %v297
  %7385 = vmatmul.mubr.bf16.gmra.mrb[0].mxu0 %v296
  %v7386 = vpop.f32.mrb[0].mxu0
  %v7387 = vadd.f32 %v1375, %v7386
  %v7388 = vpop.f32.mrb[0].mxu0
  %v7389 = vadd.f32 %v1379, %v7388
  %v7390 = vpop.f32.mrb[0].mxu0
  %v7391 = vpop.f32.mrb[0].mxu0
  %7392 = vdwg.mxu0
  %7393 = vmatprep.subr.bf16.mxu0 %v4751
  %7394 = vmatpush1.bf16.msra.mxu0 %v4750
  %7395 = vmatprep.subr.bf16.mxu0 %v4767
  %7396 = vmatpush1.bf16.msra.mxu0 %v4766
  %7397 = vmatprep.subr.bf16.mxu0 %v4783
  %7398 = vmatpush1.bf16.msra.mxu0 %v4782
  %7399 = vmatprep.subr.bf16.mxu0 %v4799
  %7400 = vmatpush1.bf16.msra.mxu0 %v4798
  %7401 = vmatprep.subr.bf16.mxu0 %v4815
  %7402 = vmatpush1.bf16.msra.mxu0 %v4814
  %7403 = vmatprep.subr.bf16.mxu0 %v4831
  %7404 = vmatpush1.bf16.msra.mxu0 %v4830
  %7405 = vmatprep.subr.bf16.mxu0 %v4847
  %7406 = vmatpush1.bf16.msra.mxu0 %v4846
  %7407 = vmatprep.subr.bf16.mxu0 %v4863
  %7408 = vmatpush1.bf16.msra.mxu0 %v4862
  %7409 = vmatprep.subr.bf16.mxu0 %v4879
  %7410 = vmatpush1.bf16.msra.mxu0 %v4878
  %7411 = vmatprep.subr.bf16.mxu0 %v4895
  %7412 = vmatpush1.bf16.msra.mxu0 %v4894
  %7413 = vmatprep.subr.bf16.mxu0 %v4911
  %7414 = vmatpush1.bf16.msra.mxu0 %v4910
  %7415 = vmatprep.subr.bf16.mxu0 %v4927
  %7416 = vmatpush1.bf16.msra.mxu0 %v4926
  %7417 = vmatprep.subr.bf16.mxu0 %v4943
  %7418 = vmatpush1.bf16.msra.mxu0 %v4942
  %7419 = vmatprep.subr.bf16.mxu0 %v4959
  %7420 = vmatpush1.bf16.msra.mxu0 %v4958
  %7421 = vmatprep.subr.bf16.mxu0 %v4975
  %7422 = vmatpush1.bf16.msra.mxu0 %v4974
  %7423 = vmatprep.subr.bf16.mxu0 %v4991
  %7424 = vmatpush1.bf16.msra.mxu0 %v4990
  %7425 = vmatprep.mubr.bf16.mxu0 %v299
  %7426 = vmatmul.mubr.bf16.gmra.mrb[0].mxu0 %v298
  %v7427 = vpop.f32.mrb[0].mxu0
  %v7428 = vadd.f32 %v7387, %v7427
  %v7429 = vpop.f32.mrb[0].mxu0
  %v7430 = vadd.f32 %v7389, %v7429
  %v7431 = vpop.f32.mrb[0].mxu0
  %v7432 = vpop.f32.mrb[0].mxu0
  %7433 = vdwg.mxu0
  %7434 = vmatprep.subr.bf16.mxu0 %v5007
  %7435 = vmatpush1.bf16.msra.mxu0 %v5006
  %7436 = vmatprep.subr.bf16.mxu0 %v5023
  %7437 = vmatpush1.bf16.msra.mxu0 %v5022
  %7438 = vmatprep.subr.bf16.mxu0 %v5039
  %7439 = vmatpush1.bf16.msra.mxu0 %v5038
  %7440 = vmatprep.subr.bf16.mxu0 %v5055
  %7441 = vmatpush1.bf16.msra.mxu0 %v5054
  %7442 = vmatprep.subr.bf16.mxu0 %v5071
  %7443 = vmatpush1.bf16.msra.mxu0 %v5070
  %7444 = vmatprep.subr.bf16.mxu0 %v5087
  %7445 = vmatpush1.bf16.msra.mxu0 %v5086
  %7446 = vmatprep.subr.bf16.mxu0 %v5103
  %7447 = vmatpush1.bf16.msra.mxu0 %v5102
  %7448 = vmatprep.subr.bf16.mxu0 %v5119
  %7449 = vmatpush1.bf16.msra.mxu0 %v5118
  %7450 = vmatprep.subr.bf16.mxu0 %v5135
  %7451 = vmatpush1.bf16.msra.mxu0 %v5134
  %7452 = vmatprep.subr.bf16.mxu0 %v5151
  %7453 = vmatpush1.bf16.msra.mxu0 %v5150
  %7454 = vmatprep.subr.bf16.mxu0 %v5167
  %7455 = vmatpush1.bf16.msra.mxu0 %v5166
  %7456 = vmatprep.subr.bf16.mxu0 %v5183
  %7457 = vmatpush1.bf16.msra.mxu0 %v5182
  %7458 = vmatprep.subr.bf16.mxu0 %v5199
  %7459 = vmatpush1.bf16.msra.mxu0 %v5198
  %7460 = vmatprep.subr.bf16.mxu0 %v5215
  %7461 = vmatpush1.bf16.msra.mxu0 %v5214
  %7462 = vmatprep.subr.bf16.mxu0 %v5231
  %7463 = vmatpush1.bf16.msra.mxu0 %v5230
  %7464 = vmatprep.subr.bf16.mxu0 %v5247
  %7465 = vmatpush1.bf16.msra.mxu0 %v5246
  %7466 = vmatprep.mubr.bf16.mxu0 %v301
  %7467 = vmatmul.mubr.bf16.gmra.mrb[0].mxu0 %v300
  %v7468 = vpop.f32.mrb[0].mxu0
  %v7469 = vadd.f32 %v7428, %v7468
  %v7470 = vpop.f32.mrb[0].mxu0
  %v7471 = vadd.f32 %v7430, %v7470
  %v7472 = vpop.f32.mrb[0].mxu0
  %v7473 = vpop.f32.mrb[0].mxu0
  %7474 = vdwg.mxu0
  %7475 = vmatprep.subr.bf16.mxu0 %v5263
  %7476 = vmatpush1.bf16.msra.mxu0 %v5262
  %7477 = vmatprep.subr.bf16.mxu0 %v5279
  %7478 = vmatpush1.bf16.msra.mxu0 %v5278
  %7479 = vmatprep.subr.bf16.mxu0 %v5295
  %7480 = vmatpush1.bf16.msra.mxu0 %v5294
  %7481 = vmatprep.subr.bf16.mxu0 %v5311
  %7482 = vmatpush1.bf16.msra.mxu0 %v5310
  %7483 = vmatprep.subr.bf16.mxu0 %v5327
  %7484 = vmatpush1.bf16.msra.mxu0 %v5326
  %7485 = vmatprep.subr.bf16.mxu0 %v5343
  %7486 = vmatpush1.bf16.msra.mxu0 %v5342
  %7487 = vmatprep.subr.bf16.mxu0 %v5359
  %7488 = vmatpush1.bf16.msra.mxu0 %v5358
  %7489 = vmatprep.subr.bf16.mxu0 %v5375
  %7490 = vmatpush1.bf16.msra.mxu0 %v5374
  %7491 = vmatprep.subr.bf16.mxu0 %v5391
  %7492 = vmatpush1.bf16.msra.mxu0 %v5390
  %7493 = vmatprep.subr.bf16.mxu0 %v5407
  %7494 = vmatpush1.bf16.msra.mxu0 %v5406
  %7495 = vmatprep.subr.bf16.mxu0 %v5423
  %7496 = vmatpush1.bf16.msra.mxu0 %v5422
  %7497 = vmatprep.subr.bf16.mxu0 %v5439
  %7498 = vmatpush1.bf16.msra.mxu0 %v5438
  %7499 = vmatprep.subr.bf16.mxu0 %v5455
  %7500 = vmatpush1.bf16.msra.mxu0 %v5454
  %7501 = vmatprep.subr.bf16.mxu0 %v5471
  %7502 = vmatpush1.bf16.msra.mxu0 %v5470
  %7503 = vmatprep.subr.bf16.mxu0 %v5487
  %7504 = vmatpush1.bf16.msra.mxu0 %v5486
  %7505 = vmatprep.subr.bf16.mxu0 %v5503
  %7506 = vmatpush1.bf16.msra.mxu0 %v5502
  %7507 = vmatprep.mubr.bf16.mxu0 %v303
  %7508 = vmatmul.mubr.bf16.gmra.mrb[0].mxu0 %v302
  %v7509 = vpop.f32.mrb[0].mxu0
  %v7510 = vadd.f32 %v7469, %v7509
  %v7511 = vpop.f32.mrb[0].mxu0
  %v7512 = vadd.f32 %v7471, %v7511
  %v7513 = vpop.f32.mrb[0].mxu0
  %v7514 = vpop.f32.mrb[0].mxu0
  %7515 = vdwg.mxu0
  %7516 = vmatprep.subr.bf16.mxu0 %v4497
  %7517 = vmatpush1.bf16.msra.mxu0 %v4496
  %7518 = vmatprep.subr.bf16.mxu0 %v4513
  %7519 = vmatpush1.bf16.msra.mxu0 %v4512
  %7520 = vmatprep.subr.bf16.mxu0 %v4529
  %7521 = vmatpush1.bf16.msra.mxu0 %v4528
  %7522 = vmatprep.subr.bf16.mxu0 %v4545
  %7523 = vmatpush1.bf16.msra.mxu0 %v4544
  %7524 = vmatprep.subr.bf16.mxu0 %v4561
  %7525 = vmatpush1.bf16.msra.mxu0 %v4560
  %7526 = vmatprep.subr.bf16.mxu0 %v4577
  %7527 = vmatpush1.bf16.msra.mxu0 %v4576
  %7528 = vmatprep.subr.bf16.mxu0 %v4593
  %7529 = vmatpush1.bf16.msra.mxu0 %v4592
  %7530 = vmatprep.subr.bf16.mxu0 %v4609
  %7531 = vmatpush1.bf16.msra.mxu0 %v4608
  %7532 = vmatprep.subr.bf16.mxu0 %v4625
  %7533 = vmatpush1.bf16.msra.mxu0 %v4624
  %7534 = vmatprep.subr.bf16.mxu0 %v4641
  %7535 = vmatpush1.bf16.msra.mxu0 %v4640
  %7536 = vmatprep.subr.bf16.mxu0 %v4657
  %7537 = vmatpush1.bf16.msra.mxu0 %v4656
  %7538 = vmatprep.subr.bf16.mxu0 %v4673
  %7539 = vmatpush1.bf16.msra.mxu0 %v4672
  %7540 = vmatprep.subr.bf16.mxu0 %v4689
  %7541 = vmatpush1.bf16.msra.mxu0 %v4688
  %7542 = vmatprep.subr.bf16.mxu0 %v4705
  %7543 = vmatpush1.bf16.msra.mxu0 %v4704
  %7544 = vmatprep.subr.bf16.mxu0 %v4721
  %7545 = vmatpush1.bf16.msra.mxu0 %v4720
  %7546 = vmatprep.subr.bf16.mxu0 %v4737
  %7547 = vmatpush1.bf16.msra.mxu0 %v4736
  %7548 = vmatprep.mubr.bf16.mxu0 %v297
  %7549 = vmatmul.mubr.bf16.gmra.mrb[0].mxu0 %v296
  %v7550 = vpop.f32.mrb[0].mxu0
  %v7551 = vadd.f32 %v1383, %v7550
  %v7552 = vpop.f32.mrb[0].mxu0
  %v7553 = vadd.f32 %v1387, %v7552
  %v7554 = vpop.f32.mrb[0].mxu0
  %v7555 = vpop.f32.mrb[0].mxu0
  %7556 = vdwg.mxu0
  %7557 = vmatprep.subr.bf16.mxu0 %v4753
  %7558 = vmatpush1.bf16.msra.mxu0 %v4752
  %7559 = vmatprep.subr.bf16.mxu0 %v4769
  %7560 = vmatpush1.bf16.msra.mxu0 %v4768
  %7561 = vmatprep.subr.bf16.mxu0 %v4785
  %7562 = vmatpush1.bf16.msra.mxu0 %v4784
  %7563 = vmatprep.subr.bf16.mxu0 %v4801
  %7564 = vmatpush1.bf16.msra.mxu0 %v4800
  %7565 = vmatprep.subr.bf16.mxu0 %v4817
  %7566 = vmatpush1.bf16.msra.mxu0 %v4816
  %7567 = vmatprep.subr.bf16.mxu0 %v4833
  %7568 = vmatpush1.bf16.msra.mxu0 %v4832
  %7569 = vmatprep.subr.bf16.mxu0 %v4849
  %7570 = vmatpush1.bf16.msra.mxu0 %v4848
  %7571 = vmatprep.subr.bf16.mxu0 %v4865
  %7572 = vmatpush1.bf16.msra.mxu0 %v4864
  %7573 = vmatprep.subr.bf16.mxu0 %v4881
  %7574 = vmatpush1.bf16.msra.mxu0 %v4880
  %7575 = vmatprep.subr.bf16.mxu0 %v4897
  %7576 = vmatpush1.bf16.msra.mxu0 %v4896
  %7577 = vmatprep.subr.bf16.mxu0 %v4913
  %7578 = vmatpush1.bf16.msra.mxu0 %v4912
  %7579 = vmatprep.subr.bf16.mxu0 %v4929
  %7580 = vmatpush1.bf16.msra.mxu0 %v4928
  %7581 = vmatprep.subr.bf16.mxu0 %v4945
  %7582 = vmatpush1.bf16.msra.mxu0 %v4944
  %7583 = vmatprep.subr.bf16.mxu0 %v4961
  %7584 = vmatpush1.bf16.msra.mxu0 %v4960
  %7585 = vmatprep.subr.bf16.mxu0 %v4977
  %7586 = vmatpush1.bf16.msra.mxu0 %v4976
  %7587 = vmatprep.subr.bf16.mxu0 %v4993
  %7588 = vmatpush1.bf16.msra.mxu0 %v4992
  %7589 = vmatprep.mubr.bf16.mxu0 %v299
  %7590 = vmatmul.mubr.bf16.gmra.mrb[0].mxu0 %v298
  %v7591 = vpop.f32.mrb[0].mxu0
  %v7592 = vadd.f32 %v7551, %v7591
  %v7593 = vpop.f32.mrb[0].mxu0
  %v7594 = vadd.f32 %v7553, %v7593
  %v7595 = vpop.f32.mrb[0].mxu0
  %v7596 = vpop.f32.mrb[0].mxu0
  %7597 = vdwg.mxu0
  %7598 = vmatprep.subr.bf16.mxu0 %v5009
  %7599 = vmatpush1.bf16.msra.mxu0 %v5008
  %7600 = vmatprep.subr.bf16.mxu0 %v5025
  %7601 = vmatpush1.bf16.msra.mxu0 %v5024
  %7602 = vmatprep.subr.bf16.mxu0 %v5041
  %7603 = vmatpush1.bf16.msra.mxu0 %v5040
  %7604 = vmatprep.subr.bf16.mxu0 %v5057
  %7605 = vmatpush1.bf16.msra.mxu0 %v5056
  %7606 = vmatprep.subr.bf16.mxu0 %v5073
  %7607 = vmatpush1.bf16.msra.mxu0 %v5072
  %7608 = vmatprep.subr.bf16.mxu0 %v5089
  %7609 = vmatpush1.bf16.msra.mxu0 %v5088
  %7610 = vmatprep.subr.bf16.mxu0 %v5105
  %7611 = vmatpush1.bf16.msra.mxu0 %v5104
  %7612 = vmatprep.subr.bf16.mxu0 %v5121
  %7613 = vmatpush1.bf16.msra.mxu0 %v5120
  %7614 = vmatprep.subr.bf16.mxu0 %v5137
  %7615 = vmatpush1.bf16.msra.mxu0 %v5136
  %7616 = vmatprep.subr.bf16.mxu0 %v5153
  %7617 = vmatpush1.bf16.msra.mxu0 %v5152
  %7618 = vmatprep.subr.bf16.mxu0 %v5169
  %7619 = vmatpush1.bf16.msra.mxu0 %v5168
  %7620 = vmatprep.subr.bf16.mxu0 %v5185
  %7621 = vmatpush1.bf16.msra.mxu0 %v5184
  %7622 = vmatprep.subr.bf16.mxu0 %v5201
  %7623 = vmatpush1.bf16.msra.mxu0 %v5200
  %7624 = vmatprep.subr.bf16.mxu0 %v5217
  %7625 = vmatpush1.bf16.msra.mxu0 %v5216
  %7626 = vmatprep.subr.bf16.mxu0 %v5233
  %7627 = vmatpush1.bf16.msra.mxu0 %v5232
  %7628 = vmatprep.subr.bf16.mxu0 %v5249
  %7629 = vmatpush1.bf16.msra.mxu0 %v5248
  %7630 = vmatprep.mubr.bf16.mxu0 %v301
  %7631 = vmatmul.mubr.bf16.gmra.mrb[0].mxu0 %v300
  %v7632 = vpop.f32.mrb[0].mxu0
  %v7633 = vadd.f32 %v7592, %v7632
  %v7634 = vpop.f32.mrb[0].mxu0
  %v7635 = vadd.f32 %v7594, %v7634
  %v7636 = vpop.f32.mrb[0].mxu0
  %v7637 = vpop.f32.mrb[0].mxu0
  %7638 = vdwg.mxu0
  %7639 = vmatprep.subr.bf16.mxu0 %v5265
  %7640 = vmatpush1.bf16.msra.mxu0 %v5264
  %7641 = vmatprep.subr.bf16.mxu0 %v5281
  %7642 = vmatpush1.bf16.msra.mxu0 %v5280
  %7643 = vmatprep.subr.bf16.mxu0 %v5297
  %7644 = vmatpush1.bf16.msra.mxu0 %v5296
  %7645 = vmatprep.subr.bf16.mxu0 %v5313
  %7646 = vmatpush1.bf16.msra.mxu0 %v5312
  %7647 = vmatprep.subr.bf16.mxu0 %v5329
  %7648 = vmatpush1.bf16.msra.mxu0 %v5328
  %7649 = vmatprep.subr.bf16.mxu0 %v5345
  %7650 = vmatpush1.bf16.msra.mxu0 %v5344
  %7651 = vmatprep.subr.bf16.mxu0 %v5361
  %7652 = vmatpush1.bf16.msra.mxu0 %v5360
  %7653 = vmatprep.subr.bf16.mxu0 %v5377
  %7654 = vmatpush1.bf16.msra.mxu0 %v5376
  %7655 = vmatprep.subr.bf16.mxu0 %v5393
  %7656 = vmatpush1.bf16.msra.mxu0 %v5392
  %7657 = vmatprep.subr.bf16.mxu0 %v5409
  %7658 = vmatpush1.bf16.msra.mxu0 %v5408
  %7659 = vmatprep.subr.bf16.mxu0 %v5425
  %7660 = vmatpush1.bf16.msra.mxu0 %v5424
  %7661 = vmatprep.subr.bf16.mxu0 %v5441
  %7662 = vmatpush1.bf16.msra.mxu0 %v5440
  %7663 = vmatprep.subr.bf16.mxu0 %v5457
  %7664 = vmatpush1.bf16.msra.mxu0 %v5456
  %7665 = vmatprep.subr.bf16.mxu0 %v5473
  %7666 = vmatpush1.bf16.msra.mxu0 %v5472
  %7667 = vmatprep.subr.bf16.mxu0 %v5489
  %7668 = vmatpush1.bf16.msra.mxu0 %v5488
  %7669 = vmatprep.subr.bf16.mxu0 %v5505
  %7670 = vmatpush1.bf16.msra.mxu0 %v5504
  %7671 = vmatprep.mubr.bf16.mxu0 %v303
  %7672 = vmatmul.mubr.bf16.gmra.mrb[0].mxu0 %v302
  %v7673 = vpop.f32.mrb[0].mxu0
  %v7674 = vadd.f32 %v7633, %v7673
  %v7675 = vpop.f32.mrb[0].mxu0
  %v7676 = vadd.f32 %v7635, %v7675
  %v7677 = vpop.f32.mrb[0].mxu0
  %v7678 = vpop.f32.mrb[0].mxu0
  %7679 = vdwg.mxu0
  %7680 = vmatprep.subr.bf16.mxu0 %v4499
  %7681 = vmatpush1.bf16.msra.mxu0 %v4498
  %7682 = vmatprep.subr.bf16.mxu0 %v4515
  %7683 = vmatpush1.bf16.msra.mxu0 %v4514
  %7684 = vmatprep.subr.bf16.mxu0 %v4531
  %7685 = vmatpush1.bf16.msra.mxu0 %v4530
  %7686 = vmatprep.subr.bf16.mxu0 %v4547
  %7687 = vmatpush1.bf16.msra.mxu0 %v4546
  %7688 = vmatprep.subr.bf16.mxu0 %v4563
  %7689 = vmatpush1.bf16.msra.mxu0 %v4562
  %7690 = vmatprep.subr.bf16.mxu0 %v4579
  %7691 = vmatpush1.bf16.msra.mxu0 %v4578
  %7692 = vmatprep.subr.bf16.mxu0 %v4595
  %7693 = vmatpush1.bf16.msra.mxu0 %v4594
  %7694 = vmatprep.subr.bf16.mxu0 %v4611
  %7695 = vmatpush1.bf16.msra.mxu0 %v4610
  %7696 = vmatprep.subr.bf16.mxu0 %v4627
  %7697 = vmatpush1.bf16.msra.mxu0 %v4626
  %7698 = vmatprep.subr.bf16.mxu0 %v4643
  %7699 = vmatpush1.bf16.msra.mxu0 %v4642
  %7700 = vmatprep.subr.bf16.mxu0 %v4659
  %7701 = vmatpush1.bf16.msra.mxu0 %v4658
  %7702 = vmatprep.subr.bf16.mxu0 %v4675
  %7703 = vmatpush1.bf16.msra.mxu0 %v4674
  %7704 = vmatprep.subr.bf16.mxu0 %v4691
  %7705 = vmatpush1.bf16.msra.mxu0 %v4690
  %7706 = vmatprep.subr.bf16.mxu0 %v4707
  %7707 = vmatpush1.bf16.msra.mxu0 %v4706
  %7708 = vmatprep.subr.bf16.mxu0 %v4723
  %7709 = vmatpush1.bf16.msra.mxu0 %v4722
  %7710 = vmatprep.subr.bf16.mxu0 %v4739
  %7711 = vmatpush1.bf16.msra.mxu0 %v4738
  %7712 = vmatprep.mubr.bf16.mxu0 %v297
  %7713 = vmatmul.mubr.bf16.gmra.mrb[0].mxu0 %v296
  %v7714 = vpop.f32.mrb[0].mxu0
  %v7715 = vadd.f32 %v1391, %v7714
  %v7716 = vpop.f32.mrb[0].mxu0
  %v7717 = vadd.f32 %v1395, %v7716
  %v7718 = vpop.f32.mrb[0].mxu0
  %v7719 = vpop.f32.mrb[0].mxu0
  %7720 = vdwg.mxu0
  %7721 = vmatprep.subr.bf16.mxu0 %v4755
  %7722 = vmatpush1.bf16.msra.mxu0 %v4754
  %7723 = vmatprep.subr.bf16.mxu0 %v4771
  %7724 = vmatpush1.bf16.msra.mxu0 %v4770
  %7725 = vmatprep.subr.bf16.mxu0 %v4787
  %7726 = vmatpush1.bf16.msra.mxu0 %v4786
  %7727 = vmatprep.subr.bf16.mxu0 %v4803
  %7728 = vmatpush1.bf16.msra.mxu0 %v4802
  %7729 = vmatprep.subr.bf16.mxu0 %v4819
  %7730 = vmatpush1.bf16.msra.mxu0 %v4818
  %7731 = vmatprep.subr.bf16.mxu0 %v4835
  %7732 = vmatpush1.bf16.msra.mxu0 %v4834
  %7733 = vmatprep.subr.bf16.mxu0 %v4851
  %7734 = vmatpush1.bf16.msra.mxu0 %v4850
  %7735 = vmatprep.subr.bf16.mxu0 %v4867
  %7736 = vmatpush1.bf16.msra.mxu0 %v4866
  %7737 = vmatprep.subr.bf16.mxu0 %v4883
  %7738 = vmatpush1.bf16.msra.mxu0 %v4882
  %7739 = vmatprep.subr.bf16.mxu0 %v4899
  %7740 = vmatpush1.bf16.msra.mxu0 %v4898
  %7741 = vmatprep.subr.bf16.mxu0 %v4915
  %7742 = vmatpush1.bf16.msra.mxu0 %v4914
  %7743 = vmatprep.subr.bf16.mxu0 %v4931
  %7744 = vmatpush1.bf16.msra.mxu0 %v4930
  %7745 = vmatprep.subr.bf16.mxu0 %v4947
  %7746 = vmatpush1.bf16.msra.mxu0 %v4946
  %7747 = vmatprep.subr.bf16.mxu0 %v4963
  %7748 = vmatpush1.bf16.msra.mxu0 %v4962
  %7749 = vmatprep.subr.bf16.mxu0 %v4979
  %7750 = vmatpush1.bf16.msra.mxu0 %v4978
  %7751 = vmatprep.subr.bf16.mxu0 %v4995
  %7752 = vmatpush1.bf16.msra.mxu0 %v4994
  %7753 = vmatprep.mubr.bf16.mxu0 %v299
  %7754 = vmatmul.mubr.bf16.gmra.mrb[0].mxu0 %v298
  %v7755 = vpop.f32.mrb[0].mxu0
  %v7756 = vadd.f32 %v7715, %v7755
  %v7757 = vpop.f32.mrb[0].mxu0
  %v7758 = vadd.f32 %v7717, %v7757
  %v7759 = vpop.f32.mrb[0].mxu0
  %v7760 = vpop.f32.mrb[0].mxu0
  %7761 = vdwg.mxu0
  %7762 = vmatprep.subr.bf16.mxu0 %v5011
  %7763 = vmatpush1.bf16.msra.mxu0 %v5010
  %7764 = vmatprep.subr.bf16.mxu0 %v5027
  %7765 = vmatpush1.bf16.msra.mxu0 %v5026
  %7766 = vmatprep.subr.bf16.mxu0 %v5043
  %7767 = vmatpush1.bf16.msra.mxu0 %v5042
  %7768 = vmatprep.subr.bf16.mxu0 %v5059
  %7769 = vmatpush1.bf16.msra.mxu0 %v5058
  %7770 = vmatprep.subr.bf16.mxu0 %v5075
  %7771 = vmatpush1.bf16.msra.mxu0 %v5074
  %7772 = vmatprep.subr.bf16.mxu0 %v5091
  %7773 = vmatpush1.bf16.msra.mxu0 %v5090
  %7774 = vmatprep.subr.bf16.mxu0 %v5107
  %7775 = vmatpush1.bf16.msra.mxu0 %v5106
  %7776 = vmatprep.subr.bf16.mxu0 %v5123
  %7777 = vmatpush1.bf16.msra.mxu0 %v5122
  %7778 = vmatprep.subr.bf16.mxu0 %v5139
  %7779 = vmatpush1.bf16.msra.mxu0 %v5138
  %7780 = vmatprep.subr.bf16.mxu0 %v5155
  %7781 = vmatpush1.bf16.msra.mxu0 %v5154
  %7782 = vmatprep.subr.bf16.mxu0 %v5171
  %7783 = vmatpush1.bf16.msra.mxu0 %v5170
  %7784 = vmatprep.subr.bf16.mxu0 %v5187
  %7785 = vmatpush1.bf16.msra.mxu0 %v5186
  %7786 = vmatprep.subr.bf16.mxu0 %v5203
  %7787 = vmatpush1.bf16.msra.mxu0 %v5202
  %7788 = vmatprep.subr.bf16.mxu0 %v5219
  %7789 = vmatpush1.bf16.msra.mxu0 %v5218
  %7790 = vmatprep.subr.bf16.mxu0 %v5235
  %7791 = vmatpush1.bf16.msra.mxu0 %v5234
  %7792 = vmatprep.subr.bf16.mxu0 %v5251
  %7793 = vmatpush1.bf16.msra.mxu0 %v5250
  %7794 = vmatprep.mubr.bf16.mxu0 %v301
  %7795 = vmatmul.mubr.bf16.gmra.mrb[0].mxu0 %v300
  %v7796 = vpop.f32.mrb[0].mxu0
  %v7797 = vadd.f32 %v7756, %v7796
  %v7798 = vpop.f32.mrb[0].mxu0
  %v7799 = vadd.f32 %v7758, %v7798
  %v7800 = vpop.f32.mrb[0].mxu0
  %v7801 = vpop.f32.mrb[0].mxu0
  %7802 = vdwg.mxu0
  %7803 = vmatprep.subr.bf16.mxu0 %v5267
  %7804 = vmatpush1.bf16.msra.mxu0 %v5266
  %7805 = vmatprep.subr.bf16.mxu0 %v5283
  %7806 = vmatpush1.bf16.msra.mxu0 %v5282
  %7807 = vmatprep.subr.bf16.mxu0 %v5299
  %7808 = vmatpush1.bf16.msra.mxu0 %v5298
  %7809 = vmatprep.subr.bf16.mxu0 %v5315
  %7810 = vmatpush1.bf16.msra.mxu0 %v5314
  %7811 = vmatprep.subr.bf16.mxu0 %v5331
  %7812 = vmatpush1.bf16.msra.mxu0 %v5330
  %7813 = vmatprep.subr.bf16.mxu0 %v5347
  %7814 = vmatpush1.bf16.msra.mxu0 %v5346
  %7815 = vmatprep.subr.bf16.mxu0 %v5363
  %7816 = vmatpush1.bf16.msra.mxu0 %v5362
  %7817 = vmatprep.subr.bf16.mxu0 %v5379
  %7818 = vmatpush1.bf16.msra.mxu0 %v5378
  %7819 = vmatprep.subr.bf16.mxu0 %v5395
  %7820 = vmatpush1.bf16.msra.mxu0 %v5394
  %7821 = vmatprep.subr.bf16.mxu0 %v5411
  %7822 = vmatpush1.bf16.msra.mxu0 %v5410
  %7823 = vmatprep.subr.bf16.mxu0 %v5427
  %7824 = vmatpush1.bf16.msra.mxu0 %v5426
  %7825 = vmatprep.subr.bf16.mxu0 %v5443
  %7826 = vmatpush1.bf16.msra.mxu0 %v5442
  %7827 = vmatprep.subr.bf16.mxu0 %v5459
  %7828 = vmatpush1.bf16.msra.mxu0 %v5458
  %7829 = vmatprep.subr.bf16.mxu0 %v5475
  %7830 = vmatpush1.bf16.msra.mxu0 %v5474
  %7831 = vmatprep.subr.bf16.mxu0 %v5491
  %7832 = vmatpush1.bf16.msra.mxu0 %v5490
  %7833 = vmatprep.subr.bf16.mxu0 %v5507
  %7834 = vmatpush1.bf16.msra.mxu0 %v5506
  %7835 = vmatprep.mubr.bf16.mxu0 %v303
  %7836 = vmatmul.mubr.bf16.gmra.mrb[0].mxu0 %v302
  %v7837 = vpop.f32.mrb[0].mxu0
  %v7838 = vadd.f32 %v7797, %v7837
  %v7839 = vpop.f32.mrb[0].mxu0
  %v7840 = vadd.f32 %v7799, %v7839
  %v7841 = vpop.f32.mrb[0].mxu0
  %v7842 = vpop.f32.mrb[0].mxu0
  %7843 = vdwg.mxu0
  %v7844 = vmax.f32 %v6690, 0.0
  %v7845 = vmax.f32 %v6692, 0.0
  %v7846 = vmax.f32 %v6854, 0.0
  %v7847 = vmax.f32 %v6856, 0.0
  %v7848 = vmax.f32 %v7018, 0.0
  %v7849 = vmax.f32 %v7020, 0.0
  %v7850 = vmax.f32 %v7182, 0.0
  %v7851 = vmax.f32 %v7184, 0.0
  %v7852 = vmax.f32 %v7346, 0.0
  %v7853 = vmax.f32 %v7348, 0.0
  %v7854 = vmax.f32 %v7510, 0.0
  %v7855 = vmax.f32 %v7512, 0.0
  %v7856 = vmax.f32 %v7674, 0.0
  %v7857 = vmax.f32 %v7676, 0.0
  %v7858 = vmax.f32 %v7838, 0.0
  %v7859 = vmax.f32 %v7840, 0.0
  %v7860 = vpack.c.bf16 %v7844, %v7844
  %v7861 = vpack.c.bf16 %v7845, %v7845
  %v7862 = vpack.c.bf16 %v7846, %v7846
  %v7863 = vpack.c.bf16 %v7847, %v7847
  %v7864 = vpack.c.bf16 %v7848, %v7848
  %v7865 = vpack.c.bf16 %v7849, %v7849
  %v7866 = vpack.c.bf16 %v7850, %v7850
  %v7867 = vpack.c.bf16 %v7851, %v7851
  %v7868 = vpack.c.bf16 %v7852, %v7852
  %v7869 = vpack.c.bf16 %v7853, %v7853
  %v7870 = vpack.c.bf16 %v7854, %v7854
  %v7871 = vpack.c.bf16 %v7855, %v7855
  %v7872 = vpack.c.bf16 %v7856, %v7856
  %v7873 = vpack.c.bf16 %v7857, %v7857
  %v7874 = vpack.c.bf16 %v7858, %v7858
  %v7875 = vpack.c.bf16 %v7859, %v7859
  %v7876 = vld [vmem:[%s5] sm:$0xff]
  %v7877 = vld [vmem:[%s5 + $0x8] sm:$0xff]
  %v7878 = vld [vmem:[%s5 + $0x10] sm:$0xff]
  %v7879 = vld [vmem:[%s5 + $0x18] sm:$0xff]
  %v7880 = vld [vmem:[%s5 + $0x20] sm:$0xff]
  %v7881 = vld [vmem:[%s5 + $0x28] sm:$0xff]
  %v7882 = vld [vmem:[%s5 + $0x30] sm:$0xff]
  %v7883 = vld [vmem:[%s5 + $0x38] sm:$0xff]
  %v7884 = vld [vmem:[%s5 + $0x40] sm:$0xff]
  %v7885 = vld [vmem:[%s5 + $0x48] sm:$0xff]
  %v7886 = vld [vmem:[%s5 + $0x50] sm:$0xff]
  %v7887 = vld [vmem:[%s5 + $0x58] sm:$0xff]
  %v7888 = vld [vmem:[%s5 + $0x60] sm:$0xff]
  %v7889 = vld [vmem:[%s5 + $0x68] sm:$0xff]
  %v7890 = vld [vmem:[%s5 + $0x70] sm:$0xff]
  %v7891 = vld [vmem:[%s5 + $0x78] sm:$0xff]
  %v7892 = vld [vmem:[%s5 + $0x80] sm:$0xff]
  %v7893 = vld [vmem:[%s5 + $0x88] sm:$0xff]
  %v7894 = vld [vmem:[%s5 + $0x90] sm:$0xff]
  %v7895 = vld [vmem:[%s5 + $0x98] sm:$0xff]
  %v7896 = vld [vmem:[%s5 + $0xa0] sm:$0xff]
  %v7897 = vld [vmem:[%s5 + $0xa8] sm:$0xff]
  %v7898 = vld [vmem:[%s5 + $0xb0] sm:$0xff]
  %v7899 = vld [vmem:[%s5 + $0xb8] sm:$0xff]
  %v7900 = vld [vmem:[%s5 + $0xc0] sm:$0xff]
  %v7901 = vld [vmem:[%s5 + $0xc8] sm:$0xff]
  %v7902 = vld [vmem:[%s5 + $0xd0] sm:$0xff]
  %v7903 = vld [vmem:[%s5 + $0xd8] sm:$0xff]
  %v7904 = vld [vmem:[%s5 + $0xe0] sm:$0xff]
  %v7905 = vld [vmem:[%s5 + $0xe8] sm:$0xff]
  %v7906 = vld [vmem:[%s5 + $0xf0] sm:$0xff]
  %v7907 = vld [vmem:[%s5 + $0xf8] sm:$0xff]
  %v7908 = vld [vmem:[%s5 + $0x100] sm:$0xff]
  %v7909 = vld [vmem:[%s5 + $0x108] sm:$0xff]
  %v7910 = vld [vmem:[%s5 + $0x110] sm:$0xff]
  %v7911 = vld [vmem:[%s5 + $0x118] sm:$0xff]
  %v7912 = vld [vmem:[%s5 + $0x120] sm:$0xff]
  %v7913 = vld [vmem:[%s5 + $0x128] sm:$0xff]
  %v7914 = vld [vmem:[%s5 + $0x130] sm:$0xff]
  %v7915 = vld [vmem:[%s5 + $0x138] sm:$0xff]
  %v7916 = vld [vmem:[%s5 + $0x140] sm:$0xff]
  %v7917 = vld [vmem:[%s5 + $0x148] sm:$0xff]
  %v7918 = vld [vmem:[%s5 + $0x150] sm:$0xff]
  %v7919 = vld [vmem:[%s5 + $0x158] sm:$0xff]
  %v7920 = vld [vmem:[%s5 + $0x160] sm:$0xff]
  %v7921 = vld [vmem:[%s5 + $0x168] sm:$0xff]
  %v7922 = vld [vmem:[%s5 + $0x170] sm:$0xff]
  %v7923 = vld [vmem:[%s5 + $0x178] sm:$0xff]
  %v7924 = vld [vmem:[%s5 + $0x180] sm:$0xff]
  %v7925 = vld [vmem:[%s5 + $0x188] sm:$0xff]
  %v7926 = vld [vmem:[%s5 + $0x190] sm:$0xff]
  %v7927 = vld [vmem:[%s5 + $0x198] sm:$0xff]
  %v7928 = vld [vmem:[%s5 + $0x1a0] sm:$0xff]
  %v7929 = vld [vmem:[%s5 + $0x1a8] sm:$0xff]
  %v7930 = vld [vmem:[%s5 + $0x1b0] sm:$0xff]
  %v7931 = vld [vmem:[%s5 + $0x1b8] sm:$0xff]
  %v7932 = vld [vmem:[%s5 + $0x1c0] sm:$0xff]
  %v7933 = vld [vmem:[%s5 + $0x1c8] sm:$0xff]
  %v7934 = vld [vmem:[%s5 + $0x1d0] sm:$0xff]
  %v7935 = vld [vmem:[%s5 + $0x1d8] sm:$0xff]
  %v7936 = vld [vmem:[%s5 + $0x1e0] sm:$0xff]
  %v7937 = vld [vmem:[%s5 + $0x1e8] sm:$0xff]
  %v7938 = vld [vmem:[%s5 + $0x1f0] sm:$0xff]
  %v7939 = vld [vmem:[%s5 + $0x1f8] sm:$0xff]
  %v7940 = vld [vmem:[%s5 + $0x200] sm:$0xff]
  %v7941 = vld [vmem:[%s5 + $0x208] sm:$0xff]
  %v7942 = vld [vmem:[%s5 + $0x210] sm:$0xff]
  %v7943 = vld [vmem:[%s5 + $0x218] sm:$0xff]
  %v7944 = vld [vmem:[%s5 + $0x220] sm:$0xff]
  %v7945 = vld [vmem:[%s5 + $0x228] sm:$0xff]
  %v7946 = vld [vmem:[%s5 + $0x230] sm:$0xff]
  %v7947 = vld [vmem:[%s5 + $0x238] sm:$0xff]
  %v7948 = vld [vmem:[%s5 + $0x240] sm:$0xff]
  %v7949 = vld [vmem:[%s5 + $0x248] sm:$0xff]
  %v7950 = vld [vmem:[%s5 + $0x250] sm:$0xff]
  %v7951 = vld [vmem:[%s5 + $0x258] sm:$0xff]
  %v7952 = vld [vmem:[%s5 + $0x260] sm:$0xff]
  %v7953 = vld [vmem:[%s5 + $0x268] sm:$0xff]
  %v7954 = vld [vmem:[%s5 + $0x270] sm:$0xff]
  %v7955 = vld [vmem:[%s5 + $0x278] sm:$0xff]
  %v7956 = vld [vmem:[%s5 + $0x280] sm:$0xff]
  %v7957 = vld [vmem:[%s5 + $0x288] sm:$0xff]
  %v7958 = vld [vmem:[%s5 + $0x290] sm:$0xff]
  %v7959 = vld [vmem:[%s5 + $0x298] sm:$0xff]
  %v7960 = vld [vmem:[%s5 + $0x2a0] sm:$0xff]
  %v7961 = vld [vmem:[%s5 + $0x2a8] sm:$0xff]
  %v7962 = vld [vmem:[%s5 + $0x2b0] sm:$0xff]
  %v7963 = vld [vmem:[%s5 + $0x2b8] sm:$0xff]
  %v7964 = vld [vmem:[%s5 + $0x2c0] sm:$0xff]
  %v7965 = vld [vmem:[%s5 + $0x2c8] sm:$0xff]
  %v7966 = vld [vmem:[%s5 + $0x2d0] sm:$0xff]
  %v7967 = vld [vmem:[%s5 + $0x2d8] sm:$0xff]
  %v7968 = vld [vmem:[%s5 + $0x2e0] sm:$0xff]
  %v7969 = vld [vmem:[%s5 + $0x2e8] sm:$0xff]
  %v7970 = vld [vmem:[%s5 + $0x2f0] sm:$0xff]
  %v7971 = vld [vmem:[%s5 + $0x2f8] sm:$0xff]
  %v7972 = vld [vmem:[%s5 + $0x300] sm:$0xff]
  %v7973 = vld [vmem:[%s5 + $0x308] sm:$0xff]
  %v7974 = vld [vmem:[%s5 + $0x310] sm:$0xff]
  %v7975 = vld [vmem:[%s5 + $0x318] sm:$0xff]
  %v7976 = vld [vmem:[%s5 + $0x320] sm:$0xff]
  %v7977 = vld [vmem:[%s5 + $0x328] sm:$0xff]
  %v7978 = vld [vmem:[%s5 + $0x330] sm:$0xff]
  %v7979 = vld [vmem:[%s5 + $0x338] sm:$0xff]
  %v7980 = vld [vmem:[%s5 + $0x340] sm:$0xff]
  %v7981 = vld [vmem:[%s5 + $0x348] sm:$0xff]
  %v7982 = vld [vmem:[%s5 + $0x350] sm:$0xff]
  %v7983 = vld [vmem:[%s5 + $0x358] sm:$0xff]
  %v7984 = vld [vmem:[%s5 + $0x360] sm:$0xff]
  %v7985 = vld [vmem:[%s5 + $0x368] sm:$0xff]
  %v7986 = vld [vmem:[%s5 + $0x370] sm:$0xff]
  %v7987 = vld [vmem:[%s5 + $0x378] sm:$0xff]
  %v7988 = vld [vmem:[%s5 + $0x380] sm:$0xff]
  %v7989 = vld [vmem:[%s5 + $0x388] sm:$0xff]
  %v7990 = vld [vmem:[%s5 + $0x390] sm:$0xff]
  %v7991 = vld [vmem:[%s5 + $0x398] sm:$0xff]
  %v7992 = vld [vmem:[%s5 + $0x3a0] sm:$0xff]
  %v7993 = vld [vmem:[%s5 + $0x3a8] sm:$0xff]
  %v7994 = vld [vmem:[%s5 + $0x3b0] sm:$0xff]
  %v7995 = vld [vmem:[%s5 + $0x3b8] sm:$0xff]
  %v7996 = vld [vmem:[%s5 + $0x3c0] sm:$0xff]
  %v7997 = vld [vmem:[%s5 + $0x3c8] sm:$0xff]
  %v7998 = vld [vmem:[%s5 + $0x3d0] sm:$0xff]
  %v7999 = vld [vmem:[%s5 + $0x3d8] sm:$0xff]
  %v8000 = vld [vmem:[%s5 + $0x3e0] sm:$0xff]
  %v8001 = vld [vmem:[%s5 + $0x3e8] sm:$0xff]
  %v8002 = vld [vmem:[%s5 + $0x3f0] sm:$0xff]
  %v8003 = vld [vmem:[%s5 + $0x3f8] sm:$0xff]
  %v8004 = vld [vmem:[%s5 + $0x400] sm:$0xff]
  %v8005 = vld [vmem:[%s5 + $0x408] sm:$0xff]
  %v8006 = vld [vmem:[%s5 + $0x410] sm:$0xff]
  %v8007 = vld [vmem:[%s5 + $0x418] sm:$0xff]
  %v8008 = vld [vmem:[%s5 + $0x420] sm:$0xff]
  %v8009 = vld [vmem:[%s5 + $0x428] sm:$0xff]
  %v8010 = vld [vmem:[%s5 + $0x430] sm:$0xff]
  %v8011 = vld [vmem:[%s5 + $0x438] sm:$0xff]
  %v8012 = vld [vmem:[%s5 + $0x440] sm:$0xff]
  %v8013 = vld [vmem:[%s5 + $0x448] sm:$0xff]
  %v8014 = vld [vmem:[%s5 + $0x450] sm:$0xff]
  %v8015 = vld [vmem:[%s5 + $0x458] sm:$0xff]
  %v8016 = vld [vmem:[%s5 + $0x460] sm:$0xff]
  %v8017 = vld [vmem:[%s5 + $0x468] sm:$0xff]
  %v8018 = vld [vmem:[%s5 + $0x470] sm:$0xff]
  %v8019 = vld [vmem:[%s5 + $0x478] sm:$0xff]
  %v8020 = vld [vmem:[%s5 + $0x480] sm:$0xff]
  %v8021 = vld [vmem:[%s5 + $0x488] sm:$0xff]
  %v8022 = vld [vmem:[%s5 + $0x490] sm:$0xff]
  %v8023 = vld [vmem:[%s5 + $0x498] sm:$0xff]
  %v8024 = vld [vmem:[%s5 + $0x4a0] sm:$0xff]
  %v8025 = vld [vmem:[%s5 + $0x4a8] sm:$0xff]
  %v8026 = vld [vmem:[%s5 + $0x4b0] sm:$0xff]
  %v8027 = vld [vmem:[%s5 + $0x4b8] sm:$0xff]
  %v8028 = vld [vmem:[%s5 + $0x4c0] sm:$0xff]
  %v8029 = vld [vmem:[%s5 + $0x4c8] sm:$0xff]
  %v8030 = vld [vmem:[%s5 + $0x4d0] sm:$0xff]
  %v8031 = vld [vmem:[%s5 + $0x4d8] sm:$0xff]
  %v8032 = vld [vmem:[%s5 + $0x4e0] sm:$0xff]
  %v8033 = vld [vmem:[%s5 + $0x4e8] sm:$0xff]
  %v8034 = vld [vmem:[%s5 + $0x4f0] sm:$0xff]
  %v8035 = vld [vmem:[%s5 + $0x4f8] sm:$0xff]
  %v8036 = vld [vmem:[%s5 + $0x500] sm:$0xff]
  %v8037 = vld [vmem:[%s5 + $0x508] sm:$0xff]
  %v8038 = vld [vmem:[%s5 + $0x510] sm:$0xff]
  %v8039 = vld [vmem:[%s5 + $0x518] sm:$0xff]
  %v8040 = vld [vmem:[%s5 + $0x520] sm:$0xff]
  %v8041 = vld [vmem:[%s5 + $0x528] sm:$0xff]
  %v8042 = vld [vmem:[%s5 + $0x530] sm:$0xff]
  %v8043 = vld [vmem:[%s5 + $0x538] sm:$0xff]
  %v8044 = vld [vmem:[%s5 + $0x540] sm:$0xff]
  %v8045 = vld [vmem:[%s5 + $0x548] sm:$0xff]
  %v8046 = vld [vmem:[%s5 + $0x550] sm:$0xff]
  %v8047 = vld [vmem:[%s5 + $0x558] sm:$0xff]
  %v8048 = vld [vmem:[%s5 + $0x560] sm:$0xff]
  %v8049 = vld [vmem:[%s5 + $0x568] sm:$0xff]
  %v8050 = vld [vmem:[%s5 + $0x570] sm:$0xff]
  %v8051 = vld [vmem:[%s5 + $0x578] sm:$0xff]
  %v8052 = vld [vmem:[%s5 + $0x580] sm:$0xff]
  %v8053 = vld [vmem:[%s5 + $0x588] sm:$0xff]
  %v8054 = vld [vmem:[%s5 + $0x590] sm:$0xff]
  %v8055 = vld [vmem:[%s5 + $0x598] sm:$0xff]
  %v8056 = vld [vmem:[%s5 + $0x5a0] sm:$0xff]
  %v8057 = vld [vmem:[%s5 + $0x5a8] sm:$0xff]
  %v8058 = vld [vmem:[%s5 + $0x5b0] sm:$0xff]
  %v8059 = vld [vmem:[%s5 + $0x5b8] sm:$0xff]
  %v8060 = vld [vmem:[%s5 + $0x5c0] sm:$0xff]
  %v8061 = vld [vmem:[%s5 + $0x5c8] sm:$0xff]
  %v8062 = vld [vmem:[%s5 + $0x5d0] sm:$0xff]
  %v8063 = vld [vmem:[%s5 + $0x5d8] sm:$0xff]
  %v8064 = vld [vmem:[%s5 + $0x5e0] sm:$0xff]
  %v8065 = vld [vmem:[%s5 + $0x5e8] sm:$0xff]
  %v8066 = vld [vmem:[%s5 + $0x5f0] sm:$0xff]
  %v8067 = vld [vmem:[%s5 + $0x5f8] sm:$0xff]
  %v8068 = vld [vmem:[%s5 + $0x600] sm:$0xff]
  %v8069 = vld [vmem:[%s5 + $0x608] sm:$0xff]
  %v8070 = vld [vmem:[%s5 + $0x610] sm:$0xff]
  %v8071 = vld [vmem:[%s5 + $0x618] sm:$0xff]
  %v8072 = vld [vmem:[%s5 + $0x620] sm:$0xff]
  %v8073 = vld [vmem:[%s5 + $0x628] sm:$0xff]
  %v8074 = vld [vmem:[%s5 + $0x630] sm:$0xff]
  %v8075 = vld [vmem:[%s5 + $0x638] sm:$0xff]
  %v8076 = vld [vmem:[%s5 + $0x640] sm:$0xff]
  %v8077 = vld [vmem:[%s5 + $0x648] sm:$0xff]
  %v8078 = vld [vmem:[%s5 + $0x650] sm:$0xff]
  %v8079 = vld [vmem:[%s5 + $0x658] sm:$0xff]
  %v8080 = vld [vmem:[%s5 + $0x660] sm:$0xff]
  %v8081 = vld [vmem:[%s5 + $0x668] sm:$0xff]
  %v8082 = vld [vmem:[%s5 + $0x670] sm:$0xff]
  %v8083 = vld [vmem:[%s5 + $0x678] sm:$0xff]
  %v8084 = vld [vmem:[%s5 + $0x680] sm:$0xff]
  %v8085 = vld [vmem:[%s5 + $0x688] sm:$0xff]
  %v8086 = vld [vmem:[%s5 + $0x690] sm:$0xff]
  %v8087 = vld [vmem:[%s5 + $0x698] sm:$0xff]
  %v8088 = vld [vmem:[%s5 + $0x6a0] sm:$0xff]
  %v8089 = vld [vmem:[%s5 + $0x6a8] sm:$0xff]
  %v8090 = vld [vmem:[%s5 + $0x6b0] sm:$0xff]
  %v8091 = vld [vmem:[%s5 + $0x6b8] sm:$0xff]
  %v8092 = vld [vmem:[%s5 + $0x6c0] sm:$0xff]
  %v8093 = vld [vmem:[%s5 + $0x6c8] sm:$0xff]
  %v8094 = vld [vmem:[%s5 + $0x6d0] sm:$0xff]
  %v8095 = vld [vmem:[%s5 + $0x6d8] sm:$0xff]
  %v8096 = vld [vmem:[%s5 + $0x6e0] sm:$0xff]
  %v8097 = vld [vmem:[%s5 + $0x6e8] sm:$0xff]
  %v8098 = vld [vmem:[%s5 + $0x6f0] sm:$0xff]
  %v8099 = vld [vmem:[%s5 + $0x6f8] sm:$0xff]
  %v8100 = vld [vmem:[%s5 + $0x700] sm:$0xff]
  %v8101 = vld [vmem:[%s5 + $0x708] sm:$0xff]
  %v8102 = vld [vmem:[%s5 + $0x710] sm:$0xff]
  %v8103 = vld [vmem:[%s5 + $0x718] sm:$0xff]
  %v8104 = vld [vmem:[%s5 + $0x720] sm:$0xff]
  %v8105 = vld [vmem:[%s5 + $0x728] sm:$0xff]
  %v8106 = vld [vmem:[%s5 + $0x730] sm:$0xff]
  %v8107 = vld [vmem:[%s5 + $0x738] sm:$0xff]
  %v8108 = vld [vmem:[%s5 + $0x740] sm:$0xff]
  %v8109 = vld [vmem:[%s5 + $0x748] sm:$0xff]
  %v8110 = vld [vmem:[%s5 + $0x750] sm:$0xff]
  %v8111 = vld [vmem:[%s5 + $0x758] sm:$0xff]
  %v8112 = vld [vmem:[%s5 + $0x760] sm:$0xff]
  %v8113 = vld [vmem:[%s5 + $0x768] sm:$0xff]
  %v8114 = vld [vmem:[%s5 + $0x770] sm:$0xff]
  %v8115 = vld [vmem:[%s5 + $0x778] sm:$0xff]
  %v8116 = vld [vmem:[%s5 + $0x780] sm:$0xff]
  %v8117 = vld [vmem:[%s5 + $0x788] sm:$0xff]
  %v8118 = vld [vmem:[%s5 + $0x790] sm:$0xff]
  %v8119 = vld [vmem:[%s5 + $0x798] sm:$0xff]
  %v8120 = vld [vmem:[%s5 + $0x7a0] sm:$0xff]
  %v8121 = vld [vmem:[%s5 + $0x7a8] sm:$0xff]
  %v8122 = vld [vmem:[%s5 + $0x7b0] sm:$0xff]
  %v8123 = vld [vmem:[%s5 + $0x7b8] sm:$0xff]
  %v8124 = vld [vmem:[%s5 + $0x7c0] sm:$0xff]
  %v8125 = vld [vmem:[%s5 + $0x7c8] sm:$0xff]
  %v8126 = vld [vmem:[%s5 + $0x7d0] sm:$0xff]
  %v8127 = vld [vmem:[%s5 + $0x7d8] sm:$0xff]
  %v8128 = vld [vmem:[%s5 + $0x7e0] sm:$0xff]
  %v8129 = vld [vmem:[%s5 + $0x7e8] sm:$0xff]
  %v8130 = vld [vmem:[%s5 + $0x7f0] sm:$0xff]
  %v8131 = vld [vmem:[%s5 + $0x7f8] sm:$0xff]
  %v8132 = vld [vmem:[%s5 + $0x800] sm:$0xff]
  %v8133 = vld [vmem:[%s5 + $0x808] sm:$0xff]
  %v8134 = vld [vmem:[%s5 + $0x810] sm:$0xff]
  %v8135 = vld [vmem:[%s5 + $0x818] sm:$0xff]
  %v8136 = vld [vmem:[%s5 + $0x820] sm:$0xff]
  %v8137 = vld [vmem:[%s5 + $0x828] sm:$0xff]
  %v8138 = vld [vmem:[%s5 + $0x830] sm:$0xff]
  %v8139 = vld [vmem:[%s5 + $0x838] sm:$0xff]
  %v8140 = vld [vmem:[%s5 + $0x840] sm:$0xff]
  %v8141 = vld [vmem:[%s5 + $0x848] sm:$0xff]
  %v8142 = vld [vmem:[%s5 + $0x850] sm:$0xff]
  %v8143 = vld [vmem:[%s5 + $0x858] sm:$0xff]
  %v8144 = vld [vmem:[%s5 + $0x860] sm:$0xff]
  %v8145 = vld [vmem:[%s5 + $0x868] sm:$0xff]
  %v8146 = vld [vmem:[%s5 + $0x870] sm:$0xff]
  %v8147 = vld [vmem:[%s5 + $0x878] sm:$0xff]
  %v8148 = vld [vmem:[%s5 + $0x880] sm:$0xff]
  %v8149 = vld [vmem:[%s5 + $0x888] sm:$0xff]
  %v8150 = vld [vmem:[%s5 + $0x890] sm:$0xff]
  %v8151 = vld [vmem:[%s5 + $0x898] sm:$0xff]
  %v8152 = vld [vmem:[%s5 + $0x8a0] sm:$0xff]
  %v8153 = vld [vmem:[%s5 + $0x8a8] sm:$0xff]
  %v8154 = vld [vmem:[%s5 + $0x8b0] sm:$0xff]
  %v8155 = vld [vmem:[%s5 + $0x8b8] sm:$0xff]
  %v8156 = vld [vmem:[%s5 + $0x8c0] sm:$0xff]
  %v8157 = vld [vmem:[%s5 + $0x8c8] sm:$0xff]
  %v8158 = vld [vmem:[%s5 + $0x8d0] sm:$0xff]
  %v8159 = vld [vmem:[%s5 + $0x8d8] sm:$0xff]
  %v8160 = vld [vmem:[%s5 + $0x8e0] sm:$0xff]
  %v8161 = vld [vmem:[%s5 + $0x8e8] sm:$0xff]
  %v8162 = vld [vmem:[%s5 + $0x8f0] sm:$0xff]
  %v8163 = vld [vmem:[%s5 + $0x8f8] sm:$0xff]
  %v8164 = vld [vmem:[%s5 + $0x900] sm:$0xff]
  %v8165 = vld [vmem:[%s5 + $0x908] sm:$0xff]
  %v8166 = vld [vmem:[%s5 + $0x910] sm:$0xff]
  %v8167 = vld [vmem:[%s5 + $0x918] sm:$0xff]
  %v8168 = vld [vmem:[%s5 + $0x920] sm:$0xff]
  %v8169 = vld [vmem:[%s5 + $0x928] sm:$0xff]
  %v8170 = vld [vmem:[%s5 + $0x930] sm:$0xff]
  %v8171 = vld [vmem:[%s5 + $0x938] sm:$0xff]
  %v8172 = vld [vmem:[%s5 + $0x940] sm:$0xff]
  %v8173 = vld [vmem:[%s5 + $0x948] sm:$0xff]
  %v8174 = vld [vmem:[%s5 + $0x950] sm:$0xff]
  %v8175 = vld [vmem:[%s5 + $0x958] sm:$0xff]
  %v8176 = vld [vmem:[%s5 + $0x960] sm:$0xff]
  %v8177 = vld [vmem:[%s5 + $0x968] sm:$0xff]
  %v8178 = vld [vmem:[%s5 + $0x970] sm:$0xff]
  %v8179 = vld [vmem:[%s5 + $0x978] sm:$0xff]
  %v8180 = vld [vmem:[%s5 + $0x980] sm:$0xff]
  %v8181 = vld [vmem:[%s5 + $0x988] sm:$0xff]
  %v8182 = vld [vmem:[%s5 + $0x990] sm:$0xff]
  %v8183 = vld [vmem:[%s5 + $0x998] sm:$0xff]
  %v8184 = vld [vmem:[%s5 + $0x9a0] sm:$0xff]
  %v8185 = vld [vmem:[%s5 + $0x9a8] sm:$0xff]
  %v8186 = vld [vmem:[%s5 + $0x9b0] sm:$0xff]
  %v8187 = vld [vmem:[%s5 + $0x9b8] sm:$0xff]
  %v8188 = vld [vmem:[%s5 + $0x9c0] sm:$0xff]
  %v8189 = vld [vmem:[%s5 + $0x9c8] sm:$0xff]
  %v8190 = vld [vmem:[%s5 + $0x9d0] sm:$0xff]
  %v8191 = vld [vmem:[%s5 + $0x9d8] sm:$0xff]
  %v8192 = vld [vmem:[%s5 + $0x9e0] sm:$0xff]
  %v8193 = vld [vmem:[%s5 + $0x9e8] sm:$0xff]
  %v8194 = vld [vmem:[%s5 + $0x9f0] sm:$0xff]
  %v8195 = vld [vmem:[%s5 + $0x9f8] sm:$0xff]
  %v8196 = vld [vmem:[%s5 + $0xa00] sm:$0xff]
  %v8197 = vld [vmem:[%s5 + $0xa08] sm:$0xff]
  %v8198 = vld [vmem:[%s5 + $0xa10] sm:$0xff]
  %v8199 = vld [vmem:[%s5 + $0xa18] sm:$0xff]
  %v8200 = vld [vmem:[%s5 + $0xa20] sm:$0xff]
  %v8201 = vld [vmem:[%s5 + $0xa28] sm:$0xff]
  %v8202 = vld [vmem:[%s5 + $0xa30] sm:$0xff]
  %v8203 = vld [vmem:[%s5 + $0xa38] sm:$0xff]
  %v8204 = vld [vmem:[%s5 + $0xa40] sm:$0xff]
  %v8205 = vld [vmem:[%s5 + $0xa48] sm:$0xff]
  %v8206 = vld [vmem:[%s5 + $0xa50] sm:$0xff]
  %v8207 = vld [vmem:[%s5 + $0xa58] sm:$0xff]
  %v8208 = vld [vmem:[%s5 + $0xa60] sm:$0xff]
  %v8209 = vld [vmem:[%s5 + $0xa68] sm:$0xff]
  %v8210 = vld [vmem:[%s5 + $0xa70] sm:$0xff]
  %v8211 = vld [vmem:[%s5 + $0xa78] sm:$0xff]
  %v8212 = vld [vmem:[%s5 + $0xa80] sm:$0xff]
  %v8213 = vld [vmem:[%s5 + $0xa88] sm:$0xff]
  %v8214 = vld [vmem:[%s5 + $0xa90] sm:$0xff]
  %v8215 = vld [vmem:[%s5 + $0xa98] sm:$0xff]
  %v8216 = vld [vmem:[%s5 + $0xaa0] sm:$0xff]
  %v8217 = vld [vmem:[%s5 + $0xaa8] sm:$0xff]
  %v8218 = vld [vmem:[%s5 + $0xab0] sm:$0xff]
  %v8219 = vld [vmem:[%s5 + $0xab8] sm:$0xff]
  %v8220 = vld [vmem:[%s5 + $0xac0] sm:$0xff]
  %v8221 = vld [vmem:[%s5 + $0xac8] sm:$0xff]
  %v8222 = vld [vmem:[%s5 + $0xad0] sm:$0xff]
  %v8223 = vld [vmem:[%s5 + $0xad8] sm:$0xff]
  %v8224 = vld [vmem:[%s5 + $0xae0] sm:$0xff]
  %v8225 = vld [vmem:[%s5 + $0xae8] sm:$0xff]
  %v8226 = vld [vmem:[%s5 + $0xaf0] sm:$0xff]
  %v8227 = vld [vmem:[%s5 + $0xaf8] sm:$0xff]
  %v8228 = vld [vmem:[%s5 + $0xb00] sm:$0xff]
  %v8229 = vld [vmem:[%s5 + $0xb08] sm:$0xff]
  %v8230 = vld [vmem:[%s5 + $0xb10] sm:$0xff]
  %v8231 = vld [vmem:[%s5 + $0xb18] sm:$0xff]
  %v8232 = vld [vmem:[%s5 + $0xb20] sm:$0xff]
  %v8233 = vld [vmem:[%s5 + $0xb28] sm:$0xff]
  %v8234 = vld [vmem:[%s5 + $0xb30] sm:$0xff]
  %v8235 = vld [vmem:[%s5 + $0xb38] sm:$0xff]
  %v8236 = vld [vmem:[%s5 + $0xb40] sm:$0xff]
  %v8237 = vld [vmem:[%s5 + $0xb48] sm:$0xff]
  %v8238 = vld [vmem:[%s5 + $0xb50] sm:$0xff]
  %v8239 = vld [vmem:[%s5 + $0xb58] sm:$0xff]
  %v8240 = vld [vmem:[%s5 + $0xb60] sm:$0xff]
  %v8241 = vld [vmem:[%s5 + $0xb68] sm:$0xff]
  %v8242 = vld [vmem:[%s5 + $0xb70] sm:$0xff]
  %v8243 = vld [vmem:[%s5 + $0xb78] sm:$0xff]
  %v8244 = vld [vmem:[%s5 + $0xb80] sm:$0xff]
  %v8245 = vld [vmem:[%s5 + $0xb88] sm:$0xff]
  %v8246 = vld [vmem:[%s5 + $0xb90] sm:$0xff]
  %v8247 = vld [vmem:[%s5 + $0xb98] sm:$0xff]
  %v8248 = vld [vmem:[%s5 + $0xba0] sm:$0xff]
  %v8249 = vld [vmem:[%s5 + $0xba8] sm:$0xff]
  %v8250 = vld [vmem:[%s5 + $0xbb0] sm:$0xff]
  %v8251 = vld [vmem:[%s5 + $0xbb8] sm:$0xff]
  %v8252 = vld [vmem:[%s5 + $0xbc0] sm:$0xff]
  %v8253 = vld [vmem:[%s5 + $0xbc8] sm:$0xff]
  %v8254 = vld [vmem:[%s5 + $0xbd0] sm:$0xff]
  %v8255 = vld [vmem:[%s5 + $0xbd8] sm:$0xff]
  %v8256 = vld [vmem:[%s5 + $0xbe0] sm:$0xff]
  %v8257 = vld [vmem:[%s5 + $0xbe8] sm:$0xff]
  %v8258 = vld [vmem:[%s5 + $0xbf0] sm:$0xff]
  %v8259 = vld [vmem:[%s5 + $0xbf8] sm:$0xff]
  %v8260 = vld [vmem:[%s5 + $0xc00] sm:$0xff]
  %v8261 = vld [vmem:[%s5 + $0xc08] sm:$0xff]
  %v8262 = vld [vmem:[%s5 + $0xc10] sm:$0xff]
  %v8263 = vld [vmem:[%s5 + $0xc18] sm:$0xff]
  %v8264 = vld [vmem:[%s5 + $0xc20] sm:$0xff]
  %v8265 = vld [vmem:[%s5 + $0xc28] sm:$0xff]
  %v8266 = vld [vmem:[%s5 + $0xc30] sm:$0xff]
  %v8267 = vld [vmem:[%s5 + $0xc38] sm:$0xff]
  %v8268 = vld [vmem:[%s5 + $0xc40] sm:$0xff]
  %v8269 = vld [vmem:[%s5 + $0xc48] sm:$0xff]
  %v8270 = vld [vmem:[%s5 + $0xc50] sm:$0xff]
  %v8271 = vld [vmem:[%s5 + $0xc58] sm:$0xff]
  %v8272 = vld [vmem:[%s5 + $0xc60] sm:$0xff]
  %v8273 = vld [vmem:[%s5 + $0xc68] sm:$0xff]
  %v8274 = vld [vmem:[%s5 + $0xc70] sm:$0xff]
  %v8275 = vld [vmem:[%s5 + $0xc78] sm:$0xff]
  %v8276 = vld [vmem:[%s5 + $0xc80] sm:$0xff]
  %v8277 = vld [vmem:[%s5 + $0xc88] sm:$0xff]
  %v8278 = vld [vmem:[%s5 + $0xc90] sm:$0xff]
  %v8279 = vld [vmem:[%s5 + $0xc98] sm:$0xff]
  %v8280 = vld [vmem:[%s5 + $0xca0] sm:$0xff]
  %v8281 = vld [vmem:[%s5 + $0xca8] sm:$0xff]
  %v8282 = vld [vmem:[%s5 + $0xcb0] sm:$0xff]
  %v8283 = vld [vmem:[%s5 + $0xcb8] sm:$0xff]
  %v8284 = vld [vmem:[%s5 + $0xcc0] sm:$0xff]
  %v8285 = vld [vmem:[%s5 + $0xcc8] sm:$0xff]
  %v8286 = vld [vmem:[%s5 + $0xcd0] sm:$0xff]
  %v8287 = vld [vmem:[%s5 + $0xcd8] sm:$0xff]
  %v8288 = vld [vmem:[%s5 + $0xce0] sm:$0xff]
  %v8289 = vld [vmem:[%s5 + $0xce8] sm:$0xff]
  %v8290 = vld [vmem:[%s5 + $0xcf0] sm:$0xff]
  %v8291 = vld [vmem:[%s5 + $0xcf8] sm:$0xff]
  %v8292 = vld [vmem:[%s5 + $0xd00] sm:$0xff]
  %v8293 = vld [vmem:[%s5 + $0xd08] sm:$0xff]
  %v8294 = vld [vmem:[%s5 + $0xd10] sm:$0xff]
  %v8295 = vld [vmem:[%s5 + $0xd18] sm:$0xff]
  %v8296 = vld [vmem:[%s5 + $0xd20] sm:$0xff]
  %v8297 = vld [vmem:[%s5 + $0xd28] sm:$0xff]
  %v8298 = vld [vmem:[%s5 + $0xd30] sm:$0xff]
  %v8299 = vld [vmem:[%s5 + $0xd38] sm:$0xff]
  %v8300 = vld [vmem:[%s5 + $0xd40] sm:$0xff]
  %v8301 = vld [vmem:[%s5 + $0xd48] sm:$0xff]
  %v8302 = vld [vmem:[%s5 + $0xd50] sm:$0xff]
  %v8303 = vld [vmem:[%s5 + $0xd58] sm:$0xff]
  %v8304 = vld [vmem:[%s5 + $0xd60] sm:$0xff]
  %v8305 = vld [vmem:[%s5 + $0xd68] sm:$0xff]
  %v8306 = vld [vmem:[%s5 + $0xd70] sm:$0xff]
  %v8307 = vld [vmem:[%s5 + $0xd78] sm:$0xff]
  %v8308 = vld [vmem:[%s5 + $0xd80] sm:$0xff]
  %v8309 = vld [vmem:[%s5 + $0xd88] sm:$0xff]
  %v8310 = vld [vmem:[%s5 + $0xd90] sm:$0xff]
  %v8311 = vld [vmem:[%s5 + $0xd98] sm:$0xff]
  %v8312 = vld [vmem:[%s5 + $0xda0] sm:$0xff]
  %v8313 = vld [vmem:[%s5 + $0xda8] sm:$0xff]
  %v8314 = vld [vmem:[%s5 + $0xdb0] sm:$0xff]
  %v8315 = vld [vmem:[%s5 + $0xdb8] sm:$0xff]
  %v8316 = vld [vmem:[%s5 + $0xdc0] sm:$0xff]
  %v8317 = vld [vmem:[%s5 + $0xdc8] sm:$0xff]
  %v8318 = vld [vmem:[%s5 + $0xdd0] sm:$0xff]
  %v8319 = vld [vmem:[%s5 + $0xdd8] sm:$0xff]
  %v8320 = vld [vmem:[%s5 + $0xde0] sm:$0xff]
  %v8321 = vld [vmem:[%s5 + $0xde8] sm:$0xff]
  %v8322 = vld [vmem:[%s5 + $0xdf0] sm:$0xff]
  %v8323 = vld [vmem:[%s5 + $0xdf8] sm:$0xff]
  %v8324 = vld [vmem:[%s5 + $0xe00] sm:$0xff]
  %v8325 = vld [vmem:[%s5 + $0xe08] sm:$0xff]
  %v8326 = vld [vmem:[%s5 + $0xe10] sm:$0xff]
  %v8327 = vld [vmem:[%s5 + $0xe18] sm:$0xff]
  %v8328 = vld [vmem:[%s5 + $0xe20] sm:$0xff]
  %v8329 = vld [vmem:[%s5 + $0xe28] sm:$0xff]
  %v8330 = vld [vmem:[%s5 + $0xe30] sm:$0xff]
  %v8331 = vld [vmem:[%s5 + $0xe38] sm:$0xff]
  %v8332 = vld [vmem:[%s5 + $0xe40] sm:$0xff]
  %v8333 = vld [vmem:[%s5 + $0xe48] sm:$0xff]
  %v8334 = vld [vmem:[%s5 + $0xe50] sm:$0xff]
  %v8335 = vld [vmem:[%s5 + $0xe58] sm:$0xff]
  %v8336 = vld [vmem:[%s5 + $0xe60] sm:$0xff]
  %v8337 = vld [vmem:[%s5 + $0xe68] sm:$0xff]
  %v8338 = vld [vmem:[%s5 + $0xe70] sm:$0xff]
  %v8339 = vld [vmem:[%s5 + $0xe78] sm:$0xff]
  %v8340 = vld [vmem:[%s5 + $0xe80] sm:$0xff]
  %v8341 = vld [vmem:[%s5 + $0xe88] sm:$0xff]
  %v8342 = vld [vmem:[%s5 + $0xe90] sm:$0xff]
  %v8343 = vld [vmem:[%s5 + $0xe98] sm:$0xff]
  %v8344 = vld [vmem:[%s5 + $0xea0] sm:$0xff]
  %v8345 = vld [vmem:[%s5 + $0xea8] sm:$0xff]
  %v8346 = vld [vmem:[%s5 + $0xeb0] sm:$0xff]
  %v8347 = vld [vmem:[%s5 + $0xeb8] sm:$0xff]
  %v8348 = vld [vmem:[%s5 + $0xec0] sm:$0xff]
  %v8349 = vld [vmem:[%s5 + $0xec8] sm:$0xff]
  %v8350 = vld [vmem:[%s5 + $0xed0] sm:$0xff]
  %v8351 = vld [vmem:[%s5 + $0xed8] sm:$0xff]
  %v8352 = vld [vmem:[%s5 + $0xee0] sm:$0xff]
  %v8353 = vld [vmem:[%s5 + $0xee8] sm:$0xff]
  %v8354 = vld [vmem:[%s5 + $0xef0] sm:$0xff]
  %v8355 = vld [vmem:[%s5 + $0xef8] sm:$0xff]
  %v8356 = vld [vmem:[%s5 + $0xf00] sm:$0xff]
  %v8357 = vld [vmem:[%s5 + $0xf08] sm:$0xff]
  %v8358 = vld [vmem:[%s5 + $0xf10] sm:$0xff]
  %v8359 = vld [vmem:[%s5 + $0xf18] sm:$0xff]
  %v8360 = vld [vmem:[%s5 + $0xf20] sm:$0xff]
  %v8361 = vld [vmem:[%s5 + $0xf28] sm:$0xff]
  %v8362 = vld [vmem:[%s5 + $0xf30] sm:$0xff]
  %v8363 = vld [vmem:[%s5 + $0xf38] sm:$0xff]
  %v8364 = vld [vmem:[%s5 + $0xf40] sm:$0xff]
  %v8365 = vld [vmem:[%s5 + $0xf48] sm:$0xff]
  %v8366 = vld [vmem:[%s5 + $0xf50] sm:$0xff]
  %v8367 = vld [vmem:[%s5 + $0xf58] sm:$0xff]
  %v8368 = vld [vmem:[%s5 + $0xf60] sm:$0xff]
  %v8369 = vld [vmem:[%s5 + $0xf68] sm:$0xff]
  %v8370 = vld [vmem:[%s5 + $0xf70] sm:$0xff]
  %v8371 = vld [vmem:[%s5 + $0xf78] sm:$0xff]
  %v8372 = vld [vmem:[%s5 + $0xf80] sm:$0xff]
  %v8373 = vld [vmem:[%s5 + $0xf88] sm:$0xff]
  %v8374 = vld [vmem:[%s5 + $0xf90] sm:$0xff]
  %v8375 = vld [vmem:[%s5 + $0xf98] sm:$0xff]
  %v8376 = vld [vmem:[%s5 + $0xfa0] sm:$0xff]
  %v8377 = vld [vmem:[%s5 + $0xfa8] sm:$0xff]
  %v8378 = vld [vmem:[%s5 + $0xfb0] sm:$0xff]
  %v8379 = vld [vmem:[%s5 + $0xfb8] sm:$0xff]
  %v8380 = vld [vmem:[%s5 + $0xfc0] sm:$0xff]
  %v8381 = vld [vmem:[%s5 + $0xfc8] sm:$0xff]
  %v8382 = vld [vmem:[%s5 + $0xfd0] sm:$0xff]
  %v8383 = vld [vmem:[%s5 + $0xfd8] sm:$0xff]
  %v8384 = vld [vmem:[%s5 + $0xfe0] sm:$0xff]
  %v8385 = vld [vmem:[%s5 + $0xfe8] sm:$0xff]
  %v8386 = vld [vmem:[%s5 + $0xff0] sm:$0xff]
  %v8387 = vld [vmem:[%s5 + $0xff8] sm:$0xff]
  %v8388 = vld [vmem:[%s5 + $0x1000] sm:$0xff]
  %v8389 = vld [vmem:[%s5 + $0x1008] sm:$0xff]
  %v8390 = vld [vmem:[%s5 + $0x1010] sm:$0xff]
  %v8391 = vld [vmem:[%s5 + $0x1018] sm:$0xff]
  %v8392 = vld [vmem:[%s5 + $0x1020] sm:$0xff]
  %v8393 = vld [vmem:[%s5 + $0x1028] sm:$0xff]
  %v8394 = vld [vmem:[%s5 + $0x1030] sm:$0xff]
  %v8395 = vld [vmem:[%s5 + $0x1038] sm:$0xff]
  %v8396 = vld [vmem:[%s5 + $0x1040] sm:$0xff]
  %v8397 = vld [vmem:[%s5 + $0x1048] sm:$0xff]
  %v8398 = vld [vmem:[%s5 + $0x1050] sm:$0xff]
  %v8399 = vld [vmem:[%s5 + $0x1058] sm:$0xff]
  %v8400 = vld [vmem:[%s5 + $0x1060] sm:$0xff]
  %v8401 = vld [vmem:[%s5 + $0x1068] sm:$0xff]
  %v8402 = vld [vmem:[%s5 + $0x1070] sm:$0xff]
  %v8403 = vld [vmem:[%s5 + $0x1078] sm:$0xff]
  %v8404 = vld [vmem:[%s5 + $0x1080] sm:$0xff]
  %v8405 = vld [vmem:[%s5 + $0x1088] sm:$0xff]
  %v8406 = vld [vmem:[%s5 + $0x1090] sm:$0xff]
  %v8407 = vld [vmem:[%s5 + $0x1098] sm:$0xff]
  %v8408 = vld [vmem:[%s5 + $0x10a0] sm:$0xff]
  %v8409 = vld [vmem:[%s5 + $0x10a8] sm:$0xff]
  %v8410 = vld [vmem:[%s5 + $0x10b0] sm:$0xff]
  %v8411 = vld [vmem:[%s5 + $0x10b8] sm:$0xff]
  %v8412 = vld [vmem:[%s5 + $0x10c0] sm:$0xff]
  %v8413 = vld [vmem:[%s5 + $0x10c8] sm:$0xff]
  %v8414 = vld [vmem:[%s5 + $0x10d0] sm:$0xff]
  %v8415 = vld [vmem:[%s5 + $0x10d8] sm:$0xff]
  %v8416 = vld [vmem:[%s5 + $0x10e0] sm:$0xff]
  %v8417 = vld [vmem:[%s5 + $0x10e8] sm:$0xff]
  %v8418 = vld [vmem:[%s5 + $0x10f0] sm:$0xff]
  %v8419 = vld [vmem:[%s5 + $0x10f8] sm:$0xff]
  %v8420 = vld [vmem:[%s5 + $0x1100] sm:$0xff]
  %v8421 = vld [vmem:[%s5 + $0x1108] sm:$0xff]
  %v8422 = vld [vmem:[%s5 + $0x1110] sm:$0xff]
  %v8423 = vld [vmem:[%s5 + $0x1118] sm:$0xff]
  %v8424 = vld [vmem:[%s5 + $0x1120] sm:$0xff]
  %v8425 = vld [vmem:[%s5 + $0x1128] sm:$0xff]
  %v8426 = vld [vmem:[%s5 + $0x1130] sm:$0xff]
  %v8427 = vld [vmem:[%s5 + $0x1138] sm:$0xff]
  %v8428 = vld [vmem:[%s5 + $0x1140] sm:$0xff]
  %v8429 = vld [vmem:[%s5 + $0x1148] sm:$0xff]
  %v8430 = vld [vmem:[%s5 + $0x1150] sm:$0xff]
  %v8431 = vld [vmem:[%s5 + $0x1158] sm:$0xff]
  %v8432 = vld [vmem:[%s5 + $0x1160] sm:$0xff]
  %v8433 = vld [vmem:[%s5 + $0x1168] sm:$0xff]
  %v8434 = vld [vmem:[%s5 + $0x1170] sm:$0xff]
  %v8435 = vld [vmem:[%s5 + $0x1178] sm:$0xff]
  %v8436 = vld [vmem:[%s5 + $0x1180] sm:$0xff]
  %v8437 = vld [vmem:[%s5 + $0x1188] sm:$0xff]
  %v8438 = vld [vmem:[%s5 + $0x1190] sm:$0xff]
  %v8439 = vld [vmem:[%s5 + $0x1198] sm:$0xff]
  %v8440 = vld [vmem:[%s5 + $0x11a0] sm:$0xff]
  %v8441 = vld [vmem:[%s5 + $0x11a8] sm:$0xff]
  %v8442 = vld [vmem:[%s5 + $0x11b0] sm:$0xff]
  %v8443 = vld [vmem:[%s5 + $0x11b8] sm:$0xff]
  %v8444 = vld [vmem:[%s5 + $0x11c0] sm:$0xff]
  %v8445 = vld [vmem:[%s5 + $0x11c8] sm:$0xff]
  %v8446 = vld [vmem:[%s5 + $0x11d0] sm:$0xff]
  %v8447 = vld [vmem:[%s5 + $0x11d8] sm:$0xff]
  %v8448 = vld [vmem:[%s5 + $0x11e0] sm:$0xff]
  %v8449 = vld [vmem:[%s5 + $0x11e8] sm:$0xff]
  %v8450 = vld [vmem:[%s5 + $0x11f0] sm:$0xff]
  %v8451 = vld [vmem:[%s5 + $0x11f8] sm:$0xff]
  %v8452 = vld [vmem:[%s5 + $0x1200] sm:$0xff]
  %v8453 = vld [vmem:[%s5 + $0x1208] sm:$0xff]
  %v8454 = vld [vmem:[%s5 + $0x1210] sm:$0xff]
  %v8455 = vld [vmem:[%s5 + $0x1218] sm:$0xff]
  %v8456 = vld [vmem:[%s5 + $0x1220] sm:$0xff]
  %v8457 = vld [vmem:[%s5 + $0x1228] sm:$0xff]
  %v8458 = vld [vmem:[%s5 + $0x1230] sm:$0xff]
  %v8459 = vld [vmem:[%s5 + $0x1238] sm:$0xff]
  %v8460 = vld [vmem:[%s5 + $0x1240] sm:$0xff]
  %v8461 = vld [vmem:[%s5 + $0x1248] sm:$0xff]
  %v8462 = vld [vmem:[%s5 + $0x1250] sm:$0xff]
  %v8463 = vld [vmem:[%s5 + $0x1258] sm:$0xff]
  %v8464 = vld [vmem:[%s5 + $0x1260] sm:$0xff]
  %v8465 = vld [vmem:[%s5 + $0x1268] sm:$0xff]
  %v8466 = vld [vmem:[%s5 + $0x1270] sm:$0xff]
  %v8467 = vld [vmem:[%s5 + $0x1278] sm:$0xff]
  %v8468 = vld [vmem:[%s5 + $0x1280] sm:$0xff]
  %v8469 = vld [vmem:[%s5 + $0x1288] sm:$0xff]
  %v8470 = vld [vmem:[%s5 + $0x1290] sm:$0xff]
  %v8471 = vld [vmem:[%s5 + $0x1298] sm:$0xff]
  %v8472 = vld [vmem:[%s5 + $0x12a0] sm:$0xff]
  %v8473 = vld [vmem:[%s5 + $0x12a8] sm:$0xff]
  %v8474 = vld [vmem:[%s5 + $0x12b0] sm:$0xff]
  %v8475 = vld [vmem:[%s5 + $0x12b8] sm:$0xff]
  %v8476 = vld [vmem:[%s5 + $0x12c0] sm:$0xff]
  %v8477 = vld [vmem:[%s5 + $0x12c8] sm:$0xff]
  %v8478 = vld [vmem:[%s5 + $0x12d0] sm:$0xff]
  %v8479 = vld [vmem:[%s5 + $0x12d8] sm:$0xff]
  %v8480 = vld [vmem:[%s5 + $0x12e0] sm:$0xff]
  %v8481 = vld [vmem:[%s5 + $0x12e8] sm:$0xff]
  %v8482 = vld [vmem:[%s5 + $0x12f0] sm:$0xff]
  %v8483 = vld [vmem:[%s5 + $0x12f8] sm:$0xff]
  %v8484 = vld [vmem:[%s5 + $0x1300] sm:$0xff]
  %v8485 = vld [vmem:[%s5 + $0x1308] sm:$0xff]
  %v8486 = vld [vmem:[%s5 + $0x1310] sm:$0xff]
  %v8487 = vld [vmem:[%s5 + $0x1318] sm:$0xff]
  %v8488 = vld [vmem:[%s5 + $0x1320] sm:$0xff]
  %v8489 = vld [vmem:[%s5 + $0x1328] sm:$0xff]
  %v8490 = vld [vmem:[%s5 + $0x1330] sm:$0xff]
  %v8491 = vld [vmem:[%s5 + $0x1338] sm:$0xff]
  %v8492 = vld [vmem:[%s5 + $0x1340] sm:$0xff]
  %v8493 = vld [vmem:[%s5 + $0x1348] sm:$0xff]
  %v8494 = vld [vmem:[%s5 + $0x1350] sm:$0xff]
  %v8495 = vld [vmem:[%s5 + $0x1358] sm:$0xff]
  %v8496 = vld [vmem:[%s5 + $0x1360] sm:$0xff]
  %v8497 = vld [vmem:[%s5 + $0x1368] sm:$0xff]
  %v8498 = vld [vmem:[%s5 + $0x1370] sm:$0xff]
  %v8499 = vld [vmem:[%s5 + $0x1378] sm:$0xff]
  %v8500 = vld [vmem:[%s5 + $0x1380] sm:$0xff]
  %v8501 = vld [vmem:[%s5 + $0x1388] sm:$0xff]
  %v8502 = vld [vmem:[%s5 + $0x1390] sm:$0xff]
  %v8503 = vld [vmem:[%s5 + $0x1398] sm:$0xff]
  %v8504 = vld [vmem:[%s5 + $0x13a0] sm:$0xff]
  %v8505 = vld [vmem:[%s5 + $0x13a8] sm:$0xff]
  %v8506 = vld [vmem:[%s5 + $0x13b0] sm:$0xff]
  %v8507 = vld [vmem:[%s5 + $0x13b8] sm:$0xff]
  %v8508 = vld [vmem:[%s5 + $0x13c0] sm:$0xff]
  %v8509 = vld [vmem:[%s5 + $0x13c8] sm:$0xff]
  %v8510 = vld [vmem:[%s5 + $0x13d0] sm:$0xff]
  %v8511 = vld [vmem:[%s5 + $0x13d8] sm:$0xff]
  %v8512 = vld [vmem:[%s5 + $0x13e0] sm:$0xff]
  %v8513 = vld [vmem:[%s5 + $0x13e8] sm:$0xff]
  %v8514 = vld [vmem:[%s5 + $0x13f0] sm:$0xff]
  %v8515 = vld [vmem:[%s5 + $0x13f8] sm:$0xff]
  %v8516 = vld [vmem:[%s5 + $0x1400] sm:$0xff]
  %v8517 = vld [vmem:[%s5 + $0x1408] sm:$0xff]
  %v8518 = vld [vmem:[%s5 + $0x1410] sm:$0xff]
  %v8519 = vld [vmem:[%s5 + $0x1418] sm:$0xff]
  %v8520 = vld [vmem:[%s5 + $0x1420] sm:$0xff]
  %v8521 = vld [vmem:[%s5 + $0x1428] sm:$0xff]
  %v8522 = vld [vmem:[%s5 + $0x1430] sm:$0xff]
  %v8523 = vld [vmem:[%s5 + $0x1438] sm:$0xff]
  %v8524 = vld [vmem:[%s5 + $0x1440] sm:$0xff]
  %v8525 = vld [vmem:[%s5 + $0x1448] sm:$0xff]
  %v8526 = vld [vmem:[%s5 + $0x1450] sm:$0xff]
  %v8527 = vld [vmem:[%s5 + $0x1458] sm:$0xff]
  %v8528 = vld [vmem:[%s5 + $0x1460] sm:$0xff]
  %v8529 = vld [vmem:[%s5 + $0x1468] sm:$0xff]
  %v8530 = vld [vmem:[%s5 + $0x1470] sm:$0xff]
  %v8531 = vld [vmem:[%s5 + $0x1478] sm:$0xff]
  %v8532 = vld [vmem:[%s5 + $0x1480] sm:$0xff]
  %v8533 = vld [vmem:[%s5 + $0x1488] sm:$0xff]
  %v8534 = vld [vmem:[%s5 + $0x1490] sm:$0xff]
  %v8535 = vld [vmem:[%s5 + $0x1498] sm:$0xff]
  %v8536 = vld [vmem:[%s5 + $0x14a0] sm:$0xff]
  %v8537 = vld [vmem:[%s5 + $0x14a8] sm:$0xff]
  %v8538 = vld [vmem:[%s5 + $0x14b0] sm:$0xff]
  %v8539 = vld [vmem:[%s5 + $0x14b8] sm:$0xff]
  %v8540 = vld [vmem:[%s5 + $0x14c0] sm:$0xff]
  %v8541 = vld [vmem:[%s5 + $0x14c8] sm:$0xff]
  %v8542 = vld [vmem:[%s5 + $0x14d0] sm:$0xff]
  %v8543 = vld [vmem:[%s5 + $0x14d8] sm:$0xff]
  %v8544 = vld [vmem:[%s5 + $0x14e0] sm:$0xff]
  %v8545 = vld [vmem:[%s5 + $0x14e8] sm:$0xff]
  %v8546 = vld [vmem:[%s5 + $0x14f0] sm:$0xff]
  %v8547 = vld [vmem:[%s5 + $0x14f8] sm:$0xff]
  %v8548 = vld [vmem:[%s5 + $0x1500] sm:$0xff]
  %v8549 = vld [vmem:[%s5 + $0x1508] sm:$0xff]
  %v8550 = vld [vmem:[%s5 + $0x1510] sm:$0xff]
  %v8551 = vld [vmem:[%s5 + $0x1518] sm:$0xff]
  %v8552 = vld [vmem:[%s5 + $0x1520] sm:$0xff]
  %v8553 = vld [vmem:[%s5 + $0x1528] sm:$0xff]
  %v8554 = vld [vmem:[%s5 + $0x1530] sm:$0xff]
  %v8555 = vld [vmem:[%s5 + $0x1538] sm:$0xff]
  %v8556 = vld [vmem:[%s5 + $0x1540] sm:$0xff]
  %v8557 = vld [vmem:[%s5 + $0x1548] sm:$0xff]
  %v8558 = vld [vmem:[%s5 + $0x1550] sm:$0xff]
  %v8559 = vld [vmem:[%s5 + $0x1558] sm:$0xff]
  %v8560 = vld [vmem:[%s5 + $0x1560] sm:$0xff]
  %v8561 = vld [vmem:[%s5 + $0x1568] sm:$0xff]
  %v8562 = vld [vmem:[%s5 + $0x1570] sm:$0xff]
  %v8563 = vld [vmem:[%s5 + $0x1578] sm:$0xff]
  %v8564 = vld [vmem:[%s5 + $0x1580] sm:$0xff]
  %v8565 = vld [vmem:[%s5 + $0x1588] sm:$0xff]
  %v8566 = vld [vmem:[%s5 + $0x1590] sm:$0xff]
  %v8567 = vld [vmem:[%s5 + $0x1598] sm:$0xff]
  %v8568 = vld [vmem:[%s5 + $0x15a0] sm:$0xff]
  %v8569 = vld [vmem:[%s5 + $0x15a8] sm:$0xff]
  %v8570 = vld [vmem:[%s5 + $0x15b0] sm:$0xff]
  %v8571 = vld [vmem:[%s5 + $0x15b8] sm:$0xff]
  %v8572 = vld [vmem:[%s5 + $0x15c0] sm:$0xff]
  %v8573 = vld [vmem:[%s5 + $0x15c8] sm:$0xff]
  %v8574 = vld [vmem:[%s5 + $0x15d0] sm:$0xff]
  %v8575 = vld [vmem:[%s5 + $0x15d8] sm:$0xff]
  %v8576 = vld [vmem:[%s5 + $0x15e0] sm:$0xff]
  %v8577 = vld [vmem:[%s5 + $0x15e8] sm:$0xff]
  %v8578 = vld [vmem:[%s5 + $0x15f0] sm:$0xff]
  %v8579 = vld [vmem:[%s5 + $0x15f8] sm:$0xff]
  %v8580 = vld [vmem:[%s5 + $0x1600] sm:$0xff]
  %v8581 = vld [vmem:[%s5 + $0x1608] sm:$0xff]
  %v8582 = vld [vmem:[%s5 + $0x1610] sm:$0xff]
  %v8583 = vld [vmem:[%s5 + $0x1618] sm:$0xff]
  %v8584 = vld [vmem:[%s5 + $0x1620] sm:$0xff]
  %v8585 = vld [vmem:[%s5 + $0x1628] sm:$0xff]
  %v8586 = vld [vmem:[%s5 + $0x1630] sm:$0xff]
  %v8587 = vld [vmem:[%s5 + $0x1638] sm:$0xff]
  %v8588 = vld [vmem:[%s5 + $0x1640] sm:$0xff]
  %v8589 = vld [vmem:[%s5 + $0x1648] sm:$0xff]
  %v8590 = vld [vmem:[%s5 + $0x1650] sm:$0xff]
  %v8591 = vld [vmem:[%s5 + $0x1658] sm:$0xff]
  %v8592 = vld [vmem:[%s5 + $0x1660] sm:$0xff]
  %v8593 = vld [vmem:[%s5 + $0x1668] sm:$0xff]
  %v8594 = vld [vmem:[%s5 + $0x1670] sm:$0xff]
  %v8595 = vld [vmem:[%s5 + $0x1678] sm:$0xff]
  %v8596 = vld [vmem:[%s5 + $0x1680] sm:$0xff]
  %v8597 = vld [vmem:[%s5 + $0x1688] sm:$0xff]
  %v8598 = vld [vmem:[%s5 + $0x1690] sm:$0xff]
  %v8599 = vld [vmem:[%s5 + $0x1698] sm:$0xff]
  %v8600 = vld [vmem:[%s5 + $0x16a0] sm:$0xff]
  %v8601 = vld [vmem:[%s5 + $0x16a8] sm:$0xff]
  %v8602 = vld [vmem:[%s5 + $0x16b0] sm:$0xff]
  %v8603 = vld [vmem:[%s5 + $0x16b8] sm:$0xff]
  %v8604 = vld [vmem:[%s5 + $0x16c0] sm:$0xff]
  %v8605 = vld [vmem:[%s5 + $0x16c8] sm:$0xff]
  %v8606 = vld [vmem:[%s5 + $0x16d0] sm:$0xff]
  %v8607 = vld [vmem:[%s5 + $0x16d8] sm:$0xff]
  %v8608 = vld [vmem:[%s5 + $0x16e0] sm:$0xff]
  %v8609 = vld [vmem:[%s5 + $0x16e8] sm:$0xff]
  %v8610 = vld [vmem:[%s5 + $0x16f0] sm:$0xff]
  %v8611 = vld [vmem:[%s5 + $0x16f8] sm:$0xff]
  %v8612 = vld [vmem:[%s5 + $0x1700] sm:$0xff]
  %v8613 = vld [vmem:[%s5 + $0x1708] sm:$0xff]
  %v8614 = vld [vmem:[%s5 + $0x1710] sm:$0xff]
  %v8615 = vld [vmem:[%s5 + $0x1718] sm:$0xff]
  %v8616 = vld [vmem:[%s5 + $0x1720] sm:$0xff]
  %v8617 = vld [vmem:[%s5 + $0x1728] sm:$0xff]
  %v8618 = vld [vmem:[%s5 + $0x1730] sm:$0xff]
  %v8619 = vld [vmem:[%s5 + $0x1738] sm:$0xff]
  %v8620 = vld [vmem:[%s5 + $0x1740] sm:$0xff]
  %v8621 = vld [vmem:[%s5 + $0x1748] sm:$0xff]
  %v8622 = vld [vmem:[%s5 + $0x1750] sm:$0xff]
  %v8623 = vld [vmem:[%s5 + $0x1758] sm:$0xff]
  %v8624 = vld [vmem:[%s5 + $0x1760] sm:$0xff]
  %v8625 = vld [vmem:[%s5 + $0x1768] sm:$0xff]
  %v8626 = vld [vmem:[%s5 + $0x1770] sm:$0xff]
  %v8627 = vld [vmem:[%s5 + $0x1778] sm:$0xff]
  %v8628 = vld [vmem:[%s5 + $0x1780] sm:$0xff]
  %v8629 = vld [vmem:[%s5 + $0x1788] sm:$0xff]
  %v8630 = vld [vmem:[%s5 + $0x1790] sm:$0xff]
  %v8631 = vld [vmem:[%s5 + $0x1798] sm:$0xff]
  %v8632 = vld [vmem:[%s5 + $0x17a0] sm:$0xff]
  %v8633 = vld [vmem:[%s5 + $0x17a8] sm:$0xff]
  %v8634 = vld [vmem:[%s5 + $0x17b0] sm:$0xff]
  %v8635 = vld [vmem:[%s5 + $0x17b8] sm:$0xff]
  %v8636 = vld [vmem:[%s5 + $0x17c0] sm:$0xff]
  %v8637 = vld [vmem:[%s5 + $0x17c8] sm:$0xff]
  %v8638 = vld [vmem:[%s5 + $0x17d0] sm:$0xff]
  %v8639 = vld [vmem:[%s5 + $0x17d8] sm:$0xff]
  %v8640 = vld [vmem:[%s5 + $0x17e0] sm:$0xff]
  %v8641 = vld [vmem:[%s5 + $0x17e8] sm:$0xff]
  %v8642 = vld [vmem:[%s5 + $0x17f0] sm:$0xff]
  %v8643 = vld [vmem:[%s5 + $0x17f8] sm:$0xff]
  %v8644 = vld [vmem:[%s6] sm:$0x3f]
  %v8646 = vlaneseq
  %v8647 = vshrl.u32 %v8646, 7
  %v8648 = vsub.s32 0, %v8647
  %v8649 = vrot.slane %v8644, %v8648
  %v8650 = vlaneseq
  %v8651 = vshrl.u32 %v8650, 7
  %v8652 = vsub.s32 1, %v8651
  %v8653 = vrot.slane %v8644, %v8652
  %v8654 = vlaneseq
  %v8655 = vshrl.u32 %v8654, 7
  %v8656 = vsub.s32 2, %v8655
  %v8657 = vrot.slane %v8644, %v8656
  %v8658 = vlaneseq
  %v8659 = vshrl.u32 %v8658, 7
  %v8660 = vsub.s32 3, %v8659
  %v8661 = vrot.slane %v8644, %v8660
  %v8662 = vlaneseq
  %v8663 = vshrl.u32 %v8662, 7
  %v8664 = vsub.s32 4, %v8663
  %v8665 = vrot.slane %v8644, %v8664
  %v8666 = vlaneseq
  %v8667 = vshrl.u32 %v8666, 7
  %v8668 = vsub.s32 5, %v8667
  %v8669 = vrot.slane %v8644, %v8668
  %v9444 = vunpack.c.l.b16 %v7876
  %v9445 = vunpack.c.h.b16 %v7876
  %v9446 = vunpack.c.l.b16 %v7877
  %v9447 = vunpack.c.h.b16 %v7877
  %v9448 = vunpack.c.l.b16 %v7878
  %v9449 = vunpack.c.h.b16 %v7878
  %v9450 = vunpack.c.l.b16 %v7879
  %v9451 = vunpack.c.h.b16 %v7879
  %v9452 = vunpack.c.l.b16 %v7880
  %v9453 = vunpack.c.h.b16 %v7880
  %v9454 = vunpack.c.l.b16 %v7881
  %v9455 = vunpack.c.h.b16 %v7881
  %v9456 = vunpack.c.l.b16 %v7882
  %v9457 = vunpack.c.h.b16 %v7882
  %v9458 = vunpack.c.l.b16 %v7883
  %v9459 = vunpack.c.h.b16 %v7883
  %v9460 = vunpack.c.l.b16 %v7884
  %v9461 = vunpack.c.h.b16 %v7884
  %v9462 = vunpack.c.l.b16 %v7885
  %v9463 = vunpack.c.h.b16 %v7885
  %v9464 = vunpack.c.l.b16 %v7886
  %v9465 = vunpack.c.h.b16 %v7886
  %v9466 = vunpack.c.l.b16 %v7887
  %v9467 = vunpack.c.h.b16 %v7887
  %v9468 = vunpack.c.l.b16 %v7888
  %v9469 = vunpack.c.h.b16 %v7888
  %v9470 = vunpack.c.l.b16 %v7889
  %v9471 = vunpack.c.h.b16 %v7889
  %v9472 = vunpack.c.l.b16 %v7890
  %v9473 = vunpack.c.h.b16 %v7890
  %v9474 = vunpack.c.l.b16 %v7891
  %v9475 = vunpack.c.h.b16 %v7891
  %v9476 = vunpack.c.l.b16 %v7892
  %v9477 = vunpack.c.h.b16 %v7892
  %v9478 = vunpack.c.l.b16 %v7893
  %v9479 = vunpack.c.h.b16 %v7893
  %v9480 = vunpack.c.l.b16 %v7894
  %v9481 = vunpack.c.h.b16 %v7894
  %v9482 = vunpack.c.l.b16 %v7895
  %v9483 = vunpack.c.h.b16 %v7895
  %v9484 = vunpack.c.l.b16 %v7896
  %v9485 = vunpack.c.h.b16 %v7896
  %v9486 = vunpack.c.l.b16 %v7897
  %v9487 = vunpack.c.h.b16 %v7897
  %v9488 = vunpack.c.l.b16 %v7898
  %v9489 = vunpack.c.h.b16 %v7898
  %v9490 = vunpack.c.l.b16 %v7899
  %v9491 = vunpack.c.h.b16 %v7899
  %v9492 = vunpack.c.l.b16 %v7900
  %v9493 = vunpack.c.h.b16 %v7900
  %v9494 = vunpack.c.l.b16 %v7901
  %v9495 = vunpack.c.h.b16 %v7901
  %v9496 = vunpack.c.l.b16 %v7902
  %v9497 = vunpack.c.h.b16 %v7902
  %v9498 = vunpack.c.l.b16 %v7903
  %v9499 = vunpack.c.h.b16 %v7903
  %v9500 = vunpack.c.l.b16 %v7904
  %v9501 = vunpack.c.h.b16 %v7904
  %v9502 = vunpack.c.l.b16 %v7905
  %v9503 = vunpack.c.h.b16 %v7905
  %v9504 = vunpack.c.l.b16 %v7906
  %v9505 = vunpack.c.h.b16 %v7906
  %v9506 = vunpack.c.l.b16 %v7907
  %v9507 = vunpack.c.h.b16 %v7907
  %v9508 = vunpack.c.l.b16 %v7908
  %v9509 = vunpack.c.h.b16 %v7908
  %v9510 = vunpack.c.l.b16 %v7909
  %v9511 = vunpack.c.h.b16 %v7909
  %v9512 = vunpack.c.l.b16 %v7910
  %v9513 = vunpack.c.h.b16 %v7910
  %v9514 = vunpack.c.l.b16 %v7911
  %v9515 = vunpack.c.h.b16 %v7911
  %v9516 = vunpack.c.l.b16 %v7912
  %v9517 = vunpack.c.h.b16 %v7912
  %v9518 = vunpack.c.l.b16 %v7913
  %v9519 = vunpack.c.h.b16 %v7913
  %v9520 = vunpack.c.l.b16 %v7914
  %v9521 = vunpack.c.h.b16 %v7914
  %v9522 = vunpack.c.l.b16 %v7915
  %v9523 = vunpack.c.h.b16 %v7915
  %v9524 = vunpack.c.l.b16 %v7916
  %v9525 = vunpack.c.h.b16 %v7916
  %v9526 = vunpack.c.l.b16 %v7917
  %v9527 = vunpack.c.h.b16 %v7917
  %v9528 = vunpack.c.l.b16 %v7918
  %v9529 = vunpack.c.h.b16 %v7918
  %v9530 = vunpack.c.l.b16 %v7919
  %v9531 = vunpack.c.h.b16 %v7919
  %v9532 = vunpack.c.l.b16 %v7920
  %v9533 = vunpack.c.h.b16 %v7920
  %v9534 = vunpack.c.l.b16 %v7921
  %v9535 = vunpack.c.h.b16 %v7921
  %v9536 = vunpack.c.l.b16 %v7922
  %v9537 = vunpack.c.h.b16 %v7922
  %v9538 = vunpack.c.l.b16 %v7923
  %v9539 = vunpack.c.h.b16 %v7923
  %v9540 = vunpack.c.l.b16 %v7924
  %v9541 = vunpack.c.h.b16 %v7924
  %v9542 = vunpack.c.l.b16 %v7925
  %v9543 = vunpack.c.h.b16 %v7925
  %v9544 = vunpack.c.l.b16 %v7926
  %v9545 = vunpack.c.h.b16 %v7926
  %v9546 = vunpack.c.l.b16 %v7927
  %v9547 = vunpack.c.h.b16 %v7927
  %v9548 = vunpack.c.l.b16 %v7928
  %v9549 = vunpack.c.h.b16 %v7928
  %v9550 = vunpack.c.l.b16 %v7929
  %v9551 = vunpack.c.h.b16 %v7929
  %v9552 = vunpack.c.l.b16 %v7930
  %v9553 = vunpack.c.h.b16 %v7930
  %v9554 = vunpack.c.l.b16 %v7931
  %v9555 = vunpack.c.h.b16 %v7931
  %v9556 = vunpack.c.l.b16 %v7932
  %v9557 = vunpack.c.h.b16 %v7932
  %v9558 = vunpack.c.l.b16 %v7933
  %v9559 = vunpack.c.h.b16 %v7933
  %v9560 = vunpack.c.l.b16 %v7934
  %v9561 = vunpack.c.h.b16 %v7934
  %v9562 = vunpack.c.l.b16 %v7935
  %v9563 = vunpack.c.h.b16 %v7935
  %v9564 = vunpack.c.l.b16 %v7936
  %v9565 = vunpack.c.h.b16 %v7936
  %v9566 = vunpack.c.l.b16 %v7937
  %v9567 = vunpack.c.h.b16 %v7937
  %v9568 = vunpack.c.l.b16 %v7938
  %v9569 = vunpack.c.h.b16 %v7938
  %v9570 = vunpack.c.l.b16 %v7939
  %v9571 = vunpack.c.h.b16 %v7939
  %v9572 = vunpack.c.l.b16 %v7940
  %v9573 = vunpack.c.h.b16 %v7940
  %v9574 = vunpack.c.l.b16 %v7941
  %v9575 = vunpack.c.h.b16 %v7941
  %v9576 = vunpack.c.l.b16 %v7942
  %v9577 = vunpack.c.h.b16 %v7942
  %v9578 = vunpack.c.l.b16 %v7943
  %v9579 = vunpack.c.h.b16 %v7943
  %v9580 = vunpack.c.l.b16 %v7944
  %v9581 = vunpack.c.h.b16 %v7944
  %v9582 = vunpack.c.l.b16 %v7945
  %v9583 = vunpack.c.h.b16 %v7945
  %v9584 = vunpack.c.l.b16 %v7946
  %v9585 = vunpack.c.h.b16 %v7946
  %v9586 = vunpack.c.l.b16 %v7947
  %v9587 = vunpack.c.h.b16 %v7947
  %v9588 = vunpack.c.l.b16 %v7948
  %v9589 = vunpack.c.h.b16 %v7948
  %v9590 = vunpack.c.l.b16 %v7949
  %v9591 = vunpack.c.h.b16 %v7949
  %v9592 = vunpack.c.l.b16 %v7950
  %v9593 = vunpack.c.h.b16 %v7950
  %v9594 = vunpack.c.l.b16 %v7951
  %v9595 = vunpack.c.h.b16 %v7951
  %v9596 = vunpack.c.l.b16 %v7952
  %v9597 = vunpack.c.h.b16 %v7952
  %v9598 = vunpack.c.l.b16 %v7953
  %v9599 = vunpack.c.h.b16 %v7953
  %v9600 = vunpack.c.l.b16 %v7954
  %v9601 = vunpack.c.h.b16 %v7954
  %v9602 = vunpack.c.l.b16 %v7955
  %v9603 = vunpack.c.h.b16 %v7955
  %v9604 = vunpack.c.l.b16 %v7956
  %v9605 = vunpack.c.h.b16 %v7956
  %v9606 = vunpack.c.l.b16 %v7957
  %v9607 = vunpack.c.h.b16 %v7957
  %v9608 = vunpack.c.l.b16 %v7958
  %v9609 = vunpack.c.h.b16 %v7958
  %v9610 = vunpack.c.l.b16 %v7959
  %v9611 = vunpack.c.h.b16 %v7959
  %v9612 = vunpack.c.l.b16 %v7960
  %v9613 = vunpack.c.h.b16 %v7960
  %v9614 = vunpack.c.l.b16 %v7961
  %v9615 = vunpack.c.h.b16 %v7961
  %v9616 = vunpack.c.l.b16 %v7962
  %v9617 = vunpack.c.h.b16 %v7962
  %v9618 = vunpack.c.l.b16 %v7963
  %v9619 = vunpack.c.h.b16 %v7963
  %v9620 = vunpack.c.l.b16 %v7964
  %v9621 = vunpack.c.h.b16 %v7964
  %v9622 = vunpack.c.l.b16 %v7965
  %v9623 = vunpack.c.h.b16 %v7965
  %v9624 = vunpack.c.l.b16 %v7966
  %v9625 = vunpack.c.h.b16 %v7966
  %v9626 = vunpack.c.l.b16 %v7967
  %v9627 = vunpack.c.h.b16 %v7967
  %v9628 = vunpack.c.l.b16 %v7968
  %v9629 = vunpack.c.h.b16 %v7968
  %v9630 = vunpack.c.l.b16 %v7969
  %v9631 = vunpack.c.h.b16 %v7969
  %v9632 = vunpack.c.l.b16 %v7970
  %v9633 = vunpack.c.h.b16 %v7970
  %v9634 = vunpack.c.l.b16 %v7971
  %v9635 = vunpack.c.h.b16 %v7971
  %v9636 = vunpack.c.l.b16 %v7972
  %v9637 = vunpack.c.h.b16 %v7972
  %v9638 = vunpack.c.l.b16 %v7973
  %v9639 = vunpack.c.h.b16 %v7973
  %v9640 = vunpack.c.l.b16 %v7974
  %v9641 = vunpack.c.h.b16 %v7974
  %v9642 = vunpack.c.l.b16 %v7975
  %v9643 = vunpack.c.h.b16 %v7975
  %v9644 = vunpack.c.l.b16 %v7976
  %v9645 = vunpack.c.h.b16 %v7976
  %v9646 = vunpack.c.l.b16 %v7977
  %v9647 = vunpack.c.h.b16 %v7977
  %v9648 = vunpack.c.l.b16 %v7978
  %v9649 = vunpack.c.h.b16 %v7978
  %v9650 = vunpack.c.l.b16 %v7979
  %v9651 = vunpack.c.h.b16 %v7979
  %v9652 = vunpack.c.l.b16 %v7980
  %v9653 = vunpack.c.h.b16 %v7980
  %v9654 = vunpack.c.l.b16 %v7981
  %v9655 = vunpack.c.h.b16 %v7981
  %v9656 = vunpack.c.l.b16 %v7982
  %v9657 = vunpack.c.h.b16 %v7982
  %v9658 = vunpack.c.l.b16 %v7983
  %v9659 = vunpack.c.h.b16 %v7983
  %v9660 = vunpack.c.l.b16 %v7984
  %v9661 = vunpack.c.h.b16 %v7984
  %v9662 = vunpack.c.l.b16 %v7985
  %v9663 = vunpack.c.h.b16 %v7985
  %v9664 = vunpack.c.l.b16 %v7986
  %v9665 = vunpack.c.h.b16 %v7986
  %v9666 = vunpack.c.l.b16 %v7987
  %v9667 = vunpack.c.h.b16 %v7987
  %v9668 = vunpack.c.l.b16 %v7988
  %v9669 = vunpack.c.h.b16 %v7988
  %v9670 = vunpack.c.l.b16 %v7989
  %v9671 = vunpack.c.h.b16 %v7989
  %v9672 = vunpack.c.l.b16 %v7990
  %v9673 = vunpack.c.h.b16 %v7990
  %v9674 = vunpack.c.l.b16 %v7991
  %v9675 = vunpack.c.h.b16 %v7991
  %v9676 = vunpack.c.l.b16 %v7992
  %v9677 = vunpack.c.h.b16 %v7992
  %v9678 = vunpack.c.l.b16 %v7993
  %v9679 = vunpack.c.h.b16 %v7993
  %v9680 = vunpack.c.l.b16 %v7994
  %v9681 = vunpack.c.h.b16 %v7994
  %v9682 = vunpack.c.l.b16 %v7995
  %v9683 = vunpack.c.h.b16 %v7995
  %v9684 = vunpack.c.l.b16 %v7996
  %v9685 = vunpack.c.h.b16 %v7996
  %v9686 = vunpack.c.l.b16 %v7997
  %v9687 = vunpack.c.h.b16 %v7997
  %v9688 = vunpack.c.l.b16 %v7998
  %v9689 = vunpack.c.h.b16 %v7998
  %v9690 = vunpack.c.l.b16 %v7999
  %v9691 = vunpack.c.h.b16 %v7999
  %v9692 = vunpack.c.l.b16 %v8000
  %v9693 = vunpack.c.h.b16 %v8000
  %v9694 = vunpack.c.l.b16 %v8001
  %v9695 = vunpack.c.h.b16 %v8001
  %v9696 = vunpack.c.l.b16 %v8002
  %v9697 = vunpack.c.h.b16 %v8002
  %v9698 = vunpack.c.l.b16 %v8003
  %v9699 = vunpack.c.h.b16 %v8003
  %v9700 = vunpack.c.l.b16 %v8004
  %v9701 = vunpack.c.h.b16 %v8004
  %v9702 = vunpack.c.l.b16 %v8005
  %v9703 = vunpack.c.h.b16 %v8005
  %v9704 = vunpack.c.l.b16 %v8006
  %v9705 = vunpack.c.h.b16 %v8006
  %v9706 = vunpack.c.l.b16 %v8007
  %v9707 = vunpack.c.h.b16 %v8007
  %v9708 = vunpack.c.l.b16 %v8008
  %v9709 = vunpack.c.h.b16 %v8008
  %v9710 = vunpack.c.l.b16 %v8009
  %v9711 = vunpack.c.h.b16 %v8009
  %v9712 = vunpack.c.l.b16 %v8010
  %v9713 = vunpack.c.h.b16 %v8010
  %v9714 = vunpack.c.l.b16 %v8011
  %v9715 = vunpack.c.h.b16 %v8011
  %v9716 = vunpack.c.l.b16 %v8012
  %v9717 = vunpack.c.h.b16 %v8012
  %v9718 = vunpack.c.l.b16 %v8013
  %v9719 = vunpack.c.h.b16 %v8013
  %v9720 = vunpack.c.l.b16 %v8014
  %v9721 = vunpack.c.h.b16 %v8014
  %v9722 = vunpack.c.l.b16 %v8015
  %v9723 = vunpack.c.h.b16 %v8015
  %v9724 = vunpack.c.l.b16 %v8016
  %v9725 = vunpack.c.h.b16 %v8016
  %v9726 = vunpack.c.l.b16 %v8017
  %v9727 = vunpack.c.h.b16 %v8017
  %v9728 = vunpack.c.l.b16 %v8018
  %v9729 = vunpack.c.h.b16 %v8018
  %v9730 = vunpack.c.l.b16 %v8019
  %v9731 = vunpack.c.h.b16 %v8019
  %v9732 = vunpack.c.l.b16 %v8020
  %v9733 = vunpack.c.h.b16 %v8020
  %v9734 = vunpack.c.l.b16 %v8021
  %v9735 = vunpack.c.h.b16 %v8021
  %v9736 = vunpack.c.l.b16 %v8022
  %v9737 = vunpack.c.h.b16 %v8022
  %v9738 = vunpack.c.l.b16 %v8023
  %v9739 = vunpack.c.h.b16 %v8023
  %v9740 = vunpack.c.l.b16 %v8024
  %v9741 = vunpack.c.h.b16 %v8024
  %v9742 = vunpack.c.l.b16 %v8025
  %v9743 = vunpack.c.h.b16 %v8025
  %v9744 = vunpack.c.l.b16 %v8026
  %v9745 = vunpack.c.h.b16 %v8026
  %v9746 = vunpack.c.l.b16 %v8027
  %v9747 = vunpack.c.h.b16 %v8027
  %v9748 = vunpack.c.l.b16 %v8028
  %v9749 = vunpack.c.h.b16 %v8028
  %v9750 = vunpack.c.l.b16 %v8029
  %v9751 = vunpack.c.h.b16 %v8029
  %v9752 = vunpack.c.l.b16 %v8030
  %v9753 = vunpack.c.h.b16 %v8030
  %v9754 = vunpack.c.l.b16 %v8031
  %v9755 = vunpack.c.h.b16 %v8031
  %v9756 = vunpack.c.l.b16 %v8032
  %v9757 = vunpack.c.h.b16 %v8032
  %v9758 = vunpack.c.l.b16 %v8033
  %v9759 = vunpack.c.h.b16 %v8033
  %v9760 = vunpack.c.l.b16 %v8034
  %v9761 = vunpack.c.h.b16 %v8034
  %v9762 = vunpack.c.l.b16 %v8035
  %v9763 = vunpack.c.h.b16 %v8035
  %v9764 = vunpack.c.l.b16 %v8036
  %v9765 = vunpack.c.h.b16 %v8036
  %v9766 = vunpack.c.l.b16 %v8037
  %v9767 = vunpack.c.h.b16 %v8037
  %v9768 = vunpack.c.l.b16 %v8038
  %v9769 = vunpack.c.h.b16 %v8038
  %v9770 = vunpack.c.l.b16 %v8039
  %v9771 = vunpack.c.h.b16 %v8039
  %v9772 = vunpack.c.l.b16 %v8040
  %v9773 = vunpack.c.h.b16 %v8040
  %v9774 = vunpack.c.l.b16 %v8041
  %v9775 = vunpack.c.h.b16 %v8041
  %v9776 = vunpack.c.l.b16 %v8042
  %v9777 = vunpack.c.h.b16 %v8042
  %v9778 = vunpack.c.l.b16 %v8043
  %v9779 = vunpack.c.h.b16 %v8043
  %v9780 = vunpack.c.l.b16 %v8044
  %v9781 = vunpack.c.h.b16 %v8044
  %v9782 = vunpack.c.l.b16 %v8045
  %v9783 = vunpack.c.h.b16 %v8045
  %v9784 = vunpack.c.l.b16 %v8046
  %v9785 = vunpack.c.h.b16 %v8046
  %v9786 = vunpack.c.l.b16 %v8047
  %v9787 = vunpack.c.h.b16 %v8047
  %v9788 = vunpack.c.l.b16 %v8048
  %v9789 = vunpack.c.h.b16 %v8048
  %v9790 = vunpack.c.l.b16 %v8049
  %v9791 = vunpack.c.h.b16 %v8049
  %v9792 = vunpack.c.l.b16 %v8050
  %v9793 = vunpack.c.h.b16 %v8050
  %v9794 = vunpack.c.l.b16 %v8051
  %v9795 = vunpack.c.h.b16 %v8051
  %v9796 = vunpack.c.l.b16 %v8052
  %v9797 = vunpack.c.h.b16 %v8052
  %v9798 = vunpack.c.l.b16 %v8053
  %v9799 = vunpack.c.h.b16 %v8053
  %v9800 = vunpack.c.l.b16 %v8054
  %v9801 = vunpack.c.h.b16 %v8054
  %v9802 = vunpack.c.l.b16 %v8055
  %v9803 = vunpack.c.h.b16 %v8055
  %v9804 = vunpack.c.l.b16 %v8056
  %v9805 = vunpack.c.h.b16 %v8056
  %v9806 = vunpack.c.l.b16 %v8057
  %v9807 = vunpack.c.h.b16 %v8057
  %v9808 = vunpack.c.l.b16 %v8058
  %v9809 = vunpack.c.h.b16 %v8058
  %v9810 = vunpack.c.l.b16 %v8059
  %v9811 = vunpack.c.h.b16 %v8059
  %v9812 = vunpack.c.l.b16 %v8060
  %v9813 = vunpack.c.h.b16 %v8060
  %v9814 = vunpack.c.l.b16 %v8061
  %v9815 = vunpack.c.h.b16 %v8061
  %v9816 = vunpack.c.l.b16 %v8062
  %v9817 = vunpack.c.h.b16 %v8062
  %v9818 = vunpack.c.l.b16 %v8063
  %v9819 = vunpack.c.h.b16 %v8063
  %v9820 = vunpack.c.l.b16 %v8064
  %v9821 = vunpack.c.h.b16 %v8064
  %v9822 = vunpack.c.l.b16 %v8065
  %v9823 = vunpack.c.h.b16 %v8065
  %v9824 = vunpack.c.l.b16 %v8066
  %v9825 = vunpack.c.h.b16 %v8066
  %v9826 = vunpack.c.l.b16 %v8067
  %v9827 = vunpack.c.h.b16 %v8067
  %v9828 = vunpack.c.l.b16 %v8068
  %v9829 = vunpack.c.h.b16 %v8068
  %v9830 = vunpack.c.l.b16 %v8069
  %v9831 = vunpack.c.h.b16 %v8069
  %v9832 = vunpack.c.l.b16 %v8070
  %v9833 = vunpack.c.h.b16 %v8070
  %v9834 = vunpack.c.l.b16 %v8071
  %v9835 = vunpack.c.h.b16 %v8071
  %v9836 = vunpack.c.l.b16 %v8072
  %v9837 = vunpack.c.h.b16 %v8072
  %v9838 = vunpack.c.l.b16 %v8073
  %v9839 = vunpack.c.h.b16 %v8073
  %v9840 = vunpack.c.l.b16 %v8074
  %v9841 = vunpack.c.h.b16 %v8074
  %v9842 = vunpack.c.l.b16 %v8075
  %v9843 = vunpack.c.h.b16 %v8075
  %v9844 = vunpack.c.l.b16 %v8076
  %v9845 = vunpack.c.h.b16 %v8076
  %v9846 = vunpack.c.l.b16 %v8077
  %v9847 = vunpack.c.h.b16 %v8077
  %v9848 = vunpack.c.l.b16 %v8078
  %v9849 = vunpack.c.h.b16 %v8078
  %v9850 = vunpack.c.l.b16 %v8079
  %v9851 = vunpack.c.h.b16 %v8079
  %v9852 = vunpack.c.l.b16 %v8080
  %v9853 = vunpack.c.h.b16 %v8080
  %v9854 = vunpack.c.l.b16 %v8081
  %v9855 = vunpack.c.h.b16 %v8081
  %v9856 = vunpack.c.l.b16 %v8082
  %v9857 = vunpack.c.h.b16 %v8082
  %v9858 = vunpack.c.l.b16 %v8083
  %v9859 = vunpack.c.h.b16 %v8083
  %v9860 = vunpack.c.l.b16 %v8084
  %v9861 = vunpack.c.h.b16 %v8084
  %v9862 = vunpack.c.l.b16 %v8085
  %v9863 = vunpack.c.h.b16 %v8085
  %v9864 = vunpack.c.l.b16 %v8086
  %v9865 = vunpack.c.h.b16 %v8086
  %v9866 = vunpack.c.l.b16 %v8087
  %v9867 = vunpack.c.h.b16 %v8087
  %v9868 = vunpack.c.l.b16 %v8088
  %v9869 = vunpack.c.h.b16 %v8088
  %v9870 = vunpack.c.l.b16 %v8089
  %v9871 = vunpack.c.h.b16 %v8089
  %v9872 = vunpack.c.l.b16 %v8090
  %v9873 = vunpack.c.h.b16 %v8090
  %v9874 = vunpack.c.l.b16 %v8091
  %v9875 = vunpack.c.h.b16 %v8091
  %v9876 = vunpack.c.l.b16 %v8092
  %v9877 = vunpack.c.h.b16 %v8092
  %v9878 = vunpack.c.l.b16 %v8093
  %v9879 = vunpack.c.h.b16 %v8093
  %v9880 = vunpack.c.l.b16 %v8094
  %v9881 = vunpack.c.h.b16 %v8094
  %v9882 = vunpack.c.l.b16 %v8095
  %v9883 = vunpack.c.h.b16 %v8095
  %v9884 = vunpack.c.l.b16 %v8096
  %v9885 = vunpack.c.h.b16 %v8096
  %v9886 = vunpack.c.l.b16 %v8097
  %v9887 = vunpack.c.h.b16 %v8097
  %v9888 = vunpack.c.l.b16 %v8098
  %v9889 = vunpack.c.h.b16 %v8098
  %v9890 = vunpack.c.l.b16 %v8099
  %v9891 = vunpack.c.h.b16 %v8099
  %v9892 = vunpack.c.l.b16 %v8100
  %v9893 = vunpack.c.h.b16 %v8100
  %v9894 = vunpack.c.l.b16 %v8101
  %v9895 = vunpack.c.h.b16 %v8101
  %v9896 = vunpack.c.l.b16 %v8102
  %v9897 = vunpack.c.h.b16 %v8102
  %v9898 = vunpack.c.l.b16 %v8103
  %v9899 = vunpack.c.h.b16 %v8103
  %v9900 = vunpack.c.l.b16 %v8104
  %v9901 = vunpack.c.h.b16 %v8104
  %v9902 = vunpack.c.l.b16 %v8105
  %v9903 = vunpack.c.h.b16 %v8105
  %v9904 = vunpack.c.l.b16 %v8106
  %v9905 = vunpack.c.h.b16 %v8106
  %v9906 = vunpack.c.l.b16 %v8107
  %v9907 = vunpack.c.h.b16 %v8107
  %v9908 = vunpack.c.l.b16 %v8108
  %v9909 = vunpack.c.h.b16 %v8108
  %v9910 = vunpack.c.l.b16 %v8109
  %v9911 = vunpack.c.h.b16 %v8109
  %v9912 = vunpack.c.l.b16 %v8110
  %v9913 = vunpack.c.h.b16 %v8110
  %v9914 = vunpack.c.l.b16 %v8111
  %v9915 = vunpack.c.h.b16 %v8111
  %v9916 = vunpack.c.l.b16 %v8112
  %v9917 = vunpack.c.h.b16 %v8112
  %v9918 = vunpack.c.l.b16 %v8113
  %v9919 = vunpack.c.h.b16 %v8113
  %v9920 = vunpack.c.l.b16 %v8114
  %v9921 = vunpack.c.h.b16 %v8114
  %v9922 = vunpack.c.l.b16 %v8115
  %v9923 = vunpack.c.h.b16 %v8115
  %v9924 = vunpack.c.l.b16 %v8116
  %v9925 = vunpack.c.h.b16 %v8116
  %v9926 = vunpack.c.l.b16 %v8117
  %v9927 = vunpack.c.h.b16 %v8117
  %v9928 = vunpack.c.l.b16 %v8118
  %v9929 = vunpack.c.h.b16 %v8118
  %v9930 = vunpack.c.l.b16 %v8119
  %v9931 = vunpack.c.h.b16 %v8119
  %v9932 = vunpack.c.l.b16 %v8120
  %v9933 = vunpack.c.h.b16 %v8120
  %v9934 = vunpack.c.l.b16 %v8121
  %v9935 = vunpack.c.h.b16 %v8121
  %v9936 = vunpack.c.l.b16 %v8122
  %v9937 = vunpack.c.h.b16 %v8122
  %v9938 = vunpack.c.l.b16 %v8123
  %v9939 = vunpack.c.h.b16 %v8123
  %v9940 = vunpack.c.l.b16 %v8124
  %v9941 = vunpack.c.h.b16 %v8124
  %v9942 = vunpack.c.l.b16 %v8125
  %v9943 = vunpack.c.h.b16 %v8125
  %v9944 = vunpack.c.l.b16 %v8126
  %v9945 = vunpack.c.h.b16 %v8126
  %v9946 = vunpack.c.l.b16 %v8127
  %v9947 = vunpack.c.h.b16 %v8127
  %v9948 = vunpack.c.l.b16 %v8128
  %v9949 = vunpack.c.h.b16 %v8128
  %v9950 = vunpack.c.l.b16 %v8129
  %v9951 = vunpack.c.h.b16 %v8129
  %v9952 = vunpack.c.l.b16 %v8130
  %v9953 = vunpack.c.h.b16 %v8130
  %v9954 = vunpack.c.l.b16 %v8131
  %v9955 = vunpack.c.h.b16 %v8131
  %v9956 = vunpack.c.l.b16 %v8132
  %v9957 = vunpack.c.h.b16 %v8132
  %v9958 = vunpack.c.l.b16 %v8133
  %v9959 = vunpack.c.h.b16 %v8133
  %v9960 = vunpack.c.l.b16 %v8134
  %v9961 = vunpack.c.h.b16 %v8134
  %v9962 = vunpack.c.l.b16 %v8135
  %v9963 = vunpack.c.h.b16 %v8135
  %v9964 = vunpack.c.l.b16 %v8136
  %v9965 = vunpack.c.h.b16 %v8136
  %v9966 = vunpack.c.l.b16 %v8137
  %v9967 = vunpack.c.h.b16 %v8137
  %v9968 = vunpack.c.l.b16 %v8138
  %v9969 = vunpack.c.h.b16 %v8138
  %v9970 = vunpack.c.l.b16 %v8139
  %v9971 = vunpack.c.h.b16 %v8139
  %v9972 = vunpack.c.l.b16 %v8140
  %v9973 = vunpack.c.h.b16 %v8140
  %v9974 = vunpack.c.l.b16 %v8141
  %v9975 = vunpack.c.h.b16 %v8141
  %v9976 = vunpack.c.l.b16 %v8142
  %v9977 = vunpack.c.h.b16 %v8142
  %v9978 = vunpack.c.l.b16 %v8143
  %v9979 = vunpack.c.h.b16 %v8143
  %v9980 = vunpack.c.l.b16 %v8144
  %v9981 = vunpack.c.h.b16 %v8144
  %v9982 = vunpack.c.l.b16 %v8145
  %v9983 = vunpack.c.h.b16 %v8145
  %v9984 = vunpack.c.l.b16 %v8146
  %v9985 = vunpack.c.h.b16 %v8146
  %v9986 = vunpack.c.l.b16 %v8147
  %v9987 = vunpack.c.h.b16 %v8147
  %v9988 = vunpack.c.l.b16 %v8148
  %v9989 = vunpack.c.h.b16 %v8148
  %v9990 = vunpack.c.l.b16 %v8149
  %v9991 = vunpack.c.h.b16 %v8149
  %v9992 = vunpack.c.l.b16 %v8150
  %v9993 = vunpack.c.h.b16 %v8150
  %v9994 = vunpack.c.l.b16 %v8151
  %v9995 = vunpack.c.h.b16 %v8151
  %v9996 = vunpack.c.l.b16 %v8152
  %v9997 = vunpack.c.h.b16 %v8152
  %v9998 = vunpack.c.l.b16 %v8153
  %v9999 = vunpack.c.h.b16 %v8153
  %v10000 = vunpack.c.l.b16 %v8154
  %v10001 = vunpack.c.h.b16 %v8154
  %v10002 = vunpack.c.l.b16 %v8155
  %v10003 = vunpack.c.h.b16 %v8155
  %v10004 = vunpack.c.l.b16 %v8156
  %v10005 = vunpack.c.h.b16 %v8156
  %v10006 = vunpack.c.l.b16 %v8157
  %v10007 = vunpack.c.h.b16 %v8157
  %v10008 = vunpack.c.l.b16 %v8158
  %v10009 = vunpack.c.h.b16 %v8158
  %v10010 = vunpack.c.l.b16 %v8159
  %v10011 = vunpack.c.h.b16 %v8159
  %v10012 = vunpack.c.l.b16 %v8160
  %v10013 = vunpack.c.h.b16 %v8160
  %v10014 = vunpack.c.l.b16 %v8161
  %v10015 = vunpack.c.h.b16 %v8161
  %v10016 = vunpack.c.l.b16 %v8162
  %v10017 = vunpack.c.h.b16 %v8162
  %v10018 = vunpack.c.l.b16 %v8163
  %v10019 = vunpack.c.h.b16 %v8163
  %v10020 = vunpack.c.l.b16 %v8164
  %v10021 = vunpack.c.h.b16 %v8164
  %v10022 = vunpack.c.l.b16 %v8165
  %v10023 = vunpack.c.h.b16 %v8165
  %v10024 = vunpack.c.l.b16 %v8166
  %v10025 = vunpack.c.h.b16 %v8166
  %v10026 = vunpack.c.l.b16 %v8167
  %v10027 = vunpack.c.h.b16 %v8167
  %v10028 = vunpack.c.l.b16 %v8168
  %v10029 = vunpack.c.h.b16 %v8168
  %v10030 = vunpack.c.l.b16 %v8169
  %v10031 = vunpack.c.h.b16 %v8169
  %v10032 = vunpack.c.l.b16 %v8170
  %v10033 = vunpack.c.h.b16 %v8170
  %v10034 = vunpack.c.l.b16 %v8171
  %v10035 = vunpack.c.h.b16 %v8171
  %v10036 = vunpack.c.l.b16 %v8172
  %v10037 = vunpack.c.h.b16 %v8172
  %v10038 = vunpack.c.l.b16 %v8173
  %v10039 = vunpack.c.h.b16 %v8173
  %v10040 = vunpack.c.l.b16 %v8174
  %v10041 = vunpack.c.h.b16 %v8174
  %v10042 = vunpack.c.l.b16 %v8175
  %v10043 = vunpack.c.h.b16 %v8175
  %v10044 = vunpack.c.l.b16 %v8176
  %v10045 = vunpack.c.h.b16 %v8176
  %v10046 = vunpack.c.l.b16 %v8177
  %v10047 = vunpack.c.h.b16 %v8177
  %v10048 = vunpack.c.l.b16 %v8178
  %v10049 = vunpack.c.h.b16 %v8178
  %v10050 = vunpack.c.l.b16 %v8179
  %v10051 = vunpack.c.h.b16 %v8179
  %v10052 = vunpack.c.l.b16 %v8180
  %v10053 = vunpack.c.h.b16 %v8180
  %v10054 = vunpack.c.l.b16 %v8181
  %v10055 = vunpack.c.h.b16 %v8181
  %v10056 = vunpack.c.l.b16 %v8182
  %v10057 = vunpack.c.h.b16 %v8182
  %v10058 = vunpack.c.l.b16 %v8183
  %v10059 = vunpack.c.h.b16 %v8183
  %v10060 = vunpack.c.l.b16 %v8184
  %v10061 = vunpack.c.h.b16 %v8184
  %v10062 = vunpack.c.l.b16 %v8185
  %v10063 = vunpack.c.h.b16 %v8185
  %v10064 = vunpack.c.l.b16 %v8186
  %v10065 = vunpack.c.h.b16 %v8186
  %v10066 = vunpack.c.l.b16 %v8187
  %v10067 = vunpack.c.h.b16 %v8187
  %v10068 = vunpack.c.l.b16 %v8188
  %v10069 = vunpack.c.h.b16 %v8188
  %v10070 = vunpack.c.l.b16 %v8189
  %v10071 = vunpack.c.h.b16 %v8189
  %v10072 = vunpack.c.l.b16 %v8190
  %v10073 = vunpack.c.h.b16 %v8190
  %v10074 = vunpack.c.l.b16 %v8191
  %v10075 = vunpack.c.h.b16 %v8191
  %v10076 = vunpack.c.l.b16 %v8192
  %v10077 = vunpack.c.h.b16 %v8192
  %v10078 = vunpack.c.l.b16 %v8193
  %v10079 = vunpack.c.h.b16 %v8193
  %v10080 = vunpack.c.l.b16 %v8194
  %v10081 = vunpack.c.h.b16 %v8194
  %v10082 = vunpack.c.l.b16 %v8195
  %v10083 = vunpack.c.h.b16 %v8195
  %v10084 = vunpack.c.l.b16 %v8196
  %v10085 = vunpack.c.h.b16 %v8196
  %v10086 = vunpack.c.l.b16 %v8197
  %v10087 = vunpack.c.h.b16 %v8197
  %v10088 = vunpack.c.l.b16 %v8198
  %v10089 = vunpack.c.h.b16 %v8198
  %v10090 = vunpack.c.l.b16 %v8199
  %v10091 = vunpack.c.h.b16 %v8199
  %v10092 = vunpack.c.l.b16 %v8200
  %v10093 = vunpack.c.h.b16 %v8200
  %v10094 = vunpack.c.l.b16 %v8201
  %v10095 = vunpack.c.h.b16 %v8201
  %v10096 = vunpack.c.l.b16 %v8202
  %v10097 = vunpack.c.h.b16 %v8202
  %v10098 = vunpack.c.l.b16 %v8203
  %v10099 = vunpack.c.h.b16 %v8203
  %v10100 = vunpack.c.l.b16 %v8204
  %v10101 = vunpack.c.h.b16 %v8204
  %v10102 = vunpack.c.l.b16 %v8205
  %v10103 = vunpack.c.h.b16 %v8205
  %v10104 = vunpack.c.l.b16 %v8206
  %v10105 = vunpack.c.h.b16 %v8206
  %v10106 = vunpack.c.l.b16 %v8207
  %v10107 = vunpack.c.h.b16 %v8207
  %v10108 = vunpack.c.l.b16 %v8208
  %v10109 = vunpack.c.h.b16 %v8208
  %v10110 = vunpack.c.l.b16 %v8209
  %v10111 = vunpack.c.h.b16 %v8209
  %v10112 = vunpack.c.l.b16 %v8210
  %v10113 = vunpack.c.h.b16 %v8210
  %v10114 = vunpack.c.l.b16 %v8211
  %v10115 = vunpack.c.h.b16 %v8211
  %v10116 = vunpack.c.l.b16 %v8212
  %v10117 = vunpack.c.h.b16 %v8212
  %v10118 = vunpack.c.l.b16 %v8213
  %v10119 = vunpack.c.h.b16 %v8213
  %v10120 = vunpack.c.l.b16 %v8214
  %v10121 = vunpack.c.h.b16 %v8214
  %v10122 = vunpack.c.l.b16 %v8215
  %v10123 = vunpack.c.h.b16 %v8215
  %v10124 = vunpack.c.l.b16 %v8216
  %v10125 = vunpack.c.h.b16 %v8216
  %v10126 = vunpack.c.l.b16 %v8217
  %v10127 = vunpack.c.h.b16 %v8217
  %v10128 = vunpack.c.l.b16 %v8218
  %v10129 = vunpack.c.h.b16 %v8218
  %v10130 = vunpack.c.l.b16 %v8219
  %v10131 = vunpack.c.h.b16 %v8219
  %v10132 = vunpack.c.l.b16 %v8220
  %v10133 = vunpack.c.h.b16 %v8220
  %v10134 = vunpack.c.l.b16 %v8221
  %v10135 = vunpack.c.h.b16 %v8221
  %v10136 = vunpack.c.l.b16 %v8222
  %v10137 = vunpack.c.h.b16 %v8222
  %v10138 = vunpack.c.l.b16 %v8223
  %v10139 = vunpack.c.h.b16 %v8223
  %v10140 = vunpack.c.l.b16 %v8224
  %v10141 = vunpack.c.h.b16 %v8224
  %v10142 = vunpack.c.l.b16 %v8225
  %v10143 = vunpack.c.h.b16 %v8225
  %v10144 = vunpack.c.l.b16 %v8226
  %v10145 = vunpack.c.h.b16 %v8226
  %v10146 = vunpack.c.l.b16 %v8227
  %v10147 = vunpack.c.h.b16 %v8227
  %v10148 = vunpack.c.l.b16 %v8228
  %v10149 = vunpack.c.h.b16 %v8228
  %v10150 = vunpack.c.l.b16 %v8229
  %v10151 = vunpack.c.h.b16 %v8229
  %v10152 = vunpack.c.l.b16 %v8230
  %v10153 = vunpack.c.h.b16 %v8230
  %v10154 = vunpack.c.l.b16 %v8231
  %v10155 = vunpack.c.h.b16 %v8231
  %v10156 = vunpack.c.l.b16 %v8232
  %v10157 = vunpack.c.h.b16 %v8232
  %v10158 = vunpack.c.l.b16 %v8233
  %v10159 = vunpack.c.h.b16 %v8233
  %v10160 = vunpack.c.l.b16 %v8234
  %v10161 = vunpack.c.h.b16 %v8234
  %v10162 = vunpack.c.l.b16 %v8235
  %v10163 = vunpack.c.h.b16 %v8235
  %v10164 = vunpack.c.l.b16 %v8236
  %v10165 = vunpack.c.h.b16 %v8236
  %v10166 = vunpack.c.l.b16 %v8237
  %v10167 = vunpack.c.h.b16 %v8237
  %v10168 = vunpack.c.l.b16 %v8238
  %v10169 = vunpack.c.h.b16 %v8238
  %v10170 = vunpack.c.l.b16 %v8239
  %v10171 = vunpack.c.h.b16 %v8239
  %v10172 = vunpack.c.l.b16 %v8240
  %v10173 = vunpack.c.h.b16 %v8240
  %v10174 = vunpack.c.l.b16 %v8241
  %v10175 = vunpack.c.h.b16 %v8241
  %v10176 = vunpack.c.l.b16 %v8242
  %v10177 = vunpack.c.h.b16 %v8242
  %v10178 = vunpack.c.l.b16 %v8243
  %v10179 = vunpack.c.h.b16 %v8243
  %v10180 = vunpack.c.l.b16 %v8244
  %v10181 = vunpack.c.h.b16 %v8244
  %v10182 = vunpack.c.l.b16 %v8245
  %v10183 = vunpack.c.h.b16 %v8245
  %v10184 = vunpack.c.l.b16 %v8246
  %v10185 = vunpack.c.h.b16 %v8246
  %v10186 = vunpack.c.l.b16 %v8247
  %v10187 = vunpack.c.h.b16 %v8247
  %v10188 = vunpack.c.l.b16 %v8248
  %v10189 = vunpack.c.h.b16 %v8248
  %v10190 = vunpack.c.l.b16 %v8249
  %v10191 = vunpack.c.h.b16 %v8249
  %v10192 = vunpack.c.l.b16 %v8250
  %v10193 = vunpack.c.h.b16 %v8250
  %v10194 = vunpack.c.l.b16 %v8251
  %v10195 = vunpack.c.h.b16 %v8251
  %v10196 = vunpack.c.l.b16 %v8252
  %v10197 = vunpack.c.h.b16 %v8252
  %v10198 = vunpack.c.l.b16 %v8253
  %v10199 = vunpack.c.h.b16 %v8253
  %v10200 = vunpack.c.l.b16 %v8254
  %v10201 = vunpack.c.h.b16 %v8254
  %v10202 = vunpack.c.l.b16 %v8255
  %v10203 = vunpack.c.h.b16 %v8255
  %v10204 = vunpack.c.l.b16 %v8256
  %v10205 = vunpack.c.h.b16 %v8256
  %v10206 = vunpack.c.l.b16 %v8257
  %v10207 = vunpack.c.h.b16 %v8257
  %v10208 = vunpack.c.l.b16 %v8258
  %v10209 = vunpack.c.h.b16 %v8258
  %v10210 = vunpack.c.l.b16 %v8259
  %v10211 = vunpack.c.h.b16 %v8259
  %v10212 = vunpack.c.l.b16 %v8260
  %v10213 = vunpack.c.h.b16 %v8260
  %v10214 = vunpack.c.l.b16 %v8261
  %v10215 = vunpack.c.h.b16 %v8261
  %v10216 = vunpack.c.l.b16 %v8262
  %v10217 = vunpack.c.h.b16 %v8262
  %v10218 = vunpack.c.l.b16 %v8263
  %v10219 = vunpack.c.h.b16 %v8263
  %v10220 = vunpack.c.l.b16 %v8264
  %v10221 = vunpack.c.h.b16 %v8264
  %v10222 = vunpack.c.l.b16 %v8265
  %v10223 = vunpack.c.h.b16 %v8265
  %v10224 = vunpack.c.l.b16 %v8266
  %v10225 = vunpack.c.h.b16 %v8266
  %v10226 = vunpack.c.l.b16 %v8267
  %v10227 = vunpack.c.h.b16 %v8267
  %v10228 = vunpack.c.l.b16 %v8268
  %v10229 = vunpack.c.h.b16 %v8268
  %v10230 = vunpack.c.l.b16 %v8269
  %v10231 = vunpack.c.h.b16 %v8269
  %v10232 = vunpack.c.l.b16 %v8270
  %v10233 = vunpack.c.h.b16 %v8270
  %v10234 = vunpack.c.l.b16 %v8271
  %v10235 = vunpack.c.h.b16 %v8271
  %v10236 = vunpack.c.l.b16 %v8272
  %v10237 = vunpack.c.h.b16 %v8272
  %v10238 = vunpack.c.l.b16 %v8273
  %v10239 = vunpack.c.h.b16 %v8273
  %v10240 = vunpack.c.l.b16 %v8274
  %v10241 = vunpack.c.h.b16 %v8274
  %v10242 = vunpack.c.l.b16 %v8275
  %v10243 = vunpack.c.h.b16 %v8275
  %v10244 = vunpack.c.l.b16 %v8276
  %v10245 = vunpack.c.h.b16 %v8276
  %v10246 = vunpack.c.l.b16 %v8277
  %v10247 = vunpack.c.h.b16 %v8277
  %v10248 = vunpack.c.l.b16 %v8278
  %v10249 = vunpack.c.h.b16 %v8278
  %v10250 = vunpack.c.l.b16 %v8279
  %v10251 = vunpack.c.h.b16 %v8279
  %v10252 = vunpack.c.l.b16 %v8280
  %v10253 = vunpack.c.h.b16 %v8280
  %v10254 = vunpack.c.l.b16 %v8281
  %v10255 = vunpack.c.h.b16 %v8281
  %v10256 = vunpack.c.l.b16 %v8282
  %v10257 = vunpack.c.h.b16 %v8282
  %v10258 = vunpack.c.l.b16 %v8283
  %v10259 = vunpack.c.h.b16 %v8283
  %v10260 = vunpack.c.l.b16 %v8284
  %v10261 = vunpack.c.h.b16 %v8284
  %v10262 = vunpack.c.l.b16 %v8285
  %v10263 = vunpack.c.h.b16 %v8285
  %v10264 = vunpack.c.l.b16 %v8286
  %v10265 = vunpack.c.h.b16 %v8286
  %v10266 = vunpack.c.l.b16 %v8287
  %v10267 = vunpack.c.h.b16 %v8287
  %v10268 = vunpack.c.l.b16 %v8288
  %v10269 = vunpack.c.h.b16 %v8288
  %v10270 = vunpack.c.l.b16 %v8289
  %v10271 = vunpack.c.h.b16 %v8289
  %v10272 = vunpack.c.l.b16 %v8290
  %v10273 = vunpack.c.h.b16 %v8290
  %v10274 = vunpack.c.l.b16 %v8291
  %v10275 = vunpack.c.h.b16 %v8291
  %v10276 = vunpack.c.l.b16 %v8292
  %v10277 = vunpack.c.h.b16 %v8292
  %v10278 = vunpack.c.l.b16 %v8293
  %v10279 = vunpack.c.h.b16 %v8293
  %v10280 = vunpack.c.l.b16 %v8294
  %v10281 = vunpack.c.h.b16 %v8294
  %v10282 = vunpack.c.l.b16 %v8295
  %v10283 = vunpack.c.h.b16 %v8295
  %v10284 = vunpack.c.l.b16 %v8296
  %v10285 = vunpack.c.h.b16 %v8296
  %v10286 = vunpack.c.l.b16 %v8297
  %v10287 = vunpack.c.h.b16 %v8297
  %v10288 = vunpack.c.l.b16 %v8298
  %v10289 = vunpack.c.h.b16 %v8298
  %v10290 = vunpack.c.l.b16 %v8299
  %v10291 = vunpack.c.h.b16 %v8299
  %v10292 = vunpack.c.l.b16 %v8300
  %v10293 = vunpack.c.h.b16 %v8300
  %v10294 = vunpack.c.l.b16 %v8301
  %v10295 = vunpack.c.h.b16 %v8301
  %v10296 = vunpack.c.l.b16 %v8302
  %v10297 = vunpack.c.h.b16 %v8302
  %v10298 = vunpack.c.l.b16 %v8303
  %v10299 = vunpack.c.h.b16 %v8303
  %v10300 = vunpack.c.l.b16 %v8304
  %v10301 = vunpack.c.h.b16 %v8304
  %v10302 = vunpack.c.l.b16 %v8305
  %v10303 = vunpack.c.h.b16 %v8305
  %v10304 = vunpack.c.l.b16 %v8306
  %v10305 = vunpack.c.h.b16 %v8306
  %v10306 = vunpack.c.l.b16 %v8307
  %v10307 = vunpack.c.h.b16 %v8307
  %v10308 = vunpack.c.l.b16 %v8308
  %v10309 = vunpack.c.h.b16 %v8308
  %v10310 = vunpack.c.l.b16 %v8309
  %v10311 = vunpack.c.h.b16 %v8309
  %v10312 = vunpack.c.l.b16 %v8310
  %v10313 = vunpack.c.h.b16 %v8310
  %v10314 = vunpack.c.l.b16 %v8311
  %v10315 = vunpack.c.h.b16 %v8311
  %v10316 = vunpack.c.l.b16 %v8312
  %v10317 = vunpack.c.h.b16 %v8312
  %v10318 = vunpack.c.l.b16 %v8313
  %v10319 = vunpack.c.h.b16 %v8313
  %v10320 = vunpack.c.l.b16 %v8314
  %v10321 = vunpack.c.h.b16 %v8314
  %v10322 = vunpack.c.l.b16 %v8315
  %v10323 = vunpack.c.h.b16 %v8315
  %v10324 = vunpack.c.l.b16 %v8316
  %v10325 = vunpack.c.h.b16 %v8316
  %v10326 = vunpack.c.l.b16 %v8317
  %v10327 = vunpack.c.h.b16 %v8317
  %v10328 = vunpack.c.l.b16 %v8318
  %v10329 = vunpack.c.h.b16 %v8318
  %v10330 = vunpack.c.l.b16 %v8319
  %v10331 = vunpack.c.h.b16 %v8319
  %v10332 = vunpack.c.l.b16 %v8320
  %v10333 = vunpack.c.h.b16 %v8320
  %v10334 = vunpack.c.l.b16 %v8321
  %v10335 = vunpack.c.h.b16 %v8321
  %v10336 = vunpack.c.l.b16 %v8322
  %v10337 = vunpack.c.h.b16 %v8322
  %v10338 = vunpack.c.l.b16 %v8323
  %v10339 = vunpack.c.h.b16 %v8323
  %v10340 = vunpack.c.l.b16 %v8324
  %v10341 = vunpack.c.h.b16 %v8324
  %v10342 = vunpack.c.l.b16 %v8325
  %v10343 = vunpack.c.h.b16 %v8325
  %v10344 = vunpack.c.l.b16 %v8326
  %v10345 = vunpack.c.h.b16 %v8326
  %v10346 = vunpack.c.l.b16 %v8327
  %v10347 = vunpack.c.h.b16 %v8327
  %v10348 = vunpack.c.l.b16 %v8328
  %v10349 = vunpack.c.h.b16 %v8328
  %v10350 = vunpack.c.l.b16 %v8329
  %v10351 = vunpack.c.h.b16 %v8329
  %v10352 = vunpack.c.l.b16 %v8330
  %v10353 = vunpack.c.h.b16 %v8330
  %v10354 = vunpack.c.l.b16 %v8331
  %v10355 = vunpack.c.h.b16 %v8331
  %v10356 = vunpack.c.l.b16 %v8332
  %v10357 = vunpack.c.h.b16 %v8332
  %v10358 = vunpack.c.l.b16 %v8333
  %v10359 = vunpack.c.h.b16 %v8333
  %v10360 = vunpack.c.l.b16 %v8334
  %v10361 = vunpack.c.h.b16 %v8334
  %v10362 = vunpack.c.l.b16 %v8335
  %v10363 = vunpack.c.h.b16 %v8335
  %v10364 = vunpack.c.l.b16 %v8336
  %v10365 = vunpack.c.h.b16 %v8336
  %v10366 = vunpack.c.l.b16 %v8337
  %v10367 = vunpack.c.h.b16 %v8337
  %v10368 = vunpack.c.l.b16 %v8338
  %v10369 = vunpack.c.h.b16 %v8338
  %v10370 = vunpack.c.l.b16 %v8339
  %v10371 = vunpack.c.h.b16 %v8339
  %v10372 = vunpack.c.l.b16 %v8340
  %v10373 = vunpack.c.h.b16 %v8340
  %v10374 = vunpack.c.l.b16 %v8341
  %v10375 = vunpack.c.h.b16 %v8341
  %v10376 = vunpack.c.l.b16 %v8342
  %v10377 = vunpack.c.h.b16 %v8342
  %v10378 = vunpack.c.l.b16 %v8343
  %v10379 = vunpack.c.h.b16 %v8343
  %v10380 = vunpack.c.l.b16 %v8344
  %v10381 = vunpack.c.h.b16 %v8344
  %v10382 = vunpack.c.l.b16 %v8345
  %v10383 = vunpack.c.h.b16 %v8345
  %v10384 = vunpack.c.l.b16 %v8346
  %v10385 = vunpack.c.h.b16 %v8346
  %v10386 = vunpack.c.l.b16 %v8347
  %v10387 = vunpack.c.h.b16 %v8347
  %v10388 = vunpack.c.l.b16 %v8348
  %v10389 = vunpack.c.h.b16 %v8348
  %v10390 = vunpack.c.l.b16 %v8349
  %v10391 = vunpack.c.h.b16 %v8349
  %v10392 = vunpack.c.l.b16 %v8350
  %v10393 = vunpack.c.h.b16 %v8350
  %v10394 = vunpack.c.l.b16 %v8351
  %v10395 = vunpack.c.h.b16 %v8351
  %v10396 = vunpack.c.l.b16 %v8352
  %v10397 = vunpack.c.h.b16 %v8352
  %v10398 = vunpack.c.l.b16 %v8353
  %v10399 = vunpack.c.h.b16 %v8353
  %v10400 = vunpack.c.l.b16 %v8354
  %v10401 = vunpack.c.h.b16 %v8354
  %v10402 = vunpack.c.l.b16 %v8355
  %v10403 = vunpack.c.h.b16 %v8355
  %v10404 = vunpack.c.l.b16 %v8356
  %v10405 = vunpack.c.h.b16 %v8356
  %v10406 = vunpack.c.l.b16 %v8357
  %v10407 = vunpack.c.h.b16 %v8357
  %v10408 = vunpack.c.l.b16 %v8358
  %v10409 = vunpack.c.h.b16 %v8358
  %v10410 = vunpack.c.l.b16 %v8359
  %v10411 = vunpack.c.h.b16 %v8359
  %v10412 = vunpack.c.l.b16 %v8360
  %v10413 = vunpack.c.h.b16 %v8360
  %v10414 = vunpack.c.l.b16 %v8361
  %v10415 = vunpack.c.h.b16 %v8361
  %v10416 = vunpack.c.l.b16 %v8362
  %v10417 = vunpack.c.h.b16 %v8362
  %v10418 = vunpack.c.l.b16 %v8363
  %v10419 = vunpack.c.h.b16 %v8363
  %v10420 = vunpack.c.l.b16 %v8364
  %v10421 = vunpack.c.h.b16 %v8364
  %v10422 = vunpack.c.l.b16 %v8365
  %v10423 = vunpack.c.h.b16 %v8365
  %v10424 = vunpack.c.l.b16 %v8366
  %v10425 = vunpack.c.h.b16 %v8366
  %v10426 = vunpack.c.l.b16 %v8367
  %v10427 = vunpack.c.h.b16 %v8367
  %v10428 = vunpack.c.l.b16 %v8368
  %v10429 = vunpack.c.h.b16 %v8368
  %v10430 = vunpack.c.l.b16 %v8369
  %v10431 = vunpack.c.h.b16 %v8369
  %v10432 = vunpack.c.l.b16 %v8370
  %v10433 = vunpack.c.h.b16 %v8370
  %v10434 = vunpack.c.l.b16 %v8371
  %v10435 = vunpack.c.h.b16 %v8371
  %v10436 = vunpack.c.l.b16 %v8372
  %v10437 = vunpack.c.h.b16 %v8372
  %v10438 = vunpack.c.l.b16 %v8373
  %v10439 = vunpack.c.h.b16 %v8373
  %v10440 = vunpack.c.l.b16 %v8374
  %v10441 = vunpack.c.h.b16 %v8374
  %v10442 = vunpack.c.l.b16 %v8375
  %v10443 = vunpack.c.h.b16 %v8375
  %v10444 = vunpack.c.l.b16 %v8376
  %v10445 = vunpack.c.h.b16 %v8376
  %v10446 = vunpack.c.l.b16 %v8377
  %v10447 = vunpack.c.h.b16 %v8377
  %v10448 = vunpack.c.l.b16 %v8378
  %v10449 = vunpack.c.h.b16 %v8378
  %v10450 = vunpack.c.l.b16 %v8379
  %v10451 = vunpack.c.h.b16 %v8379
  %v10452 = vunpack.c.l.b16 %v8380
  %v10453 = vunpack.c.h.b16 %v8380
  %v10454 = vunpack.c.l.b16 %v8381
  %v10455 = vunpack.c.h.b16 %v8381
  %v10456 = vunpack.c.l.b16 %v8382
  %v10457 = vunpack.c.h.b16 %v8382
  %v10458 = vunpack.c.l.b16 %v8383
  %v10459 = vunpack.c.h.b16 %v8383
  %v10460 = vunpack.c.l.b16 %v8384
  %v10461 = vunpack.c.h.b16 %v8384
  %v10462 = vunpack.c.l.b16 %v8385
  %v10463 = vunpack.c.h.b16 %v8385
  %v10464 = vunpack.c.l.b16 %v8386
  %v10465 = vunpack.c.h.b16 %v8386
  %v10466 = vunpack.c.l.b16 %v8387
  %v10467 = vunpack.c.h.b16 %v8387
  %v10468 = vunpack.c.l.b16 %v8388
  %v10469 = vunpack.c.h.b16 %v8388
  %v10470 = vunpack.c.l.b16 %v8389
  %v10471 = vunpack.c.h.b16 %v8389
  %v10472 = vunpack.c.l.b16 %v8390
  %v10473 = vunpack.c.h.b16 %v8390
  %v10474 = vunpack.c.l.b16 %v8391
  %v10475 = vunpack.c.h.b16 %v8391
  %v10476 = vunpack.c.l.b16 %v8392
  %v10477 = vunpack.c.h.b16 %v8392
  %v10478 = vunpack.c.l.b16 %v8393
  %v10479 = vunpack.c.h.b16 %v8393
  %v10480 = vunpack.c.l.b16 %v8394
  %v10481 = vunpack.c.h.b16 %v8394
  %v10482 = vunpack.c.l.b16 %v8395
  %v10483 = vunpack.c.h.b16 %v8395
  %v10484 = vunpack.c.l.b16 %v8396
  %v10485 = vunpack.c.h.b16 %v8396
  %v10486 = vunpack.c.l.b16 %v8397
  %v10487 = vunpack.c.h.b16 %v8397
  %v10488 = vunpack.c.l.b16 %v8398
  %v10489 = vunpack.c.h.b16 %v8398
  %v10490 = vunpack.c.l.b16 %v8399
  %v10491 = vunpack.c.h.b16 %v8399
  %v10492 = vunpack.c.l.b16 %v8400
  %v10493 = vunpack.c.h.b16 %v8400
  %v10494 = vunpack.c.l.b16 %v8401
  %v10495 = vunpack.c.h.b16 %v8401
  %v10496 = vunpack.c.l.b16 %v8402
  %v10497 = vunpack.c.h.b16 %v8402
  %v10498 = vunpack.c.l.b16 %v8403
  %v10499 = vunpack.c.h.b16 %v8403
  %v10500 = vunpack.c.l.b16 %v8404
  %v10501 = vunpack.c.h.b16 %v8404
  %v10502 = vunpack.c.l.b16 %v8405
  %v10503 = vunpack.c.h.b16 %v8405
  %v10504 = vunpack.c.l.b16 %v8406
  %v10505 = vunpack.c.h.b16 %v8406
  %v10506 = vunpack.c.l.b16 %v8407
  %v10507 = vunpack.c.h.b16 %v8407
  %v10508 = vunpack.c.l.b16 %v8408
  %v10509 = vunpack.c.h.b16 %v8408
  %v10510 = vunpack.c.l.b16 %v8409
  %v10511 = vunpack.c.h.b16 %v8409
  %v10512 = vunpack.c.l.b16 %v8410
  %v10513 = vunpack.c.h.b16 %v8410
  %v10514 = vunpack.c.l.b16 %v8411
  %v10515 = vunpack.c.h.b16 %v8411
  %v10516 = vunpack.c.l.b16 %v8412
  %v10517 = vunpack.c.h.b16 %v8412
  %v10518 = vunpack.c.l.b16 %v8413
  %v10519 = vunpack.c.h.b16 %v8413
  %v10520 = vunpack.c.l.b16 %v8414
  %v10521 = vunpack.c.h.b16 %v8414
  %v10522 = vunpack.c.l.b16 %v8415
  %v10523 = vunpack.c.h.b16 %v8415
  %v10524 = vunpack.c.l.b16 %v8416
  %v10525 = vunpack.c.h.b16 %v8416
  %v10526 = vunpack.c.l.b16 %v8417
  %v10527 = vunpack.c.h.b16 %v8417
  %v10528 = vunpack.c.l.b16 %v8418
  %v10529 = vunpack.c.h.b16 %v8418
  %v10530 = vunpack.c.l.b16 %v8419
  %v10531 = vunpack.c.h.b16 %v8419
  %v10532 = vunpack.c.l.b16 %v8420
  %v10533 = vunpack.c.h.b16 %v8420
  %v10534 = vunpack.c.l.b16 %v8421
  %v10535 = vunpack.c.h.b16 %v8421
  %v10536 = vunpack.c.l.b16 %v8422
  %v10537 = vunpack.c.h.b16 %v8422
  %v10538 = vunpack.c.l.b16 %v8423
  %v10539 = vunpack.c.h.b16 %v8423
  %v10540 = vunpack.c.l.b16 %v8424
  %v10541 = vunpack.c.h.b16 %v8424
  %v10542 = vunpack.c.l.b16 %v8425
  %v10543 = vunpack.c.h.b16 %v8425
  %v10544 = vunpack.c.l.b16 %v8426
  %v10545 = vunpack.c.h.b16 %v8426
  %v10546 = vunpack.c.l.b16 %v8427
  %v10547 = vunpack.c.h.b16 %v8427
  %v10548 = vunpack.c.l.b16 %v8428
  %v10549 = vunpack.c.h.b16 %v8428
  %v10550 = vunpack.c.l.b16 %v8429
  %v10551 = vunpack.c.h.b16 %v8429
  %v10552 = vunpack.c.l.b16 %v8430
  %v10553 = vunpack.c.h.b16 %v8430
  %v10554 = vunpack.c.l.b16 %v8431
  %v10555 = vunpack.c.h.b16 %v8431
  %v10556 = vunpack.c.l.b16 %v8432
  %v10557 = vunpack.c.h.b16 %v8432
  %v10558 = vunpack.c.l.b16 %v8433
  %v10559 = vunpack.c.h.b16 %v8433
  %v10560 = vunpack.c.l.b16 %v8434
  %v10561 = vunpack.c.h.b16 %v8434
  %v10562 = vunpack.c.l.b16 %v8435
  %v10563 = vunpack.c.h.b16 %v8435
  %v10564 = vunpack.c.l.b16 %v8436
  %v10565 = vunpack.c.h.b16 %v8436
  %v10566 = vunpack.c.l.b16 %v8437
  %v10567 = vunpack.c.h.b16 %v8437
  %v10568 = vunpack.c.l.b16 %v8438
  %v10569 = vunpack.c.h.b16 %v8438
  %v10570 = vunpack.c.l.b16 %v8439
  %v10571 = vunpack.c.h.b16 %v8439
  %v10572 = vunpack.c.l.b16 %v8440
  %v10573 = vunpack.c.h.b16 %v8440
  %v10574 = vunpack.c.l.b16 %v8441
  %v10575 = vunpack.c.h.b16 %v8441
  %v10576 = vunpack.c.l.b16 %v8442
  %v10577 = vunpack.c.h.b16 %v8442
  %v10578 = vunpack.c.l.b16 %v8443
  %v10579 = vunpack.c.h.b16 %v8443
  %v10580 = vunpack.c.l.b16 %v8444
  %v10581 = vunpack.c.h.b16 %v8444
  %v10582 = vunpack.c.l.b16 %v8445
  %v10583 = vunpack.c.h.b16 %v8445
  %v10584 = vunpack.c.l.b16 %v8446
  %v10585 = vunpack.c.h.b16 %v8446
  %v10586 = vunpack.c.l.b16 %v8447
  %v10587 = vunpack.c.h.b16 %v8447
  %v10588 = vunpack.c.l.b16 %v8448
  %v10589 = vunpack.c.h.b16 %v8448
  %v10590 = vunpack.c.l.b16 %v8449
  %v10591 = vunpack.c.h.b16 %v8449
  %v10592 = vunpack.c.l.b16 %v8450
  %v10593 = vunpack.c.h.b16 %v8450
  %v10594 = vunpack.c.l.b16 %v8451
  %v10595 = vunpack.c.h.b16 %v8451
  %v10596 = vunpack.c.l.b16 %v8452
  %v10597 = vunpack.c.h.b16 %v8452
  %v10598 = vunpack.c.l.b16 %v8453
  %v10599 = vunpack.c.h.b16 %v8453
  %v10600 = vunpack.c.l.b16 %v8454
  %v10601 = vunpack.c.h.b16 %v8454
  %v10602 = vunpack.c.l.b16 %v8455
  %v10603 = vunpack.c.h.b16 %v8455
  %v10604 = vunpack.c.l.b16 %v8456
  %v10605 = vunpack.c.h.b16 %v8456
  %v10606 = vunpack.c.l.b16 %v8457
  %v10607 = vunpack.c.h.b16 %v8457
  %v10608 = vunpack.c.l.b16 %v8458
  %v10609 = vunpack.c.h.b16 %v8458
  %v10610 = vunpack.c.l.b16 %v8459
  %v10611 = vunpack.c.h.b16 %v8459
  %v10612 = vunpack.c.l.b16 %v8460
  %v10613 = vunpack.c.h.b16 %v8460
  %v10614 = vunpack.c.l.b16 %v8461
  %v10615 = vunpack.c.h.b16 %v8461
  %v10616 = vunpack.c.l.b16 %v8462
  %v10617 = vunpack.c.h.b16 %v8462
  %v10618 = vunpack.c.l.b16 %v8463
  %v10619 = vunpack.c.h.b16 %v8463
  %v10620 = vunpack.c.l.b16 %v8464
  %v10621 = vunpack.c.h.b16 %v8464
  %v10622 = vunpack.c.l.b16 %v8465
  %v10623 = vunpack.c.h.b16 %v8465
  %v10624 = vunpack.c.l.b16 %v8466
  %v10625 = vunpack.c.h.b16 %v8466
  %v10626 = vunpack.c.l.b16 %v8467
  %v10627 = vunpack.c.h.b16 %v8467
  %v10628 = vunpack.c.l.b16 %v8468
  %v10629 = vunpack.c.h.b16 %v8468
  %v10630 = vunpack.c.l.b16 %v8469
  %v10631 = vunpack.c.h.b16 %v8469
  %v10632 = vunpack.c.l.b16 %v8470
  %v10633 = vunpack.c.h.b16 %v8470
  %v10634 = vunpack.c.l.b16 %v8471
  %v10635 = vunpack.c.h.b16 %v8471
  %v10636 = vunpack.c.l.b16 %v8472
  %v10637 = vunpack.c.h.b16 %v8472
  %v10638 = vunpack.c.l.b16 %v8473
  %v10639 = vunpack.c.h.b16 %v8473
  %v10640 = vunpack.c.l.b16 %v8474
  %v10641 = vunpack.c.h.b16 %v8474
  %v10642 = vunpack.c.l.b16 %v8475
  %v10643 = vunpack.c.h.b16 %v8475
  %v10644 = vunpack.c.l.b16 %v8476
  %v10645 = vunpack.c.h.b16 %v8476
  %v10646 = vunpack.c.l.b16 %v8477
  %v10647 = vunpack.c.h.b16 %v8477
  %v10648 = vunpack.c.l.b16 %v8478
  %v10649 = vunpack.c.h.b16 %v8478
  %v10650 = vunpack.c.l.b16 %v8479
  %v10651 = vunpack.c.h.b16 %v8479
  %v10652 = vunpack.c.l.b16 %v8480
  %v10653 = vunpack.c.h.b16 %v8480
  %v10654 = vunpack.c.l.b16 %v8481
  %v10655 = vunpack.c.h.b16 %v8481
  %v10656 = vunpack.c.l.b16 %v8482
  %v10657 = vunpack.c.h.b16 %v8482
  %v10658 = vunpack.c.l.b16 %v8483
  %v10659 = vunpack.c.h.b16 %v8483
  %v10660 = vunpack.c.l.b16 %v8484
  %v10661 = vunpack.c.h.b16 %v8484
  %v10662 = vunpack.c.l.b16 %v8485
  %v10663 = vunpack.c.h.b16 %v8485
  %v10664 = vunpack.c.l.b16 %v8486
  %v10665 = vunpack.c.h.b16 %v8486
  %v10666 = vunpack.c.l.b16 %v8487
  %v10667 = vunpack.c.h.b16 %v8487
  %v10668 = vunpack.c.l.b16 %v8488
  %v10669 = vunpack.c.h.b16 %v8488
  %v10670 = vunpack.c.l.b16 %v8489
  %v10671 = vunpack.c.h.b16 %v8489
  %v10672 = vunpack.c.l.b16 %v8490
  %v10673 = vunpack.c.h.b16 %v8490
  %v10674 = vunpack.c.l.b16 %v8491
  %v10675 = vunpack.c.h.b16 %v8491
  %v10676 = vunpack.c.l.b16 %v8492
  %v10677 = vunpack.c.h.b16 %v8492
  %v10678 = vunpack.c.l.b16 %v8493
  %v10679 = vunpack.c.h.b16 %v8493
  %v10680 = vunpack.c.l.b16 %v8494
  %v10681 = vunpack.c.h.b16 %v8494
  %v10682 = vunpack.c.l.b16 %v8495
  %v10683 = vunpack.c.h.b16 %v8495
  %v10684 = vunpack.c.l.b16 %v8496
  %v10685 = vunpack.c.h.b16 %v8496
  %v10686 = vunpack.c.l.b16 %v8497
  %v10687 = vunpack.c.h.b16 %v8497
  %v10688 = vunpack.c.l.b16 %v8498
  %v10689 = vunpack.c.h.b16 %v8498
  %v10690 = vunpack.c.l.b16 %v8499
  %v10691 = vunpack.c.h.b16 %v8499
  %v10692 = vunpack.c.l.b16 %v8500
  %v10693 = vunpack.c.h.b16 %v8500
  %v10694 = vunpack.c.l.b16 %v8501
  %v10695 = vunpack.c.h.b16 %v8501
  %v10696 = vunpack.c.l.b16 %v8502
  %v10697 = vunpack.c.h.b16 %v8502
  %v10698 = vunpack.c.l.b16 %v8503
  %v10699 = vunpack.c.h.b16 %v8503
  %v10700 = vunpack.c.l.b16 %v8504
  %v10701 = vunpack.c.h.b16 %v8504
  %v10702 = vunpack.c.l.b16 %v8505
  %v10703 = vunpack.c.h.b16 %v8505
  %v10704 = vunpack.c.l.b16 %v8506
  %v10705 = vunpack.c.h.b16 %v8506
  %v10706 = vunpack.c.l.b16 %v8507
  %v10707 = vunpack.c.h.b16 %v8507
  %v10708 = vunpack.c.l.b16 %v8508
  %v10709 = vunpack.c.h.b16 %v8508
  %v10710 = vunpack.c.l.b16 %v8509
  %v10711 = vunpack.c.h.b16 %v8509
  %v10712 = vunpack.c.l.b16 %v8510
  %v10713 = vunpack.c.h.b16 %v8510
  %v10714 = vunpack.c.l.b16 %v8511
  %v10715 = vunpack.c.h.b16 %v8511
  %v10716 = vunpack.c.l.b16 %v8512
  %v10717 = vunpack.c.h.b16 %v8512
  %v10718 = vunpack.c.l.b16 %v8513
  %v10719 = vunpack.c.h.b16 %v8513
  %v10720 = vunpack.c.l.b16 %v8514
  %v10721 = vunpack.c.h.b16 %v8514
  %v10722 = vunpack.c.l.b16 %v8515
  %v10723 = vunpack.c.h.b16 %v8515
  %v10724 = vunpack.c.l.b16 %v8516
  %v10725 = vunpack.c.h.b16 %v8516
  %v10726 = vunpack.c.l.b16 %v8517
  %v10727 = vunpack.c.h.b16 %v8517
  %v10728 = vunpack.c.l.b16 %v8518
  %v10729 = vunpack.c.h.b16 %v8518
  %v10730 = vunpack.c.l.b16 %v8519
  %v10731 = vunpack.c.h.b16 %v8519
  %v10732 = vunpack.c.l.b16 %v8520
  %v10733 = vunpack.c.h.b16 %v8520
  %v10734 = vunpack.c.l.b16 %v8521
  %v10735 = vunpack.c.h.b16 %v8521
  %v10736 = vunpack.c.l.b16 %v8522
  %v10737 = vunpack.c.h.b16 %v8522
  %v10738 = vunpack.c.l.b16 %v8523
  %v10739 = vunpack.c.h.b16 %v8523
  %v10740 = vunpack.c.l.b16 %v8524
  %v10741 = vunpack.c.h.b16 %v8524
  %v10742 = vunpack.c.l.b16 %v8525
  %v10743 = vunpack.c.h.b16 %v8525
  %v10744 = vunpack.c.l.b16 %v8526
  %v10745 = vunpack.c.h.b16 %v8526
  %v10746 = vunpack.c.l.b16 %v8527
  %v10747 = vunpack.c.h.b16 %v8527
  %v10748 = vunpack.c.l.b16 %v8528
  %v10749 = vunpack.c.h.b16 %v8528
  %v10750 = vunpack.c.l.b16 %v8529
  %v10751 = vunpack.c.h.b16 %v8529
  %v10752 = vunpack.c.l.b16 %v8530
  %v10753 = vunpack.c.h.b16 %v8530
  %v10754 = vunpack.c.l.b16 %v8531
  %v10755 = vunpack.c.h.b16 %v8531
  %v10756 = vunpack.c.l.b16 %v8532
  %v10757 = vunpack.c.h.b16 %v8532
  %v10758 = vunpack.c.l.b16 %v8533
  %v10759 = vunpack.c.h.b16 %v8533
  %v10760 = vunpack.c.l.b16 %v8534
  %v10761 = vunpack.c.h.b16 %v8534
  %v10762 = vunpack.c.l.b16 %v8535
  %v10763 = vunpack.c.h.b16 %v8535
  %v10764 = vunpack.c.l.b16 %v8536
  %v10765 = vunpack.c.h.b16 %v8536
  %v10766 = vunpack.c.l.b16 %v8537
  %v10767 = vunpack.c.h.b16 %v8537
  %v10768 = vunpack.c.l.b16 %v8538
  %v10769 = vunpack.c.h.b16 %v8538
  %v10770 = vunpack.c.l.b16 %v8539
  %v10771 = vunpack.c.h.b16 %v8539
  %v10772 = vunpack.c.l.b16 %v8540
  %v10773 = vunpack.c.h.b16 %v8540
  %v10774 = vunpack.c.l.b16 %v8541
  %v10775 = vunpack.c.h.b16 %v8541
  %v10776 = vunpack.c.l.b16 %v8542
  %v10777 = vunpack.c.h.b16 %v8542
  %v10778 = vunpack.c.l.b16 %v8543
  %v10779 = vunpack.c.h.b16 %v8543
  %v10780 = vunpack.c.l.b16 %v8544
  %v10781 = vunpack.c.h.b16 %v8544
  %v10782 = vunpack.c.l.b16 %v8545
  %v10783 = vunpack.c.h.b16 %v8545
  %v10784 = vunpack.c.l.b16 %v8546
  %v10785 = vunpack.c.h.b16 %v8546
  %v10786 = vunpack.c.l.b16 %v8547
  %v10787 = vunpack.c.h.b16 %v8547
  %v10788 = vunpack.c.l.b16 %v8548
  %v10789 = vunpack.c.h.b16 %v8548
  %v10790 = vunpack.c.l.b16 %v8549
  %v10791 = vunpack.c.h.b16 %v8549
  %v10792 = vunpack.c.l.b16 %v8550
  %v10793 = vunpack.c.h.b16 %v8550
  %v10794 = vunpack.c.l.b16 %v8551
  %v10795 = vunpack.c.h.b16 %v8551
  %v10796 = vunpack.c.l.b16 %v8552
  %v10797 = vunpack.c.h.b16 %v8552
  %v10798 = vunpack.c.l.b16 %v8553
  %v10799 = vunpack.c.h.b16 %v8553
  %v10800 = vunpack.c.l.b16 %v8554
  %v10801 = vunpack.c.h.b16 %v8554
  %v10802 = vunpack.c.l.b16 %v8555
  %v10803 = vunpack.c.h.b16 %v8555
  %v10804 = vunpack.c.l.b16 %v8556
  %v10805 = vunpack.c.h.b16 %v8556
  %v10806 = vunpack.c.l.b16 %v8557
  %v10807 = vunpack.c.h.b16 %v8557
  %v10808 = vunpack.c.l.b16 %v8558
  %v10809 = vunpack.c.h.b16 %v8558
  %v10810 = vunpack.c.l.b16 %v8559
  %v10811 = vunpack.c.h.b16 %v8559
  %v10812 = vunpack.c.l.b16 %v8560
  %v10813 = vunpack.c.h.b16 %v8560
  %v10814 = vunpack.c.l.b16 %v8561
  %v10815 = vunpack.c.h.b16 %v8561
  %v10816 = vunpack.c.l.b16 %v8562
  %v10817 = vunpack.c.h.b16 %v8562
  %v10818 = vunpack.c.l.b16 %v8563
  %v10819 = vunpack.c.h.b16 %v8563
  %v10820 = vunpack.c.l.b16 %v8564
  %v10821 = vunpack.c.h.b16 %v8564
  %v10822 = vunpack.c.l.b16 %v8565
  %v10823 = vunpack.c.h.b16 %v8565
  %v10824 = vunpack.c.l.b16 %v8566
  %v10825 = vunpack.c.h.b16 %v8566
  %v10826 = vunpack.c.l.b16 %v8567
  %v10827 = vunpack.c.h.b16 %v8567
  %v10828 = vunpack.c.l.b16 %v8568
  %v10829 = vunpack.c.h.b16 %v8568
  %v10830 = vunpack.c.l.b16 %v8569
  %v10831 = vunpack.c.h.b16 %v8569
  %v10832 = vunpack.c.l.b16 %v8570
  %v10833 = vunpack.c.h.b16 %v8570
  %v10834 = vunpack.c.l.b16 %v8571
  %v10835 = vunpack.c.h.b16 %v8571
  %v10836 = vunpack.c.l.b16 %v8572
  %v10837 = vunpack.c.h.b16 %v8572
  %v10838 = vunpack.c.l.b16 %v8573
  %v10839 = vunpack.c.h.b16 %v8573
  %v10840 = vunpack.c.l.b16 %v8574
  %v10841 = vunpack.c.h.b16 %v8574
  %v10842 = vunpack.c.l.b16 %v8575
  %v10843 = vunpack.c.h.b16 %v8575
  %v10844 = vunpack.c.l.b16 %v8576
  %v10845 = vunpack.c.h.b16 %v8576
  %v10846 = vunpack.c.l.b16 %v8577
  %v10847 = vunpack.c.h.b16 %v8577
  %v10848 = vunpack.c.l.b16 %v8578
  %v10849 = vunpack.c.h.b16 %v8578
  %v10850 = vunpack.c.l.b16 %v8579
  %v10851 = vunpack.c.h.b16 %v8579
  %v10852 = vunpack.c.l.b16 %v8580
  %v10853 = vunpack.c.h.b16 %v8580
  %v10854 = vunpack.c.l.b16 %v8581
  %v10855 = vunpack.c.h.b16 %v8581
  %v10856 = vunpack.c.l.b16 %v8582
  %v10857 = vunpack.c.h.b16 %v8582
  %v10858 = vunpack.c.l.b16 %v8583
  %v10859 = vunpack.c.h.b16 %v8583
  %v10860 = vunpack.c.l.b16 %v8584
  %v10861 = vunpack.c.h.b16 %v8584
  %v10862 = vunpack.c.l.b16 %v8585
  %v10863 = vunpack.c.h.b16 %v8585
  %v10864 = vunpack.c.l.b16 %v8586
  %v10865 = vunpack.c.h.b16 %v8586
  %v10866 = vunpack.c.l.b16 %v8587
  %v10867 = vunpack.c.h.b16 %v8587
  %v10868 = vunpack.c.l.b16 %v8588
  %v10869 = vunpack.c.h.b16 %v8588
  %v10870 = vunpack.c.l.b16 %v8589
  %v10871 = vunpack.c.h.b16 %v8589
  %v10872 = vunpack.c.l.b16 %v8590
  %v10873 = vunpack.c.h.b16 %v8590
  %v10874 = vunpack.c.l.b16 %v8591
  %v10875 = vunpack.c.h.b16 %v8591
  %v10876 = vunpack.c.l.b16 %v8592
  %v10877 = vunpack.c.h.b16 %v8592
  %v10878 = vunpack.c.l.b16 %v8593
  %v10879 = vunpack.c.h.b16 %v8593
  %v10880 = vunpack.c.l.b16 %v8594
  %v10881 = vunpack.c.h.b16 %v8594
  %v10882 = vunpack.c.l.b16 %v8595
  %v10883 = vunpack.c.h.b16 %v8595
  %v10884 = vunpack.c.l.b16 %v8596
  %v10885 = vunpack.c.h.b16 %v8596
  %v10886 = vunpack.c.l.b16 %v8597
  %v10887 = vunpack.c.h.b16 %v8597
  %v10888 = vunpack.c.l.b16 %v8598
  %v10889 = vunpack.c.h.b16 %v8598
  %v10890 = vunpack.c.l.b16 %v8599
  %v10891 = vunpack.c.h.b16 %v8599
  %v10892 = vunpack.c.l.b16 %v8600
  %v10893 = vunpack.c.h.b16 %v8600
  %v10894 = vunpack.c.l.b16 %v8601
  %v10895 = vunpack.c.h.b16 %v8601
  %v10896 = vunpack.c.l.b16 %v8602
  %v10897 = vunpack.c.h.b16 %v8602
  %v10898 = vunpack.c.l.b16 %v8603
  %v10899 = vunpack.c.h.b16 %v8603
  %v10900 = vunpack.c.l.b16 %v8604
  %v10901 = vunpack.c.h.b16 %v8604
  %v10902 = vunpack.c.l.b16 %v8605
  %v10903 = vunpack.c.h.b16 %v8605
  %v10904 = vunpack.c.l.b16 %v8606
  %v10905 = vunpack.c.h.b16 %v8606
  %v10906 = vunpack.c.l.b16 %v8607
  %v10907 = vunpack.c.h.b16 %v8607
  %v10908 = vunpack.c.l.b16 %v8608
  %v10909 = vunpack.c.h.b16 %v8608
  %v10910 = vunpack.c.l.b16 %v8609
  %v10911 = vunpack.c.h.b16 %v8609
  %v10912 = vunpack.c.l.b16 %v8610
  %v10913 = vunpack.c.h.b16 %v8610
  %v10914 = vunpack.c.l.b16 %v8611
  %v10915 = vunpack.c.h.b16 %v8611
  %v10916 = vunpack.c.l.b16 %v8612
  %v10917 = vunpack.c.h.b16 %v8612
  %v10918 = vunpack.c.l.b16 %v8613
  %v10919 = vunpack.c.h.b16 %v8613
  %v10920 = vunpack.c.l.b16 %v8614
  %v10921 = vunpack.c.h.b16 %v8614
  %v10922 = vunpack.c.l.b16 %v8615
  %v10923 = vunpack.c.h.b16 %v8615
  %v10924 = vunpack.c.l.b16 %v8616
  %v10925 = vunpack.c.h.b16 %v8616
  %v10926 = vunpack.c.l.b16 %v8617
  %v10927 = vunpack.c.h.b16 %v8617
  %v10928 = vunpack.c.l.b16 %v8618
  %v10929 = vunpack.c.h.b16 %v8618
  %v10930 = vunpack.c.l.b16 %v8619
  %v10931 = vunpack.c.h.b16 %v8619
  %v10932 = vunpack.c.l.b16 %v8620
  %v10933 = vunpack.c.h.b16 %v8620
  %v10934 = vunpack.c.l.b16 %v8621
  %v10935 = vunpack.c.h.b16 %v8621
  %v10936 = vunpack.c.l.b16 %v8622
  %v10937 = vunpack.c.h.b16 %v8622
  %v10938 = vunpack.c.l.b16 %v8623
  %v10939 = vunpack.c.h.b16 %v8623
  %v10940 = vunpack.c.l.b16 %v8624
  %v10941 = vunpack.c.h.b16 %v8624
  %v10942 = vunpack.c.l.b16 %v8625
  %v10943 = vunpack.c.h.b16 %v8625
  %v10944 = vunpack.c.l.b16 %v8626
  %v10945 = vunpack.c.h.b16 %v8626
  %v10946 = vunpack.c.l.b16 %v8627
  %v10947 = vunpack.c.h.b16 %v8627
  %v10948 = vunpack.c.l.b16 %v8628
  %v10949 = vunpack.c.h.b16 %v8628
  %v10950 = vunpack.c.l.b16 %v8629
  %v10951 = vunpack.c.h.b16 %v8629
  %v10952 = vunpack.c.l.b16 %v8630
  %v10953 = vunpack.c.h.b16 %v8630
  %v10954 = vunpack.c.l.b16 %v8631
  %v10955 = vunpack.c.h.b16 %v8631
  %v10956 = vunpack.c.l.b16 %v8632
  %v10957 = vunpack.c.h.b16 %v8632
  %v10958 = vunpack.c.l.b16 %v8633
  %v10959 = vunpack.c.h.b16 %v8633
  %v10960 = vunpack.c.l.b16 %v8634
  %v10961 = vunpack.c.h.b16 %v8634
  %v10962 = vunpack.c.l.b16 %v8635
  %v10963 = vunpack.c.h.b16 %v8635
  %v10964 = vunpack.c.l.b16 %v8636
  %v10965 = vunpack.c.h.b16 %v8636
  %v10966 = vunpack.c.l.b16 %v8637
  %v10967 = vunpack.c.h.b16 %v8637
  %v10968 = vunpack.c.l.b16 %v8638
  %v10969 = vunpack.c.h.b16 %v8638
  %v10970 = vunpack.c.l.b16 %v8639
  %v10971 = vunpack.c.h.b16 %v8639
  %v10972 = vunpack.c.l.b16 %v8640
  %v10973 = vunpack.c.h.b16 %v8640
  %v10974 = vunpack.c.l.b16 %v8641
  %v10975 = vunpack.c.h.b16 %v8641
  %v10976 = vunpack.c.l.b16 %v8642
  %v10977 = vunpack.c.h.b16 %v8642
  %v10978 = vunpack.c.l.b16 %v8643
  %v10979 = vunpack.c.h.b16 %v8643
  %v10980 = vpack.c.b16 %v9450, %v9444
  %v10981 = vpack.c.b16 %v9451, %v9445
  %v10982 = vpack.c.b16 %v9452, %v9446
  %v10983 = vpack.c.b16 %v9453, %v9447
  %v10984 = vpack.c.b16 %v9454, %v9448
  %v10985 = vpack.c.b16 %v9455, %v9449
  %v10986 = vpack.c.b16 %v9462, %v9456
  %v10987 = vpack.c.b16 %v9463, %v9457
  %v10988 = vpack.c.b16 %v9464, %v9458
  %v10989 = vpack.c.b16 %v9465, %v9459
  %v10990 = vpack.c.b16 %v9466, %v9460
  %v10991 = vpack.c.b16 %v9467, %v9461
  %v10992 = vpack.c.b16 %v9474, %v9468
  %v10993 = vpack.c.b16 %v9475, %v9469
  %v10994 = vpack.c.b16 %v9476, %v9470
  %v10995 = vpack.c.b16 %v9477, %v9471
  %v10996 = vpack.c.b16 %v9478, %v9472
  %v10997 = vpack.c.b16 %v9479, %v9473
  %v10998 = vpack.c.b16 %v9486, %v9480
  %v10999 = vpack.c.b16 %v9487, %v9481
  %v11000 = vpack.c.b16 %v9488, %v9482
  %v11001 = vpack.c.b16 %v9489, %v9483
  %v11002 = vpack.c.b16 %v9490, %v9484
  %v11003 = vpack.c.b16 %v9491, %v9485
  %v11004 = vpack.c.b16 %v9498, %v9492
  %v11005 = vpack.c.b16 %v9499, %v9493
  %v11006 = vpack.c.b16 %v9500, %v9494
  %v11007 = vpack.c.b16 %v9501, %v9495
  %v11008 = vpack.c.b16 %v9502, %v9496
  %v11009 = vpack.c.b16 %v9503, %v9497
  %v11010 = vpack.c.b16 %v9510, %v9504
  %v11011 = vpack.c.b16 %v9511, %v9505
  %v11012 = vpack.c.b16 %v9512, %v9506
  %v11013 = vpack.c.b16 %v9513, %v9507
  %v11014 = vpack.c.b16 %v9514, %v9508
  %v11015 = vpack.c.b16 %v9515, %v9509
  %v11016 = vpack.c.b16 %v9522, %v9516
  %v11017 = vpack.c.b16 %v9523, %v9517
  %v11018 = vpack.c.b16 %v9524, %v9518
  %v11019 = vpack.c.b16 %v9525, %v9519
  %v11020 = vpack.c.b16 %v9526, %v9520
  %v11021 = vpack.c.b16 %v9527, %v9521
  %v11022 = vpack.c.b16 %v9534, %v9528
  %v11023 = vpack.c.b16 %v9535, %v9529
  %v11024 = vpack.c.b16 %v9536, %v9530
  %v11025 = vpack.c.b16 %v9537, %v9531
  %v11026 = vpack.c.b16 %v9538, %v9532
  %v11027 = vpack.c.b16 %v9539, %v9533
  %v11028 = vpack.c.b16 %v9546, %v9540
  %v11029 = vpack.c.b16 %v9547, %v9541
  %v11030 = vpack.c.b16 %v9548, %v9542
  %v11031 = vpack.c.b16 %v9549, %v9543
  %v11032 = vpack.c.b16 %v9550, %v9544
  %v11033 = vpack.c.b16 %v9551, %v9545
  %v11034 = vpack.c.b16 %v9558, %v9552
  %v11035 = vpack.c.b16 %v9559, %v9553
  %v11036 = vpack.c.b16 %v9560, %v9554
  %v11037 = vpack.c.b16 %v9561, %v9555
  %v11038 = vpack.c.b16 %v9562, %v9556
  %v11039 = vpack.c.b16 %v9563, %v9557
  %v11040 = vpack.c.b16 %v9570, %v9564
  %v11041 = vpack.c.b16 %v9571, %v9565
  %v11042 = vpack.c.b16 %v9572, %v9566
  %v11043 = vpack.c.b16 %v9573, %v9567
  %v11044 = vpack.c.b16 %v9574, %v9568
  %v11045 = vpack.c.b16 %v9575, %v9569
  %v11046 = vpack.c.b16 %v9582, %v9576
  %v11047 = vpack.c.b16 %v9583, %v9577
  %v11048 = vpack.c.b16 %v9584, %v9578
  %v11049 = vpack.c.b16 %v9585, %v9579
  %v11050 = vpack.c.b16 %v9586, %v9580
  %v11051 = vpack.c.b16 %v9587, %v9581
  %v11052 = vpack.c.b16 %v9594, %v9588
  %v11053 = vpack.c.b16 %v9595, %v9589
  %v11054 = vpack.c.b16 %v9596, %v9590
  %v11055 = vpack.c.b16 %v9597, %v9591
  %v11056 = vpack.c.b16 %v9598, %v9592
  %v11057 = vpack.c.b16 %v9599, %v9593
  %v11058 = vpack.c.b16 %v9606, %v9600
  %v11059 = vpack.c.b16 %v9607, %v9601
  %v11060 = vpack.c.b16 %v9608, %v9602
  %v11061 = vpack.c.b16 %v9609, %v9603
  %v11062 = vpack.c.b16 %v9610, %v9604
  %v11063 = vpack.c.b16 %v9611, %v9605
  %v11064 = vpack.c.b16 %v9618, %v9612
  %v11065 = vpack.c.b16 %v9619, %v9613
  %v11066 = vpack.c.b16 %v9620, %v9614
  %v11067 = vpack.c.b16 %v9621, %v9615
  %v11068 = vpack.c.b16 %v9622, %v9616
  %v11069 = vpack.c.b16 %v9623, %v9617
  %v11070 = vpack.c.b16 %v9630, %v9624
  %v11071 = vpack.c.b16 %v9631, %v9625
  %v11072 = vpack.c.b16 %v9632, %v9626
  %v11073 = vpack.c.b16 %v9633, %v9627
  %v11074 = vpack.c.b16 %v9634, %v9628
  %v11075 = vpack.c.b16 %v9635, %v9629
  %v11076 = vpack.c.b16 %v9642, %v9636
  %v11077 = vpack.c.b16 %v9643, %v9637
  %v11078 = vpack.c.b16 %v9644, %v9638
  %v11079 = vpack.c.b16 %v9645, %v9639
  %v11080 = vpack.c.b16 %v9646, %v9640
  %v11081 = vpack.c.b16 %v9647, %v9641
  %v11082 = vpack.c.b16 %v9654, %v9648
  %v11083 = vpack.c.b16 %v9655, %v9649
  %v11084 = vpack.c.b16 %v9656, %v9650
  %v11085 = vpack.c.b16 %v9657, %v9651
  %v11086 = vpack.c.b16 %v9658, %v9652
  %v11087 = vpack.c.b16 %v9659, %v9653
  %v11088 = vpack.c.b16 %v9666, %v9660
  %v11089 = vpack.c.b16 %v9667, %v9661
  %v11090 = vpack.c.b16 %v9668, %v9662
  %v11091 = vpack.c.b16 %v9669, %v9663
  %v11092 = vpack.c.b16 %v9670, %v9664
  %v11093 = vpack.c.b16 %v9671, %v9665
  %v11094 = vpack.c.b16 %v9678, %v9672
  %v11095 = vpack.c.b16 %v9679, %v9673
  %v11096 = vpack.c.b16 %v9680, %v9674
  %v11097 = vpack.c.b16 %v9681, %v9675
  %v11098 = vpack.c.b16 %v9682, %v9676
  %v11099 = vpack.c.b16 %v9683, %v9677
  %v11100 = vpack.c.b16 %v9690, %v9684
  %v11101 = vpack.c.b16 %v9691, %v9685
  %v11102 = vpack.c.b16 %v9692, %v9686
  %v11103 = vpack.c.b16 %v9693, %v9687
  %v11104 = vpack.c.b16 %v9694, %v9688
  %v11105 = vpack.c.b16 %v9695, %v9689
  %v11106 = vpack.c.b16 %v9702, %v9696
  %v11107 = vpack.c.b16 %v9703, %v9697
  %v11108 = vpack.c.b16 %v9704, %v9698
  %v11109 = vpack.c.b16 %v9705, %v9699
  %v11110 = vpack.c.b16 %v9706, %v9700
  %v11111 = vpack.c.b16 %v9707, %v9701
  %v11112 = vpack.c.b16 %v9714, %v9708
  %v11113 = vpack.c.b16 %v9715, %v9709
  %v11114 = vpack.c.b16 %v9716, %v9710
  %v11115 = vpack.c.b16 %v9717, %v9711
  %v11116 = vpack.c.b16 %v9718, %v9712
  %v11117 = vpack.c.b16 %v9719, %v9713
  %v11118 = vpack.c.b16 %v9726, %v9720
  %v11119 = vpack.c.b16 %v9727, %v9721
  %v11120 = vpack.c.b16 %v9728, %v9722
  %v11121 = vpack.c.b16 %v9729, %v9723
  %v11122 = vpack.c.b16 %v9730, %v9724
  %v11123 = vpack.c.b16 %v9731, %v9725
  %v11124 = vpack.c.b16 %v9738, %v9732
  %v11125 = vpack.c.b16 %v9739, %v9733
  %v11126 = vpack.c.b16 %v9740, %v9734
  %v11127 = vpack.c.b16 %v9741, %v9735
  %v11128 = vpack.c.b16 %v9742, %v9736
  %v11129 = vpack.c.b16 %v9743, %v9737
  %v11130 = vpack.c.b16 %v9750, %v9744
  %v11131 = vpack.c.b16 %v9751, %v9745
  %v11132 = vpack.c.b16 %v9752, %v9746
  %v11133 = vpack.c.b16 %v9753, %v9747
  %v11134 = vpack.c.b16 %v9754, %v9748
  %v11135 = vpack.c.b16 %v9755, %v9749
  %v11136 = vpack.c.b16 %v9762, %v9756
  %v11137 = vpack.c.b16 %v9763, %v9757
  %v11138 = vpack.c.b16 %v9764, %v9758
  %v11139 = vpack.c.b16 %v9765, %v9759
  %v11140 = vpack.c.b16 %v9766, %v9760
  %v11141 = vpack.c.b16 %v9767, %v9761
  %v11142 = vpack.c.b16 %v9774, %v9768
  %v11143 = vpack.c.b16 %v9775, %v9769
  %v11144 = vpack.c.b16 %v9776, %v9770
  %v11145 = vpack.c.b16 %v9777, %v9771
  %v11146 = vpack.c.b16 %v9778, %v9772
  %v11147 = vpack.c.b16 %v9779, %v9773
  %v11148 = vpack.c.b16 %v9786, %v9780
  %v11149 = vpack.c.b16 %v9787, %v9781
  %v11150 = vpack.c.b16 %v9788, %v9782
  %v11151 = vpack.c.b16 %v9789, %v9783
  %v11152 = vpack.c.b16 %v9790, %v9784
  %v11153 = vpack.c.b16 %v9791, %v9785
  %v11154 = vpack.c.b16 %v9798, %v9792
  %v11155 = vpack.c.b16 %v9799, %v9793
  %v11156 = vpack.c.b16 %v9800, %v9794
  %v11157 = vpack.c.b16 %v9801, %v9795
  %v11158 = vpack.c.b16 %v9802, %v9796
  %v11159 = vpack.c.b16 %v9803, %v9797
  %v11160 = vpack.c.b16 %v9810, %v9804
  %v11161 = vpack.c.b16 %v9811, %v9805
  %v11162 = vpack.c.b16 %v9812, %v9806
  %v11163 = vpack.c.b16 %v9813, %v9807
  %v11164 = vpack.c.b16 %v9814, %v9808
  %v11165 = vpack.c.b16 %v9815, %v9809
  %v11166 = vpack.c.b16 %v9822, %v9816
  %v11167 = vpack.c.b16 %v9823, %v9817
  %v11168 = vpack.c.b16 %v9824, %v9818
  %v11169 = vpack.c.b16 %v9825, %v9819
  %v11170 = vpack.c.b16 %v9826, %v9820
  %v11171 = vpack.c.b16 %v9827, %v9821
  %v11172 = vpack.c.b16 %v9834, %v9828
  %v11173 = vpack.c.b16 %v9835, %v9829
  %v11174 = vpack.c.b16 %v9836, %v9830
  %v11175 = vpack.c.b16 %v9837, %v9831
  %v11176 = vpack.c.b16 %v9838, %v9832
  %v11177 = vpack.c.b16 %v9839, %v9833
  %v11178 = vpack.c.b16 %v9846, %v9840
  %v11179 = vpack.c.b16 %v9847, %v9841
  %v11180 = vpack.c.b16 %v9848, %v9842
  %v11181 = vpack.c.b16 %v9849, %v9843
  %v11182 = vpack.c.b16 %v9850, %v9844
  %v11183 = vpack.c.b16 %v9851, %v9845
  %v11184 = vpack.c.b16 %v9858, %v9852
  %v11185 = vpack.c.b16 %v9859, %v9853
  %v11186 = vpack.c.b16 %v9860, %v9854
  %v11187 = vpack.c.b16 %v9861, %v9855
  %v11188 = vpack.c.b16 %v9862, %v9856
  %v11189 = vpack.c.b16 %v9863, %v9857
  %v11190 = vpack.c.b16 %v9870, %v9864
  %v11191 = vpack.c.b16 %v9871, %v9865
  %v11192 = vpack.c.b16 %v9872, %v9866
  %v11193 = vpack.c.b16 %v9873, %v9867
  %v11194 = vpack.c.b16 %v9874, %v9868
  %v11195 = vpack.c.b16 %v9875, %v9869
  %v11196 = vpack.c.b16 %v9882, %v9876
  %v11197 = vpack.c.b16 %v9883, %v9877
  %v11198 = vpack.c.b16 %v9884, %v9878
  %v11199 = vpack.c.b16 %v9885, %v9879
  %v11200 = vpack.c.b16 %v9886, %v9880
  %v11201 = vpack.c.b16 %v9887, %v9881
  %v11202 = vpack.c.b16 %v9894, %v9888
  %v11203 = vpack.c.b16 %v9895, %v9889
  %v11204 = vpack.c.b16 %v9896, %v9890
  %v11205 = vpack.c.b16 %v9897, %v9891
  %v11206 = vpack.c.b16 %v9898, %v9892
  %v11207 = vpack.c.b16 %v9899, %v9893
  %v11208 = vpack.c.b16 %v9906, %v9900
  %v11209 = vpack.c.b16 %v9907, %v9901
  %v11210 = vpack.c.b16 %v9908, %v9902
  %v11211 = vpack.c.b16 %v9909, %v9903
  %v11212 = vpack.c.b16 %v9910, %v9904
  %v11213 = vpack.c.b16 %v9911, %v9905
  %v11214 = vpack.c.b16 %v9918, %v9912
  %v11215 = vpack.c.b16 %v9919, %v9913
  %v11216 = vpack.c.b16 %v9920, %v9914
  %v11217 = vpack.c.b16 %v9921, %v9915
  %v11218 = vpack.c.b16 %v9922, %v9916
  %v11219 = vpack.c.b16 %v9923, %v9917
  %v11220 = vpack.c.b16 %v9930, %v9924
  %v11221 = vpack.c.b16 %v9931, %v9925
  %v11222 = vpack.c.b16 %v9932, %v9926
  %v11223 = vpack.c.b16 %v9933, %v9927
  %v11224 = vpack.c.b16 %v9934, %v9928
  %v11225 = vpack.c.b16 %v9935, %v9929
  %v11226 = vpack.c.b16 %v9942, %v9936
  %v11227 = vpack.c.b16 %v9943, %v9937
  %v11228 = vpack.c.b16 %v9944, %v9938
  %v11229 = vpack.c.b16 %v9945, %v9939
  %v11230 = vpack.c.b16 %v9946, %v9940
  %v11231 = vpack.c.b16 %v9947, %v9941
  %v11232 = vpack.c.b16 %v9954, %v9948
  %v11233 = vpack.c.b16 %v9955, %v9949
  %v11234 = vpack.c.b16 %v9956, %v9950
  %v11235 = vpack.c.b16 %v9957, %v9951
  %v11236 = vpack.c.b16 %v9958, %v9952
  %v11237 = vpack.c.b16 %v9959, %v9953
  %v11238 = vpack.c.b16 %v9966, %v9960
  %v11239 = vpack.c.b16 %v9967, %v9961
  %v11240 = vpack.c.b16 %v9968, %v9962
  %v11241 = vpack.c.b16 %v9969, %v9963
  %v11242 = vpack.c.b16 %v9970, %v9964
  %v11243 = vpack.c.b16 %v9971, %v9965
  %v11244 = vpack.c.b16 %v9978, %v9972
  %v11245 = vpack.c.b16 %v9979, %v9973
  %v11246 = vpack.c.b16 %v9980, %v9974
  %v11247 = vpack.c.b16 %v9981, %v9975
  %v11248 = vpack.c.b16 %v9982, %v9976
  %v11249 = vpack.c.b16 %v9983, %v9977
  %v11250 = vpack.c.b16 %v9990, %v9984
  %v11251 = vpack.c.b16 %v9991, %v9985
  %v11252 = vpack.c.b16 %v9992, %v9986
  %v11253 = vpack.c.b16 %v9993, %v9987
  %v11254 = vpack.c.b16 %v9994, %v9988
  %v11255 = vpack.c.b16 %v9995, %v9989
  %v11256 = vpack.c.b16 %v10002, %v9996
  %v11257 = vpack.c.b16 %v10003, %v9997
  %v11258 = vpack.c.b16 %v10004, %v9998
  %v11259 = vpack.c.b16 %v10005, %v9999
  %v11260 = vpack.c.b16 %v10006, %v10000
  %v11261 = vpack.c.b16 %v10007, %v10001
  %v11262 = vpack.c.b16 %v10014, %v10008
  %v11263 = vpack.c.b16 %v10015, %v10009
  %v11264 = vpack.c.b16 %v10016, %v10010
  %v11265 = vpack.c.b16 %v10017, %v10011
  %v11266 = vpack.c.b16 %v10018, %v10012
  %v11267 = vpack.c.b16 %v10019, %v10013
  %v11268 = vpack.c.b16 %v10026, %v10020
  %v11269 = vpack.c.b16 %v10027, %v10021
  %v11270 = vpack.c.b16 %v10028, %v10022
  %v11271 = vpack.c.b16 %v10029, %v10023
  %v11272 = vpack.c.b16 %v10030, %v10024
  %v11273 = vpack.c.b16 %v10031, %v10025
  %v11274 = vpack.c.b16 %v10038, %v10032
  %v11275 = vpack.c.b16 %v10039, %v10033
  %v11276 = vpack.c.b16 %v10040, %v10034
  %v11277 = vpack.c.b16 %v10041, %v10035
  %v11278 = vpack.c.b16 %v10042, %v10036
  %v11279 = vpack.c.b16 %v10043, %v10037
  %v11280 = vpack.c.b16 %v10050, %v10044
  %v11281 = vpack.c.b16 %v10051, %v10045
  %v11282 = vpack.c.b16 %v10052, %v10046
  %v11283 = vpack.c.b16 %v10053, %v10047
  %v11284 = vpack.c.b16 %v10054, %v10048
  %v11285 = vpack.c.b16 %v10055, %v10049
  %v11286 = vpack.c.b16 %v10062, %v10056
  %v11287 = vpack.c.b16 %v10063, %v10057
  %v11288 = vpack.c.b16 %v10064, %v10058
  %v11289 = vpack.c.b16 %v10065, %v10059
  %v11290 = vpack.c.b16 %v10066, %v10060
  %v11291 = vpack.c.b16 %v10067, %v10061
  %v11292 = vpack.c.b16 %v10074, %v10068
  %v11293 = vpack.c.b16 %v10075, %v10069
  %v11294 = vpack.c.b16 %v10076, %v10070
  %v11295 = vpack.c.b16 %v10077, %v10071
  %v11296 = vpack.c.b16 %v10078, %v10072
  %v11297 = vpack.c.b16 %v10079, %v10073
  %v11298 = vpack.c.b16 %v10086, %v10080
  %v11299 = vpack.c.b16 %v10087, %v10081
  %v11300 = vpack.c.b16 %v10088, %v10082
  %v11301 = vpack.c.b16 %v10089, %v10083
  %v11302 = vpack.c.b16 %v10090, %v10084
  %v11303 = vpack.c.b16 %v10091, %v10085
  %v11304 = vpack.c.b16 %v10098, %v10092
  %v11305 = vpack.c.b16 %v10099, %v10093
  %v11306 = vpack.c.b16 %v10100, %v10094
  %v11307 = vpack.c.b16 %v10101, %v10095
  %v11308 = vpack.c.b16 %v10102, %v10096
  %v11309 = vpack.c.b16 %v10103, %v10097
  %v11310 = vpack.c.b16 %v10110, %v10104
  %v11311 = vpack.c.b16 %v10111, %v10105
  %v11312 = vpack.c.b16 %v10112, %v10106
  %v11313 = vpack.c.b16 %v10113, %v10107
  %v11314 = vpack.c.b16 %v10114, %v10108
  %v11315 = vpack.c.b16 %v10115, %v10109
  %v11316 = vpack.c.b16 %v10122, %v10116
  %v11317 = vpack.c.b16 %v10123, %v10117
  %v11318 = vpack.c.b16 %v10124, %v10118
  %v11319 = vpack.c.b16 %v10125, %v10119
  %v11320 = vpack.c.b16 %v10126, %v10120
  %v11321 = vpack.c.b16 %v10127, %v10121
  %v11322 = vpack.c.b16 %v10134, %v10128
  %v11323 = vpack.c.b16 %v10135, %v10129
  %v11324 = vpack.c.b16 %v10136, %v10130
  %v11325 = vpack.c.b16 %v10137, %v10131
  %v11326 = vpack.c.b16 %v10138, %v10132
  %v11327 = vpack.c.b16 %v10139, %v10133
  %v11328 = vpack.c.b16 %v10146, %v10140
  %v11329 = vpack.c.b16 %v10147, %v10141
  %v11330 = vpack.c.b16 %v10148, %v10142
  %v11331 = vpack.c.b16 %v10149, %v10143
  %v11332 = vpack.c.b16 %v10150, %v10144
  %v11333 = vpack.c.b16 %v10151, %v10145
  %v11334 = vpack.c.b16 %v10158, %v10152
  %v11335 = vpack.c.b16 %v10159, %v10153
  %v11336 = vpack.c.b16 %v10160, %v10154
  %v11337 = vpack.c.b16 %v10161, %v10155
  %v11338 = vpack.c.b16 %v10162, %v10156
  %v11339 = vpack.c.b16 %v10163, %v10157
  %v11340 = vpack.c.b16 %v10170, %v10164
  %v11341 = vpack.c.b16 %v10171, %v10165
  %v11342 = vpack.c.b16 %v10172, %v10166
  %v11343 = vpack.c.b16 %v10173, %v10167
  %v11344 = vpack.c.b16 %v10174, %v10168
  %v11345 = vpack.c.b16 %v10175, %v10169
  %v11346 = vpack.c.b16 %v10182, %v10176
  %v11347 = vpack.c.b16 %v10183, %v10177
  %v11348 = vpack.c.b16 %v10184, %v10178
  %v11349 = vpack.c.b16 %v10185, %v10179
  %v11350 = vpack.c.b16 %v10186, %v10180
  %v11351 = vpack.c.b16 %v10187, %v10181
  %v11352 = vpack.c.b16 %v10194, %v10188
  %v11353 = vpack.c.b16 %v10195, %v10189
  %v11354 = vpack.c.b16 %v10196, %v10190
  %v11355 = vpack.c.b16 %v10197, %v10191
  %v11356 = vpack.c.b16 %v10198, %v10192
  %v11357 = vpack.c.b16 %v10199, %v10193
  %v11358 = vpack.c.b16 %v10206, %v10200
  %v11359 = vpack.c.b16 %v10207, %v10201
  %v11360 = vpack.c.b16 %v10208, %v10202
  %v11361 = vpack.c.b16 %v10209, %v10203
  %v11362 = vpack.c.b16 %v10210, %v10204
  %v11363 = vpack.c.b16 %v10211, %v10205
  %v11364 = vpack.c.b16 %v10218, %v10212
  %v11365 = vpack.c.b16 %v10219, %v10213
  %v11366 = vpack.c.b16 %v10220, %v10214
  %v11367 = vpack.c.b16 %v10221, %v10215
  %v11368 = vpack.c.b16 %v10222, %v10216
  %v11369 = vpack.c.b16 %v10223, %v10217
  %v11370 = vpack.c.b16 %v10230, %v10224
  %v11371 = vpack.c.b16 %v10231, %v10225
  %v11372 = vpack.c.b16 %v10232, %v10226
  %v11373 = vpack.c.b16 %v10233, %v10227
  %v11374 = vpack.c.b16 %v10234, %v10228
  %v11375 = vpack.c.b16 %v10235, %v10229
  %v11376 = vpack.c.b16 %v10242, %v10236
  %v11377 = vpack.c.b16 %v10243, %v10237
  %v11378 = vpack.c.b16 %v10244, %v10238
  %v11379 = vpack.c.b16 %v10245, %v10239
  %v11380 = vpack.c.b16 %v10246, %v10240
  %v11381 = vpack.c.b16 %v10247, %v10241
  %v11382 = vpack.c.b16 %v10254, %v10248
  %v11383 = vpack.c.b16 %v10255, %v10249
  %v11384 = vpack.c.b16 %v10256, %v10250
  %v11385 = vpack.c.b16 %v10257, %v10251
  %v11386 = vpack.c.b16 %v10258, %v10252
  %v11387 = vpack.c.b16 %v10259, %v10253
  %v11388 = vpack.c.b16 %v10266, %v10260
  %v11389 = vpack.c.b16 %v10267, %v10261
  %v11390 = vpack.c.b16 %v10268, %v10262
  %v11391 = vpack.c.b16 %v10269, %v10263
  %v11392 = vpack.c.b16 %v10270, %v10264
  %v11393 = vpack.c.b16 %v10271, %v10265
  %v11394 = vpack.c.b16 %v10278, %v10272
  %v11395 = vpack.c.b16 %v10279, %v10273
  %v11396 = vpack.c.b16 %v10280, %v10274
  %v11397 = vpack.c.b16 %v10281, %v10275
  %v11398 = vpack.c.b16 %v10282, %v10276
  %v11399 = vpack.c.b16 %v10283, %v10277
  %v11400 = vpack.c.b16 %v10290, %v10284
  %v11401 = vpack.c.b16 %v10291, %v10285
  %v11402 = vpack.c.b16 %v10292, %v10286
  %v11403 = vpack.c.b16 %v10293, %v10287
  %v11404 = vpack.c.b16 %v10294, %v10288
  %v11405 = vpack.c.b16 %v10295, %v10289
  %v11406 = vpack.c.b16 %v10302, %v10296
  %v11407 = vpack.c.b16 %v10303, %v10297
  %v11408 = vpack.c.b16 %v10304, %v10298
  %v11409 = vpack.c.b16 %v10305, %v10299
  %v11410 = vpack.c.b16 %v10306, %v10300
  %v11411 = vpack.c.b16 %v10307, %v10301
  %v11412 = vpack.c.b16 %v10314, %v10308
  %v11413 = vpack.c.b16 %v10315, %v10309
  %v11414 = vpack.c.b16 %v10316, %v10310
  %v11415 = vpack.c.b16 %v10317, %v10311
  %v11416 = vpack.c.b16 %v10318, %v10312
  %v11417 = vpack.c.b16 %v10319, %v10313
  %v11418 = vpack.c.b16 %v10326, %v10320
  %v11419 = vpack.c.b16 %v10327, %v10321
  %v11420 = vpack.c.b16 %v10328, %v10322
  %v11421 = vpack.c.b16 %v10329, %v10323
  %v11422 = vpack.c.b16 %v10330, %v10324
  %v11423 = vpack.c.b16 %v10331, %v10325
  %v11424 = vpack.c.b16 %v10338, %v10332
  %v11425 = vpack.c.b16 %v10339, %v10333
  %v11426 = vpack.c.b16 %v10340, %v10334
  %v11427 = vpack.c.b16 %v10341, %v10335
  %v11428 = vpack.c.b16 %v10342, %v10336
  %v11429 = vpack.c.b16 %v10343, %v10337
  %v11430 = vpack.c.b16 %v10350, %v10344
  %v11431 = vpack.c.b16 %v10351, %v10345
  %v11432 = vpack.c.b16 %v10352, %v10346
  %v11433 = vpack.c.b16 %v10353, %v10347
  %v11434 = vpack.c.b16 %v10354, %v10348
  %v11435 = vpack.c.b16 %v10355, %v10349
  %v11436 = vpack.c.b16 %v10362, %v10356
  %v11437 = vpack.c.b16 %v10363, %v10357
  %v11438 = vpack.c.b16 %v10364, %v10358
  %v11439 = vpack.c.b16 %v10365, %v10359
  %v11440 = vpack.c.b16 %v10366, %v10360
  %v11441 = vpack.c.b16 %v10367, %v10361
  %v11442 = vpack.c.b16 %v10374, %v10368
  %v11443 = vpack.c.b16 %v10375, %v10369
  %v11444 = vpack.c.b16 %v10376, %v10370
  %v11445 = vpack.c.b16 %v10377, %v10371
  %v11446 = vpack.c.b16 %v10378, %v10372
  %v11447 = vpack.c.b16 %v10379, %v10373
  %v11448 = vpack.c.b16 %v10386, %v10380
  %v11449 = vpack.c.b16 %v10387, %v10381
  %v11450 = vpack.c.b16 %v10388, %v10382
  %v11451 = vpack.c.b16 %v10389, %v10383
  %v11452 = vpack.c.b16 %v10390, %v10384
  %v11453 = vpack.c.b16 %v10391, %v10385
  %v11454 = vpack.c.b16 %v10398, %v10392
  %v11455 = vpack.c.b16 %v10399, %v10393
  %v11456 = vpack.c.b16 %v10400, %v10394
  %v11457 = vpack.c.b16 %v10401, %v10395
  %v11458 = vpack.c.b16 %v10402, %v10396
  %v11459 = vpack.c.b16 %v10403, %v10397
  %v11460 = vpack.c.b16 %v10410, %v10404
  %v11461 = vpack.c.b16 %v10411, %v10405
  %v11462 = vpack.c.b16 %v10412, %v10406
  %v11463 = vpack.c.b16 %v10413, %v10407
  %v11464 = vpack.c.b16 %v10414, %v10408
  %v11465 = vpack.c.b16 %v10415, %v10409
  %v11466 = vpack.c.b16 %v10422, %v10416
  %v11467 = vpack.c.b16 %v10423, %v10417
  %v11468 = vpack.c.b16 %v10424, %v10418
  %v11469 = vpack.c.b16 %v10425, %v10419
  %v11470 = vpack.c.b16 %v10426, %v10420
  %v11471 = vpack.c.b16 %v10427, %v10421
  %v11472 = vpack.c.b16 %v10434, %v10428
  %v11473 = vpack.c.b16 %v10435, %v10429
  %v11474 = vpack.c.b16 %v10436, %v10430
  %v11475 = vpack.c.b16 %v10437, %v10431
  %v11476 = vpack.c.b16 %v10438, %v10432
  %v11477 = vpack.c.b16 %v10439, %v10433
  %v11478 = vpack.c.b16 %v10446, %v10440
  %v11479 = vpack.c.b16 %v10447, %v10441
  %v11480 = vpack.c.b16 %v10448, %v10442
  %v11481 = vpack.c.b16 %v10449, %v10443
  %v11482 = vpack.c.b16 %v10450, %v10444
  %v11483 = vpack.c.b16 %v10451, %v10445
  %v11484 = vpack.c.b16 %v10458, %v10452
  %v11485 = vpack.c.b16 %v10459, %v10453
  %v11486 = vpack.c.b16 %v10460, %v10454
  %v11487 = vpack.c.b16 %v10461, %v10455
  %v11488 = vpack.c.b16 %v10462, %v10456
  %v11489 = vpack.c.b16 %v10463, %v10457
  %v11490 = vpack.c.b16 %v10470, %v10464
  %v11491 = vpack.c.b16 %v10471, %v10465
  %v11492 = vpack.c.b16 %v10472, %v10466
  %v11493 = vpack.c.b16 %v10473, %v10467
  %v11494 = vpack.c.b16 %v10474, %v10468
  %v11495 = vpack.c.b16 %v10475, %v10469
  %v11496 = vpack.c.b16 %v10482, %v10476
  %v11497 = vpack.c.b16 %v10483, %v10477
  %v11498 = vpack.c.b16 %v10484, %v10478
  %v11499 = vpack.c.b16 %v10485, %v10479
  %v11500 = vpack.c.b16 %v10486, %v10480
  %v11501 = vpack.c.b16 %v10487, %v10481
  %v11502 = vpack.c.b16 %v10494, %v10488
  %v11503 = vpack.c.b16 %v10495, %v10489
  %v11504 = vpack.c.b16 %v10496, %v10490
  %v11505 = vpack.c.b16 %v10497, %v10491
  %v11506 = vpack.c.b16 %v10498, %v10492
  %v11507 = vpack.c.b16 %v10499, %v10493
  %v11508 = vpack.c.b16 %v10506, %v10500
  %v11509 = vpack.c.b16 %v10507, %v10501
  %v11510 = vpack.c.b16 %v10508, %v10502
  %v11511 = vpack.c.b16 %v10509, %v10503
  %v11512 = vpack.c.b16 %v10510, %v10504
  %v11513 = vpack.c.b16 %v10511, %v10505
  %v11514 = vpack.c.b16 %v10518, %v10512
  %v11515 = vpack.c.b16 %v10519, %v10513
  %v11516 = vpack.c.b16 %v10520, %v10514
  %v11517 = vpack.c.b16 %v10521, %v10515
  %v11518 = vpack.c.b16 %v10522, %v10516
  %v11519 = vpack.c.b16 %v10523, %v10517
  %v11520 = vpack.c.b16 %v10530, %v10524
  %v11521 = vpack.c.b16 %v10531, %v10525
  %v11522 = vpack.c.b16 %v10532, %v10526
  %v11523 = vpack.c.b16 %v10533, %v10527
  %v11524 = vpack.c.b16 %v10534, %v10528
  %v11525 = vpack.c.b16 %v10535, %v10529
  %v11526 = vpack.c.b16 %v10542, %v10536
  %v11527 = vpack.c.b16 %v10543, %v10537
  %v11528 = vpack.c.b16 %v10544, %v10538
  %v11529 = vpack.c.b16 %v10545, %v10539
  %v11530 = vpack.c.b16 %v10546, %v10540
  %v11531 = vpack.c.b16 %v10547, %v10541
  %v11532 = vpack.c.b16 %v10554, %v10548
  %v11533 = vpack.c.b16 %v10555, %v10549
  %v11534 = vpack.c.b16 %v10556, %v10550
  %v11535 = vpack.c.b16 %v10557, %v10551
  %v11536 = vpack.c.b16 %v10558, %v10552
  %v11537 = vpack.c.b16 %v10559, %v10553
  %v11538 = vpack.c.b16 %v10566, %v10560
  %v11539 = vpack.c.b16 %v10567, %v10561
  %v11540 = vpack.c.b16 %v10568, %v10562
  %v11541 = vpack.c.b16 %v10569, %v10563
  %v11542 = vpack.c.b16 %v10570, %v10564
  %v11543 = vpack.c.b16 %v10571, %v10565
  %v11544 = vpack.c.b16 %v10578, %v10572
  %v11545 = vpack.c.b16 %v10579, %v10573
  %v11546 = vpack.c.b16 %v10580, %v10574
  %v11547 = vpack.c.b16 %v10581, %v10575
  %v11548 = vpack.c.b16 %v10582, %v10576
  %v11549 = vpack.c.b16 %v10583, %v10577
  %v11550 = vpack.c.b16 %v10590, %v10584
  %v11551 = vpack.c.b16 %v10591, %v10585
  %v11552 = vpack.c.b16 %v10592, %v10586
  %v11553 = vpack.c.b16 %v10593, %v10587
  %v11554 = vpack.c.b16 %v10594, %v10588
  %v11555 = vpack.c.b16 %v10595, %v10589
  %v11556 = vpack.c.b16 %v10602, %v10596
  %v11557 = vpack.c.b16 %v10603, %v10597
  %v11558 = vpack.c.b16 %v10604, %v10598
  %v11559 = vpack.c.b16 %v10605, %v10599
  %v11560 = vpack.c.b16 %v10606, %v10600
  %v11561 = vpack.c.b16 %v10607, %v10601
  %v11562 = vpack.c.b16 %v10614, %v10608
  %v11563 = vpack.c.b16 %v10615, %v10609
  %v11564 = vpack.c.b16 %v10616, %v10610
  %v11565 = vpack.c.b16 %v10617, %v10611
  %v11566 = vpack.c.b16 %v10618, %v10612
  %v11567 = vpack.c.b16 %v10619, %v10613
  %v11568 = vpack.c.b16 %v10626, %v10620
  %v11569 = vpack.c.b16 %v10627, %v10621
  %v11570 = vpack.c.b16 %v10628, %v10622
  %v11571 = vpack.c.b16 %v10629, %v10623
  %v11572 = vpack.c.b16 %v10630, %v10624
  %v11573 = vpack.c.b16 %v10631, %v10625
  %v11574 = vpack.c.b16 %v10638, %v10632
  %v11575 = vpack.c.b16 %v10639, %v10633
  %v11576 = vpack.c.b16 %v10640, %v10634
  %v11577 = vpack.c.b16 %v10641, %v10635
  %v11578 = vpack.c.b16 %v10642, %v10636
  %v11579 = vpack.c.b16 %v10643, %v10637
  %v11580 = vpack.c.b16 %v10650, %v10644
  %v11581 = vpack.c.b16 %v10651, %v10645
  %v11582 = vpack.c.b16 %v10652, %v10646
  %v11583 = vpack.c.b16 %v10653, %v10647
  %v11584 = vpack.c.b16 %v10654, %v10648
  %v11585 = vpack.c.b16 %v10655, %v10649
  %v11586 = vpack.c.b16 %v10662, %v10656
  %v11587 = vpack.c.b16 %v10663, %v10657
  %v11588 = vpack.c.b16 %v10664, %v10658
  %v11589 = vpack.c.b16 %v10665, %v10659
  %v11590 = vpack.c.b16 %v10666, %v10660
  %v11591 = vpack.c.b16 %v10667, %v10661
  %v11592 = vpack.c.b16 %v10674, %v10668
  %v11593 = vpack.c.b16 %v10675, %v10669
  %v11594 = vpack.c.b16 %v10676, %v10670
  %v11595 = vpack.c.b16 %v10677, %v10671
  %v11596 = vpack.c.b16 %v10678, %v10672
  %v11597 = vpack.c.b16 %v10679, %v10673
  %v11598 = vpack.c.b16 %v10686, %v10680
  %v11599 = vpack.c.b16 %v10687, %v10681
  %v11600 = vpack.c.b16 %v10688, %v10682
  %v11601 = vpack.c.b16 %v10689, %v10683
  %v11602 = vpack.c.b16 %v10690, %v10684
  %v11603 = vpack.c.b16 %v10691, %v10685
  %v11604 = vpack.c.b16 %v10698, %v10692
  %v11605 = vpack.c.b16 %v10699, %v10693
  %v11606 = vpack.c.b16 %v10700, %v10694
  %v11607 = vpack.c.b16 %v10701, %v10695
  %v11608 = vpack.c.b16 %v10702, %v10696
  %v11609 = vpack.c.b16 %v10703, %v10697
  %v11610 = vpack.c.b16 %v10710, %v10704
  %v11611 = vpack.c.b16 %v10711, %v10705
  %v11612 = vpack.c.b16 %v10712, %v10706
  %v11613 = vpack.c.b16 %v10713, %v10707
  %v11614 = vpack.c.b16 %v10714, %v10708
  %v11615 = vpack.c.b16 %v10715, %v10709
  %v11616 = vpack.c.b16 %v10722, %v10716
  %v11617 = vpack.c.b16 %v10723, %v10717
  %v11618 = vpack.c.b16 %v10724, %v10718
  %v11619 = vpack.c.b16 %v10725, %v10719
  %v11620 = vpack.c.b16 %v10726, %v10720
  %v11621 = vpack.c.b16 %v10727, %v10721
  %v11622 = vpack.c.b16 %v10734, %v10728
  %v11623 = vpack.c.b16 %v10735, %v10729
  %v11624 = vpack.c.b16 %v10736, %v10730
  %v11625 = vpack.c.b16 %v10737, %v10731
  %v11626 = vpack.c.b16 %v10738, %v10732
  %v11627 = vpack.c.b16 %v10739, %v10733
  %v11628 = vpack.c.b16 %v10746, %v10740
  %v11629 = vpack.c.b16 %v10747, %v10741
  %v11630 = vpack.c.b16 %v10748, %v10742
  %v11631 = vpack.c.b16 %v10749, %v10743
  %v11632 = vpack.c.b16 %v10750, %v10744
  %v11633 = vpack.c.b16 %v10751, %v10745
  %v11634 = vpack.c.b16 %v10758, %v10752
  %v11635 = vpack.c.b16 %v10759, %v10753
  %v11636 = vpack.c.b16 %v10760, %v10754
  %v11637 = vpack.c.b16 %v10761, %v10755
  %v11638 = vpack.c.b16 %v10762, %v10756
  %v11639 = vpack.c.b16 %v10763, %v10757
  %v11640 = vpack.c.b16 %v10770, %v10764
  %v11641 = vpack.c.b16 %v10771, %v10765
  %v11642 = vpack.c.b16 %v10772, %v10766
  %v11643 = vpack.c.b16 %v10773, %v10767
  %v11644 = vpack.c.b16 %v10774, %v10768
  %v11645 = vpack.c.b16 %v10775, %v10769
  %v11646 = vpack.c.b16 %v10782, %v10776
  %v11647 = vpack.c.b16 %v10783, %v10777
  %v11648 = vpack.c.b16 %v10784, %v10778
  %v11649 = vpack.c.b16 %v10785, %v10779
  %v11650 = vpack.c.b16 %v10786, %v10780
  %v11651 = vpack.c.b16 %v10787, %v10781
  %v11652 = vpack.c.b16 %v10794, %v10788
  %v11653 = vpack.c.b16 %v10795, %v10789
  %v11654 = vpack.c.b16 %v10796, %v10790
  %v11655 = vpack.c.b16 %v10797, %v10791
  %v11656 = vpack.c.b16 %v10798, %v10792
  %v11657 = vpack.c.b16 %v10799, %v10793
  %v11658 = vpack.c.b16 %v10806, %v10800
  %v11659 = vpack.c.b16 %v10807, %v10801
  %v11660 = vpack.c.b16 %v10808, %v10802
  %v11661 = vpack.c.b16 %v10809, %v10803
  %v11662 = vpack.c.b16 %v10810, %v10804
  %v11663 = vpack.c.b16 %v10811, %v10805
  %v11664 = vpack.c.b16 %v10818, %v10812
  %v11665 = vpack.c.b16 %v10819, %v10813
  %v11666 = vpack.c.b16 %v10820, %v10814
  %v11667 = vpack.c.b16 %v10821, %v10815
  %v11668 = vpack.c.b16 %v10822, %v10816
  %v11669 = vpack.c.b16 %v10823, %v10817
  %v11670 = vpack.c.b16 %v10830, %v10824
  %v11671 = vpack.c.b16 %v10831, %v10825
  %v11672 = vpack.c.b16 %v10832, %v10826
  %v11673 = vpack.c.b16 %v10833, %v10827
  %v11674 = vpack.c.b16 %v10834, %v10828
  %v11675 = vpack.c.b16 %v10835, %v10829
  %v11676 = vpack.c.b16 %v10842, %v10836
  %v11677 = vpack.c.b16 %v10843, %v10837
  %v11678 = vpack.c.b16 %v10844, %v10838
  %v11679 = vpack.c.b16 %v10845, %v10839
  %v11680 = vpack.c.b16 %v10846, %v10840
  %v11681 = vpack.c.b16 %v10847, %v10841
  %v11682 = vpack.c.b16 %v10854, %v10848
  %v11683 = vpack.c.b16 %v10855, %v10849
  %v11684 = vpack.c.b16 %v10856, %v10850
  %v11685 = vpack.c.b16 %v10857, %v10851
  %v11686 = vpack.c.b16 %v10858, %v10852
  %v11687 = vpack.c.b16 %v10859, %v10853
  %v11688 = vpack.c.b16 %v10866, %v10860
  %v11689 = vpack.c.b16 %v10867, %v10861
  %v11690 = vpack.c.b16 %v10868, %v10862
  %v11691 = vpack.c.b16 %v10869, %v10863
  %v11692 = vpack.c.b16 %v10870, %v10864
  %v11693 = vpack.c.b16 %v10871, %v10865
  %v11694 = vpack.c.b16 %v10878, %v10872
  %v11695 = vpack.c.b16 %v10879, %v10873
  %v11696 = vpack.c.b16 %v10880, %v10874
  %v11697 = vpack.c.b16 %v10881, %v10875
  %v11698 = vpack.c.b16 %v10882, %v10876
  %v11699 = vpack.c.b16 %v10883, %v10877
  %v11700 = vpack.c.b16 %v10890, %v10884
  %v11701 = vpack.c.b16 %v10891, %v10885
  %v11702 = vpack.c.b16 %v10892, %v10886
  %v11703 = vpack.c.b16 %v10893, %v10887
  %v11704 = vpack.c.b16 %v10894, %v10888
  %v11705 = vpack.c.b16 %v10895, %v10889
  %v11706 = vpack.c.b16 %v10902, %v10896
  %v11707 = vpack.c.b16 %v10903, %v10897
  %v11708 = vpack.c.b16 %v10904, %v10898
  %v11709 = vpack.c.b16 %v10905, %v10899
  %v11710 = vpack.c.b16 %v10906, %v10900
  %v11711 = vpack.c.b16 %v10907, %v10901
  %v11712 = vpack.c.b16 %v10914, %v10908
  %v11713 = vpack.c.b16 %v10915, %v10909
  %v11714 = vpack.c.b16 %v10916, %v10910
  %v11715 = vpack.c.b16 %v10917, %v10911
  %v11716 = vpack.c.b16 %v10918, %v10912
  %v11717 = vpack.c.b16 %v10919, %v10913
  %v11718 = vpack.c.b16 %v10926, %v10920
  %v11719 = vpack.c.b16 %v10927, %v10921
  %v11720 = vpack.c.b16 %v10928, %v10922
  %v11721 = vpack.c.b16 %v10929, %v10923
  %v11722 = vpack.c.b16 %v10930, %v10924
  %v11723 = vpack.c.b16 %v10931, %v10925
  %v11724 = vpack.c.b16 %v10938, %v10932
  %v11725 = vpack.c.b16 %v10939, %v10933
  %v11726 = vpack.c.b16 %v10940, %v10934
  %v11727 = vpack.c.b16 %v10941, %v10935
  %v11728 = vpack.c.b16 %v10942, %v10936
  %v11729 = vpack.c.b16 %v10943, %v10937
  %v11730 = vpack.c.b16 %v10950, %v10944
  %v11731 = vpack.c.b16 %v10951, %v10945
  %v11732 = vpack.c.b16 %v10952, %v10946
  %v11733 = vpack.c.b16 %v10953, %v10947
  %v11734 = vpack.c.b16 %v10954, %v10948
  %v11735 = vpack.c.b16 %v10955, %v10949
  %v11736 = vpack.c.b16 %v10962, %v10956
  %v11737 = vpack.c.b16 %v10963, %v10957
  %v11738 = vpack.c.b16 %v10964, %v10958
  %v11739 = vpack.c.b16 %v10965, %v10959
  %v11740 = vpack.c.b16 %v10966, %v10960
  %v11741 = vpack.c.b16 %v10967, %v10961
  %v11742 = vpack.c.b16 %v10974, %v10968
  %v11743 = vpack.c.b16 %v10975, %v10969
  %v11744 = vpack.c.b16 %v10976, %v10970
  %v11745 = vpack.c.b16 %v10977, %v10971
  %v11746 = vpack.c.b16 %v10978, %v10972
  %v11747 = vpack.c.b16 %v10979, %v10973
  %12516 = vmatprep.subr.bf16.mxu0 %v10981
  %12517 = vmatpush1.bf16.msra.mxu0 %v10980
  %12518 = vmatprep.subr.bf16.mxu0 %v10987
  %12519 = vmatpush1.bf16.msra.mxu0 %v10986
  %12520 = vmatprep.subr.bf16.mxu0 %v10993
  %12521 = vmatpush1.bf16.msra.mxu0 %v10992
  %12522 = vmatprep.subr.bf16.mxu0 %v10999
  %12523 = vmatpush1.bf16.msra.mxu0 %v10998
  %12524 = vmatprep.subr.bf16.mxu0 %v11005
  %12525 = vmatpush1.bf16.msra.mxu0 %v11004
  %12526 = vmatprep.subr.bf16.mxu0 %v11011
  %12527 = vmatpush1.bf16.msra.mxu0 %v11010
  %12528 = vmatprep.subr.bf16.mxu0 %v11017
  %12529 = vmatpush1.bf16.msra.mxu0 %v11016
  %12530 = vmatprep.subr.bf16.mxu0 %v11023
  %12531 = vmatpush1.bf16.msra.mxu0 %v11022
  %12532 = vmatprep.subr.bf16.mxu0 %v11029
  %12533 = vmatpush1.bf16.msra.mxu0 %v11028
  %12534 = vmatprep.subr.bf16.mxu0 %v11035
  %12535 = vmatpush1.bf16.msra.mxu0 %v11034
  %12536 = vmatprep.subr.bf16.mxu0 %v11041
  %12537 = vmatpush1.bf16.msra.mxu0 %v11040
  %12538 = vmatprep.subr.bf16.mxu0 %v11047
  %12539 = vmatpush1.bf16.msra.mxu0 %v11046
  %12540 = vmatprep.subr.bf16.mxu0 %v11053
  %12541 = vmatpush1.bf16.msra.mxu0 %v11052
  %12542 = vmatprep.subr.bf16.mxu0 %v11059
  %12543 = vmatpush1.bf16.msra.mxu0 %v11058
  %12544 = vmatprep.subr.bf16.mxu0 %v11065
  %12545 = vmatpush1.bf16.msra.mxu0 %v11064
  %12546 = vmatprep.subr.bf16.mxu0 %v11071
  %12547 = vmatpush1.bf16.msra.mxu0 %v11070
  %12548 = vmatprep.mubr.bf16.mxu0 %v7861
  %12549 = vmatmul.mubr.bf16.gmra.mrb[0].mxu0 %v7860
  %v12550 = vpop.f32.mrb[0].mxu0
  %v12551 = vadd.f32 %v8649, %v12550
  %v12552 = vpop.f32.mrb[0].mxu0
  %v12553 = vadd.f32 %v8653, %v12552
  %v12554 = vpop.f32.mrb[0].mxu0
  %v12555 = vpop.f32.mrb[0].mxu0
  %12556 = vdwg.mxu0
  %12557 = vmatprep.subr.bf16.mxu0 %v11077
  %12558 = vmatpush1.bf16.msra.mxu0 %v11076
  %12559 = vmatprep.subr.bf16.mxu0 %v11083
  %12560 = vmatpush1.bf16.msra.mxu0 %v11082
  %12561 = vmatprep.subr.bf16.mxu0 %v11089
  %12562 = vmatpush1.bf16.msra.mxu0 %v11088
  %12563 = vmatprep.subr.bf16.mxu0 %v11095
  %12564 = vmatpush1.bf16.msra.mxu0 %v11094
  %12565 = vmatprep.subr.bf16.mxu0 %v11101
  %12566 = vmatpush1.bf16.msra.mxu0 %v11100
  %12567 = vmatprep.subr.bf16.mxu0 %v11107
  %12568 = vmatpush1.bf16.msra.mxu0 %v11106
  %12569 = vmatprep.subr.bf16.mxu0 %v11113
  %12570 = vmatpush1.bf16.msra.mxu0 %v11112
  %12571 = vmatprep.subr.bf16.mxu0 %v11119
  %12572 = vmatpush1.bf16.msra.mxu0 %v11118
  %12573 = vmatprep.subr.bf16.mxu0 %v11125
  %12574 = vmatpush1.bf16.msra.mxu0 %v11124
  %12575 = vmatprep.subr.bf16.mxu0 %v11131
  %12576 = vmatpush1.bf16.msra.mxu0 %v11130
  %12577 = vmatprep.subr.bf16.mxu0 %v11137
  %12578 = vmatpush1.bf16.msra.mxu0 %v11136
  %12579 = vmatprep.subr.bf16.mxu0 %v11143
  %12580 = vmatpush1.bf16.msra.mxu0 %v11142
  %12581 = vmatprep.subr.bf16.mxu0 %v11149
  %12582 = vmatpush1.bf16.msra.mxu0 %v11148
  %12583 = vmatprep.subr.bf16.mxu0 %v11155
  %12584 = vmatpush1.bf16.msra.mxu0 %v11154
  %12585 = vmatprep.subr.bf16.mxu0 %v11161
  %12586 = vmatpush1.bf16.msra.mxu0 %v11160
  %12587 = vmatprep.subr.bf16.mxu0 %v11167
  %12588 = vmatpush1.bf16.msra.mxu0 %v11166
  %12589 = vmatprep.mubr.bf16.mxu0 %v7863
  %12590 = vmatmul.mubr.bf16.gmra.mrb[0].mxu0 %v7862
  %v12591 = vpop.f32.mrb[0].mxu0
  %v12592 = vadd.f32 %v12551, %v12591
  %v12593 = vpop.f32.mrb[0].mxu0
  %v12594 = vadd.f32 %v12553, %v12593
  %v12595 = vpop.f32.mrb[0].mxu0
  %v12596 = vpop.f32.mrb[0].mxu0
  %12597 = vdwg.mxu0
  %12598 = vmatprep.subr.bf16.mxu0 %v11173
  %12599 = vmatpush1.bf16.msra.mxu0 %v11172
  %12600 = vmatprep.subr.bf16.mxu0 %v11179
  %12601 = vmatpush1.bf16.msra.mxu0 %v11178
  %12602 = vmatprep.subr.bf16.mxu0 %v11185
  %12603 = vmatpush1.bf16.msra.mxu0 %v11184
  %12604 = vmatprep.subr.bf16.mxu0 %v11191
  %12605 = vmatpush1.bf16.msra.mxu0 %v11190
  %12606 = vmatprep.subr.bf16.mxu0 %v11197
  %12607 = vmatpush1.bf16.msra.mxu0 %v11196
  %12608 = vmatprep.subr.bf16.mxu0 %v11203
  %12609 = vmatpush1.bf16.msra.mxu0 %v11202
  %12610 = vmatprep.subr.bf16.mxu0 %v11209
  %12611 = vmatpush1.bf16.msra.mxu0 %v11208
  %12612 = vmatprep.subr.bf16.mxu0 %v11215
  %12613 = vmatpush1.bf16.msra.mxu0 %v11214
  %12614 = vmatprep.subr.bf16.mxu0 %v11221
  %12615 = vmatpush1.bf16.msra.mxu0 %v11220
  %12616 = vmatprep.subr.bf16.mxu0 %v11227
  %12617 = vmatpush1.bf16.msra.mxu0 %v11226
  %12618 = vmatprep.subr.bf16.mxu0 %v11233
  %12619 = vmatpush1.bf16.msra.mxu0 %v11232
  %12620 = vmatprep.subr.bf16.mxu0 %v11239
  %12621 = vmatpush1.bf16.msra.mxu0 %v11238
  %12622 = vmatprep.subr.bf16.mxu0 %v11245
  %12623 = vmatpush1.bf16.msra.mxu0 %v11244
  %12624 = vmatprep.subr.bf16.mxu0 %v11251
  %12625 = vmatpush1.bf16.msra.mxu0 %v11250
  %12626 = vmatprep.subr.bf16.mxu0 %v11257
  %12627 = vmatpush1.bf16.msra.mxu0 %v11256
  %12628 = vmatprep.subr.bf16.mxu0 %v11263
  %12629 = vmatpush1.bf16.msra.mxu0 %v11262
  %12630 = vmatprep.mubr.bf16.mxu0 %v7865
  %12631 = vmatmul.mubr.bf16.gmra.mrb[0].mxu0 %v7864
  %v12632 = vpop.f32.mrb[0].mxu0
  %v12633 = vadd.f32 %v12592, %v12632
  %v12634 = vpop.f32.mrb[0].mxu0
  %v12635 = vadd.f32 %v12594, %v12634
  %v12636 = vpop.f32.mrb[0].mxu0
  %v12637 = vpop.f32.mrb[0].mxu0
  %12638 = vdwg.mxu0
  %12639 = vmatprep.subr.bf16.mxu0 %v11269
  %12640 = vmatpush1.bf16.msra.mxu0 %v11268
  %12641 = vmatprep.subr.bf16.mxu0 %v11275
  %12642 = vmatpush1.bf16.msra.mxu0 %v11274
  %12643 = vmatprep.subr.bf16.mxu0 %v11281
  %12644 = vmatpush1.bf16.msra.mxu0 %v11280
  %12645 = vmatprep.subr.bf16.mxu0 %v11287
  %12646 = vmatpush1.bf16.msra.mxu0 %v11286
  %12647 = vmatprep.subr.bf16.mxu0 %v11293
  %12648 = vmatpush1.bf16.msra.mxu0 %v11292
  %12649 = vmatprep.subr.bf16.mxu0 %v11299
  %12650 = vmatpush1.bf16.msra.mxu0 %v11298
  %12651 = vmatprep.subr.bf16.mxu0 %v11305
  %12652 = vmatpush1.bf16.msra.mxu0 %v11304
  %12653 = vmatprep.subr.bf16.mxu0 %v11311
  %12654 = vmatpush1.bf16.msra.mxu0 %v11310
  %12655 = vmatprep.subr.bf16.mxu0 %v11317
  %12656 = vmatpush1.bf16.msra.mxu0 %v11316
  %12657 = vmatprep.subr.bf16.mxu0 %v11323
  %12658 = vmatpush1.bf16.msra.mxu0 %v11322
  %12659 = vmatprep.subr.bf16.mxu0 %v11329
  %12660 = vmatpush1.bf16.msra.mxu0 %v11328
  %12661 = vmatprep.subr.bf16.mxu0 %v11335
  %12662 = vmatpush1.bf16.msra.mxu0 %v11334
  %12663 = vmatprep.subr.bf16.mxu0 %v11341
  %12664 = vmatpush1.bf16.msra.mxu0 %v11340
  %12665 = vmatprep.subr.bf16.mxu0 %v11347
  %12666 = vmatpush1.bf16.msra.mxu0 %v11346
  %12667 = vmatprep.subr.bf16.mxu0 %v11353
  %12668 = vmatpush1.bf16.msra.mxu0 %v11352
  %12669 = vmatprep.subr.bf16.mxu0 %v11359
  %12670 = vmatpush1.bf16.msra.mxu0 %v11358
  %12671 = vmatprep.mubr.bf16.mxu0 %v7867
  %12672 = vmatmul.mubr.bf16.gmra.mrb[0].mxu0 %v7866
  %v12673 = vpop.f32.mrb[0].mxu0
  %v12674 = vadd.f32 %v12633, %v12673
  %v12675 = vpop.f32.mrb[0].mxu0
  %v12676 = vadd.f32 %v12635, %v12675
  %v12677 = vpop.f32.mrb[0].mxu0
  %v12678 = vpop.f32.mrb[0].mxu0
  %12679 = vdwg.mxu0
  %12680 = vmatprep.subr.bf16.mxu0 %v11365
  %12681 = vmatpush1.bf16.msra.mxu0 %v11364
  %12682 = vmatprep.subr.bf16.mxu0 %v11371
  %12683 = vmatpush1.bf16.msra.mxu0 %v11370
  %12684 = vmatprep.subr.bf16.mxu0 %v11377
  %12685 = vmatpush1.bf16.msra.mxu0 %v11376
  %12686 = vmatprep.subr.bf16.mxu0 %v11383
  %12687 = vmatpush1.bf16.msra.mxu0 %v11382
  %12688 = vmatprep.subr.bf16.mxu0 %v11389
  %12689 = vmatpush1.bf16.msra.mxu0 %v11388
  %12690 = vmatprep.subr.bf16.mxu0 %v11395
  %12691 = vmatpush1.bf16.msra.mxu0 %v11394
  %12692 = vmatprep.subr.bf16.mxu0 %v11401
  %12693 = vmatpush1.bf16.msra.mxu0 %v11400
  %12694 = vmatprep.subr.bf16.mxu0 %v11407
  %12695 = vmatpush1.bf16.msra.mxu0 %v11406
  %12696 = vmatprep.subr.bf16.mxu0 %v11413
  %12697 = vmatpush1.bf16.msra.mxu0 %v11412
  %12698 = vmatprep.subr.bf16.mxu0 %v11419
  %12699 = vmatpush1.bf16.msra.mxu0 %v11418
  %12700 = vmatprep.subr.bf16.mxu0 %v11425
  %12701 = vmatpush1.bf16.msra.mxu0 %v11424
  %12702 = vmatprep.subr.bf16.mxu0 %v11431
  %12703 = vmatpush1.bf16.msra.mxu0 %v11430
  %12704 = vmatprep.subr.bf16.mxu0 %v11437
  %12705 = vmatpush1.bf16.msra.mxu0 %v11436
  %12706 = vmatprep.subr.bf16.mxu0 %v11443
  %12707 = vmatpush1.bf16.msra.mxu0 %v11442
  %12708 = vmatprep.subr.bf16.mxu0 %v11449
  %12709 = vmatpush1.bf16.msra.mxu0 %v11448
  %12710 = vmatprep.subr.bf16.mxu0 %v11455
  %12711 = vmatpush1.bf16.msra.mxu0 %v11454
  %12712 = vmatprep.mubr.bf16.mxu0 %v7869
  %12713 = vmatmul.mubr.bf16.gmra.mrb[0].mxu0 %v7868
  %v12714 = vpop.f32.mrb[0].mxu0
  %v12715 = vadd.f32 %v12674, %v12714
  %v12716 = vpop.f32.mrb[0].mxu0
  %v12717 = vadd.f32 %v12676, %v12716
  %v12718 = vpop.f32.mrb[0].mxu0
  %v12719 = vpop.f32.mrb[0].mxu0
  %12720 = vdwg.mxu0
  %12721 = vmatprep.subr.bf16.mxu0 %v11461
  %12722 = vmatpush1.bf16.msra.mxu0 %v11460
  %12723 = vmatprep.subr.bf16.mxu0 %v11467
  %12724 = vmatpush1.bf16.msra.mxu0 %v11466
  %12725 = vmatprep.subr.bf16.mxu0 %v11473
  %12726 = vmatpush1.bf16.msra.mxu0 %v11472
  %12727 = vmatprep.subr.bf16.mxu0 %v11479
  %12728 = vmatpush1.bf16.msra.mxu0 %v11478
  %12729 = vmatprep.subr.bf16.mxu0 %v11485
  %12730 = vmatpush1.bf16.msra.mxu0 %v11484
  %12731 = vmatprep.subr.bf16.mxu0 %v11491
  %12732 = vmatpush1.bf16.msra.mxu0 %v11490
  %12733 = vmatprep.subr.bf16.mxu0 %v11497
  %12734 = vmatpush1.bf16.msra.mxu0 %v11496
  %12735 = vmatprep.subr.bf16.mxu0 %v11503
  %12736 = vmatpush1.bf16.msra.mxu0 %v11502
  %12737 = vmatprep.subr.bf16.mxu0 %v11509
  %12738 = vmatpush1.bf16.msra.mxu0 %v11508
  %12739 = vmatprep.subr.bf16.mxu0 %v11515
  %12740 = vmatpush1.bf16.msra.mxu0 %v11514
  %12741 = vmatprep.subr.bf16.mxu0 %v11521
  %12742 = vmatpush1.bf16.msra.mxu0 %v11520
  %12743 = vmatprep.subr.bf16.mxu0 %v11527
  %12744 = vmatpush1.bf16.msra.mxu0 %v11526
  %12745 = vmatprep.subr.bf16.mxu0 %v11533
  %12746 = vmatpush1.bf16.msra.mxu0 %v11532
  %12747 = vmatprep.subr.bf16.mxu0 %v11539
  %12748 = vmatpush1.bf16.msra.mxu0 %v11538
  %12749 = vmatprep.subr.bf16.mxu0 %v11545
  %12750 = vmatpush1.bf16.msra.mxu0 %v11544
  %12751 = vmatprep.subr.bf16.mxu0 %v11551
  %12752 = vmatpush1.bf16.msra.mxu0 %v11550
  %12753 = vmatprep.mubr.bf16.mxu0 %v7871
  %12754 = vmatmul.mubr.bf16.gmra.mrb[0].mxu0 %v7870
  %v12755 = vpop.f32.mrb[0].mxu0
  %v12756 = vadd.f32 %v12715, %v12755
  %v12757 = vpop.f32.mrb[0].mxu0
  %v12758 = vadd.f32 %v12717, %v12757
  %v12759 = vpop.f32.mrb[0].mxu0
  %v12760 = vpop.f32.mrb[0].mxu0
  %12761 = vdwg.mxu0
  %12762 = vmatprep.subr.bf16.mxu0 %v11557
  %12763 = vmatpush1.bf16.msra.mxu0 %v11556
  %12764 = vmatprep.subr.bf16.mxu0 %v11563
  %12765 = vmatpush1.bf16.msra.mxu0 %v11562
  %12766 = vmatprep.subr.bf16.mxu0 %v11569
  %12767 = vmatpush1.bf16.msra.mxu0 %v11568
  %12768 = vmatprep.subr.bf16.mxu0 %v11575
  %12769 = vmatpush1.bf16.msra.mxu0 %v11574
  %12770 = vmatprep.subr.bf16.mxu0 %v11581
  %12771 = vmatpush1.bf16.msra.mxu0 %v11580
  %12772 = vmatprep.subr.bf16.mxu0 %v11587
  %12773 = vmatpush1.bf16.msra.mxu0 %v11586
  %12774 = vmatprep.subr.bf16.mxu0 %v11593
  %12775 = vmatpush1.bf16.msra.mxu0 %v11592
  %12776 = vmatprep.subr.bf16.mxu0 %v11599
  %12777 = vmatpush1.bf16.msra.mxu0 %v11598
  %12778 = vmatprep.subr.bf16.mxu0 %v11605
  %12779 = vmatpush1.bf16.msra.mxu0 %v11604
  %12780 = vmatprep.subr.bf16.mxu0 %v11611
  %12781 = vmatpush1.bf16.msra.mxu0 %v11610
  %12782 = vmatprep.subr.bf16.mxu0 %v11617
  %12783 = vmatpush1.bf16.msra.mxu0 %v11616
  %12784 = vmatprep.subr.bf16.mxu0 %v11623
  %12785 = vmatpush1.bf16.msra.mxu0 %v11622
  %12786 = vmatprep.subr.bf16.mxu0 %v11629
  %12787 = vmatpush1.bf16.msra.mxu0 %v11628
  %12788 = vmatprep.subr.bf16.mxu0 %v11635
  %12789 = vmatpush1.bf16.msra.mxu0 %v11634
  %12790 = vmatprep.subr.bf16.mxu0 %v11641
  %12791 = vmatpush1.bf16.msra.mxu0 %v11640
  %12792 = vmatprep.subr.bf16.mxu0 %v11647
  %12793 = vmatpush1.bf16.msra.mxu0 %v11646
  %12794 = vmatprep.mubr.bf16.mxu0 %v7873
  %12795 = vmatmul.mubr.bf16.gmra.mrb[0].mxu0 %v7872
  %v12796 = vpop.f32.mrb[0].mxu0
  %v12797 = vadd.f32 %v12756, %v12796
  %v12798 = vpop.f32.mrb[0].mxu0
  %v12799 = vadd.f32 %v12758, %v12798
  %v12800 = vpop.f32.mrb[0].mxu0
  %v12801 = vpop.f32.mrb[0].mxu0
  %12802 = vdwg.mxu0
  %12803 = vmatprep.subr.bf16.mxu0 %v11653
  %12804 = vmatpush1.bf16.msra.mxu0 %v11652
  %12805 = vmatprep.subr.bf16.mxu0 %v11659
  %12806 = vmatpush1.bf16.msra.mxu0 %v11658
  %12807 = vmatprep.subr.bf16.mxu0 %v11665
  %12808 = vmatpush1.bf16.msra.mxu0 %v11664
  %12809 = vmatprep.subr.bf16.mxu0 %v11671
  %12810 = vmatpush1.bf16.msra.mxu0 %v11670
  %12811 = vmatprep.subr.bf16.mxu0 %v11677
  %12812 = vmatpush1.bf16.msra.mxu0 %v11676
  %12813 = vmatprep.subr.bf16.mxu0 %v11683
  %12814 = vmatpush1.bf16.msra.mxu0 %v11682
  %12815 = vmatprep.subr.bf16.mxu0 %v11689
  %12816 = vmatpush1.bf16.msra.mxu0 %v11688
  %12817 = vmatprep.subr.bf16.mxu0 %v11695
  %12818 = vmatpush1.bf16.msra.mxu0 %v11694
  %12819 = vmatprep.subr.bf16.mxu0 %v11701
  %12820 = vmatpush1.bf16.msra.mxu0 %v11700
  %12821 = vmatprep.subr.bf16.mxu0 %v11707
  %12822 = vmatpush1.bf16.msra.mxu0 %v11706
  %12823 = vmatprep.subr.bf16.mxu0 %v11713
  %12824 = vmatpush1.bf16.msra.mxu0 %v11712
  %12825 = vmatprep.subr.bf16.mxu0 %v11719
  %12826 = vmatpush1.bf16.msra.mxu0 %v11718
  %12827 = vmatprep.subr.bf16.mxu0 %v11725
  %12828 = vmatpush1.bf16.msra.mxu0 %v11724
  %12829 = vmatprep.subr.bf16.mxu0 %v11731
  %12830 = vmatpush1.bf16.msra.mxu0 %v11730
  %12831 = vmatprep.subr.bf16.mxu0 %v11737
  %12832 = vmatpush1.bf16.msra.mxu0 %v11736
  %12833 = vmatprep.subr.bf16.mxu0 %v11743
  %12834 = vmatpush1.bf16.msra.mxu0 %v11742
  %12835 = vmatprep.mubr.bf16.mxu0 %v7875
  %12836 = vmatmul.mubr.bf16.gmra.mrb[0].mxu0 %v7874
  %v12837 = vpop.f32.mrb[0].mxu0
  %v12838 = vadd.f32 %v12797, %v12837
  %v12839 = vpop.f32.mrb[0].mxu0
  %v12840 = vadd.f32 %v12799, %v12839
  %v12841 = vpop.f32.mrb[0].mxu0
  %v12842 = vpop.f32.mrb[0].mxu0
  %12843 = vdwg.mxu0
  %12844 = vmatprep.subr.bf16.mxu0 %v10983
  %12845 = vmatpush1.bf16.msra.mxu0 %v10982
  %12846 = vmatprep.subr.bf16.mxu0 %v10989
  %12847 = vmatpush1.bf16.msra.mxu0 %v10988
  %12848 = vmatprep.subr.bf16.mxu0 %v10995
  %12849 = vmatpush1.bf16.msra.mxu0 %v10994
  %12850 = vmatprep.subr.bf16.mxu0 %v11001
  %12851 = vmatpush1.bf16.msra.mxu0 %v11000
  %12852 = vmatprep.subr.bf16.mxu0 %v11007
  %12853 = vmatpush1.bf16.msra.mxu0 %v11006
  %12854 = vmatprep.subr.bf16.mxu0 %v11013
  %12855 = vmatpush1.bf16.msra.mxu0 %v11012
  %12856 = vmatprep.subr.bf16.mxu0 %v11019
  %12857 = vmatpush1.bf16.msra.mxu0 %v11018
  %12858 = vmatprep.subr.bf16.mxu0 %v11025
  %12859 = vmatpush1.bf16.msra.mxu0 %v11024
  %12860 = vmatprep.subr.bf16.mxu0 %v11031
  %12861 = vmatpush1.bf16.msra.mxu0 %v11030
  %12862 = vmatprep.subr.bf16.mxu0 %v11037
  %12863 = vmatpush1.bf16.msra.mxu0 %v11036
  %12864 = vmatprep.subr.bf16.mxu0 %v11043
  %12865 = vmatpush1.bf16.msra.mxu0 %v11042
  %12866 = vmatprep.subr.bf16.mxu0 %v11049
  %12867 = vmatpush1.bf16.msra.mxu0 %v11048
  %12868 = vmatprep.subr.bf16.mxu0 %v11055
  %12869 = vmatpush1.bf16.msra.mxu0 %v11054
  %12870 = vmatprep.subr.bf16.mxu0 %v11061
  %12871 = vmatpush1.bf16.msra.mxu0 %v11060
  %12872 = vmatprep.subr.bf16.mxu0 %v11067
  %12873 = vmatpush1.bf16.msra.mxu0 %v11066
  %12874 = vmatprep.subr.bf16.mxu0 %v11073
  %12875 = vmatpush1.bf16.msra.mxu0 %v11072
  %12876 = vmatprep.mubr.bf16.mxu0 %v7861
  %12877 = vmatmul.mubr.bf16.gmra.mrb[0].mxu0 %v7860
  %v12878 = vpop.f32.mrb[0].mxu0
  %v12879 = vadd.f32 %v8657, %v12878
  %v12880 = vpop.f32.mrb[0].mxu0
  %v12881 = vadd.f32 %v8661, %v12880
  %v12882 = vpop.f32.mrb[0].mxu0
  %v12883 = vpop.f32.mrb[0].mxu0
  %12884 = vdwg.mxu0
  %12885 = vmatprep.subr.bf16.mxu0 %v11079
  %12886 = vmatpush1.bf16.msra.mxu0 %v11078
  %12887 = vmatprep.subr.bf16.mxu0 %v11085
  %12888 = vmatpush1.bf16.msra.mxu0 %v11084
  %12889 = vmatprep.subr.bf16.mxu0 %v11091
  %12890 = vmatpush1.bf16.msra.mxu0 %v11090
  %12891 = vmatprep.subr.bf16.mxu0 %v11097
  %12892 = vmatpush1.bf16.msra.mxu0 %v11096
  %12893 = vmatprep.subr.bf16.mxu0 %v11103
  %12894 = vmatpush1.bf16.msra.mxu0 %v11102
  %12895 = vmatprep.subr.bf16.mxu0 %v11109
  %12896 = vmatpush1.bf16.msra.mxu0 %v11108
  %12897 = vmatprep.subr.bf16.mxu0 %v11115
  %12898 = vmatpush1.bf16.msra.mxu0 %v11114
  %12899 = vmatprep.subr.bf16.mxu0 %v11121
  %12900 = vmatpush1.bf16.msra.mxu0 %v11120
  %12901 = vmatprep.subr.bf16.mxu0 %v11127
  %12902 = vmatpush1.bf16.msra.mxu0 %v11126
  %12903 = vmatprep.subr.bf16.mxu0 %v11133
  %12904 = vmatpush1.bf16.msra.mxu0 %v11132
  %12905 = vmatprep.subr.bf16.mxu0 %v11139
  %12906 = vmatpush1.bf16.msra.mxu0 %v11138
  %12907 = vmatprep.subr.bf16.mxu0 %v11145
  %12908 = vmatpush1.bf16.msra.mxu0 %v11144
  %12909 = vmatprep.subr.bf16.mxu0 %v11151
  %12910 = vmatpush1.bf16.msra.mxu0 %v11150
  %12911 = vmatprep.subr.bf16.mxu0 %v11157
  %12912 = vmatpush1.bf16.msra.mxu0 %v11156
  %12913 = vmatprep.subr.bf16.mxu0 %v11163
  %12914 = vmatpush1.bf16.msra.mxu0 %v11162
  %12915 = vmatprep.subr.bf16.mxu0 %v11169
  %12916 = vmatpush1.bf16.msra.mxu0 %v11168
  %12917 = vmatprep.mubr.bf16.mxu0 %v7863
  %12918 = vmatmul.mubr.bf16.gmra.mrb[0].mxu0 %v7862
  %v12919 = vpop.f32.mrb[0].mxu0
  %v12920 = vadd.f32 %v12879, %v12919
  %v12921 = vpop.f32.mrb[0].mxu0
  %v12922 = vadd.f32 %v12881, %v12921
  %v12923 = vpop.f32.mrb[0].mxu0
  %v12924 = vpop.f32.mrb[0].mxu0
  %12925 = vdwg.mxu0
  %12926 = vmatprep.subr.bf16.mxu0 %v11175
  %12927 = vmatpush1.bf16.msra.mxu0 %v11174
  %12928 = vmatprep.subr.bf16.mxu0 %v11181
  %12929 = vmatpush1.bf16.msra.mxu0 %v11180
  %12930 = vmatprep.subr.bf16.mxu0 %v11187
  %12931 = vmatpush1.bf16.msra.mxu0 %v11186
  %12932 = vmatprep.subr.bf16.mxu0 %v11193
  %12933 = vmatpush1.bf16.msra.mxu0 %v11192
  %12934 = vmatprep.subr.bf16.mxu0 %v11199
  %12935 = vmatpush1.bf16.msra.mxu0 %v11198
  %12936 = vmatprep.subr.bf16.mxu0 %v11205
  %12937 = vmatpush1.bf16.msra.mxu0 %v11204
  %12938 = vmatprep.subr.bf16.mxu0 %v11211
  %12939 = vmatpush1.bf16.msra.mxu0 %v11210
  %12940 = vmatprep.subr.bf16.mxu0 %v11217
  %12941 = vmatpush1.bf16.msra.mxu0 %v11216
  %12942 = vmatprep.subr.bf16.mxu0 %v11223
  %12943 = vmatpush1.bf16.msra.mxu0 %v11222
  %12944 = vmatprep.subr.bf16.mxu0 %v11229
  %12945 = vmatpush1.bf16.msra.mxu0 %v11228
  %12946 = vmatprep.subr.bf16.mxu0 %v11235
  %12947 = vmatpush1.bf16.msra.mxu0 %v11234
  %12948 = vmatprep.subr.bf16.mxu0 %v11241
  %12949 = vmatpush1.bf16.msra.mxu0 %v11240
  %12950 = vmatprep.subr.bf16.mxu0 %v11247
  %12951 = vmatpush1.bf16.msra.mxu0 %v11246
  %12952 = vmatprep.subr.bf16.mxu0 %v11253
  %12953 = vmatpush1.bf16.msra.mxu0 %v11252
  %12954 = vmatprep.subr.bf16.mxu0 %v11259
  %12955 = vmatpush1.bf16.msra.mxu0 %v11258
  %12956 = vmatprep.subr.bf16.mxu0 %v11265
  %12957 = vmatpush1.bf16.msra.mxu0 %v11264
  %12958 = vmatprep.mubr.bf16.mxu0 %v7865
  %12959 = vmatmul.mubr.bf16.gmra.mrb[0].mxu0 %v7864
  %v12960 = vpop.f32.mrb[0].mxu0
  %v12961 = vadd.f32 %v12920, %v12960
  %v12962 = vpop.f32.mrb[0].mxu0
  %v12963 = vadd.f32 %v12922, %v12962
  %v12964 = vpop.f32.mrb[0].mxu0
  %v12965 = vpop.f32.mrb[0].mxu0
  %12966 = vdwg.mxu0
  %12967 = vmatprep.subr.bf16.mxu0 %v11271
  %12968 = vmatpush1.bf16.msra.mxu0 %v11270
  %12969 = vmatprep.subr.bf16.mxu0 %v11277
  %12970 = vmatpush1.bf16.msra.mxu0 %v11276
  %12971 = vmatprep.subr.bf16.mxu0 %v11283
  %12972 = vmatpush1.bf16.msra.mxu0 %v11282
  %12973 = vmatprep.subr.bf16.mxu0 %v11289
  %12974 = vmatpush1.bf16.msra.mxu0 %v11288
  %12975 = vmatprep.subr.bf16.mxu0 %v11295
  %12976 = vmatpush1.bf16.msra.mxu0 %v11294
  %12977 = vmatprep.subr.bf16.mxu0 %v11301
  %12978 = vmatpush1.bf16.msra.mxu0 %v11300
  %12979 = vmatprep.subr.bf16.mxu0 %v11307
  %12980 = vmatpush1.bf16.msra.mxu0 %v11306
  %12981 = vmatprep.subr.bf16.mxu0 %v11313
  %12982 = vmatpush1.bf16.msra.mxu0 %v11312
  %12983 = vmatprep.subr.bf16.mxu0 %v11319
  %12984 = vmatpush1.bf16.msra.mxu0 %v11318
  %12985 = vmatprep.subr.bf16.mxu0 %v11325
  %12986 = vmatpush1.bf16.msra.mxu0 %v11324
  %12987 = vmatprep.subr.bf16.mxu0 %v11331
  %12988 = vmatpush1.bf16.msra.mxu0 %v11330
  %12989 = vmatprep.subr.bf16.mxu0 %v11337
  %12990 = vmatpush1.bf16.msra.mxu0 %v11336
  %12991 = vmatprep.subr.bf16.mxu0 %v11343
  %12992 = vmatpush1.bf16.msra.mxu0 %v11342
  %12993 = vmatprep.subr.bf16.mxu0 %v11349
  %12994 = vmatpush1.bf16.msra.mxu0 %v11348
  %12995 = vmatprep.subr.bf16.mxu0 %v11355
  %12996 = vmatpush1.bf16.msra.mxu0 %v11354
  %12997 = vmatprep.subr.bf16.mxu0 %v11361
  %12998 = vmatpush1.bf16.msra.mxu0 %v11360
  %12999 = vmatprep.mubr.bf16.mxu0 %v7867
  %13000 = vmatmul.mubr.bf16.gmra.mrb[0].mxu0 %v7866
  %v13001 = vpop.f32.mrb[0].mxu0
  %v13002 = vadd.f32 %v12961, %v13001
  %v13003 = vpop.f32.mrb[0].mxu0
  %v13004 = vadd.f32 %v12963, %v13003
  %v13005 = vpop.f32.mrb[0].mxu0
  %v13006 = vpop.f32.mrb[0].mxu0
  %13007 = vdwg.mxu0
  %13008 = vmatprep.subr.bf16.mxu0 %v11367
  %13009 = vmatpush1.bf16.msra.mxu0 %v11366
  %13010 = vmatprep.subr.bf16.mxu0 %v11373
  %13011 = vmatpush1.bf16.msra.mxu0 %v11372
  %13012 = vmatprep.subr.bf16.mxu0 %v11379
  %13013 = vmatpush1.bf16.msra.mxu0 %v11378
  %13014 = vmatprep.subr.bf16.mxu0 %v11385
  %13015 = vmatpush1.bf16.msra.mxu0 %v11384
  %13016 = vmatprep.subr.bf16.mxu0 %v11391
  %13017 = vmatpush1.bf16.msra.mxu0 %v11390
  %13018 = vmatprep.subr.bf16.mxu0 %v11397
  %13019 = vmatpush1.bf16.msra.mxu0 %v11396
  %13020 = vmatprep.subr.bf16.mxu0 %v11403
  %13021 = vmatpush1.bf16.msra.mxu0 %v11402
  %13022 = vmatprep.subr.bf16.mxu0 %v11409
  %13023 = vmatpush1.bf16.msra.mxu0 %v11408
  %13024 = vmatprep.subr.bf16.mxu0 %v11415
  %13025 = vmatpush1.bf16.msra.mxu0 %v11414
  %13026 = vmatprep.subr.bf16.mxu0 %v11421
  %13027 = vmatpush1.bf16.msra.mxu0 %v11420
  %13028 = vmatprep.subr.bf16.mxu0 %v11427
  %13029 = vmatpush1.bf16.msra.mxu0 %v11426
  %13030 = vmatprep.subr.bf16.mxu0 %v11433
  %13031 = vmatpush1.bf16.msra.mxu0 %v11432
  %13032 = vmatprep.subr.bf16.mxu0 %v11439
  %13033 = vmatpush1.bf16.msra.mxu0 %v11438
  %13034 = vmatprep.subr.bf16.mxu0 %v11445
  %13035 = vmatpush1.bf16.msra.mxu0 %v11444
  %13036 = vmatprep.subr.bf16.mxu0 %v11451
  %13037 = vmatpush1.bf16.msra.mxu0 %v11450
  %13038 = vmatprep.subr.bf16.mxu0 %v11457
  %13039 = vmatpush1.bf16.msra.mxu0 %v11456
  %13040 = vmatprep.mubr.bf16.mxu0 %v7869
  %13041 = vmatmul.mubr.bf16.gmra.mrb[0].mxu0 %v7868
  %v13042 = vpop.f32.mrb[0].mxu0
  %v13043 = vadd.f32 %v13002, %v13042
  %v13044 = vpop.f32.mrb[0].mxu0
  %v13045 = vadd.f32 %v13004, %v13044
  %v13046 = vpop.f32.mrb[0].mxu0
  %v13047 = vpop.f32.mrb[0].mxu0
  %13048 = vdwg.mxu0
  %13049 = vmatprep.subr.bf16.mxu0 %v11463
  %13050 = vmatpush1.bf16.msra.mxu0 %v11462
  %13051 = vmatprep.subr.bf16.mxu0 %v11469
  %13052 = vmatpush1.bf16.msra.mxu0 %v11468
  %13053 = vmatprep.subr.bf16.mxu0 %v11475
  %13054 = vmatpush1.bf16.msra.mxu0 %v11474
  %13055 = vmatprep.subr.bf16.mxu0 %v11481
  %13056 = vmatpush1.bf16.msra.mxu0 %v11480
  %13057 = vmatprep.subr.bf16.mxu0 %v11487
  %13058 = vmatpush1.bf16.msra.mxu0 %v11486
  %13059 = vmatprep.subr.bf16.mxu0 %v11493
  %13060 = vmatpush1.bf16.msra.mxu0 %v11492
  %13061 = vmatprep.subr.bf16.mxu0 %v11499
  %13062 = vmatpush1.bf16.msra.mxu0 %v11498
  %13063 = vmatprep.subr.bf16.mxu0 %v11505
  %13064 = vmatpush1.bf16.msra.mxu0 %v11504
  %13065 = vmatprep.subr.bf16.mxu0 %v11511
  %13066 = vmatpush1.bf16.msra.mxu0 %v11510
  %13067 = vmatprep.subr.bf16.mxu0 %v11517
  %13068 = vmatpush1.bf16.msra.mxu0 %v11516
  %13069 = vmatprep.subr.bf16.mxu0 %v11523
  %13070 = vmatpush1.bf16.msra.mxu0 %v11522
  %13071 = vmatprep.subr.bf16.mxu0 %v11529
  %13072 = vmatpush1.bf16.msra.mxu0 %v11528
  %13073 = vmatprep.subr.bf16.mxu0 %v11535
  %13074 = vmatpush1.bf16.msra.mxu0 %v11534
  %13075 = vmatprep.subr.bf16.mxu0 %v11541
  %13076 = vmatpush1.bf16.msra.mxu0 %v11540
  %13077 = vmatprep.subr.bf16.mxu0 %v11547
  %13078 = vmatpush1.bf16.msra.mxu0 %v11546
  %13079 = vmatprep.subr.bf16.mxu0 %v11553
  %13080 = vmatpush1.bf16.msra.mxu0 %v11552
  %13081 = vmatprep.mubr.bf16.mxu0 %v7871
  %13082 = vmatmul.mubr.bf16.gmra.mrb[0].mxu0 %v7870
  %v13083 = vpop.f32.mrb[0].mxu0
  %v13084 = vadd.f32 %v13043, %v13083
  %v13085 = vpop.f32.mrb[0].mxu0
  %v13086 = vadd.f32 %v13045, %v13085
  %v13087 = vpop.f32.mrb[0].mxu0
  %v13088 = vpop.f32.mrb[0].mxu0
  %13089 = vdwg.mxu0
  %13090 = vmatprep.subr.bf16.mxu0 %v11559
  %13091 = vmatpush1.bf16.msra.mxu0 %v11558
  %13092 = vmatprep.subr.bf16.mxu0 %v11565
  %13093 = vmatpush1.bf16.msra.mxu0 %v11564
  %13094 = vmatprep.subr.bf16.mxu0 %v11571
  %13095 = vmatpush1.bf16.msra.mxu0 %v11570
  %13096 = vmatprep.subr.bf16.mxu0 %v11577
  %13097 = vmatpush1.bf16.msra.mxu0 %v11576
  %13098 = vmatprep.subr.bf16.mxu0 %v11583
  %13099 = vmatpush1.bf16.msra.mxu0 %v11582
  %13100 = vmatprep.subr.bf16.mxu0 %v11589
  %13101 = vmatpush1.bf16.msra.mxu0 %v11588
  %13102 = vmatprep.subr.bf16.mxu0 %v11595
  %13103 = vmatpush1.bf16.msra.mxu0 %v11594
  %13104 = vmatprep.subr.bf16.mxu0 %v11601
  %13105 = vmatpush1.bf16.msra.mxu0 %v11600
  %13106 = vmatprep.subr.bf16.mxu0 %v11607
  %13107 = vmatpush1.bf16.msra.mxu0 %v11606
  %13108 = vmatprep.subr.bf16.mxu0 %v11613
  %13109 = vmatpush1.bf16.msra.mxu0 %v11612
  %13110 = vmatprep.subr.bf16.mxu0 %v11619
  %13111 = vmatpush1.bf16.msra.mxu0 %v11618
  %13112 = vmatprep.subr.bf16.mxu0 %v11625
  %13113 = vmatpush1.bf16.msra.mxu0 %v11624
  %13114 = vmatprep.subr.bf16.mxu0 %v11631
  %13115 = vmatpush1.bf16.msra.mxu0 %v11630
  %13116 = vmatprep.subr.bf16.mxu0 %v11637
  %13117 = vmatpush1.bf16.msra.mxu0 %v11636
  %13118 = vmatprep.subr.bf16.mxu0 %v11643
  %13119 = vmatpush1.bf16.msra.mxu0 %v11642
  %13120 = vmatprep.subr.bf16.mxu0 %v11649
  %13121 = vmatpush1.bf16.msra.mxu0 %v11648
  %13122 = vmatprep.mubr.bf16.mxu0 %v7873
  %13123 = vmatmul.mubr.bf16.gmra.mrb[0].mxu0 %v7872
  %v13124 = vpop.f32.mrb[0].mxu0
  %v13125 = vadd.f32 %v13084, %v13124
  %v13126 = vpop.f32.mrb[0].mxu0
  %v13127 = vadd.f32 %v13086, %v13126
  %v13128 = vpop.f32.mrb[0].mxu0
  %v13129 = vpop.f32.mrb[0].mxu0
  %13130 = vdwg.mxu0
  %13131 = vmatprep.subr.bf16.mxu0 %v11655
  %13132 = vmatpush1.bf16.msra.mxu0 %v11654
  %13133 = vmatprep.subr.bf16.mxu0 %v11661
  %13134 = vmatpush1.bf16.msra.mxu0 %v11660
  %13135 = vmatprep.subr.bf16.mxu0 %v11667
  %13136 = vmatpush1.bf16.msra.mxu0 %v11666
  %13137 = vmatprep.subr.bf16.mxu0 %v11673
  %13138 = vmatpush1.bf16.msra.mxu0 %v11672
  %13139 = vmatprep.subr.bf16.mxu0 %v11679
  %13140 = vmatpush1.bf16.msra.mxu0 %v11678
  %13141 = vmatprep.subr.bf16.mxu0 %v11685
  %13142 = vmatpush1.bf16.msra.mxu0 %v11684
  %13143 = vmatprep.subr.bf16.mxu0 %v11691
  %13144 = vmatpush1.bf16.msra.mxu0 %v11690
  %13145 = vmatprep.subr.bf16.mxu0 %v11697
  %13146 = vmatpush1.bf16.msra.mxu0 %v11696
  %13147 = vmatprep.subr.bf16.mxu0 %v11703
  %13148 = vmatpush1.bf16.msra.mxu0 %v11702
  %13149 = vmatprep.subr.bf16.mxu0 %v11709
  %13150 = vmatpush1.bf16.msra.mxu0 %v11708
  %13151 = vmatprep.subr.bf16.mxu0 %v11715
  %13152 = vmatpush1.bf16.msra.mxu0 %v11714
  %13153 = vmatprep.subr.bf16.mxu0 %v11721
  %13154 = vmatpush1.bf16.msra.mxu0 %v11720
  %13155 = vmatprep.subr.bf16.mxu0 %v11727
  %13156 = vmatpush1.bf16.msra.mxu0 %v11726
  %13157 = vmatprep.subr.bf16.mxu0 %v11733
  %13158 = vmatpush1.bf16.msra.mxu0 %v11732
  %13159 = vmatprep.subr.bf16.mxu0 %v11739
  %13160 = vmatpush1.bf16.msra.mxu0 %v11738
  %13161 = vmatprep.subr.bf16.mxu0 %v11745
  %13162 = vmatpush1.bf16.msra.mxu0 %v11744
  %13163 = vmatprep.mubr.bf16.mxu0 %v7875
  %13164 = vmatmul.mubr.bf16.gmra.mrb[0].mxu0 %v7874
  %v13165 = vpop.f32.mrb[0].mxu0
  %v13166 = vadd.f32 %v13125, %v13165
  %v13167 = vpop.f32.mrb[0].mxu0
  %v13168 = vadd.f32 %v13127, %v13167
  %v13169 = vpop.f32.mrb[0].mxu0
  %v13170 = vpop.f32.mrb[0].mxu0
  %13171 = vdwg.mxu0
  %13172 = vmatprep.subr.bf16.mxu0 %v10985
  %13173 = vmatpush1.bf16.msra.mxu0 %v10984
  %13174 = vmatprep.subr.bf16.mxu0 %v10991
  %13175 = vmatpush1.bf16.msra.mxu0 %v10990
  %13176 = vmatprep.subr.bf16.mxu0 %v10997
  %13177 = vmatpush1.bf16.msra.mxu0 %v10996
  %13178 = vmatprep.subr.bf16.mxu0 %v11003
  %13179 = vmatpush1.bf16.msra.mxu0 %v11002
  %13180 = vmatprep.subr.bf16.mxu0 %v11009
  %13181 = vmatpush1.bf16.msra.mxu0 %v11008
  %13182 = vmatprep.subr.bf16.mxu0 %v11015
  %13183 = vmatpush1.bf16.msra.mxu0 %v11014
  %13184 = vmatprep.subr.bf16.mxu0 %v11021
  %13185 = vmatpush1.bf16.msra.mxu0 %v11020
  %13186 = vmatprep.subr.bf16.mxu0 %v11027
  %13187 = vmatpush1.bf16.msra.mxu0 %v11026
  %13188 = vmatprep.subr.bf16.mxu0 %v11033
  %13189 = vmatpush1.bf16.msra.mxu0 %v11032
  %13190 = vmatprep.subr.bf16.mxu0 %v11039
  %13191 = vmatpush1.bf16.msra.mxu0 %v11038
  %13192 = vmatprep.subr.bf16.mxu0 %v11045
  %13193 = vmatpush1.bf16.msra.mxu0 %v11044
  %13194 = vmatprep.subr.bf16.mxu0 %v11051
  %13195 = vmatpush1.bf16.msra.mxu0 %v11050
  %13196 = vmatprep.subr.bf16.mxu0 %v11057
  %13197 = vmatpush1.bf16.msra.mxu0 %v11056
  %13198 = vmatprep.subr.bf16.mxu0 %v11063
  %13199 = vmatpush1.bf16.msra.mxu0 %v11062
  %13200 = vmatprep.subr.bf16.mxu0 %v11069
  %13201 = vmatpush1.bf16.msra.mxu0 %v11068
  %13202 = vmatprep.subr.bf16.mxu0 %v11075
  %13203 = vmatpush1.bf16.msra.mxu0 %v11074
  %13204 = vmatprep.mubr.bf16.mxu0 %v7861
  %13205 = vmatmul.mubr.bf16.gmra.mrb[0].mxu0 %v7860
  %v13206 = vpop.f32.mrb[0].mxu0
  %v13207 = vadd.f32 %v8665, %v13206
  %v13208 = vpop.f32.mrb[0].mxu0
  %v13209 = vadd.f32 %v8669, %v13208
  %v13210 = vpop.f32.mrb[0].mxu0
  %v13211 = vpop.f32.mrb[0].mxu0
  %13212 = vdwg.mxu0
  %13213 = vmatprep.subr.bf16.mxu0 %v11081
  %13214 = vmatpush1.bf16.msra.mxu0 %v11080
  %13215 = vmatprep.subr.bf16.mxu0 %v11087
  %13216 = vmatpush1.bf16.msra.mxu0 %v11086
  %13217 = vmatprep.subr.bf16.mxu0 %v11093
  %13218 = vmatpush1.bf16.msra.mxu0 %v11092
  %13219 = vmatprep.subr.bf16.mxu0 %v11099
  %13220 = vmatpush1.bf16.msra.mxu0 %v11098
  %13221 = vmatprep.subr.bf16.mxu0 %v11105
  %13222 = vmatpush1.bf16.msra.mxu0 %v11104
  %13223 = vmatprep.subr.bf16.mxu0 %v11111
  %13224 = vmatpush1.bf16.msra.mxu0 %v11110
  %13225 = vmatprep.subr.bf16.mxu0 %v11117
  %13226 = vmatpush1.bf16.msra.mxu0 %v11116
  %13227 = vmatprep.subr.bf16.mxu0 %v11123
  %13228 = vmatpush1.bf16.msra.mxu0 %v11122
  %13229 = vmatprep.subr.bf16.mxu0 %v11129
  %13230 = vmatpush1.bf16.msra.mxu0 %v11128
  %13231 = vmatprep.subr.bf16.mxu0 %v11135
  %13232 = vmatpush1.bf16.msra.mxu0 %v11134
  %13233 = vmatprep.subr.bf16.mxu0 %v11141
  %13234 = vmatpush1.bf16.msra.mxu0 %v11140
  %13235 = vmatprep.subr.bf16.mxu0 %v11147
  %13236 = vmatpush1.bf16.msra.mxu0 %v11146
  %13237 = vmatprep.subr.bf16.mxu0 %v11153
  %13238 = vmatpush1.bf16.msra.mxu0 %v11152
  %13239 = vmatprep.subr.bf16.mxu0 %v11159
  %13240 = vmatpush1.bf16.msra.mxu0 %v11158
  %13241 = vmatprep.subr.bf16.mxu0 %v11165
  %13242 = vmatpush1.bf16.msra.mxu0 %v11164
  %13243 = vmatprep.subr.bf16.mxu0 %v11171
  %13244 = vmatpush1.bf16.msra.mxu0 %v11170
  %13245 = vmatprep.mubr.bf16.mxu0 %v7863
  %13246 = vmatmul.mubr.bf16.gmra.mrb[0].mxu0 %v7862
  %v13247 = vpop.f32.mrb[0].mxu0
  %v13248 = vadd.f32 %v13207, %v13247
  %v13249 = vpop.f32.mrb[0].mxu0
  %v13250 = vadd.f32 %v13209, %v13249
  %v13251 = vpop.f32.mrb[0].mxu0
  %v13252 = vpop.f32.mrb[0].mxu0
  %13253 = vdwg.mxu0
  %13254 = vmatprep.subr.bf16.mxu0 %v11177
  %13255 = vmatpush1.bf16.msra.mxu0 %v11176
  %13256 = vmatprep.subr.bf16.mxu0 %v11183
  %13257 = vmatpush1.bf16.msra.mxu0 %v11182
  %13258 = vmatprep.subr.bf16.mxu0 %v11189
  %13259 = vmatpush1.bf16.msra.mxu0 %v11188
  %13260 = vmatprep.subr.bf16.mxu0 %v11195
  %13261 = vmatpush1.bf16.msra.mxu0 %v11194
  %13262 = vmatprep.subr.bf16.mxu0 %v11201
  %13263 = vmatpush1.bf16.msra.mxu0 %v11200
  %13264 = vmatprep.subr.bf16.mxu0 %v11207
  %13265 = vmatpush1.bf16.msra.mxu0 %v11206
  %13266 = vmatprep.subr.bf16.mxu0 %v11213
  %13267 = vmatpush1.bf16.msra.mxu0 %v11212
  %13268 = vmatprep.subr.bf16.mxu0 %v11219
  %13269 = vmatpush1.bf16.msra.mxu0 %v11218
  %13270 = vmatprep.subr.bf16.mxu0 %v11225
  %13271 = vmatpush1.bf16.msra.mxu0 %v11224
  %13272 = vmatprep.subr.bf16.mxu0 %v11231
  %13273 = vmatpush1.bf16.msra.mxu0 %v11230
  %13274 = vmatprep.subr.bf16.mxu0 %v11237
  %13275 = vmatpush1.bf16.msra.mxu0 %v11236
  %13276 = vmatprep.subr.bf16.mxu0 %v11243
  %13277 = vmatpush1.bf16.msra.mxu0 %v11242
  %13278 = vmatprep.subr.bf16.mxu0 %v11249
  %13279 = vmatpush1.bf16.msra.mxu0 %v11248
  %13280 = vmatprep.subr.bf16.mxu0 %v11255
  %13281 = vmatpush1.bf16.msra.mxu0 %v11254
  %13282 = vmatprep.subr.bf16.mxu0 %v11261
  %13283 = vmatpush1.bf16.msra.mxu0 %v11260
  %13284 = vmatprep.subr.bf16.mxu0 %v11267
  %13285 = vmatpush1.bf16.msra.mxu0 %v11266
  %13286 = vmatprep.mubr.bf16.mxu0 %v7865
  %13287 = vmatmul.mubr.bf16.gmra.mrb[0].mxu0 %v7864
  %v13288 = vpop.f32.mrb[0].mxu0
  %v13289 = vadd.f32 %v13248, %v13288
  %v13290 = vpop.f32.mrb[0].mxu0
  %v13291 = vadd.f32 %v13250, %v13290
  %v13292 = vpop.f32.mrb[0].mxu0
  %v13293 = vpop.f32.mrb[0].mxu0
  %13294 = vdwg.mxu0
  %13295 = vmatprep.subr.bf16.mxu0 %v11273
  %13296 = vmatpush1.bf16.msra.mxu0 %v11272
  %13297 = vmatprep.subr.bf16.mxu0 %v11279
  %13298 = vmatpush1.bf16.msra.mxu0 %v11278
  %13299 = vmatprep.subr.bf16.mxu0 %v11285
  %13300 = vmatpush1.bf16.msra.mxu0 %v11284
  %13301 = vmatprep.subr.bf16.mxu0 %v11291
  %13302 = vmatpush1.bf16.msra.mxu0 %v11290
  %13303 = vmatprep.subr.bf16.mxu0 %v11297
  %13304 = vmatpush1.bf16.msra.mxu0 %v11296
  %13305 = vmatprep.subr.bf16.mxu0 %v11303
  %13306 = vmatpush1.bf16.msra.mxu0 %v11302
  %13307 = vmatprep.subr.bf16.mxu0 %v11309
  %13308 = vmatpush1.bf16.msra.mxu0 %v11308
  %13309 = vmatprep.subr.bf16.mxu0 %v11315
  %13310 = vmatpush1.bf16.msra.mxu0 %v11314
  %13311 = vmatprep.subr.bf16.mxu0 %v11321
  %13312 = vmatpush1.bf16.msra.mxu0 %v11320
  %13313 = vmatprep.subr.bf16.mxu0 %v11327
  %13314 = vmatpush1.bf16.msra.mxu0 %v11326
  %13315 = vmatprep.subr.bf16.mxu0 %v11333
  %13316 = vmatpush1.bf16.msra.mxu0 %v11332
  %13317 = vmatprep.subr.bf16.mxu0 %v11339
  %13318 = vmatpush1.bf16.msra.mxu0 %v11338
  %13319 = vmatprep.subr.bf16.mxu0 %v11345
  %13320 = vmatpush1.bf16.msra.mxu0 %v11344
  %13321 = vmatprep.subr.bf16.mxu0 %v11351
  %13322 = vmatpush1.bf16.msra.mxu0 %v11350
  %13323 = vmatprep.subr.bf16.mxu0 %v11357
  %13324 = vmatpush1.bf16.msra.mxu0 %v11356
  %13325 = vmatprep.subr.bf16.mxu0 %v11363
  %13326 = vmatpush1.bf16.msra.mxu0 %v11362
  %13327 = vmatprep.mubr.bf16.mxu0 %v7867
  %13328 = vmatmul.mubr.bf16.gmra.mrb[0].mxu0 %v7866
  %v13329 = vpop.f32.mrb[0].mxu0
  %v13330 = vadd.f32 %v13289, %v13329
  %v13331 = vpop.f32.mrb[0].mxu0
  %v13332 = vadd.f32 %v13291, %v13331
  %v13333 = vpop.f32.mrb[0].mxu0
  %v13334 = vpop.f32.mrb[0].mxu0
  %13335 = vdwg.mxu0
  %13336 = vmatprep.subr.bf16.mxu0 %v11369
  %13337 = vmatpush1.bf16.msra.mxu0 %v11368
  %13338 = vmatprep.subr.bf16.mxu0 %v11375
  %13339 = vmatpush1.bf16.msra.mxu0 %v11374
  %13340 = vmatprep.subr.bf16.mxu0 %v11381
  %13341 = vmatpush1.bf16.msra.mxu0 %v11380
  %13342 = vmatprep.subr.bf16.mxu0 %v11387
  %13343 = vmatpush1.bf16.msra.mxu0 %v11386
  %13344 = vmatprep.subr.bf16.mxu0 %v11393
  %13345 = vmatpush1.bf16.msra.mxu0 %v11392
  %13346 = vmatprep.subr.bf16.mxu0 %v11399
  %13347 = vmatpush1.bf16.msra.mxu0 %v11398
  %13348 = vmatprep.subr.bf16.mxu0 %v11405
  %13349 = vmatpush1.bf16.msra.mxu0 %v11404
  %13350 = vmatprep.subr.bf16.mxu0 %v11411
  %13351 = vmatpush1.bf16.msra.mxu0 %v11410
  %13352 = vmatprep.subr.bf16.mxu0 %v11417
  %13353 = vmatpush1.bf16.msra.mxu0 %v11416
  %13354 = vmatprep.subr.bf16.mxu0 %v11423
  %13355 = vmatpush1.bf16.msra.mxu0 %v11422
  %13356 = vmatprep.subr.bf16.mxu0 %v11429
  %13357 = vmatpush1.bf16.msra.mxu0 %v11428
  %13358 = vmatprep.subr.bf16.mxu0 %v11435
  %13359 = vmatpush1.bf16.msra.mxu0 %v11434
  %13360 = vmatprep.subr.bf16.mxu0 %v11441
  %13361 = vmatpush1.bf16.msra.mxu0 %v11440
  %13362 = vmatprep.subr.bf16.mxu0 %v11447
  %13363 = vmatpush1.bf16.msra.mxu0 %v11446
  %13364 = vmatprep.subr.bf16.mxu0 %v11453
  %13365 = vmatpush1.bf16.msra.mxu0 %v11452
  %13366 = vmatprep.subr.bf16.mxu0 %v11459
  %13367 = vmatpush1.bf16.msra.mxu0 %v11458
  %13368 = vmatprep.mubr.bf16.mxu0 %v7869
  %13369 = vmatmul.mubr.bf16.gmra.mrb[0].mxu0 %v7868
  %v13370 = vpop.f32.mrb[0].mxu0
  %v13371 = vadd.f32 %v13330, %v13370
  %v13372 = vpop.f32.mrb[0].mxu0
  %v13373 = vadd.f32 %v13332, %v13372
  %v13374 = vpop.f32.mrb[0].mxu0
  %v13375 = vpop.f32.mrb[0].mxu0
  %13376 = vdwg.mxu0
  %13377 = vmatprep.subr.bf16.mxu0 %v11465
  %13378 = vmatpush1.bf16.msra.mxu0 %v11464
  %13379 = vmatprep.subr.bf16.mxu0 %v11471
  %13380 = vmatpush1.bf16.msra.mxu0 %v11470
  %13381 = vmatprep.subr.bf16.mxu0 %v11477
  %13382 = vmatpush1.bf16.msra.mxu0 %v11476
  %13383 = vmatprep.subr.bf16.mxu0 %v11483
  %13384 = vmatpush1.bf16.msra.mxu0 %v11482
  %13385 = vmatprep.subr.bf16.mxu0 %v11489
  %13386 = vmatpush1.bf16.msra.mxu0 %v11488
  %13387 = vmatprep.subr.bf16.mxu0 %v11495
  %13388 = vmatpush1.bf16.msra.mxu0 %v11494
  %13389 = vmatprep.subr.bf16.mxu0 %v11501
  %13390 = vmatpush1.bf16.msra.mxu0 %v11500
  %13391 = vmatprep.subr.bf16.mxu0 %v11507
  %13392 = vmatpush1.bf16.msra.mxu0 %v11506
  %13393 = vmatprep.subr.bf16.mxu0 %v11513
  %13394 = vmatpush1.bf16.msra.mxu0 %v11512
  %13395 = vmatprep.subr.bf16.mxu0 %v11519
  %13396 = vmatpush1.bf16.msra.mxu0 %v11518
  %13397 = vmatprep.subr.bf16.mxu0 %v11525
  %13398 = vmatpush1.bf16.msra.mxu0 %v11524
  %13399 = vmatprep.subr.bf16.mxu0 %v11531
  %13400 = vmatpush1.bf16.msra.mxu0 %v11530
  %13401 = vmatprep.subr.bf16.mxu0 %v11537
  %13402 = vmatpush1.bf16.msra.mxu0 %v11536
  %13403 = vmatprep.subr.bf16.mxu0 %v11543
  %13404 = vmatpush1.bf16.msra.mxu0 %v11542
  %13405 = vmatprep.subr.bf16.mxu0 %v11549
  %13406 = vmatpush1.bf16.msra.mxu0 %v11548
  %13407 = vmatprep.subr.bf16.mxu0 %v11555
  %13408 = vmatpush1.bf16.msra.mxu0 %v11554
  %13409 = vmatprep.mubr.bf16.mxu0 %v7871
  %13410 = vmatmul.mubr.bf16.gmra.mrb[0].mxu0 %v7870
  %v13411 = vpop.f32.mrb[0].mxu0
  %v13412 = vadd.f32 %v13371, %v13411
  %v13413 = vpop.f32.mrb[0].mxu0
  %v13414 = vadd.f32 %v13373, %v13413
  %v13415 = vpop.f32.mrb[0].mxu0
  %v13416 = vpop.f32.mrb[0].mxu0
  %13417 = vdwg.mxu0
  %13418 = vmatprep.subr.bf16.mxu0 %v11561
  %13419 = vmatpush1.bf16.msra.mxu0 %v11560
  %13420 = vmatprep.subr.bf16.mxu0 %v11567
  %13421 = vmatpush1.bf16.msra.mxu0 %v11566
  %13422 = vmatprep.subr.bf16.mxu0 %v11573
  %13423 = vmatpush1.bf16.msra.mxu0 %v11572
  %13424 = vmatprep.subr.bf16.mxu0 %v11579
  %13425 = vmatpush1.bf16.msra.mxu0 %v11578
  %13426 = vmatprep.subr.bf16.mxu0 %v11585
  %13427 = vmatpush1.bf16.msra.mxu0 %v11584
  %13428 = vmatprep.subr.bf16.mxu0 %v11591
  %13429 = vmatpush1.bf16.msra.mxu0 %v11590
  %13430 = vmatprep.subr.bf16.mxu0 %v11597
  %13431 = vmatpush1.bf16.msra.mxu0 %v11596
  %13432 = vmatprep.subr.bf16.mxu0 %v11603
  %13433 = vmatpush1.bf16.msra.mxu0 %v11602
  %13434 = vmatprep.subr.bf16.mxu0 %v11609
  %13435 = vmatpush1.bf16.msra.mxu0 %v11608
  %13436 = vmatprep.subr.bf16.mxu0 %v11615
  %13437 = vmatpush1.bf16.msra.mxu0 %v11614
  %13438 = vmatprep.subr.bf16.mxu0 %v11621
  %13439 = vmatpush1.bf16.msra.mxu0 %v11620
  %13440 = vmatprep.subr.bf16.mxu0 %v11627
  %13441 = vmatpush1.bf16.msra.mxu0 %v11626
  %13442 = vmatprep.subr.bf16.mxu0 %v11633
  %13443 = vmatpush1.bf16.msra.mxu0 %v11632
  %13444 = vmatprep.subr.bf16.mxu0 %v11639
  %13445 = vmatpush1.bf16.msra.mxu0 %v11638
  %13446 = vmatprep.subr.bf16.mxu0 %v11645
  %13447 = vmatpush1.bf16.msra.mxu0 %v11644
  %13448 = vmatprep.subr.bf16.mxu0 %v11651
  %13449 = vmatpush1.bf16.msra.mxu0 %v11650
  %13450 = vmatprep.mubr.bf16.mxu0 %v7873
  %13451 = vmatmul.mubr.bf16.gmra.mrb[0].mxu0 %v7872
  %v13452 = vpop.f32.mrb[0].mxu0
  %v13453 = vadd.f32 %v13412, %v13452
  %v13454 = vpop.f32.mrb[0].mxu0
  %v13455 = vadd.f32 %v13414, %v13454
  %v13456 = vpop.f32.mrb[0].mxu0
  %v13457 = vpop.f32.mrb[0].mxu0
  %13458 = vdwg.mxu0
  %13459 = vmatprep.subr.bf16.mxu0 %v11657
  %13460 = vmatpush1.bf16.msra.mxu0 %v11656
  %13461 = vmatprep.subr.bf16.mxu0 %v11663
  %13462 = vmatpush1.bf16.msra.mxu0 %v11662
  %13463 = vmatprep.subr.bf16.mxu0 %v11669
  %13464 = vmatpush1.bf16.msra.mxu0 %v11668
  %13465 = vmatprep.subr.bf16.mxu0 %v11675
  %13466 = vmatpush1.bf16.msra.mxu0 %v11674
  %13467 = vmatprep.subr.bf16.mxu0 %v11681
  %13468 = vmatpush1.bf16.msra.mxu0 %v11680
  %13469 = vmatprep.subr.bf16.mxu0 %v11687
  %13470 = vmatpush1.bf16.msra.mxu0 %v11686
  %13471 = vmatprep.subr.bf16.mxu0 %v11693
  %13472 = vmatpush1.bf16.msra.mxu0 %v11692
  %13473 = vmatprep.subr.bf16.mxu0 %v11699
  %13474 = vmatpush1.bf16.msra.mxu0 %v11698
  %13475 = vmatprep.subr.bf16.mxu0 %v11705
  %13476 = vmatpush1.bf16.msra.mxu0 %v11704
  %13477 = vmatprep.subr.bf16.mxu0 %v11711
  %13478 = vmatpush1.bf16.msra.mxu0 %v11710
  %13479 = vmatprep.subr.bf16.mxu0 %v11717
  %13480 = vmatpush1.bf16.msra.mxu0 %v11716
  %13481 = vmatprep.subr.bf16.mxu0 %v11723
  %13482 = vmatpush1.bf16.msra.mxu0 %v11722
  %13483 = vmatprep.subr.bf16.mxu0 %v11729
  %13484 = vmatpush1.bf16.msra.mxu0 %v11728
  %13485 = vmatprep.subr.bf16.mxu0 %v11735
  %13486 = vmatpush1.bf16.msra.mxu0 %v11734
  %13487 = vmatprep.subr.bf16.mxu0 %v11741
  %13488 = vmatpush1.bf16.msra.mxu0 %v11740
  %13489 = vmatprep.subr.bf16.mxu0 %v11747
  %13490 = vmatpush1.bf16.msra.mxu0 %v11746
  %13491 = vmatprep.mubr.bf16.mxu0 %v7875
  %13492 = vmatmul.mubr.bf16.gmra.mrb[0].mxu0 %v7874
  %v13493 = vpop.f32.mrb[0].mxu0
  %v13494 = vadd.f32 %v13453, %v13493
  %v13495 = vpop.f32.mrb[0].mxu0
  %v13496 = vadd.f32 %v13455, %v13495
  %v13497 = vpop.f32.mrb[0].mxu0
  %v13498 = vpop.f32.mrb[0].mxu0
  %13499 = vdwg.mxu0
  %v13500 = vtanh.pop %v12838
  %v13501 = vtanh.pop %v12840
  %v13502 = vtanh.pop %v13166
  %v13503 = vtanh.pop %v13168
  %v13504 = vtanh.pop %v13494
  %v13505 = vtanh.pop %v13496
  %v13512 = vcombine.low %v13500, %v13501
  %v13513 = vcombine.low %v13502, %v13503
  %v13515 = vunpack.c.l.s4 1983009808
  %v13516 = vunpack.c.0.s8 %v13515
  %v13517 = vlaneseq
  %v13518 = vshrl.u32 %v13517, 7
  %v13519 = vsub.s32 %v13516, %v13518
  %v13520 = vrot.slane %v13512, %v13519
  %v13522 = vunpack.c.l.s4 1983009808
  %v13523 = vunpack.c.0.s8 %v13522
  %v13524 = vlaneseq
  %v13525 = vshrl.u32 %v13524, 7
  %v13526 = vsub.s32 %v13523, %v13525
  %v13527 = vrot.slane %v13513, %v13526
  %v13528 = vcombine.low %v13520, %v13527
  %v13529 = vcombine.low %v13504, %v13505
  %v13531 = vunpack.c.l.s4 1983009808
  %v13532 = vunpack.c.0.s8 %v13531
  %v13533 = vlaneseq
  %v13534 = vshrl.u32 %v13533, 7
  %v13535 = vsub.s32 %v13532, %v13534
  %v13536 = vrot.slane %v13529, %v13535
  %13539 = vst [vmem:[%s7] sm:$0xff] %v13528
  %13540 = vst [vmem:[%s7 + $0x8] sm:$0xf] %v13536
  // Predicated region
  $region30: #{_lambda_.1} parent=0 // pred_check
    _
  $region31: #{_lambda_.1} parent=0 // pred_check_branch
    %13542 = sbr.rel (0) target = $region33
  $region32: #{_lambda_.1} parent=0 // pred_region
    _
  $region33: #{_lambda_.1} parent=0 // pred_fallthru
    _
  // Predicated region
  $region34: #{_lambda_.1} parent=0 // pred_check
    _
  $region35: #{_lambda_.1} parent=0 // pred_check_branch
    %13544 = sbr.rel (0) target = $region37
  $region36: #{_lambda_.1} parent=0 // pred_region
    _
  $region37: #{_lambda_.1} parent=0 // pred_fallthru
    _

</llo_original>
